<compile_context>
chip_gen: v7x
topology: tpu7x:2x2x1
jax: 0.10.0
libtpu: 0.0.40
codegen_flags: <defaults>
</compile_context>

<pallas_src>
import jax
import jax.numpy as jnp
import numpy as np
from jax import lax
from jax.experimental import pallas as pl
from jax.experimental.pallas import tpu as pltpu

NEG_SLOPE = 0.01   # PyTorch LeakyReLU default negative_slope
BN_EPS = 1e-5      # PyTorch BatchNorm2d default eps


# --------------------------------------------------------------------------------------
# Kernel
# --------------------------------------------------------------------------------------
def _double_conv_kernel(x_ref, w1_ref, s1_ref, b1_ref, w2_ref, s2_ref, b2_ref,
                        o_ref, xs_ref, mid_ref):
    """One batch-block per grid step.

    x_ref  : (Bt, H, W, Cin)        unpadded input block (f32 or bf16)
    w1_ref : (9, Cin, Coutp)        conv1 weights, taps flattened (bf16)
    s1_ref : (1, Coutp)             folded BN1 scale (f32)
    b1_ref : (1, Coutp)             folded BN1 shift (f32)
    w2_ref : (9, Coutp, Coutp)      conv2 weights, taps flattened (bf16)
    s2_ref : (1, Coutp)             folded BN2 scale (f32)
    b2_ref : (1, Coutp)             folded BN2 shift (f32)
    o_ref  : (Bt, H, W, Cout)       unpadded bf16 output block
    xs_ref : (Bt, H+2, W+2, Cin)    halo-padded input scratch (bf16)
    mid_ref: (Bt, H+2, W+2, Coutp)  halo-padded intermediate scratch (bf16)
    """
    Bt, H, W, Cout = o_ref.shape
    Coutp = mid_ref.shape[-1]
    Hp, Wp = H + 2, W + 2
    M = Bt * H * W

    def stage_halo(dst_ref, interior):
        # Zero only the 1-pixel border (scratch persists but megacore cores each get
        # their own scratch, so zero every step rather than gating on program_id==0).
        C = dst_ref.shape[-1]
        zr = jnp.zeros((Bt, 1, Wp, C), dst_ref.dtype)
        dst_ref[:, 0:1, :, :] = zr
        dst_ref[:, Hp - 1:Hp, :, :] = zr
        zc = jnp.zeros((Bt, H, 1, C), dst_ref.dtype)
        dst_ref[:, 1:1 + H, 0:1, :] = zc
        dst_ref[:, 1:1 + H, Wp - 1:Wp, :] = zc
        dst_ref[:, 1:1 + H, 1:1 + W, :] = interior.astype(dst_ref.dtype)

    def conv3x3(src_ref, w_ref):
        # src_ref: (Bt, Hp, Wp, C) halo-padded bf16; w_ref: (9, C, Coutp) bf16.
        C = src_ref.shape[-1]
        n_out = w_ref.shape[-1]
        # Hoist the (sublane-misaligned) dx shifts out of the dy loop: <=2 relayout
        # copies per conv instead of 6 + a lane concat.  dy slices (untiled H dim)
        # are free views of the already-loaded values.
        shifted = [src_ref[:, :, dx:dx + W, :] for dx in range(3)]
        acc = jnp.zeros((M, n_out), jnp.float32)
        for dy in range(3):
            for dx in range(3):
                patch = shifted[dx][:, dy:dy + H, :, :].reshape(M, C)
                acc = acc + jnp.dot(patch, w_ref[dy * 3 + dx],
                                    preferred_element_type=jnp.float32)
        return acc

    # ---- stage input (cast + halo handled in VMEM; HBM carried only real bytes) ----
    stage_halo(xs_ref, x_ref[...])

    # ---- conv1 + folded BN1 + LeakyReLU (f32 epilogue) ----
    y = conv3x3(xs_ref, w1_ref)
    y = y * s1_ref[...] + b1_ref[...]
    y = jnp.where(y > 0, y, NEG_SLOPE * y)
    # Dropout(rate=0.0) -> identity.
    # TODO(synk): nonzero training-mode dropout would need pltpu.prng_* masking here.

    # ---- stage intermediate in halo-padded bf16 scratch ----
    stage_halo(mid_ref, y.reshape(Bt, H, W, Coutp))

    # ---- conv2 + folded BN2 + LeakyReLU ----
    z = conv3x3(mid_ref, w2_ref)
    z = z * s2_ref[...] + b2_ref[...]
    z = jnp.where(z > 0, z, NEG_SLOPE * z)
    o_ref[...] = z.reshape(Bt, H, W, Coutp)[:, :, :, :Cout].astype(o_ref.dtype)


# --------------------------------------------------------------------------------------
# VMEM sizing (generation-aware, counts in-kernel temporaries)
# --------------------------------------------------------------------------------------
def _round_up(x, m):
    return ((x + m - 1) // m) * m


def _vmem_limit_bytes():
    phys = 64 * 1024 * 1024                      # conservative default (v7x per-core)
    try:
        phys = int(pltpu.get_tpu_info().vmem_capacity_bytes)
    except Exception:
        pass
    # 3/4 of physical, capped at 96 MiB: 48 MiB on v7x (64 MiB), 96 MiB on v5e/v6e.
    return max(min(phys * 3 // 4, 96 * 1024 * 1024), 32 * 1024 * 1024)


def _vmem_per_image(H, W, Cin, Cout, x_bytes):
    """Per-image VMEM cost of one grid step, using lane-padded VMEM layouts."""
    Hp, Wp = H + 2, W + 2
    cin_l = _round_up(Cin, 128)        # VMEM lane padding (HBM traffic stays real bytes)
    coutp = _round_up(Cout, 128)
    in_blk = 2 * H * W * cin_l * x_bytes          # double-buffered input block
    out_blk = 2 * H * W * coutp * 2               # double-buffered bf16 output block
    xs = Hp * Wp * cin_l * 2                      # halo-padded input scratch (bf16)
    mid = Hp * Wp * coutp * 2                     # halo-padded intermediate (bf16)
    shifts = 3 * Hp * W * max(cin_l, coutp) * 2   # hoisted dx-shifted copies (bf16)
    acc_epi = 2 * H * W * coutp * 4               # f32 accumulator + epilogue value
    return in_blk + out_blk + xs + mid + shifts + acc_epi


def _vmem_fixed(Cin, Coutp):
    """Grid-invariant operands (double-buffered by the pipeline)."""
    w1 = 9 * _round_up(Cin, 16) * Coutp * 2
    w2 = 9 * Coutp * Coutp * 2
    sb = 4 * Coutp * 4
    return 2 * (w1 + w2 + sb)


def _pick_bt(B, per_img, budget_bytes):
    """Images per grid step: amortize step overhead while staying VMEM-safe."""
    bt = max(1, min(B, budget_bytes // max(per_img, 1)))
    while bt > 1 and (B + bt - 1) // bt < 2:   # keep >=2 grid steps (pipelining/megacore)
        bt -= 1
    while B % bt:                              # keep uniform blocks
        bt -= 1
    return bt


def _fold_bn(gamma, beta, mean, var, cpad):
    s = gamma / jnp.sqrt(var + BN_EPS)
    b = beta - mean * s
    s = jnp.pad(s, (0, cpad - s.shape[0])).reshape(1, cpad).astype(jnp.float32)
    b = jnp.pad(b, (0, cpad - b.shape[0])).reshape(1, cpad).astype(jnp.float32)
    return s, b


# --------------------------------------------------------------------------------------
# Wrappers
# --------------------------------------------------------------------------------------
@jax.jit
def double_conv_nhwc(x_nhwc, w1, g1, beta1, m1, v1, w2, g2, beta2, m2, v2):
    """NHWC fast path: (B, H, W, Cin) -> (B, H, W, Cout) bf16.  No transpose / pad /
    slice passes over HBM; halo + lane padding live in VMEM inside the kernel."""
    B, H, W, Cin = x_nhwc.shape
    Cout = w1.shape[-1]
    Coutp = _round_up(Cout, 128)
    Hp, Wp = H + 2, W + 2

    # Fold conv weights to (9, Cin, Coutp) / (9, Coutp, Coutp) bf16 (tiny tensors).
    w1f = jnp.pad(w1, ((0, 0), (0, 0), (0, 0), (0, Coutp - Cout)))
    w1f = w1f.reshape(9, Cin, Coutp).astype(jnp.bfloat16)
    w2f = jnp.pad(w2, ((0, 0), (0, 0), (0, Coutp - Cout), (0, Coutp - Cout)))
    w2f = w2f.reshape(9, Coutp, Coutp).astype(jnp.bfloat16)

    # Inference-mode BatchNorm folded to per-channel scale/shift (f32).
    # TODO(synk): training-mode BN (batch statistics) would need a cross-batch
    # reduction pass; inference-mode folding is used here.
    s1, b1 = _fold_bn(g1, beta1, m1, v1, Coutp)
    s2, b2 = _fold_bn(g2, beta2, m2, v2, Coutp)

    vmem_limit = _vmem_limit_bytes()
    x_bytes = jnp.dtype(x_nhwc.dtype).itemsize
    per_img = _vmem_per_image(H, W, Cin, Cout, x_bytes)
    fixed = _vmem_fixed(Cin, Coutp)
    block_budget = max(vmem_limit // 2 - fixed, per_img)
    Bt = _pick_bt(B, per_img, block_budget)

    return pl.pallas_call(
        _double_conv_kernel,
        out_shape=jax.ShapeDtypeStruct((B, H, W, Cout), jnp.bfloat16),
        grid=(B // Bt,),
        in_specs=[
            pl.BlockSpec((Bt, H, W, Cin), lambda b: (b, 0, 0, 0)),
            pl.BlockSpec((9, Cin, Coutp), lambda b: (0, 0, 0)),
            pl.BlockSpec((1, Coutp), lambda b: (0, 0)),
            pl.BlockSpec((1, Coutp), lambda b: (0, 0)),
            pl.BlockSpec((9, Coutp, Coutp), lambda b: (0, 0, 0)),
            pl.BlockSpec((1, Coutp), lambda b: (0, 0)),
            pl.BlockSpec((1, Coutp), lambda b: (0, 0)),
        ],
        out_specs=pl.BlockSpec((Bt, H, W, Cout), lambda b: (b, 0, 0, 0)),
        scratch_shapes=[
            pltpu.VMEM((Bt, Hp, Wp, Cin), jnp.bfloat16),     # halo-padded input
            pltpu.VMEM((Bt, Hp, Wp, Coutp), jnp.bfloat16),   # halo-padded intermediate
        ],
        compiler_params=pltpu.CompilerParams(
            dimension_semantics=("parallel",),
            vmem_limit_bytes=vmem_limit),
    )(x_nhwc, w1f, s1, b1, w2f, s2, b2)


@jax.jit
def double_conv(x_nchw, w1, g1, beta1, m1, v1, w2, g2, beta2, m2, v2):
    """Module-parity entry: (B, Cin, H, W) f32 -> (B, Cout, H, W) f32.
    The NCHW<->NHWC transposes and the f32 cast here are exactly the extra HBM passes
    the perf review flags; in-model callers should use double_conv_nhwc directly."""
    x = jnp.transpose(x_nchw, (0, 2, 3, 1))
    out = double_conv_nhwc(x, w1, g1, beta1, m1, v1, w2, g2, beta2, m2, v2)
    return jnp.transpose(out, (0, 3, 1, 2)).astype(jnp.float32)


# --------------------------------------------------------------------------------------
# Pure-JAX reference + test
# --------------------------------------------------------------------------------------
def _reference(x_nchw, w1, g1, beta1, m1, v1, w2, g2, beta2, m2, v2):
    """Pure-JAX f32 reference of the same forward pass (NHWC conv via XLA)."""
    x = jnp.transpose(x_nchw, (0, 2, 3, 1))
    dn = ("NHWC", "HWIO", "NHWC")
    y = lax.conv_general_dilated(x, w1, (1, 1), "SAME", dimension_numbers=dn)
    y = y * (g1 / jnp.sqrt(v1 + BN_EPS)) + (beta1 - m1 * g1 / jnp.sqrt(v1 + BN_EPS))
    y = jnp.where(y > 0, y, NEG_SLOPE * y)
    z = lax.conv_general_dilated(y, w2, (1, 1), "SAME", dimension_numbers=dn)
    z = z * (g2 / jnp.sqrt(v2 + BN_EPS)) + (beta2 - m2 * g2 / jnp.sqrt(v2 + BN_EPS))
    z = jnp.where(z > 0, z, NEG_SLOPE * z)
    return jnp.transpose(z, (0, 3, 1, 2))


if __name__ == "__main__":
    B, Cin, Cout, H, W = 2, 4, 8, 16, 16

    key = jax.random.PRNGKey(0)
    kx, kw1, kw2, kg1, kb1, kg2, kb2, km1, kv1, km2, kv2 = jax.random.split(key, 11)

    x = jax.random.normal(kx, (B, Cin, H, W), jnp.float32)

    # Conv weights in HWIO layout (deterministic, Kaiming-ish scale).
    w1 = jax.random.normal(kw1, (3, 3, Cin, Cout), jnp.float32) * 0.2
    w2 = jax.random.normal(kw2, (3, 3, Cout, Cout), jnp.float32) * 0.15

    # BatchNorm parameters / running stats (inference mode).
    g1 = 1.0 + 0.1 * jax.random.normal(kg1, (Cout,), jnp.float32)
    beta1 = 0.1 * jax.random.normal(kb1, (Cout,), jnp.float32)
    m1 = 0.05 * jax.random.normal(km1, (Cout,), jnp.float32)
    v1 = 1.0 + 0.1 * jnp.abs(jax.random.normal(kv1, (Cout,), jnp.float32))

    g2 = 1.0 + 0.1 * jax.random.normal(kg2, (Cout,), jnp.float32)
    beta2 = 0.1 * jax.random.normal(kb2, (Cout,), jnp.float32)
    m2 = 0.05 * jax.random.normal(km2, (Cout,), jnp.float32)
    v2 = 1.0 + 0.1 * jnp.abs(jax.random.normal(kv2, (Cout,), jnp.float32))

    out = double_conv(x, w1, g1, beta1, m1, v1, w2, g2, beta2, m2, v2)
    out = jax.block_until_ready(out)

    ref = _reference(x, w1, g1, beta1, m1, v1, w2, g2, beta2, m2, v2)
    np.testing.assert_allclose(np.asarray(out), np.asarray(ref), rtol=5e-2, atol=5e-2)

    print("KERNEL_OK")
</pallas_src>

<mosaic_0001>
module attributes {stable_mosaic.version = 11 : i64} {
  func.func @_double_conv_kernel(%arg0: i32, %arg1: memref<1x16x16x4xf32, #tpu.memory_space<vmem>>, %arg2: memref<9x4x128xbf16, #tpu.memory_space<vmem>>, %arg3: memref<1x128xf32, #tpu.memory_space<vmem>>, %arg4: memref<1x128xf32, #tpu.memory_space<vmem>>, %arg5: memref<9x128x128xbf16, #tpu.memory_space<vmem>>, %arg6: memref<1x128xf32, #tpu.memory_space<vmem>>, %arg7: memref<1x128xf32, #tpu.memory_space<vmem>>, %arg8: memref<1x16x16x8xbf16, #tpu.memory_space<vmem>>, %arg9: memref<1x18x18x4xbf16, #tpu.memory_space<vmem>>, %arg10: memref<1x18x18x128xbf16, #tpu.memory_space<vmem>>) attributes {dimension_semantics = [#tpu.dimension_semantics<parallel>], iteration_bounds = array<i64: 2>, scalar_prefetch = 0 : i64, scratch_operands = 2 : i64, tpu.core_type = #tpu.core_type<tc>, window_params = [{transform_indices = @transform_0, window_bounds = array<i64: 1, 16, 16, 4>}, {pipeline_mode = #tpu.pipeline_mode<synchronous>, transform_indices = @transform_1, window_bounds = array<i64: 9, 4, 128>}, {pipeline_mode = #tpu.pipeline_mode<synchronous>, transform_indices = @transform_2, window_bounds = array<i64: 1, 128>}, {pipeline_mode = #tpu.pipeline_mode<synchronous>, transform_indices = @transform_3, window_bounds = array<i64: 1, 128>}, {pipeline_mode = #tpu.pipeline_mode<synchronous>, transform_indices = @transform_4, window_bounds = array<i64: 9, 128, 128>}, {pipeline_mode = #tpu.pipeline_mode<synchronous>, transform_indices = @transform_5, window_bounds = array<i64: 1, 128>}, {pipeline_mode = #tpu.pipeline_mode<synchronous>, transform_indices = @transform_6, window_bounds = array<i64: 1, 128>}, {transform_indices = @transform_7, window_bounds = array<i64: 1, 16, 16, 8>}]} {
    %c0 = arith.constant 0 : index
    %c0_0 = arith.constant 0 : index
    %c0_1 = arith.constant 0 : index
    %c0_2 = arith.constant 0 : index
    %0 = vector.load %arg1[%c0, %c0_0, %c0_1, %c0_2] : memref<1x16x16x4xf32, #tpu.memory_space<vmem>>, vector<1x16x16x4xf32>
    %cst = arith.constant 0.000000e+00 : bf16
    %1 = vector.broadcast %cst : bf16 to vector<1x1x18x4xbf16>
    %c0_3 = arith.constant 0 : index
    %c0_4 = arith.constant 0 : index
    %c0_5 = arith.constant 0 : index
    %c0_6 = arith.constant 0 : index
    %2 = vector.load %arg9[%c0_3, %c0_4, %c0_5, %c0_6] : memref<1x18x18x4xbf16, #tpu.memory_space<vmem>>, vector<1x1x18x4xbf16>
    tpu.vector_store %arg9[%c0_3, %c0_4, %c0_5, %c0_6], %1 {strides = array<i32>} : memref<1x18x18x4xbf16, #tpu.memory_space<vmem>>, vector<1x1x18x4xbf16>,
    %c0_7 = arith.constant 0 : index
    %c17 = arith.constant 17 : index
    %c0_8 = arith.constant 0 : index
    %c0_9 = arith.constant 0 : index
    %3 = vector.load %arg9[%c0_7, %c17, %c0_8, %c0_9] : memref<1x18x18x4xbf16, #tpu.memory_space<vmem>>, vector<1x1x18x4xbf16>
    tpu.vector_store %arg9[%c0_7, %c17, %c0_8, %c0_9], %1 {strides = array<i32>} : memref<1x18x18x4xbf16, #tpu.memory_space<vmem>>, vector<1x1x18x4xbf16>,
    %cst_10 = arith.constant 0.000000e+00 : bf16
    %4 = vector.broadcast %cst_10 : bf16 to vector<1x16x1x4xbf16>
    %c0_11 = arith.constant 0 : index
    %c1 = arith.constant 1 : index
    %c0_12 = arith.constant 0 : index
    %c0_13 = arith.constant 0 : index
    %5 = vector.load %arg9[%c0_11, %c1, %c0_12, %c0_13] : memref<1x18x18x4xbf16, #tpu.memory_space<vmem>>, vector<1x16x1x4xbf16>
    tpu.vector_store %arg9[%c0_11, %c1, %c0_12, %c0_13], %4 {strides = array<i32>} : memref<1x18x18x4xbf16, #tpu.memory_space<vmem>>, vector<1x16x1x4xbf16>,
    %c0_14 = arith.constant 0 : index
    %c1_15 = arith.constant 1 : index
    %c17_16 = arith.constant 17 : index
    %c0_17 = arith.constant 0 : index
    %6 = vector.load %arg9[%c0_14, %c1_15, %c17_16, %c0_17] : memref<1x18x18x4xbf16, #tpu.memory_space<vmem>>, vector<1x16x1x4xbf16>
    tpu.vector_store %arg9[%c0_14, %c1_15, %c17_16, %c0_17], %4 {strides = array<i32>} : memref<1x18x18x4xbf16, #tpu.memory_space<vmem>>, vector<1x16x1x4xbf16>,
    %7 = arith.truncf %0 : vector<1x16x16x4xf32> to vector<1x16x16x4xbf16>
    %c0_18 = arith.constant 0 : index
    %c1_19 = arith.constant 1 : index
    %c1_20 = arith.constant 1 : index
    %c0_21 = arith.constant 0 : index
    %8 = vector.load %arg9[%c0_18, %c1_19, %c1_20, %c0_21] : memref<1x18x18x4xbf16, #tpu.memory_space<vmem>>, vector<1x16x16x4xbf16>
    tpu.vector_store %arg9[%c0_18, %c1_19, %c1_20, %c0_21], %7 {strides = array<i32>} : memref<1x18x18x4xbf16, #tpu.memory_space<vmem>>, vector<1x16x16x4xbf16>,
    %c0_22 = arith.constant 0 : index
    %c0_23 = arith.constant 0 : index
    %c0_24 = arith.constant 0 : index
    %c0_25 = arith.constant 0 : index
    %9 = vector.load %arg9[%c0_22, %c0_23, %c0_24, %c0_25] : memref<1x18x18x4xbf16, #tpu.memory_space<vmem>>, vector<1x18x16x4xbf16>
    %c0_26 = arith.constant 0 : index
    %c0_27 = arith.constant 0 : index
    %c1_28 = arith.constant 1 : index
    %c0_29 = arith.constant 0 : index
    %10 = vector.load %arg9[%c0_26, %c0_27, %c1_28, %c0_29] : memref<1x18x18x4xbf16, #tpu.memory_space<vmem>>, vector<1x18x16x4xbf16>
    %c0_30 = arith.constant 0 : index
    %c0_31 = arith.constant 0 : index
    %c2 = arith.constant 2 : index
    %c0_32 = arith.constant 0 : index
    %11 = vector.load %arg9[%c0_30, %c0_31, %c2, %c0_32] : memref<1x18x18x4xbf16, #tpu.memory_space<vmem>>, vector<1x18x16x4xbf16>
    %cst_33 = arith.constant 0.000000e+00 : f32
    %12 = vector.broadcast %cst_33 : f32 to vector<256x128xf32>
    %13 = vector.extract_strided_slice %9 {offsets = [0, 0, 0, 0], sizes = [1, 16, 16, 4], strides = [1, 1, 1, 1]} : vector<1x18x16x4xbf16> to vector<1x16x16x4xbf16>
    %14 = vector.shape_cast %13 : vector<1x16x16x4xbf16> to vector<256x4xbf16>
    %c0_34 = arith.constant 0 : index
    %c0_35 = arith.constant 0 : index
    %c0_36 = arith.constant 0 : index
    %15 = vector.load %arg2[%c0_34, %c0_35, %c0_36] : memref<9x4x128xbf16, #tpu.memory_space<vmem>>, vector<1x4x128xbf16>
    %16 = vector.shape_cast %15 : vector<1x4x128xbf16> to vector<4x128xbf16>
    %cst_37 = arith.constant dense<0.000000e+00> : vector<256x128xf32>
    %17 = tpu.matmul %14, %16, %cst_37 {dimension_numbers = #tpu.dot_dimension_numbers<[1], [0], [0], [1], [0, 0, 1, 1], [], []>} : vector<256x4xbf16>, vector<4x128xbf16>, vector<256x128xf32> -> vector<256x128xf32>
    %18 = arith.addf %12, %17 : vector<256x128xf32>
    %19 = vector.extract_strided_slice %10 {offsets = [0, 0, 0, 0], sizes = [1, 16, 16, 4], strides = [1, 1, 1, 1]} : vector<1x18x16x4xbf16> to vector<1x16x16x4xbf16>
    %20 = vector.shape_cast %19 : vector<1x16x16x4xbf16> to vector<256x4xbf16>
    %c1_38 = arith.constant 1 : index
    %c0_39 = arith.constant 0 : index
    %c0_40 = arith.constant 0 : index
    %21 = vector.load %arg2[%c1_38, %c0_39, %c0_40] : memref<9x4x128xbf16, #tpu.memory_space<vmem>>, vector<1x4x128xbf16>
    %22 = vector.shape_cast %21 : vector<1x4x128xbf16> to vector<4x128xbf16>
    %cst_41 = arith.constant dense<0.000000e+00> : vector<256x128xf32>
    %23 = tpu.matmul %20, %22, %cst_41 {dimension_numbers = #tpu.dot_dimension_numbers<[1], [0], [0], [1], [0, 0, 1, 1], [], []>} : vector<256x4xbf16>, vector<4x128xbf16>, vector<256x128xf32> -> vector<256x128xf32>
    %24 = arith.addf %18, %23 : vector<256x128xf32>
    %25 = vector.extract_strided_slice %11 {offsets = [0, 0, 0, 0], sizes = [1, 16, 16, 4], strides = [1, 1, 1, 1]} : vector<1x18x16x4xbf16> to vector<1x16x16x4xbf16>
    %26 = vector.shape_cast %25 : vector<1x16x16x4xbf16> to vector<256x4xbf16>
    %c2_42 = arith.constant 2 : index
    %c0_43 = arith.constant 0 : index
    %c0_44 = arith.constant 0 : index
    %27 = vector.load %arg2[%c2_42, %c0_43, %c0_44] : memref<9x4x128xbf16, #tpu.memory_space<vmem>>, vector<1x4x128xbf16>
    %28 = vector.shape_cast %27 : vector<1x4x128xbf16> to vector<4x128xbf16>
    %cst_45 = arith.constant dense<0.000000e+00> : vector<256x128xf32>
    %29 = tpu.matmul %26, %28, %cst_45 {dimension_numbers = #tpu.dot_dimension_numbers<[1], [0], [0], [1], [0, 0, 1, 1], [], []>} : vector<256x4xbf16>, vector<4x128xbf16>, vector<256x128xf32> -> vector<256x128xf32>
    %30 = arith.addf %24, %29 : vector<256x128xf32>
    %31 = vector.extract_strided_slice %9 {offsets = [0, 1, 0, 0], sizes = [1, 16, 16, 4], strides = [1, 1, 1, 1]} : vector<1x18x16x4xbf16> to vector<1x16x16x4xbf16>
    %32 = vector.shape_cast %31 : vector<1x16x16x4xbf16> to vector<256x4xbf16>
    %c3 = arith.constant 3 : index
    %c0_46 = arith.constant 0 : index
    %c0_47 = arith.constant 0 : index
    %33 = vector.load %arg2[%c3, %c0_46, %c0_47] : memref<9x4x128xbf16, #tpu.memory_space<vmem>>, vector<1x4x128xbf16>
    %34 = vector.shape_cast %33 : vector<1x4x128xbf16> to vector<4x128xbf16>
    %cst_48 = arith.constant dense<0.000000e+00> : vector<256x128xf32>
    %35 = tpu.matmul %32, %34, %cst_48 {dimension_numbers = #tpu.dot_dimension_numbers<[1], [0], [0], [1], [0, 0, 1, 1], [], []>} : vector<256x4xbf16>, vector<4x128xbf16>, vector<256x128xf32> -> vector<256x128xf32>
    %36 = arith.addf %30, %35 : vector<256x128xf32>
    %37 = vector.extract_strided_slice %10 {offsets = [0, 1, 0, 0], sizes = [1, 16, 16, 4], strides = [1, 1, 1, 1]} : vector<1x18x16x4xbf16> to vector<1x16x16x4xbf16>
    %38 = vector.shape_cast %37 : vector<1x16x16x4xbf16> to vector<256x4xbf16>
    %c4 = arith.constant 4 : index
    %c0_49 = arith.constant 0 : index
    %c0_50 = arith.constant 0 : index
    %39 = vector.load %arg2[%c4, %c0_49, %c0_50] : memref<9x4x128xbf16, #tpu.memory_space<vmem>>, vector<1x4x128xbf16>
    %40 = vector.shape_cast %39 : vector<1x4x128xbf16> to vector<4x128xbf16>
    %cst_51 = arith.constant dense<0.000000e+00> : vector<256x128xf32>
    %41 = tpu.matmul %38, %40, %cst_51 {dimension_numbers = #tpu.dot_dimension_numbers<[1], [0], [0], [1], [0, 0, 1, 1], [], []>} : vector<256x4xbf16>, vector<4x128xbf16>, vector<256x128xf32> -> vector<256x128xf32>
    %42 = arith.addf %36, %41 : vector<256x128xf32>
    %43 = vector.extract_strided_slice %11 {offsets = [0, 1, 0, 0], sizes = [1, 16, 16, 4], strides = [1, 1, 1, 1]} : vector<1x18x16x4xbf16> to vector<1x16x16x4xbf16>
    %44 = vector.shape_cast %43 : vector<1x16x16x4xbf16> to vector<256x4xbf16>
    %c5 = arith.constant 5 : index
    %c0_52 = arith.constant 0 : index
    %c0_53 = arith.constant 0 : index
    %45 = vector.load %arg2[%c5, %c0_52, %c0_53] : memref<9x4x128xbf16, #tpu.memory_space<vmem>>, vector<1x4x128xbf16>
    %46 = vector.shape_cast %45 : vector<1x4x128xbf16> to vector<4x128xbf16>
    %cst_54 = arith.constant dense<0.000000e+00> : vector<256x128xf32>
    %47 = tpu.matmul %44, %46, %cst_54 {dimension_numbers = #tpu.dot_dimension_numbers<[1], [0], [0], [1], [0, 0, 1, 1], [], []>} : vector<256x4xbf16>, vector<4x128xbf16>, vector<256x128xf32> -> vector<256x128xf32>
    %48 = arith.addf %42, %47 : vector<256x128xf32>
    %49 = vector.extract_strided_slice %9 {offsets = [0, 2, 0, 0], sizes = [1, 16, 16, 4], strides = [1, 1, 1, 1]} : vector<1x18x16x4xbf16> to vector<1x16x16x4xbf16>
    %50 = vector.shape_cast %49 : vector<1x16x16x4xbf16> to vector<256x4xbf16>
    %c6 = arith.constant 6 : index
    %c0_55 = arith.constant 0 : index
    %c0_56 = arith.constant 0 : index
    %51 = vector.load %arg2[%c6, %c0_55, %c0_56] : memref<9x4x128xbf16, #tpu.memory_space<vmem>>, vector<1x4x128xbf16>
    %52 = vector.shape_cast %51 : vector<1x4x128xbf16> to vector<4x128xbf16>
    %cst_57 = arith.constant dense<0.000000e+00> : vector<256x128xf32>
    %53 = tpu.matmul %50, %52, %cst_57 {dimension_numbers = #tpu.dot_dimension_numbers<[1], [0], [0], [1], [0, 0, 1, 1], [], []>} : vector<256x4xbf16>, vector<4x128xbf16>, vector<256x128xf32> -> vector<256x128xf32>
    %54 = arith.addf %48, %53 : vector<256x128xf32>
    %55 = vector.extract_strided_slice %10 {offsets = [0, 2, 0, 0], sizes = [1, 16, 16, 4], strides = [1, 1, 1, 1]} : vector<1x18x16x4xbf16> to vector<1x16x16x4xbf16>
    %56 = vector.shape_cast %55 : vector<1x16x16x4xbf16> to vector<256x4xbf16>
    %c7 = arith.constant 7 : index
    %c0_58 = arith.constant 0 : index
    %c0_59 = arith.constant 0 : index
    %57 = vector.load %arg2[%c7, %c0_58, %c0_59] : memref<9x4x128xbf16, #tpu.memory_space<vmem>>, vector<1x4x128xbf16>
    %58 = vector.shape_cast %57 : vector<1x4x128xbf16> to vector<4x128xbf16>
    %cst_60 = arith.constant dense<0.000000e+00> : vector<256x128xf32>
    %59 = tpu.matmul %56, %58, %cst_60 {dimension_numbers = #tpu.dot_dimension_numbers<[1], [0], [0], [1], [0, 0, 1, 1], [], []>} : vector<256x4xbf16>, vector<4x128xbf16>, vector<256x128xf32> -> vector<256x128xf32>
    %60 = arith.addf %54, %59 : vector<256x128xf32>
    %61 = vector.extract_strided_slice %11 {offsets = [0, 2, 0, 0], sizes = [1, 16, 16, 4], strides = [1, 1, 1, 1]} : vector<1x18x16x4xbf16> to vector<1x16x16x4xbf16>
    %62 = vector.shape_cast %61 : vector<1x16x16x4xbf16> to vector<256x4xbf16>
    %c8 = arith.constant 8 : index
    %c0_61 = arith.constant 0 : index
    %c0_62 = arith.constant 0 : index
    %63 = vector.load %arg2[%c8, %c0_61, %c0_62] : memref<9x4x128xbf16, #tpu.memory_space<vmem>>, vector<1x4x128xbf16>
    %64 = vector.shape_cast %63 : vector<1x4x128xbf16> to vector<4x128xbf16>
    %cst_63 = arith.constant dense<0.000000e+00> : vector<256x128xf32>
    %65 = tpu.matmul %62, %64, %cst_63 {dimension_numbers = #tpu.dot_dimension_numbers<[1], [0], [0], [1], [0, 0, 1, 1], [], []>} : vector<256x4xbf16>, vector<4x128xbf16>, vector<256x128xf32> -> vector<256x128xf32>
    %66 = arith.addf %60, %65 : vector<256x128xf32>
    %c0_64 = arith.constant 0 : index
    %c0_65 = arith.constant 0 : index
    %67 = vector.load %arg3[%c0_64, %c0_65] : memref<1x128xf32, #tpu.memory_space<vmem>>, vector<1x128xf32>
    %68 = vector.broadcast %67 : vector<1x128xf32> to vector<256x128xf32>
    %69 = arith.mulf %66, %68 : vector<256x128xf32>
    %c0_66 = arith.constant 0 : index
    %c0_67 = arith.constant 0 : index
    %70 = vector.load %arg4[%c0_66, %c0_67] : memref<1x128xf32, #tpu.memory_space<vmem>>, vector<1x128xf32>
    %71 = vector.broadcast %70 : vector<1x128xf32> to vector<256x128xf32>
    %72 = arith.addf %69, %71 : vector<256x128xf32>
    %cst_68 = arith.constant 0.000000e+00 : f32
    %73 = vector.broadcast %cst_68 : f32 to vector<256x128xf32>
    %74 = arith.cmpf ogt, %72, %73 : vector<256x128xf32>
    %cst_69 = arith.constant 0.00999999977 : f32
    %75 = vector.broadcast %cst_69 : f32 to vector<256x128xf32>
    %76 = arith.mulf %75, %72 : vector<256x128xf32>
    %77 = arith.select %74, %72, %76 : vector<256x128xi1>, vector<256x128xf32>
    %78 = vector.shape_cast %77 : vector<256x128xf32> to vector<1x16x16x128xf32>
    %cst_70 = arith.constant 0.000000e+00 : bf16
    %79 = vector.broadcast %cst_70 : bf16 to vector<1x1x18x128xbf16>
    %c0_71 = arith.constant 0 : index
    %c0_72 = arith.constant 0 : index
    %c0_73 = arith.constant 0 : index
    %c0_74 = arith.constant 0 : index
    %80 = vector.load %arg10[%c0_71, %c0_72, %c0_73, %c0_74] : memref<1x18x18x128xbf16, #tpu.memory_space<vmem>>, vector<1x1x18x128xbf16>
    tpu.vector_store %arg10[%c0_71, %c0_72, %c0_73, %c0_74], %79 {strides = array<i32>} : memref<1x18x18x128xbf16, #tpu.memory_space<vmem>>, vector<1x1x18x128xbf16>,
    %c0_75 = arith.constant 0 : index
    %c17_76 = arith.constant 17 : index
    %c0_77 = arith.constant 0 : index
    %c0_78 = arith.constant 0 : index
    %81 = vector.load %arg10[%c0_75, %c17_76, %c0_77, %c0_78] : memref<1x18x18x128xbf16, #tpu.memory_space<vmem>>, vector<1x1x18x128xbf16>
    tpu.vector_store %arg10[%c0_75, %c17_76, %c0_77, %c0_78], %79 {strides = array<i32>} : memref<1x18x18x128xbf16, #tpu.memory_space<vmem>>, vector<1x1x18x128xbf16>,
    %cst_79 = arith.constant 0.000000e+00 : bf16
    %82 = vector.broadcast %cst_79 : bf16 to vector<1x16x1x128xbf16>
    %c0_80 = arith.constant 0 : index
    %c1_81 = arith.constant 1 : index
    %c0_82 = arith.constant 0 : index
    %c0_83 = arith.constant 0 : index
    %83 = vector.load %arg10[%c0_80, %c1_81, %c0_82, %c0_83] : memref<1x18x18x128xbf16, #tpu.memory_space<vmem>>, vector<1x16x1x128xbf16>
    tpu.vector_store %arg10[%c0_80, %c1_81, %c0_82, %c0_83], %82 {strides = array<i32>} : memref<1x18x18x128xbf16, #tpu.memory_space<vmem>>, vector<1x16x1x128xbf16>,
    %c0_84 = arith.constant 0 : index
    %c1_85 = arith.constant 1 : index
    %c17_86 = arith.constant 17 : index
    %c0_87 = arith.constant 0 : index
    %84 = vector.load %arg10[%c0_84, %c1_85, %c17_86, %c0_87] : memref<1x18x18x128xbf16, #tpu.memory_space<vmem>>, vector<1x16x1x128xbf16>
    tpu.vector_store %arg10[%c0_84, %c1_85, %c17_86, %c0_87], %82 {strides = array<i32>} : memref<1x18x18x128xbf16, #tpu.memory_space<vmem>>, vector<1x16x1x128xbf16>,
    %85 = arith.truncf %78 : vector<1x16x16x128xf32> to vector<1x16x16x128xbf16>
    %c0_88 = arith.constant 0 : index
    %c1_89 = arith.constant 1 : index
    %c1_90 = arith.constant 1 : index
    %c0_91 = arith.constant 0 : index
    %86 = vector.load %arg10[%c0_88, %c1_89, %c1_90, %c0_91] : memref<1x18x18x128xbf16, #tpu.memory_space<vmem>>, vector<1x16x16x128xbf16>
    tpu.vector_store %arg10[%c0_88, %c1_89, %c1_90, %c0_91], %85 {strides = array<i32>} : memref<1x18x18x128xbf16, #tpu.memory_space<vmem>>, vector<1x16x16x128xbf16>,
    %c0_92 = arith.constant 0 : index
    %c0_93 = arith.constant 0 : index
    %c0_94 = arith.constant 0 : index
    %c0_95 = arith.constant 0 : index
    %87 = vector.load %arg10[%c0_92, %c0_93, %c0_94, %c0_95] : memref<1x18x18x128xbf16, #tpu.memory_space<vmem>>, vector<1x18x16x128xbf16>
    %c0_96 = arith.constant 0 : index
    %c0_97 = arith.constant 0 : index
    %c1_98 = arith.constant 1 : index
    %c0_99 = arith.constant 0 : index
    %88 = vector.load %arg10[%c0_96, %c0_97, %c1_98, %c0_99] : memref<1x18x18x128xbf16, #tpu.memory_space<vmem>>, vector<1x18x16x128xbf16>
    %c0_100 = arith.constant 0 : index
    %c0_101 = arith.constant 0 : index
    %c2_102 = arith.constant 2 : index
    %c0_103 = arith.constant 0 : index
    %89 = vector.load %arg10[%c0_100, %c0_101, %c2_102, %c0_103] : memref<1x18x18x128xbf16, #tpu.memory_space<vmem>>, vector<1x18x16x128xbf16>
    %cst_104 = arith.constant 0.000000e+00 : f32
    %90 = vector.broadcast %cst_104 : f32 to vector<256x128xf32>
    %91 = vector.extract_strided_slice %87 {offsets = [0, 0, 0, 0], sizes = [1, 16, 16, 128], strides = [1, 1, 1, 1]} : vector<1x18x16x128xbf16> to vector<1x16x16x128xbf16>
    %92 = vector.shape_cast %91 : vector<1x16x16x128xbf16> to vector<256x128xbf16>
    %c0_105 = arith.constant 0 : index
    %c0_106 = arith.constant 0 : index
    %c0_107 = arith.constant 0 : index
    %93 = vector.load %arg5[%c0_105, %c0_106, %c0_107] : memref<9x128x128xbf16, #tpu.memory_space<vmem>>, vector<1x128x128xbf16>
    %94 = vector.shape_cast %93 : vector<1x128x128xbf16> to vector<128x128xbf16>
    %cst_108 = arith.constant dense<0.000000e+00> : vector<256x128xf32>
    %95 = tpu.matmul %92, %94, %cst_108 {dimension_numbers = #tpu.dot_dimension_numbers<[1], [0], [0], [1], [0, 0, 1, 1], [], []>} : vector<256x128xbf16>, vector<128x128xbf16>, vector<256x128xf32> -> vector<256x128xf32>
    %96 = arith.addf %90, %95 : vector<256x128xf32>
    %97 = vector.extract_strided_slice %88 {offsets = [0, 0, 0, 0], sizes = [1, 16, 16, 128], strides = [1, 1, 1, 1]} : vector<1x18x16x128xbf16> to vector<1x16x16x128xbf16>
    %98 = vector.shape_cast %97 : vector<1x16x16x128xbf16> to vector<256x128xbf16>
    %c1_109 = arith.constant 1 : index
    %c0_110 = arith.constant 0 : index
    %c0_111 = arith.constant 0 : index
    %99 = vector.load %arg5[%c1_109, %c0_110, %c0_111] : memref<9x128x128xbf16, #tpu.memory_space<vmem>>, vector<1x128x128xbf16>
    %100 = vector.shape_cast %99 : vector<1x128x128xbf16> to vector<128x128xbf16>
    %cst_112 = arith.constant dense<0.000000e+00> : vector<256x128xf32>
    %101 = tpu.matmul %98, %100, %cst_112 {dimension_numbers = #tpu.dot_dimension_numbers<[1], [0], [0], [1], [0, 0, 1, 1], [], []>} : vector<256x128xbf16>, vector<128x128xbf16>, vector<256x128xf32> -> vector<256x128xf32>
    %102 = arith.addf %96, %101 : vector<256x128xf32>
    %103 = vector.extract_strided_slice %89 {offsets = [0, 0, 0, 0], sizes = [1, 16, 16, 128], strides = [1, 1, 1, 1]} : vector<1x18x16x128xbf16> to vector<1x16x16x128xbf16>
    %104 = vector.shape_cast %103 : vector<1x16x16x128xbf16> to vector<256x128xbf16>
    %c2_113 = arith.constant 2 : index
    %c0_114 = arith.constant 0 : index
    %c0_115 = arith.constant 0 : index
    %105 = vector.load %arg5[%c2_113, %c0_114, %c0_115] : memref<9x128x128xbf16, #tpu.memory_space<vmem>>, vector<1x128x128xbf16>
    %106 = vector.shape_cast %105 : vector<1x128x128xbf16> to vector<128x128xbf16>
    %cst_116 = arith.constant dense<0.000000e+00> : vector<256x128xf32>
    %107 = tpu.matmul %104, %106, %cst_116 {dimension_numbers = #tpu.dot_dimension_numbers<[1], [0], [0], [1], [0, 0, 1, 1], [], []>} : vector<256x128xbf16>, vector<128x128xbf16>, vector<256x128xf32> -> vector<256x128xf32>
    %108 = arith.addf %102, %107 : vector<256x128xf32>
    %109 = vector.extract_strided_slice %87 {offsets = [0, 1, 0, 0], sizes = [1, 16, 16, 128], strides = [1, 1, 1, 1]} : vector<1x18x16x128xbf16> to vector<1x16x16x128xbf16>
    %110 = vector.shape_cast %109 : vector<1x16x16x128xbf16> to vector<256x128xbf16>
    %c3_117 = arith.constant 3 : index
    %c0_118 = arith.constant 0 : index
    %c0_119 = arith.constant 0 : index
    %111 = vector.load %arg5[%c3_117, %c0_118, %c0_119] : memref<9x128x128xbf16, #tpu.memory_space<vmem>>, vector<1x128x128xbf16>
    %112 = vector.shape_cast %111 : vector<1x128x128xbf16> to vector<128x128xbf16>
    %cst_120 = arith.constant dense<0.000000e+00> : vector<256x128xf32>
    %113 = tpu.matmul %110, %112, %cst_120 {dimension_numbers = #tpu.dot_dimension_numbers<[1], [0], [0], [1], [0, 0, 1, 1], [], []>} : vector<256x128xbf16>, vector<128x128xbf16>, vector<256x128xf32> -> vector<256x128xf32>
    %114 = arith.addf %108, %113 : vector<256x128xf32>
    %115 = vector.extract_strided_slice %88 {offsets = [0, 1, 0, 0], sizes = [1, 16, 16, 128], strides = [1, 1, 1, 1]} : vector<1x18x16x128xbf16> to vector<1x16x16x128xbf16>
    %116 = vector.shape_cast %115 : vector<1x16x16x128xbf16> to vector<256x128xbf16>
    %c4_121 = arith.constant 4 : index
    %c0_122 = arith.constant 0 : index
    %c0_123 = arith.constant 0 : index
    %117 = vector.load %arg5[%c4_121, %c0_122, %c0_123] : memref<9x128x128xbf16, #tpu.memory_space<vmem>>, vector<1x128x128xbf16>
    %118 = vector.shape_cast %117 : vector<1x128x128xbf16> to vector<128x128xbf16>
    %cst_124 = arith.constant dense<0.000000e+00> : vector<256x128xf32>
    %119 = tpu.matmul %116, %118, %cst_124 {dimension_numbers = #tpu.dot_dimension_numbers<[1], [0], [0], [1], [0, 0, 1, 1], [], []>} : vector<256x128xbf16>, vector<128x128xbf16>, vector<256x128xf32> -> vector<256x128xf32>
    %120 = arith.addf %114, %119 : vector<256x128xf32>
    %121 = vector.extract_strided_slice %89 {offsets = [0, 1, 0, 0], sizes = [1, 16, 16, 128], strides = [1, 1, 1, 1]} : vector<1x18x16x128xbf16> to vector<1x16x16x128xbf16>
    %122 = vector.shape_cast %121 : vector<1x16x16x128xbf16> to vector<256x128xbf16>
    %c5_125 = arith.constant 5 : index
    %c0_126 = arith.constant 0 : index
    %c0_127 = arith.constant 0 : index
    %123 = vector.load %arg5[%c5_125, %c0_126, %c0_127] : memref<9x128x128xbf16, #tpu.memory_space<vmem>>, vector<1x128x128xbf16>
    %124 = vector.shape_cast %123 : vector<1x128x128xbf16> to vector<128x128xbf16>
    %cst_128 = arith.constant dense<0.000000e+00> : vector<256x128xf32>
    %125 = tpu.matmul %122, %124, %cst_128 {dimension_numbers = #tpu.dot_dimension_numbers<[1], [0], [0], [1], [0, 0, 1, 1], [], []>} : vector<256x128xbf16>, vector<128x128xbf16>, vector<256x128xf32> -> vector<256x128xf32>
    %126 = arith.addf %120, %125 : vector<256x128xf32>
    %127 = vector.extract_strided_slice %87 {offsets = [0, 2, 0, 0], sizes = [1, 16, 16, 128], strides = [1, 1, 1, 1]} : vector<1x18x16x128xbf16> to vector<1x16x16x128xbf16>
    %128 = vector.shape_cast %127 : vector<1x16x16x128xbf16> to vector<256x128xbf16>
    %c6_129 = arith.constant 6 : index
    %c0_130 = arith.constant 0 : index
    %c0_131 = arith.constant 0 : index
    %129 = vector.load %arg5[%c6_129, %c0_130, %c0_131] : memref<9x128x128xbf16, #tpu.memory_space<vmem>>, vector<1x128x128xbf16>
    %130 = vector.shape_cast %129 : vector<1x128x128xbf16> to vector<128x128xbf16>
    %cst_132 = arith.constant dense<0.000000e+00> : vector<256x128xf32>
    %131 = tpu.matmul %128, %130, %cst_132 {dimension_numbers = #tpu.dot_dimension_numbers<[1], [0], [0], [1], [0, 0, 1, 1], [], []>} : vector<256x128xbf16>, vector<128x128xbf16>, vector<256x128xf32> -> vector<256x128xf32>
    %132 = arith.addf %126, %131 : vector<256x128xf32>
    %133 = vector.extract_strided_slice %88 {offsets = [0, 2, 0, 0], sizes = [1, 16, 16, 128], strides = [1, 1, 1, 1]} : vector<1x18x16x128xbf16> to vector<1x16x16x128xbf16>
    %134 = vector.shape_cast %133 : vector<1x16x16x128xbf16> to vector<256x128xbf16>
    %c7_133 = arith.constant 7 : index
    %c0_134 = arith.constant 0 : index
    %c0_135 = arith.constant 0 : index
    %135 = vector.load %arg5[%c7_133, %c0_134, %c0_135] : memref<9x128x128xbf16, #tpu.memory_space<vmem>>, vector<1x128x128xbf16>
    %136 = vector.shape_cast %135 : vector<1x128x128xbf16> to vector<128x128xbf16>
    %cst_136 = arith.constant dense<0.000000e+00> : vector<256x128xf32>
    %137 = tpu.matmul %134, %136, %cst_136 {dimension_numbers = #tpu.dot_dimension_numbers<[1], [0], [0], [1], [0, 0, 1, 1], [], []>} : vector<256x128xbf16>, vector<128x128xbf16>, vector<256x128xf32> -> vector<256x128xf32>
    %138 = arith.addf %132, %137 : vector<256x128xf32>
    %139 = vector.extract_strided_slice %89 {offsets = [0, 2, 0, 0], sizes = [1, 16, 16, 128], strides = [1, 1, 1, 1]} : vector<1x18x16x128xbf16> to vector<1x16x16x128xbf16>
    %140 = vector.shape_cast %139 : vector<1x16x16x128xbf16> to vector<256x128xbf16>
    %c8_137 = arith.constant 8 : index
    %c0_138 = arith.constant 0 : index
    %c0_139 = arith.constant 0 : index
    %141 = vector.load %arg5[%c8_137, %c0_138, %c0_139] : memref<9x128x128xbf16, #tpu.memory_space<vmem>>, vector<1x128x128xbf16>
    %142 = vector.shape_cast %141 : vector<1x128x128xbf16> to vector<128x128xbf16>
    %cst_140 = arith.constant dense<0.000000e+00> : vector<256x128xf32>
    %143 = tpu.matmul %140, %142, %cst_140 {dimension_numbers = #tpu.dot_dimension_numbers<[1], [0], [0], [1], [0, 0, 1, 1], [], []>} : vector<256x128xbf16>, vector<128x128xbf16>, vector<256x128xf32> -> vector<256x128xf32>
    %144 = arith.addf %138, %143 : vector<256x128xf32>
    %c0_141 = arith.constant 0 : index
    %c0_142 = arith.constant 0 : index
    %145 = vector.load %arg6[%c0_141, %c0_142] : memref<1x128xf32, #tpu.memory_space<vmem>>, vector<1x128xf32>
    %146 = vector.broadcast %145 : vector<1x128xf32> to vector<256x128xf32>
    %147 = arith.mulf %144, %146 : vector<256x128xf32>
    %c0_143 = arith.constant 0 : index
    %c0_144 = arith.constant 0 : index
    %148 = vector.load %arg7[%c0_143, %c0_144] : memref<1x128xf32, #tpu.memory_space<vmem>>, vector<1x128xf32>
    %149 = vector.broadcast %148 : vector<1x128xf32> to vector<256x128xf32>
    %150 = arith.addf %147, %149 : vector<256x128xf32>
    %cst_145 = arith.constant 0.000000e+00 : f32
    %151 = vector.broadcast %cst_145 : f32 to vector<256x128xf32>
    %152 = arith.cmpf ogt, %150, %151 : vector<256x128xf32>
    %cst_146 = arith.constant 0.00999999977 : f32
    %153 = vector.broadcast %cst_146 : f32 to vector<256x128xf32>
    %154 = arith.mulf %153, %150 : vector<256x128xf32>
    %155 = arith.select %152, %150, %154 : vector<256x128xi1>, vector<256x128xf32>
    %156 = vector.shape_cast %155 : vector<256x128xf32> to vector<1x16x16x128xf32>
    %157 = vector.extract_strided_slice %156 {offsets = [0, 0, 0, 0], sizes = [1, 16, 16, 8], strides = [1, 1, 1, 1]} : vector<1x16x16x128xf32> to vector<1x16x16x8xf32>
    %158 = arith.truncf %157 : vector<1x16x16x8xf32> to vector<1x16x16x8xbf16>
    %c0_147 = arith.constant 0 : index
    %c0_148 = arith.constant 0 : index
    %c0_149 = arith.constant 0 : index
    %c0_150 = arith.constant 0 : index
    %159 = vector.load %arg8[%c0_147, %c0_148, %c0_149, %c0_150] : memref<1x16x16x8xbf16, #tpu.memory_space<vmem>>, vector<1x16x16x8xbf16>
    tpu.vector_store %arg8[%c0_147, %c0_148, %c0_149, %c0_150], %158 {strides = array<i32>} : memref<1x16x16x8xbf16, #tpu.memory_space<vmem>>, vector<1x16x16x8xbf16>,
    return
  }
  func.func @transform_0(%arg0: i32) -> (i32, i32, i32, i32) {
    %c0_i32 = arith.constant 0 : i32
    %c0_i32_0 = arith.constant 0 : i32
    %c0_i32_1 = arith.constant 0 : i32
    %c0_i32_2 = arith.constant 0 : i32
    return %arg0, %c0_i32, %c0_i32_0, %c0_i32_1 : i32, i32, i32, i32
  }
  func.func @transform_1(%arg0: i32) -> (i32, i32, i32) {
    %c0_i32 = arith.constant 0 : i32
    %c0_i32_0 = arith.constant 0 : i32
    %c0_i32_1 = arith.constant 0 : i32
    %c0_i32_2 = arith.constant 0 : i32
    return %c0_i32, %c0_i32_0, %c0_i32_1 : i32, i32, i32
  }
  func.func @transform_2(%arg0: i32) -> (i32, i32) {
    %c0_i32 = arith.constant 0 : i32
    %c0_i32_0 = arith.constant 0 : i32
    %c0_i32_1 = arith.constant 0 : i32
    return %c0_i32, %c0_i32_0 : i32, i32
  }
  func.func @transform_3(%arg0: i32) -> (i32, i32) {
    %c0_i32 = arith.constant 0 : i32
    %c0_i32_0 = arith.constant 0 : i32
    %c0_i32_1 = arith.constant 0 : i32
    return %c0_i32, %c0_i32_0 : i32, i32
  }
  func.func @transform_4(%arg0: i32) -> (i32, i32, i32) {
    %c0_i32 = arith.constant 0 : i32
    %c0_i32_0 = arith.constant 0 : i32
    %c0_i32_1 = arith.constant 0 : i32
    %c0_i32_2 = arith.constant 0 : i32
    return %c0_i32, %c0_i32_0, %c0_i32_1 : i32, i32, i32
  }
  func.func @transform_5(%arg0: i32) -> (i32, i32) {
    %c0_i32 = arith.constant 0 : i32
    %c0_i32_0 = arith.constant 0 : i32
    %c0_i32_1 = arith.constant 0 : i32
    return %c0_i32, %c0_i32_0 : i32, i32
  }
  func.func @transform_6(%arg0: i32) -> (i32, i32) {
    %c0_i32 = arith.constant 0 : i32
    %c0_i32_0 = arith.constant 0 : i32
    %c0_i32_1 = arith.constant 0 : i32
    return %c0_i32, %c0_i32_0 : i32, i32
  }
  func.func @transform_7(%arg0: i32) -> (i32, i32, i32, i32) {
    %c0_i32 = arith.constant 0 : i32
    %c0_i32_0 = arith.constant 0 : i32
    %c0_i32_1 = arith.constant 0 : i32
    %c0_i32_2 = arith.constant 0 : i32
    return %arg0, %c0_i32, %c0_i32_0, %c0_i32_1 : i32, i32, i32, i32
  }
}

</mosaic_0001>

<llo_original>
// kernel: double_conv_nhwc.1
$region0: #{double_conv_nhwc.1}
  #allocation0 [shape = 'u32[]', space=smem, size = 0x4, offset = 0x4, fixed_abs, tag = 'smem constant byte address 0x4 - core index']
  #allocation1 [shape = 'u32[144,128]{1,0:T(1,128)}', space=vmem, size = 0x12000, scoped, tag = 'internal scratch']
  #allocation2 [shape = 'bf16[1,18,18,4]{3,2,1,0:T(8,128)(2,1)}', space=vmem, size = 0x1b000, scoped, tag = 'scratch operand']
  #allocation3 [shape = 'bf16[1,18,18,128]{3,2,1,0:T(8,128)(2,1)}', space=vmem, size = 0x1b000, scoped, tag = 'scratch operand']
  %s0 = inlined_call_operand.vmem [shape: f32[2,16,16,4], index: 0, kind: input, shape index: {}]
  %s1 = inlined_call_operand.vmem [shape: bf16[9,4,128], index: 1, kind: input, shape index: {}]
  %s2 = inlined_call_operand.vmem [shape: f32[1,128], index: 2, kind: input, shape index: {}]
  %s3 = inlined_call_operand.vmem [shape: f32[1,128], index: 3, kind: input, shape index: {}]
  %s4 = inlined_call_operand.vmem [shape: bf16[9,128,128], index: 4, kind: input, shape index: {}]
  %s5 = inlined_call_operand.vmem [shape: f32[1,128], index: 5, kind: input, shape index: {}]
  %s6 = inlined_call_operand.vmem [shape: f32[1,128], index: 6, kind: input, shape index: {}]
  %s7 = inlined_call_operand.vmem [shape: bf16[2,16,16,8], index: 7, kind: output, shape index: {}]
  %s8 = sld [smem:[#allocation0]]
  $region61: #{double_conv_nhwc.1} parent=0
    _
  %s10 = ssub.s32 1, %s8
  %s11 = scalar_select 0, %s10, %s8
  loop: start=0, step=1, limit=4
  $region2: #{double_conv_nhwc.1} parent=0 // loop_pre_header
    _
  $region3: #{double_conv_nhwc.1} parent=0 // loop_header
    %s13 = sphi 0, %s17
    %p14 = scmp.ge.s32.totalorder %s13, 4
    %s23 = sphi 0, %s25
    %s26 = sphi 0, %s23
    %s27 = sphi 0, %s26
    %s43 = sphi 0, %s27
    %s47 = sphi 0, %s47
    %s49 = sphi 0, %s47
    %s50 = sphi 0, %s49
    %s64 = sphi 0, %s50
    %s68 = sphi 0, %s68
    %s70 = sphi 0, %s68
    %s71 = sphi 0, %s70
    %s85 = sphi 0, %s71
    %s89 = sphi 0, %s89
    %s91 = sphi 0, %s89
    %s92 = sphi 0, %s91
    %s106 = sphi 0, %s92
    %s110 = sphi 0, %s110
    %s112 = sphi 0, %s110
    %s113 = sphi 0, %s112
    %s127 = sphi 0, %s113
    %s131 = sphi 0, %s131
    %s133 = sphi 0, %s131
    %s134 = sphi 0, %s133
    %s148 = sphi 0, %s134
    %s152 = sphi 0, %s152
    %s154 = sphi 0, %s152
    %s155 = sphi 0, %s154
    %s169 = sphi 0, %s155
    %s175 = sphi 0, %s177
    %s178 = sphi 0, %s175
    %s179 = sphi 0, %s178
    %s195 = sphi 0, %s179
  $region4: #{double_conv_nhwc.1} parent=0 // loop_header_branch
    %16 = sbr.rel (%p14) target = $region8
  $region5: #{double_conv_nhwc.1} parent=0 // loop_body
    %s18 = ssub.s32 %s13, 1
    %s19 = ssub.s32 %s13, 2
    %s20 = sadd.s32 %s13, 1
    %s21 = ssub.s32 %s13, %s20
    %p22 = scmp.eq.s32.totalorder %s21, 0
    %s24 = sadd.s32 %s23, 1
    %s25 = scalar_select %p22, %s23, %s24
    %p28 = pneg %p22
    %p29 = scmp.eq.s32.totalorder %s13, 1
    %p30 = por %p28, %p29
    %p31 = scmp.ne.s32.totalorder %s23, %s26
    %p32 = scmp.eq.s32.totalorder %s13, 0
    %p33 = por %p31, %p32
    %p34 = scmp.ne.s32.totalorder %s23, %s26
    %p35 = scmp.eq.s32.totalorder %s18, 1
    %p36 = por %p34, %p35
    %p37 = scmp.ne.s32.totalorder %s26, %s27
    %p38 = scmp.eq.s32.totalorder %s18, 0
    %p39 = por %p37, %p38
    %p40 = scmp.ne.s32.totalorder %s26, %s27
    %p41 = scmp.eq.s32.totalorder %s19, 1
    %p42 = por %p40, %p41
    %p44 = scmp.ne.s32.totalorder %s27, %s43
    %p45 = scmp.eq.s32.totalorder %s19, 0
    %p46 = por %p44, %p45
    %s48 = sadd.s32 %s47, 1
    %p51 = scmp.eq.s32.totalorder %s13, 1
    %p52 = scmp.ne.s32.totalorder %s47, %s49
    %p53 = scmp.eq.s32.totalorder %s13, 0
    %p54 = por %p52, %p53
    %p55 = scmp.ne.s32.totalorder %s47, %s49
    %p56 = scmp.eq.s32.totalorder %s18, 1
    %p57 = por %p55, %p56
    %p58 = scmp.ne.s32.totalorder %s49, %s50
    %p59 = scmp.eq.s32.totalorder %s18, 0
    %p60 = por %p58, %p59
    %p61 = scmp.ne.s32.totalorder %s49, %s50
    %p62 = scmp.eq.s32.totalorder %s19, 1
    %p63 = por %p61, %p62
    %p65 = scmp.ne.s32.totalorder %s50, %s64
    %p66 = scmp.eq.s32.totalorder %s19, 0
    %p67 = por %p65, %p66
    %s69 = sadd.s32 %s68, 1
    %p72 = scmp.eq.s32.totalorder %s13, 1
    %p73 = scmp.ne.s32.totalorder %s68, %s70
    %p74 = scmp.eq.s32.totalorder %s13, 0
    %p75 = por %p73, %p74
    %p76 = scmp.ne.s32.totalorder %s68, %s70
    %p77 = scmp.eq.s32.totalorder %s18, 1
    %p78 = por %p76, %p77
    %p79 = scmp.ne.s32.totalorder %s70, %s71
    %p80 = scmp.eq.s32.totalorder %s18, 0
    %p81 = por %p79, %p80
    %p82 = scmp.ne.s32.totalorder %s70, %s71
    %p83 = scmp.eq.s32.totalorder %s19, 1
    %p84 = por %p82, %p83
    %p86 = scmp.ne.s32.totalorder %s71, %s85
    %p87 = scmp.eq.s32.totalorder %s19, 0
    %p88 = por %p86, %p87
    %s90 = sadd.s32 %s89, 1
    %p93 = scmp.eq.s32.totalorder %s13, 1
    %p94 = scmp.ne.s32.totalorder %s89, %s91
    %p95 = scmp.eq.s32.totalorder %s13, 0
    %p96 = por %p94, %p95
    %p97 = scmp.ne.s32.totalorder %s89, %s91
    %p98 = scmp.eq.s32.totalorder %s18, 1
    %p99 = por %p97, %p98
    %p100 = scmp.ne.s32.totalorder %s91, %s92
    %p101 = scmp.eq.s32.totalorder %s18, 0
    %p102 = por %p100, %p101
    %p103 = scmp.ne.s32.totalorder %s91, %s92
    %p104 = scmp.eq.s32.totalorder %s19, 1
    %p105 = por %p103, %p104
    %p107 = scmp.ne.s32.totalorder %s92, %s106
    %p108 = scmp.eq.s32.totalorder %s19, 0
    %p109 = por %p107, %p108
    %s111 = sadd.s32 %s110, 1
    %p114 = scmp.eq.s32.totalorder %s13, 1
    %p115 = scmp.ne.s32.totalorder %s110, %s112
    %p116 = scmp.eq.s32.totalorder %s13, 0
    %p117 = por %p115, %p116
    %p118 = scmp.ne.s32.totalorder %s110, %s112
    %p119 = scmp.eq.s32.totalorder %s18, 1
    %p120 = por %p118, %p119
    %p121 = scmp.ne.s32.totalorder %s112, %s113
    %p122 = scmp.eq.s32.totalorder %s18, 0
    %p123 = por %p121, %p122
    %p124 = scmp.ne.s32.totalorder %s112, %s113
    %p125 = scmp.eq.s32.totalorder %s19, 1
    %p126 = por %p124, %p125
    %p128 = scmp.ne.s32.totalorder %s113, %s127
    %p129 = scmp.eq.s32.totalorder %s19, 0
    %p130 = por %p128, %p129
    %s132 = sadd.s32 %s131, 1
    %p135 = scmp.eq.s32.totalorder %s13, 1
    %p136 = scmp.ne.s32.totalorder %s131, %s133
    %p137 = scmp.eq.s32.totalorder %s13, 0
    %p138 = por %p136, %p137
    %p139 = scmp.ne.s32.totalorder %s131, %s133
    %p140 = scmp.eq.s32.totalorder %s18, 1
    %p141 = por %p139, %p140
    %p142 = scmp.ne.s32.totalorder %s133, %s134
    %p143 = scmp.eq.s32.totalorder %s18, 0
    %p144 = por %p142, %p143
    %p145 = scmp.ne.s32.totalorder %s133, %s134
    %p146 = scmp.eq.s32.totalorder %s19, 1
    %p147 = por %p145, %p146
    %p149 = scmp.ne.s32.totalorder %s134, %s148
    %p150 = scmp.eq.s32.totalorder %s19, 0
    %p151 = por %p149, %p150
    %s153 = sadd.s32 %s152, 1
    %p156 = scmp.eq.s32.totalorder %s13, 1
    %p157 = scmp.ne.s32.totalorder %s152, %s154
    %p158 = scmp.eq.s32.totalorder %s13, 0
    %p159 = por %p157, %p158
    %p160 = scmp.ne.s32.totalorder %s152, %s154
    %p161 = scmp.eq.s32.totalorder %s18, 1
    %p162 = por %p160, %p161
    %p163 = scmp.ne.s32.totalorder %s154, %s155
    %p164 = scmp.eq.s32.totalorder %s18, 0
    %p165 = por %p163, %p164
    %p166 = scmp.ne.s32.totalorder %s154, %s155
    %p167 = scmp.eq.s32.totalorder %s19, 1
    %p168 = por %p166, %p167
    %p170 = scmp.ne.s32.totalorder %s155, %s169
    %p171 = scmp.eq.s32.totalorder %s19, 0
    %p172 = por %p170, %p171
    %s173 = ssub.s32 %s13, %s20
    %p174 = scmp.eq.s32.totalorder %s173, 0
    %s176 = sadd.s32 %s175, 1
    %s177 = scalar_select %p174, %s175, %s176
    %p180 = pneg %p174
    %p181 = scmp.eq.s32.totalorder %s13, 1
    %p182 = por %p180, %p181
    %p183 = scmp.ne.s32.totalorder %s175, %s178
    %p184 = scmp.eq.s32.totalorder %s13, 0
    %p185 = por %p183, %p184
    %p186 = scmp.ne.s32.totalorder %s175, %s178
    %p187 = scmp.eq.s32.totalorder %s18, 1
    %p188 = por %p186, %p187
    %p189 = scmp.ne.s32.totalorder %s178, %s179
    %p190 = scmp.eq.s32.totalorder %s18, 0
    %p191 = por %p189, %p190
    %p192 = scmp.ne.s32.totalorder %s178, %s179
    %p193 = scmp.eq.s32.totalorder %s19, 1
    %p194 = por %p192, %p193
    %p196 = scmp.ne.s32.totalorder %s179, %s195
    %p197 = scmp.eq.s32.totalorder %s19, 0
    %p198 = por %p196, %p197
    %p199 = scmp.le.s32.totalorder 1, %s13
    %p200 = scmp.lt.s32.totalorder %s13, 3
    %p201 = pnand %p199, %p200
    %p202 = pneg %p201
    // Predicated region
    $region9: #{double_conv_nhwc.1} parent=5 // pred_check
      _
    $region10: #{double_conv_nhwc.1} parent=5 // pred_check_branch
      %204 = sbr.rel (%p201) target = $region12
    $region11: #{double_conv_nhwc.1} parent=5 // pred_region
      %s205 = ssub.s32 %s13, 1
      // Predicated region
      $region13: #{double_conv_nhwc.1} parent=11 // pred_check
        %p206 = pneg %p60
      $region14: #{double_conv_nhwc.1} parent=11 // pred_check_branch
        %208 = sbr.rel (%p206) target = $region16
      $region15: #{double_conv_nhwc.1} parent=11 // pred_region
        _
      $region16: #{double_conv_nhwc.1} parent=11 // pred_fallthru
        _
      // Predicated region
      $region17: #{double_conv_nhwc.1} parent=11 // pred_check
        %p209 = pneg %p81
      $region18: #{double_conv_nhwc.1} parent=11 // pred_check_branch
        %211 = sbr.rel (%p209) target = $region20
      $region19: #{double_conv_nhwc.1} parent=11 // pred_region
        _
      $region20: #{double_conv_nhwc.1} parent=11 // pred_fallthru
        _
      // Predicated region
      $region21: #{double_conv_nhwc.1} parent=11 // pred_check
        %p212 = pneg %p102
      $region22: #{double_conv_nhwc.1} parent=11 // pred_check_branch
        %214 = sbr.rel (%p212) target = $region24
      $region23: #{double_conv_nhwc.1} parent=11 // pred_region
        _
      $region24: #{double_conv_nhwc.1} parent=11 // pred_fallthru
        _
      // Predicated region
      $region25: #{double_conv_nhwc.1} parent=11 // pred_check
        %p215 = pneg %p123
      $region26: #{double_conv_nhwc.1} parent=11 // pred_check_branch
        %217 = sbr.rel (%p215) target = $region28
      $region27: #{double_conv_nhwc.1} parent=11 // pred_region
        _
      $region28: #{double_conv_nhwc.1} parent=11 // pred_fallthru
        _
      // Predicated region
      $region29: #{double_conv_nhwc.1} parent=11 // pred_check
        %p218 = pneg %p144
      $region30: #{double_conv_nhwc.1} parent=11 // pred_check_branch
        %220 = sbr.rel (%p218) target = $region32
      $region31: #{double_conv_nhwc.1} parent=11 // pred_region
        _
      $region32: #{double_conv_nhwc.1} parent=11 // pred_fallthru
        _
      // Predicated region
      $region33: #{double_conv_nhwc.1} parent=11 // pred_check
        %p221 = pneg %p165
      $region34: #{double_conv_nhwc.1} parent=11 // pred_check_branch
        %223 = sbr.rel (%p221) target = $region36
      $region35: #{double_conv_nhwc.1} parent=11 // pred_region
        _
      $region36: #{double_conv_nhwc.1} parent=11 // pred_fallthru
        _
    $region12: #{double_conv_nhwc.1} parent=5 // pred_fallthru
      _
    %p224 = scmp.lt.s32.totalorder %s13, 2
    // Predicated region
    $region37: #{double_conv_nhwc.1} parent=5 // pred_check
      %p225 = pneg %p224
    $region38: #{double_conv_nhwc.1} parent=5 // pred_check_branch
      %227 = sbr.rel (%p225) target = $region40
    $region39: #{double_conv_nhwc.1} parent=5 // pred_region
      // Predicated region
      $region41: #{double_conv_nhwc.1} parent=39 // pred_check
        %p228 = pneg %p33
      $region42: #{double_conv_nhwc.1} parent=39 // pred_check_branch
        %230 = sbr.rel (%p228) target = $region44
      $region43: #{double_conv_nhwc.1} parent=39 // pred_region
        %p231 = scmp.lt.s32.totalorder %s13, 1
        %s232 = scalar_select %p231, %s13, 1
        %s233 = smul.addr %s232, 32
        %s234 = smul.addr %s233, 8
        %s235 = scalar_lea.vmem %s0, %s234
      $region44: #{double_conv_nhwc.1} parent=39 // pred_fallthru
        _
    $region40: #{double_conv_nhwc.1} parent=5 // pred_fallthru
      _
    %p236 = scmp.le.s32.totalorder 1, %s13
    %p237 = scmp.lt.s32.totalorder %s13, 3
    %p238 = pnand %p236, %p237
    %p239 = pneg %p238
    // Predicated region
    $region45: #{double_conv_nhwc.1} parent=5 // pred_check
      _
    $region46: #{double_conv_nhwc.1} parent=5 // pred_check_branch
      %241 = sbr.rel (%p238) target = $region48
    $region47: #{double_conv_nhwc.1} parent=5 // pred_region
      %s242 = ssub.s32 %s13, 1
      %p243 = scmp.lt.s32.totalorder %s18, 1
      %s244 = scalar_select %p243, %s18, 1
      %s245 = smul.addr %s244, 32
      %s246 = smul.addr %s245, 8
      %s247 = scalar_lea.vmem %s0, %s246
      %p248 = pneg %p39
      %p249 = pneg %p36
      %p250 = pneg %p60
      %p251 = pneg %p57
      %p252 = pneg %p81
      %p253 = pneg %p78
      %p254 = pneg %p102
      %p255 = pneg %p99
      %p256 = pneg %p123
      %p257 = pneg %p120
      %p258 = pneg %p144
      %p259 = pneg %p141
      %p260 = pneg %p165
      %p261 = pneg %p162
      %p262 = pneg %p191
      %p263 = pneg %p188
      %p264 = scmp.lt.s32.totalorder %s18, 1
      %s265 = scalar_select %p264, %s18, 1
      %s266 = smul.addr %s265, 32
      %s267 = smul.addr %s266, 4
      %s268 = scalar_lea.vmem %s7, %s267
      %p269 = scmp.lt.s32.totalorder %s18, 1
      %s270 = scalar_select %p269, %s18, 1
      %s271 = smul.addr %s270, 32
      %s272 = smul.addr %s271, 8
      %s273 = scalar_lea.vmem %s0, %s272
      %p274 = scmp.lt.s32.totalorder %s18, 1
      %s275 = scalar_select %p274, %s18, 1
      %s276 = smul.addr %s275, 32
      %s277 = smul.addr %s276, 4
      %s278 = scalar_lea.vmem %s7, %s277
      %v280 = vld [vmem:[%s273] sm:$0xff]
      %v281 = vld [vmem:[%s273 + $0x8] sm:$0xff]
      %v282 = vld [vmem:[%s273 + $0x10] sm:$0xff]
      %v283 = vld [vmem:[%s273 + $0x18] sm:$0xff]
      %v284 = vld [vmem:[%s273 + $0x20] sm:$0xff]
      %v285 = vld [vmem:[%s273 + $0x28] sm:$0xff]
      %v286 = vld [vmem:[%s273 + $0x30] sm:$0xff]
      %v287 = vld [vmem:[%s273 + $0x38] sm:$0xff]
      %v288 = vld [vmem:[%s273 + $0x40] sm:$0xff]
      %v289 = vld [vmem:[%s273 + $0x48] sm:$0xff]
      %v290 = vld [vmem:[%s273 + $0x50] sm:$0xff]
      %v291 = vld [vmem:[%s273 + $0x58] sm:$0xff]
      %v292 = vld [vmem:[%s273 + $0x60] sm:$0xff]
      %v293 = vld [vmem:[%s273 + $0x68] sm:$0xff]
      %v294 = vld [vmem:[%s273 + $0x70] sm:$0xff]
      %v295 = vld [vmem:[%s273 + $0x78] sm:$0xff]
      %v296 = vld [vmem:[%s273 + $0x80] sm:$0xff]
      %v297 = vld [vmem:[%s273 + $0x88] sm:$0xff]
      %v298 = vld [vmem:[%s273 + $0x90] sm:$0xff]
      %v299 = vld [vmem:[%s273 + $0x98] sm:$0xff]
      %v300 = vld [vmem:[%s273 + $0xa0] sm:$0xff]
      %v301 = vld [vmem:[%s273 + $0xa8] sm:$0xff]
      %v302 = vld [vmem:[%s273 + $0xb0] sm:$0xff]
      %v303 = vld [vmem:[%s273 + $0xb8] sm:$0xff]
      %v304 = vld [vmem:[%s273 + $0xc0] sm:$0xff]
      %v305 = vld [vmem:[%s273 + $0xc8] sm:$0xff]
      %v306 = vld [vmem:[%s273 + $0xd0] sm:$0xff]
      %v307 = vld [vmem:[%s273 + $0xd8] sm:$0xff]
      %v308 = vld [vmem:[%s273 + $0xe0] sm:$0xff]
      %v309 = vld [vmem:[%s273 + $0xe8] sm:$0xff]
      %v310 = vld [vmem:[%s273 + $0xf0] sm:$0xff]
      %v311 = vld [vmem:[%s273 + $0xf8] sm:$0xff]
      %vm312 = vcmask 27648
      %313 = vst.msk [vmem:[#allocation2] sm:$0xf] %vm312, 0
      %314 = vst.msk [vmem:[#allocation2 + $0x4] sm:$0xf] %vm312, 0
      %vm315 = vcmask 24576
      %316 = vst.msk [vmem:[#allocation2 + $0x8] sm:$0x1] %vm315, 0
      %s317 = scalar_lea.vmem [#allocation2], 204
      %318 = vst.msk [vmem:[%s317] sm:$0xf] %vm312, 0
      %319 = vst.msk [vmem:[%s317 + $0x4] sm:$0xf] %vm312, 0
      %320 = vst.msk [vmem:[%s317 + $0x8] sm:$0x1] %vm315, 0
      %s321 = scalar_lea.vmem [#allocation2], 12
      %vm322 = vcmask 24576
      %vm323 = vsmask.f32 256
      %vm324 = vmand %vm322, %vm323
      %v325 = vld [vmem:[%s321] sm:$0x1]
      %v326 = vsel %vm324, 0, %v325
      %327 = vst [vmem:[%s321] sm:$0x1] %v326
      %v328 = vld [vmem:[%s321 + $0xc] sm:$0x1]
      %v329 = vsel %vm324, 0, %v328
      %330 = vst [vmem:[%s321 + $0xc] sm:$0x1] %v329
      %v331 = vld [vmem:[%s321 + $0x18] sm:$0x1]
      %v332 = vsel %vm324, 0, %v331
      %333 = vst [vmem:[%s321 + $0x18] sm:$0x1] %v332
      %v334 = vld [vmem:[%s321 + $0x24] sm:$0x1]
      %v335 = vsel %vm324, 0, %v334
      %336 = vst [vmem:[%s321 + $0x24] sm:$0x1] %v335
      %v337 = vld [vmem:[%s321 + $0x30] sm:$0x1]
      %v338 = vsel %vm324, 0, %v337
      %339 = vst [vmem:[%s321 + $0x30] sm:$0x1] %v338
      %v340 = vld [vmem:[%s321 + $0x3c] sm:$0x1]
      %v341 = vsel %vm324, 0, %v340
      %342 = vst [vmem:[%s321 + $0x3c] sm:$0x1] %v341
      %v343 = vld [vmem:[%s321 + $0x48] sm:$0x1]
      %v344 = vsel %vm324, 0, %v343
      %345 = vst [vmem:[%s321 + $0x48] sm:$0x1] %v344
      %v346 = vld [vmem:[%s321 + $0x54] sm:$0x1]
      %v347 = vsel %vm324, 0, %v346
      %348 = vst [vmem:[%s321 + $0x54] sm:$0x1] %v347
      %v349 = vld [vmem:[%s321 + $0x60] sm:$0x1]
      %v350 = vsel %vm324, 0, %v349
      %351 = vst [vmem:[%s321 + $0x60] sm:$0x1] %v350
      %v352 = vld [vmem:[%s321 + $0x6c] sm:$0x1]
      %v353 = vsel %vm324, 0, %v352
      %354 = vst [vmem:[%s321 + $0x6c] sm:$0x1] %v353
      %v355 = vld [vmem:[%s321 + $0x78] sm:$0x1]
      %v356 = vsel %vm324, 0, %v355
      %357 = vst [vmem:[%s321 + $0x78] sm:$0x1] %v356
      %v358 = vld [vmem:[%s321 + $0x84] sm:$0x1]
      %v359 = vsel %vm324, 0, %v358
      %360 = vst [vmem:[%s321 + $0x84] sm:$0x1] %v359
      %v361 = vld [vmem:[%s321 + $0x90] sm:$0x1]
      %v362 = vsel %vm324, 0, %v361
      %363 = vst [vmem:[%s321 + $0x90] sm:$0x1] %v362
      %v364 = vld [vmem:[%s321 + $0x9c] sm:$0x1]
      %v365 = vsel %vm324, 0, %v364
      %366 = vst [vmem:[%s321 + $0x9c] sm:$0x1] %v365
      %v367 = vld [vmem:[%s321 + $0xa8] sm:$0x1]
      %v368 = vsel %vm324, 0, %v367
      %369 = vst [vmem:[%s321 + $0xa8] sm:$0x1] %v368
      %v370 = vld [vmem:[%s321 + $0xb4] sm:$0x1]
      %v371 = vsel %vm324, 0, %v370
      %372 = vst [vmem:[%s321 + $0xb4] sm:$0x1] %v371
      %vm373 = vsmask.f32 7938
      %vm374 = vmand %vm322, %vm373
      %v375 = vld [vmem:[%s321 + $0x8] sm:$0x1]
      %v376 = vsel %vm374, 0, %v375
      %377 = vst [vmem:[%s321 + $0x8] sm:$0x1] %v376
      %v378 = vld [vmem:[%s321 + $0x14] sm:$0x1]
      %v379 = vsel %vm374, 0, %v378
      %380 = vst [vmem:[%s321 + $0x14] sm:$0x1] %v379
      %v381 = vld [vmem:[%s321 + $0x20] sm:$0x1]
      %v382 = vsel %vm374, 0, %v381
      %383 = vst [vmem:[%s321 + $0x20] sm:$0x1] %v382
      %v384 = vld [vmem:[%s321 + $0x2c] sm:$0x1]
      %v385 = vsel %vm374, 0, %v384
      %386 = vst [vmem:[%s321 + $0x2c] sm:$0x1] %v385
      %v387 = vld [vmem:[%s321 + $0x38] sm:$0x1]
      %v388 = vsel %vm374, 0, %v387
      %389 = vst [vmem:[%s321 + $0x38] sm:$0x1] %v388
      %v390 = vld [vmem:[%s321 + $0x44] sm:$0x1]
      %v391 = vsel %vm374, 0, %v390
      %392 = vst [vmem:[%s321 + $0x44] sm:$0x1] %v391
      %v393 = vld [vmem:[%s321 + $0x50] sm:$0x1]
      %v394 = vsel %vm374, 0, %v393
      %395 = vst [vmem:[%s321 + $0x50] sm:$0x1] %v394
      %v396 = vld [vmem:[%s321 + $0x5c] sm:$0x1]
      %v397 = vsel %vm374, 0, %v396
      %398 = vst [vmem:[%s321 + $0x5c] sm:$0x1] %v397
      %v399 = vld [vmem:[%s321 + $0x68] sm:$0x1]
      %v400 = vsel %vm374, 0, %v399
      %401 = vst [vmem:[%s321 + $0x68] sm:$0x1] %v400
      %v402 = vld [vmem:[%s321 + $0x74] sm:$0x1]
      %v403 = vsel %vm374, 0, %v402
      %404 = vst [vmem:[%s321 + $0x74] sm:$0x1] %v403
      %v405 = vld [vmem:[%s321 + $0x80] sm:$0x1]
      %v406 = vsel %vm374, 0, %v405
      %407 = vst [vmem:[%s321 + $0x80] sm:$0x1] %v406
      %v408 = vld [vmem:[%s321 + $0x8c] sm:$0x1]
      %v409 = vsel %vm374, 0, %v408
      %410 = vst [vmem:[%s321 + $0x8c] sm:$0x1] %v409
      %v411 = vld [vmem:[%s321 + $0x98] sm:$0x1]
      %v412 = vsel %vm374, 0, %v411
      %413 = vst [vmem:[%s321 + $0x98] sm:$0x1] %v412
      %v414 = vld [vmem:[%s321 + $0xa4] sm:$0x1]
      %v415 = vsel %vm374, 0, %v414
      %416 = vst [vmem:[%s321 + $0xa4] sm:$0x1] %v415
      %v417 = vld [vmem:[%s321 + $0xb0] sm:$0x1]
      %v418 = vsel %vm374, 0, %v417
      %419 = vst [vmem:[%s321 + $0xb0] sm:$0x1] %v418
      %v420 = vld [vmem:[%s321 + $0xbc] sm:$0x1]
      %v421 = vsel %vm374, 0, %v420
      %422 = vst [vmem:[%s321 + $0xbc] sm:$0x1] %v421
      %v423 = vpack.c.bf16 %v281, %v280
      %v424 = vpack.c.bf16 %v283, %v282
      %v425 = vpack.c.bf16 %v285, %v284
      %v426 = vpack.c.bf16 %v287, %v286
      %v427 = vpack.c.bf16 %v289, %v288
      %v428 = vpack.c.bf16 %v291, %v290
      %v429 = vpack.c.bf16 %v293, %v292
      %v430 = vpack.c.bf16 %v295, %v294
      %v431 = vpack.c.bf16 %v297, %v296
      %v432 = vpack.c.bf16 %v299, %v298
      %v433 = vpack.c.bf16 %v301, %v300
      %v434 = vpack.c.bf16 %v303, %v302
      %v435 = vpack.c.bf16 %v305, %v304
      %v436 = vpack.c.bf16 %v307, %v306
      %v437 = vpack.c.bf16 %v309, %v308
      %v438 = vpack.c.bf16 %v311, %v310
      %v455 = vunpack.c.l.b16 %v423
      %v456 = vunpack.c.h.b16 %v423
      %v457 = vunpack.c.l.b16 %v424
      %v458 = vunpack.c.h.b16 %v424
      %v459 = vunpack.c.l.b16 %v425
      %v460 = vunpack.c.h.b16 %v425
      %v461 = vunpack.c.l.b16 %v426
      %v462 = vunpack.c.h.b16 %v426
      %v463 = vunpack.c.l.b16 %v427
      %v464 = vunpack.c.h.b16 %v427
      %v465 = vunpack.c.l.b16 %v428
      %v466 = vunpack.c.h.b16 %v428
      %v467 = vunpack.c.l.b16 %v429
      %v468 = vunpack.c.h.b16 %v429
      %v469 = vunpack.c.l.b16 %v430
      %v470 = vunpack.c.h.b16 %v430
      %v471 = vunpack.c.l.b16 %v431
      %v472 = vunpack.c.h.b16 %v431
      %v473 = vunpack.c.l.b16 %v432
      %v474 = vunpack.c.h.b16 %v432
      %v475 = vunpack.c.l.b16 %v433
      %v476 = vunpack.c.h.b16 %v433
      %v477 = vunpack.c.l.b16 %v434
      %v478 = vunpack.c.h.b16 %v434
      %v479 = vunpack.c.l.b16 %v435
      %v480 = vunpack.c.h.b16 %v435
      %v481 = vunpack.c.l.b16 %v436
      %v482 = vunpack.c.h.b16 %v436
      %v483 = vunpack.c.l.b16 %v437
      %v484 = vunpack.c.h.b16 %v437
      %v485 = vunpack.c.l.b16 %v438
      %v486 = vunpack.c.h.b16 %v438
      %v487 = vpack.c.b16 %v455, %v455
      %v488 = vpack.c.b16 %v456, %v456
      %v489 = vpack.c.b16 %v457, %v457
      %v490 = vpack.c.b16 %v458, %v458
      %v491 = vpack.c.b16 %v459, %v459
      %v492 = vpack.c.b16 %v460, %v460
      %v493 = vpack.c.b16 %v461, %v461
      %v494 = vpack.c.b16 %v462, %v462
      %v495 = vpack.c.b16 %v463, %v463
      %v496 = vpack.c.b16 %v464, %v464
      %v497 = vpack.c.b16 %v465, %v465
      %v498 = vpack.c.b16 %v466, %v466
      %v499 = vpack.c.b16 %v467, %v467
      %v500 = vpack.c.b16 %v468, %v468
      %v501 = vpack.c.b16 %v469, %v469
      %v502 = vpack.c.b16 %v470, %v470
      %v503 = vpack.c.b16 %v471, %v471
      %v504 = vpack.c.b16 %v472, %v472
      %v505 = vpack.c.b16 %v473, %v473
      %v506 = vpack.c.b16 %v474, %v474
      %v507 = vpack.c.b16 %v475, %v475
      %v508 = vpack.c.b16 %v476, %v476
      %v509 = vpack.c.b16 %v477, %v477
      %v510 = vpack.c.b16 %v478, %v478
      %v511 = vpack.c.b16 %v479, %v479
      %v512 = vpack.c.b16 %v480, %v480
      %v513 = vpack.c.b16 %v481, %v481
      %v514 = vpack.c.b16 %v482, %v482
      %v515 = vpack.c.b16 %v483, %v483
      %v516 = vpack.c.b16 %v484, %v484
      %v517 = vpack.c.b16 %v485, %v485
      %v518 = vpack.c.b16 %v486, %v486
      %vm519 = vsmask.f32 4368
      %vm520 = vmor %vm323, %vm519
      %v522 = vshrl.u32 %v487, 16
      %v524 = vrot.slane %v522, 7
      %v525 = vshll.u32 %v487, 16
      %v527 = vor.u32 %v524, %v525
      %v528 = vrot.slane %v524, 4
      %v530 = vshrl.u32 %v488, 16
      %v532 = vrot.slane %v530, 7
      %v533 = vshll.u32 %v488, 16
      %v535 = vor.u32 %v532, %v533
      %v536 = vsel %vm520, %v528, %v535
      %v537 = vrot.slane %v532, 4
      %v539 = vshrl.u32 %v489, 16
      %v541 = vrot.slane %v539, 7
      %v542 = vshll.u32 %v489, 16
      %v544 = vor.u32 %v541, %v542
      %v545 = vrot.slane %v541, 4
      %v547 = vshrl.u32 %v490, 16
      %v549 = vrot.slane %v547, 7
      %v550 = vshll.u32 %v490, 16
      %v552 = vor.u32 %v549, %v550
      %v553 = vsel %vm520, %v545, %v552
      %v554 = vrot.slane %v549, 4
      %v556 = vshrl.u32 %v491, 16
      %v558 = vrot.slane %v556, 7
      %v559 = vshll.u32 %v491, 16
      %v561 = vor.u32 %v558, %v559
      %v562 = vrot.slane %v558, 4
      %v564 = vshrl.u32 %v492, 16
      %v566 = vrot.slane %v564, 7
      %v567 = vshll.u32 %v492, 16
      %v569 = vor.u32 %v566, %v567
      %v570 = vsel %vm520, %v562, %v569
      %v571 = vrot.slane %v566, 4
      %v573 = vshrl.u32 %v493, 16
      %v575 = vrot.slane %v573, 7
      %v576 = vshll.u32 %v493, 16
      %v578 = vor.u32 %v575, %v576
      %v579 = vrot.slane %v575, 4
      %v581 = vshrl.u32 %v494, 16
      %v583 = vrot.slane %v581, 7
      %v584 = vshll.u32 %v494, 16
      %v586 = vor.u32 %v583, %v584
      %v587 = vsel %vm520, %v579, %v586
      %v588 = vrot.slane %v583, 4
      %v590 = vshrl.u32 %v495, 16
      %v592 = vrot.slane %v590, 7
      %v593 = vshll.u32 %v495, 16
      %v595 = vor.u32 %v592, %v593
      %v596 = vrot.slane %v592, 4
      %v598 = vshrl.u32 %v496, 16
      %v600 = vrot.slane %v598, 7
      %v601 = vshll.u32 %v496, 16
      %v603 = vor.u32 %v600, %v601
      %v604 = vsel %vm520, %v596, %v603
      %v605 = vrot.slane %v600, 4
      %v607 = vshrl.u32 %v497, 16
      %v609 = vrot.slane %v607, 7
      %v610 = vshll.u32 %v497, 16
      %v612 = vor.u32 %v609, %v610
      %v613 = vrot.slane %v609, 4
      %v615 = vshrl.u32 %v498, 16
      %v617 = vrot.slane %v615, 7
      %v618 = vshll.u32 %v498, 16
      %v620 = vor.u32 %v617, %v618
      %v621 = vsel %vm520, %v613, %v620
      %v622 = vrot.slane %v617, 4
      %v624 = vshrl.u32 %v499, 16
      %v626 = vrot.slane %v624, 7
      %v627 = vshll.u32 %v499, 16
      %v629 = vor.u32 %v626, %v627
      %v630 = vrot.slane %v626, 4
      %v632 = vshrl.u32 %v500, 16
      %v634 = vrot.slane %v632, 7
      %v635 = vshll.u32 %v500, 16
      %v637 = vor.u32 %v634, %v635
      %v638 = vsel %vm520, %v630, %v637
      %v639 = vrot.slane %v634, 4
      %v641 = vshrl.u32 %v501, 16
      %v643 = vrot.slane %v641, 7
      %v644 = vshll.u32 %v501, 16
      %v646 = vor.u32 %v643, %v644
      %v647 = vrot.slane %v643, 4
      %v649 = vshrl.u32 %v502, 16
      %v651 = vrot.slane %v649, 7
      %v652 = vshll.u32 %v502, 16
      %v654 = vor.u32 %v651, %v652
      %v655 = vsel %vm520, %v647, %v654
      %v656 = vrot.slane %v651, 4
      %v658 = vshrl.u32 %v503, 16
      %v660 = vrot.slane %v658, 7
      %v661 = vshll.u32 %v503, 16
      %v663 = vor.u32 %v660, %v661
      %v664 = vrot.slane %v660, 4
      %v666 = vshrl.u32 %v504, 16
      %v668 = vrot.slane %v666, 7
      %v669 = vshll.u32 %v504, 16
      %v671 = vor.u32 %v668, %v669
      %v672 = vsel %vm520, %v664, %v671
      %v673 = vrot.slane %v668, 4
      %v675 = vshrl.u32 %v505, 16
      %v677 = vrot.slane %v675, 7
      %v678 = vshll.u32 %v505, 16
      %v680 = vor.u32 %v677, %v678
      %v681 = vrot.slane %v677, 4
      %v683 = vshrl.u32 %v506, 16
      %v685 = vrot.slane %v683, 7
      %v686 = vshll.u32 %v506, 16
      %v688 = vor.u32 %v685, %v686
      %v689 = vsel %vm520, %v681, %v688
      %v690 = vrot.slane %v685, 4
      %v692 = vshrl.u32 %v507, 16
      %v694 = vrot.slane %v692, 7
      %v695 = vshll.u32 %v507, 16
      %v697 = vor.u32 %v694, %v695
      %v698 = vrot.slane %v694, 4
      %v700 = vshrl.u32 %v508, 16
      %v702 = vrot.slane %v700, 7
      %v703 = vshll.u32 %v508, 16
      %v705 = vor.u32 %v702, %v703
      %v706 = vsel %vm520, %v698, %v705
      %v707 = vrot.slane %v702, 4
      %v709 = vshrl.u32 %v509, 16
      %v711 = vrot.slane %v709, 7
      %v712 = vshll.u32 %v509, 16
      %v714 = vor.u32 %v711, %v712
      %v715 = vrot.slane %v711, 4
      %v717 = vshrl.u32 %v510, 16
      %v719 = vrot.slane %v717, 7
      %v720 = vshll.u32 %v510, 16
      %v722 = vor.u32 %v719, %v720
      %v723 = vsel %vm520, %v715, %v722
      %v724 = vrot.slane %v719, 4
      %v726 = vshrl.u32 %v511, 16
      %v728 = vrot.slane %v726, 7
      %v729 = vshll.u32 %v511, 16
      %v731 = vor.u32 %v728, %v729
      %v732 = vrot.slane %v728, 4
      %v734 = vshrl.u32 %v512, 16
      %v736 = vrot.slane %v734, 7
      %v737 = vshll.u32 %v512, 16
      %v739 = vor.u32 %v736, %v737
      %v740 = vsel %vm520, %v732, %v739
      %v741 = vrot.slane %v736, 4
      %v743 = vshrl.u32 %v513, 16
      %v745 = vrot.slane %v743, 7
      %v746 = vshll.u32 %v513, 16
      %v748 = vor.u32 %v745, %v746
      %v749 = vrot.slane %v745, 4
      %v751 = vshrl.u32 %v514, 16
      %v753 = vrot.slane %v751, 7
      %v754 = vshll.u32 %v514, 16
      %v756 = vor.u32 %v753, %v754
      %v757 = vsel %vm520, %v749, %v756
      %v758 = vrot.slane %v753, 4
      %v760 = vshrl.u32 %v515, 16
      %v762 = vrot.slane %v760, 7
      %v763 = vshll.u32 %v515, 16
      %v765 = vor.u32 %v762, %v763
      %v766 = vrot.slane %v762, 4
      %v768 = vshrl.u32 %v516, 16
      %v770 = vrot.slane %v768, 7
      %v771 = vshll.u32 %v516, 16
      %v773 = vor.u32 %v770, %v771
      %v774 = vsel %vm520, %v766, %v773
      %v775 = vrot.slane %v770, 4
      %v777 = vshrl.u32 %v517, 16
      %v779 = vrot.slane %v777, 7
      %v780 = vshll.u32 %v517, 16
      %v782 = vor.u32 %v779, %v780
      %v783 = vrot.slane %v779, 4
      %v785 = vshrl.u32 %v518, 16
      %v787 = vrot.slane %v785, 7
      %v788 = vshll.u32 %v518, 16
      %v790 = vor.u32 %v787, %v788
      %v791 = vsel %vm520, %v783, %v790
      %v792 = vrot.slane %v787, 4
      %vm841 = vcmask 27648
      %vm842 = vmand %vm841, %vm373
      %v843 = vld [vmem:[%s321] sm:$0xf]
      %v844 = vsel %vm842, %v527, %v843
      %845 = vst [vmem:[%s321] sm:$0xf] %v844
      %846 = vst.msk [vmem:[%s321 + $0x4] sm:$0xf] %vm312, %v536
      %v847 = vld [vmem:[%s321 + $0x8] sm:$0x1]
      %v848 = vsel %vm324, %v537, %v847
      %849 = vst [vmem:[%s321 + $0x8] sm:$0x1] %v848
      %v850 = vld [vmem:[%s321 + $0xc] sm:$0xf]
      %v851 = vsel %vm842, %v544, %v850
      %852 = vst [vmem:[%s321 + $0xc] sm:$0xf] %v851
      %853 = vst.msk [vmem:[%s321 + $0x10] sm:$0xf] %vm312, %v553
      %v854 = vld [vmem:[%s321 + $0x14] sm:$0x1]
      %v855 = vsel %vm324, %v554, %v854
      %856 = vst [vmem:[%s321 + $0x14] sm:$0x1] %v855
      %v857 = vld [vmem:[%s321 + $0x18] sm:$0xf]
      %v858 = vsel %vm842, %v561, %v857
      %859 = vst [vmem:[%s321 + $0x18] sm:$0xf] %v858
      %860 = vst.msk [vmem:[%s321 + $0x1c] sm:$0xf] %vm312, %v570
      %v861 = vld [vmem:[%s321 + $0x20] sm:$0x1]
      %v862 = vsel %vm324, %v571, %v861
      %863 = vst [vmem:[%s321 + $0x20] sm:$0x1] %v862
      %v864 = vld [vmem:[%s321 + $0x24] sm:$0xf]
      %v865 = vsel %vm842, %v578, %v864
      %866 = vst [vmem:[%s321 + $0x24] sm:$0xf] %v865
      %867 = vst.msk [vmem:[%s321 + $0x28] sm:$0xf] %vm312, %v587
      %v868 = vld [vmem:[%s321 + $0x2c] sm:$0x1]
      %v869 = vsel %vm324, %v588, %v868
      %870 = vst [vmem:[%s321 + $0x2c] sm:$0x1] %v869
      %v871 = vld [vmem:[%s321 + $0x30] sm:$0xf]
      %v872 = vsel %vm842, %v595, %v871
      %873 = vst [vmem:[%s321 + $0x30] sm:$0xf] %v872
      %874 = vst.msk [vmem:[%s321 + $0x34] sm:$0xf] %vm312, %v604
      %v875 = vld [vmem:[%s321 + $0x38] sm:$0x1]
      %v876 = vsel %vm324, %v605, %v875
      %877 = vst [vmem:[%s321 + $0x38] sm:$0x1] %v876
      %v878 = vld [vmem:[%s321 + $0x3c] sm:$0xf]
      %v879 = vsel %vm842, %v612, %v878
      %880 = vst [vmem:[%s321 + $0x3c] sm:$0xf] %v879
      %881 = vst.msk [vmem:[%s321 + $0x40] sm:$0xf] %vm312, %v621
      %v882 = vld [vmem:[%s321 + $0x44] sm:$0x1]
      %v883 = vsel %vm324, %v622, %v882
      %884 = vst [vmem:[%s321 + $0x44] sm:$0x1] %v883
      %v885 = vld [vmem:[%s321 + $0x48] sm:$0xf]
      %v886 = vsel %vm842, %v629, %v885
      %887 = vst [vmem:[%s321 + $0x48] sm:$0xf] %v886
      %888 = vst.msk [vmem:[%s321 + $0x4c] sm:$0xf] %vm312, %v638
      %v889 = vld [vmem:[%s321 + $0x50] sm:$0x1]
      %v890 = vsel %vm324, %v639, %v889
      %891 = vst [vmem:[%s321 + $0x50] sm:$0x1] %v890
      %v892 = vld [vmem:[%s321 + $0x54] sm:$0xf]
      %v893 = vsel %vm842, %v646, %v892
      %894 = vst [vmem:[%s321 + $0x54] sm:$0xf] %v893
      %895 = vst.msk [vmem:[%s321 + $0x58] sm:$0xf] %vm312, %v655
      %v896 = vld [vmem:[%s321 + $0x5c] sm:$0x1]
      %v897 = vsel %vm324, %v656, %v896
      %898 = vst [vmem:[%s321 + $0x5c] sm:$0x1] %v897
      %v899 = vld [vmem:[%s321 + $0x60] sm:$0xf]
      %v900 = vsel %vm842, %v663, %v899
      %901 = vst [vmem:[%s321 + $0x60] sm:$0xf] %v900
      %902 = vst.msk [vmem:[%s321 + $0x64] sm:$0xf] %vm312, %v672
      %v903 = vld [vmem:[%s321 + $0x68] sm:$0x1]
      %v904 = vsel %vm324, %v673, %v903
      %905 = vst [vmem:[%s321 + $0x68] sm:$0x1] %v904
      %v906 = vld [vmem:[%s321 + $0x6c] sm:$0xf]
      %v907 = vsel %vm842, %v680, %v906
      %908 = vst [vmem:[%s321 + $0x6c] sm:$0xf] %v907
      %909 = vst.msk [vmem:[%s321 + $0x70] sm:$0xf] %vm312, %v689
      %v910 = vld [vmem:[%s321 + $0x74] sm:$0x1]
      %v911 = vsel %vm324, %v690, %v910
      %912 = vst [vmem:[%s321 + $0x74] sm:$0x1] %v911
      %v913 = vld [vmem:[%s321 + $0x78] sm:$0xf]
      %v914 = vsel %vm842, %v697, %v913
      %915 = vst [vmem:[%s321 + $0x78] sm:$0xf] %v914
      %916 = vst.msk [vmem:[%s321 + $0x7c] sm:$0xf] %vm312, %v706
      %v917 = vld [vmem:[%s321 + $0x80] sm:$0x1]
      %v918 = vsel %vm324, %v707, %v917
      %919 = vst [vmem:[%s321 + $0x80] sm:$0x1] %v918
      %v920 = vld [vmem:[%s321 + $0x84] sm:$0xf]
      %v921 = vsel %vm842, %v714, %v920
      %922 = vst [vmem:[%s321 + $0x84] sm:$0xf] %v921
      %923 = vst.msk [vmem:[%s321 + $0x88] sm:$0xf] %vm312, %v723
      %v924 = vld [vmem:[%s321 + $0x8c] sm:$0x1]
      %v925 = vsel %vm324, %v724, %v924
      %926 = vst [vmem:[%s321 + $0x8c] sm:$0x1] %v925
      %v927 = vld [vmem:[%s321 + $0x90] sm:$0xf]
      %v928 = vsel %vm842, %v731, %v927
      %929 = vst [vmem:[%s321 + $0x90] sm:$0xf] %v928
      %930 = vst.msk [vmem:[%s321 + $0x94] sm:$0xf] %vm312, %v740
      %v931 = vld [vmem:[%s321 + $0x98] sm:$0x1]
      %v932 = vsel %vm324, %v741, %v931
      %933 = vst [vmem:[%s321 + $0x98] sm:$0x1] %v932
      %v934 = vld [vmem:[%s321 + $0x9c] sm:$0xf]
      %v935 = vsel %vm842, %v748, %v934
      %936 = vst [vmem:[%s321 + $0x9c] sm:$0xf] %v935
      %937 = vst.msk [vmem:[%s321 + $0xa0] sm:$0xf] %vm312, %v757
      %v938 = vld [vmem:[%s321 + $0xa4] sm:$0x1]
      %v939 = vsel %vm324, %v758, %v938
      %940 = vst [vmem:[%s321 + $0xa4] sm:$0x1] %v939
      %v941 = vld [vmem:[%s321 + $0xa8] sm:$0xf]
      %v942 = vsel %vm842, %v765, %v941
      %943 = vst [vmem:[%s321 + $0xa8] sm:$0xf] %v942
      %944 = vst.msk [vmem:[%s321 + $0xac] sm:$0xf] %vm312, %v774
      %v945 = vld [vmem:[%s321 + $0xb0] sm:$0x1]
      %v946 = vsel %vm324, %v775, %v945
      %947 = vst [vmem:[%s321 + $0xb0] sm:$0x1] %v946
      %v948 = vld [vmem:[%s321 + $0xb4] sm:$0xf]
      %v949 = vsel %vm842, %v782, %v948
      %950 = vst [vmem:[%s321 + $0xb4] sm:$0xf] %v949
      %951 = vst.msk [vmem:[%s321 + $0xb8] sm:$0xf] %vm312, %v791
      %v952 = vld [vmem:[%s321 + $0xbc] sm:$0x1]
      %v953 = vsel %vm324, %v792, %v952
      %954 = vst [vmem:[%s321 + $0xbc] sm:$0x1] %v953
      %v955 = vld [vmem:[#allocation2] sm:$0xf]
      %v956 = vld [vmem:[#allocation2 + $0x4] sm:$0xf]
      %v957 = vld [vmem:[#allocation2 + $0xc] sm:$0xf]
      %v958 = vld [vmem:[#allocation2 + $0x10] sm:$0xf]
      %v959 = vld [vmem:[#allocation2 + $0x18] sm:$0xf]
      %v960 = vld [vmem:[#allocation2 + $0x1c] sm:$0xf]
      %v961 = vld [vmem:[#allocation2 + $0x24] sm:$0xf]
      %v962 = vld [vmem:[#allocation2 + $0x28] sm:$0xf]
      %v963 = vld [vmem:[#allocation2 + $0x30] sm:$0xf]
      %v964 = vld [vmem:[#allocation2 + $0x34] sm:$0xf]
      %v965 = vld [vmem:[#allocation2 + $0x3c] sm:$0xf]
      %v966 = vld [vmem:[#allocation2 + $0x40] sm:$0xf]
      %v967 = vld [vmem:[#allocation2 + $0x48] sm:$0xf]
      %v968 = vld [vmem:[#allocation2 + $0x4c] sm:$0xf]
      %v969 = vld [vmem:[#allocation2 + $0x54] sm:$0xf]
      %v970 = vld [vmem:[#allocation2 + $0x58] sm:$0xf]
      %v971 = vld [vmem:[#allocation2 + $0x60] sm:$0xf]
      %v972 = vld [vmem:[#allocation2 + $0x64] sm:$0xf]
      %v973 = vld [vmem:[#allocation2 + $0x6c] sm:$0xf]
      %v974 = vld [vmem:[#allocation2 + $0x70] sm:$0xf]
      %v975 = vld [vmem:[#allocation2 + $0x78] sm:$0xf]
      %v976 = vld [vmem:[#allocation2 + $0x7c] sm:$0xf]
      %v977 = vld [vmem:[#allocation2 + $0x84] sm:$0xf]
      %v978 = vld [vmem:[#allocation2 + $0x88] sm:$0xf]
      %v979 = vld [vmem:[#allocation2 + $0x90] sm:$0xf]
      %v980 = vld [vmem:[#allocation2 + $0x94] sm:$0xf]
      %v981 = vld [vmem:[#allocation2 + $0x9c] sm:$0xf]
      %v982 = vld [vmem:[#allocation2 + $0xa0] sm:$0xf]
      %v983 = vld [vmem:[#allocation2 + $0xa8] sm:$0xf]
      %v984 = vld [vmem:[#allocation2 + $0xac] sm:$0xf]
      %v985 = vld [vmem:[#allocation2 + $0xb4] sm:$0xf]
      %v986 = vld [vmem:[#allocation2 + $0xb8] sm:$0xf]
      %v987 = vld [vmem:[#allocation2 + $0xc0] sm:$0xf]
      %v988 = vld [vmem:[#allocation2 + $0xc4] sm:$0xf]
      %v989 = vld [vmem:[#allocation2 + $0xcc] sm:$0xf]
      %v990 = vld [vmem:[#allocation2 + $0xd0] sm:$0xf]
      %v991 = vld [vmem:[#allocation2 + $0x8] sm:$0x1]
      %v992 = vld [vmem:[#allocation2 + $0x14] sm:$0x1]
      %v993 = vld [vmem:[#allocation2 + $0x20] sm:$0x1]
      %v994 = vld [vmem:[#allocation2 + $0x2c] sm:$0x1]
      %v995 = vld [vmem:[#allocation2 + $0x38] sm:$0x1]
      %v996 = vld [vmem:[#allocation2 + $0x44] sm:$0x1]
      %v997 = vld [vmem:[#allocation2 + $0x50] sm:$0x1]
      %v998 = vld [vmem:[#allocation2 + $0x5c] sm:$0x1]
      %v999 = vld [vmem:[#allocation2 + $0x68] sm:$0x1]
      %v1000 = vld [vmem:[#allocation2 + $0x74] sm:$0x1]
      %v1001 = vld [vmem:[#allocation2 + $0x80] sm:$0x1]
      %v1002 = vld [vmem:[#allocation2 + $0x8c] sm:$0x1]
      %v1003 = vld [vmem:[#allocation2 + $0x98] sm:$0x1]
      %v1004 = vld [vmem:[#allocation2 + $0xa4] sm:$0x1]
      %v1005 = vld [vmem:[#allocation2 + $0xb0] sm:$0x1]
      %v1006 = vld [vmem:[#allocation2 + $0xbc] sm:$0x1]
      %v1007 = vld [vmem:[#allocation2 + $0xc8] sm:$0x1]
      %v1008 = vld [vmem:[#allocation2 + $0xd4] sm:$0x1]
      %v1009 = vld [vmem:[#allocation2] sm:$0xe]
      %v1010 = vld [vmem:[#allocation2 + $0xc] sm:$0xe]
      %v1011 = vld [vmem:[#allocation2 + $0x18] sm:$0xe]
      %v1012 = vld [vmem:[#allocation2 + $0x24] sm:$0xe]
      %v1013 = vld [vmem:[#allocation2 + $0x30] sm:$0xe]
      %v1014 = vld [vmem:[#allocation2 + $0x3c] sm:$0xe]
      %v1015 = vld [vmem:[#allocation2 + $0x48] sm:$0xe]
      %v1016 = vld [vmem:[#allocation2 + $0x54] sm:$0xe]
      %v1017 = vld [vmem:[#allocation2 + $0x60] sm:$0xe]
      %v1018 = vld [vmem:[#allocation2 + $0x6c] sm:$0xe]
      %v1019 = vld [vmem:[#allocation2 + $0x78] sm:$0xe]
      %v1020 = vld [vmem:[#allocation2 + $0x84] sm:$0xe]
      %v1021 = vld [vmem:[#allocation2 + $0x90] sm:$0xe]
      %v1022 = vld [vmem:[#allocation2 + $0x9c] sm:$0xe]
      %v1023 = vld [vmem:[#allocation2 + $0xa8] sm:$0xe]
      %v1024 = vld [vmem:[#allocation2 + $0xb4] sm:$0xe]
      %v1025 = vld [vmem:[#allocation2 + $0xc0] sm:$0xe]
      %v1026 = vld [vmem:[#allocation2 + $0xcc] sm:$0xe]
      %v1027 = vld [vmem:[%s1] sm:$0x3]
      %vm1028 = vsmask.f32 3328
      %vm1029 = vsmask.f32 7440
      %vm1030 = vmor %vm1028, %vm1029
      %v1032 = vshrl.u32 %v955, 16
      %v1034 = vrot.slane %v1032, 4
      %v1035 = vshll.u32 %v955, 16
      %v1037 = vrot.slane %v1035, 5
      %v1038 = vor.u32 %v1034, %v1037
      %v1039 = vrot.slane %v1038, 4
      %v1041 = vshll.u32 %v956, 16
      %v1043 = vrot.slane %v1041, 5
      %v1044 = vsel %vm1030, %v1039, %v1043
      %v1045 = vshrl.u32 %v956, 16
      %v1047 = vrot.slane %v1045, 4
      %v1048 = vor.u32 %v1047, %v1043
      %v1049 = vrot.slane %v1048, 4
      %v1051 = vshll.u32 %v991, 16
      %v1053 = vrot.slane %v1051, 5
      %v1054 = vsel %vm1030, %v1049, %v1053
      %v1056 = vshrl.u32 %v957, 16
      %v1058 = vrot.slane %v1056, 4
      %v1059 = vshll.u32 %v957, 16
      %v1061 = vrot.slane %v1059, 5
      %v1062 = vor.u32 %v1058, %v1061
      %v1063 = vrot.slane %v1062, 4
      %v1065 = vshll.u32 %v958, 16
      %v1067 = vrot.slane %v1065, 5
      %v1068 = vsel %vm1030, %v1063, %v1067
      %v1069 = vshrl.u32 %v958, 16
      %v1071 = vrot.slane %v1069, 4
      %v1072 = vor.u32 %v1071, %v1067
      %v1073 = vrot.slane %v1072, 4
      %v1075 = vshll.u32 %v992, 16
      %v1077 = vrot.slane %v1075, 5
      %v1078 = vsel %vm1030, %v1073, %v1077
      %v1080 = vshrl.u32 %v959, 16
      %v1082 = vrot.slane %v1080, 4
      %v1083 = vshll.u32 %v959, 16
      %v1085 = vrot.slane %v1083, 5
      %v1086 = vor.u32 %v1082, %v1085
      %v1087 = vrot.slane %v1086, 4
      %v1089 = vshll.u32 %v960, 16
      %v1091 = vrot.slane %v1089, 5
      %v1092 = vsel %vm1030, %v1087, %v1091
      %v1093 = vshrl.u32 %v960, 16
      %v1095 = vrot.slane %v1093, 4
      %v1096 = vor.u32 %v1095, %v1091
      %v1097 = vrot.slane %v1096, 4
      %v1099 = vshll.u32 %v993, 16
      %v1101 = vrot.slane %v1099, 5
      %v1102 = vsel %vm1030, %v1097, %v1101
      %v1104 = vshrl.u32 %v961, 16
      %v1106 = vrot.slane %v1104, 4
      %v1107 = vshll.u32 %v961, 16
      %v1109 = vrot.slane %v1107, 5
      %v1110 = vor.u32 %v1106, %v1109
      %v1111 = vrot.slane %v1110, 4
      %v1113 = vshll.u32 %v962, 16
      %v1115 = vrot.slane %v1113, 5
      %v1116 = vsel %vm1030, %v1111, %v1115
      %v1117 = vshrl.u32 %v962, 16
      %v1119 = vrot.slane %v1117, 4
      %v1120 = vor.u32 %v1119, %v1115
      %v1121 = vrot.slane %v1120, 4
      %v1123 = vshll.u32 %v994, 16
      %v1125 = vrot.slane %v1123, 5
      %v1126 = vsel %vm1030, %v1121, %v1125
      %v1128 = vshrl.u32 %v963, 16
      %v1130 = vrot.slane %v1128, 4
      %v1131 = vshll.u32 %v963, 16
      %v1133 = vrot.slane %v1131, 5
      %v1134 = vor.u32 %v1130, %v1133
      %v1135 = vrot.slane %v1134, 4
      %v1137 = vshll.u32 %v964, 16
      %v1139 = vrot.slane %v1137, 5
      %v1140 = vsel %vm1030, %v1135, %v1139
      %v1141 = vshrl.u32 %v964, 16
      %v1143 = vrot.slane %v1141, 4
      %v1144 = vor.u32 %v1143, %v1139
      %v1145 = vrot.slane %v1144, 4
      %v1147 = vshll.u32 %v995, 16
      %v1149 = vrot.slane %v1147, 5
      %v1150 = vsel %vm1030, %v1145, %v1149
      %v1152 = vshrl.u32 %v965, 16
      %v1154 = vrot.slane %v1152, 4
      %v1155 = vshll.u32 %v965, 16
      %v1157 = vrot.slane %v1155, 5
      %v1158 = vor.u32 %v1154, %v1157
      %v1159 = vrot.slane %v1158, 4
      %v1161 = vshll.u32 %v966, 16
      %v1163 = vrot.slane %v1161, 5
      %v1164 = vsel %vm1030, %v1159, %v1163
      %v1165 = vshrl.u32 %v966, 16
      %v1167 = vrot.slane %v1165, 4
      %v1168 = vor.u32 %v1167, %v1163
      %v1169 = vrot.slane %v1168, 4
      %v1171 = vshll.u32 %v996, 16
      %v1173 = vrot.slane %v1171, 5
      %v1174 = vsel %vm1030, %v1169, %v1173
      %v1176 = vshrl.u32 %v967, 16
      %v1178 = vrot.slane %v1176, 4
      %v1179 = vshll.u32 %v967, 16
      %v1181 = vrot.slane %v1179, 5
      %v1182 = vor.u32 %v1178, %v1181
      %v1183 = vrot.slane %v1182, 4
      %v1185 = vshll.u32 %v968, 16
      %v1187 = vrot.slane %v1185, 5
      %v1188 = vsel %vm1030, %v1183, %v1187
      %v1189 = vshrl.u32 %v968, 16
      %v1191 = vrot.slane %v1189, 4
      %v1192 = vor.u32 %v1191, %v1187
      %v1193 = vrot.slane %v1192, 4
      %v1195 = vshll.u32 %v997, 16
      %v1197 = vrot.slane %v1195, 5
      %v1198 = vsel %vm1030, %v1193, %v1197
      %v1200 = vshrl.u32 %v969, 16
      %v1202 = vrot.slane %v1200, 4
      %v1203 = vshll.u32 %v969, 16
      %v1205 = vrot.slane %v1203, 5
      %v1206 = vor.u32 %v1202, %v1205
      %v1207 = vrot.slane %v1206, 4
      %v1209 = vshll.u32 %v970, 16
      %v1211 = vrot.slane %v1209, 5
      %v1212 = vsel %vm1030, %v1207, %v1211
      %v1213 = vshrl.u32 %v970, 16
      %v1215 = vrot.slane %v1213, 4
      %v1216 = vor.u32 %v1215, %v1211
      %v1217 = vrot.slane %v1216, 4
      %v1219 = vshll.u32 %v998, 16
      %v1221 = vrot.slane %v1219, 5
      %v1222 = vsel %vm1030, %v1217, %v1221
      %v1224 = vshrl.u32 %v971, 16
      %v1226 = vrot.slane %v1224, 4
      %v1227 = vshll.u32 %v971, 16
      %v1229 = vrot.slane %v1227, 5
      %v1230 = vor.u32 %v1226, %v1229
      %v1231 = vrot.slane %v1230, 4
      %v1233 = vshll.u32 %v972, 16
      %v1235 = vrot.slane %v1233, 5
      %v1236 = vsel %vm1030, %v1231, %v1235
      %v1237 = vshrl.u32 %v972, 16
      %v1239 = vrot.slane %v1237, 4
      %v1240 = vor.u32 %v1239, %v1235
      %v1241 = vrot.slane %v1240, 4
      %v1243 = vshll.u32 %v999, 16
      %v1245 = vrot.slane %v1243, 5
      %v1246 = vsel %vm1030, %v1241, %v1245
      %v1248 = vshrl.u32 %v973, 16
      %v1250 = vrot.slane %v1248, 4
      %v1251 = vshll.u32 %v973, 16
      %v1253 = vrot.slane %v1251, 5
      %v1254 = vor.u32 %v1250, %v1253
      %v1255 = vrot.slane %v1254, 4
      %v1257 = vshll.u32 %v974, 16
      %v1259 = vrot.slane %v1257, 5
      %v1260 = vsel %vm1030, %v1255, %v1259
      %v1261 = vshrl.u32 %v974, 16
      %v1263 = vrot.slane %v1261, 4
      %v1264 = vor.u32 %v1263, %v1259
      %v1265 = vrot.slane %v1264, 4
      %v1267 = vshll.u32 %v1000, 16
      %v1269 = vrot.slane %v1267, 5
      %v1270 = vsel %vm1030, %v1265, %v1269
      %v1272 = vshrl.u32 %v975, 16
      %v1274 = vrot.slane %v1272, 4
      %v1275 = vshll.u32 %v975, 16
      %v1277 = vrot.slane %v1275, 5
      %v1278 = vor.u32 %v1274, %v1277
      %v1279 = vrot.slane %v1278, 4
      %v1281 = vshll.u32 %v976, 16
      %v1283 = vrot.slane %v1281, 5
      %v1284 = vsel %vm1030, %v1279, %v1283
      %v1285 = vshrl.u32 %v976, 16
      %v1287 = vrot.slane %v1285, 4
      %v1288 = vor.u32 %v1287, %v1283
      %v1289 = vrot.slane %v1288, 4
      %v1291 = vshll.u32 %v1001, 16
      %v1293 = vrot.slane %v1291, 5
      %v1294 = vsel %vm1030, %v1289, %v1293
      %v1296 = vshrl.u32 %v977, 16
      %v1298 = vrot.slane %v1296, 4
      %v1299 = vshll.u32 %v977, 16
      %v1301 = vrot.slane %v1299, 5
      %v1302 = vor.u32 %v1298, %v1301
      %v1303 = vrot.slane %v1302, 4
      %v1305 = vshll.u32 %v978, 16
      %v1307 = vrot.slane %v1305, 5
      %v1308 = vsel %vm1030, %v1303, %v1307
      %v1309 = vshrl.u32 %v978, 16
      %v1311 = vrot.slane %v1309, 4
      %v1312 = vor.u32 %v1311, %v1307
      %v1313 = vrot.slane %v1312, 4
      %v1315 = vshll.u32 %v1002, 16
      %v1317 = vrot.slane %v1315, 5
      %v1318 = vsel %vm1030, %v1313, %v1317
      %v1320 = vshrl.u32 %v979, 16
      %v1322 = vrot.slane %v1320, 4
      %v1323 = vshll.u32 %v979, 16
      %v1325 = vrot.slane %v1323, 5
      %v1326 = vor.u32 %v1322, %v1325
      %v1327 = vrot.slane %v1326, 4
      %v1329 = vshll.u32 %v980, 16
      %v1331 = vrot.slane %v1329, 5
      %v1332 = vsel %vm1030, %v1327, %v1331
      %v1333 = vshrl.u32 %v980, 16
      %v1335 = vrot.slane %v1333, 4
      %v1336 = vor.u32 %v1335, %v1331
      %v1337 = vrot.slane %v1336, 4
      %v1339 = vshll.u32 %v1003, 16
      %v1341 = vrot.slane %v1339, 5
      %v1342 = vsel %vm1030, %v1337, %v1341
      %v1344 = vshrl.u32 %v981, 16
      %v1346 = vrot.slane %v1344, 4
      %v1347 = vshll.u32 %v981, 16
      %v1349 = vrot.slane %v1347, 5
      %v1350 = vor.u32 %v1346, %v1349
      %v1351 = vrot.slane %v1350, 4
      %v1353 = vshll.u32 %v982, 16
      %v1355 = vrot.slane %v1353, 5
      %v1356 = vsel %vm1030, %v1351, %v1355
      %v1357 = vshrl.u32 %v982, 16
      %v1359 = vrot.slane %v1357, 4
      %v1360 = vor.u32 %v1359, %v1355
      %v1361 = vrot.slane %v1360, 4
      %v1363 = vshll.u32 %v1004, 16
      %v1365 = vrot.slane %v1363, 5
      %v1366 = vsel %vm1030, %v1361, %v1365
      %v1368 = vshrl.u32 %v983, 16
      %v1370 = vrot.slane %v1368, 4
      %v1371 = vshll.u32 %v983, 16
      %v1373 = vrot.slane %v1371, 5
      %v1374 = vor.u32 %v1370, %v1373
      %v1375 = vrot.slane %v1374, 4
      %v1377 = vshll.u32 %v984, 16
      %v1379 = vrot.slane %v1377, 5
      %v1380 = vsel %vm1030, %v1375, %v1379
      %v1381 = vshrl.u32 %v984, 16
      %v1383 = vrot.slane %v1381, 4
      %v1384 = vor.u32 %v1383, %v1379
      %v1385 = vrot.slane %v1384, 4
      %v1387 = vshll.u32 %v1005, 16
      %v1389 = vrot.slane %v1387, 5
      %v1390 = vsel %vm1030, %v1385, %v1389
      %v1392 = vshrl.u32 %v985, 16
      %v1394 = vrot.slane %v1392, 4
      %v1395 = vshll.u32 %v985, 16
      %v1397 = vrot.slane %v1395, 5
      %v1398 = vor.u32 %v1394, %v1397
      %v1399 = vrot.slane %v1398, 4
      %v1401 = vshll.u32 %v986, 16
      %v1403 = vrot.slane %v1401, 5
      %v1404 = vsel %vm1030, %v1399, %v1403
      %v1405 = vshrl.u32 %v986, 16
      %v1407 = vrot.slane %v1405, 4
      %v1408 = vor.u32 %v1407, %v1403
      %v1409 = vrot.slane %v1408, 4
      %v1411 = vshll.u32 %v1006, 16
      %v1413 = vrot.slane %v1411, 5
      %v1414 = vsel %vm1030, %v1409, %v1413
      %s1415 = scalar_lea.vmem %s1, 2
      %v1416 = vld [vmem:[%s1415] sm:$0x3]
      %v1417 = vunpack.c.l.b16 %v1044
      %v1418 = vunpack.c.l.b16 %v1054
      %v1419 = vunpack.c.l.b16 %v1068
      %v1420 = vunpack.c.l.b16 %v1078
      %v1421 = vunpack.c.l.b16 %v1092
      %v1422 = vunpack.c.l.b16 %v1102
      %v1423 = vunpack.c.l.b16 %v1116
      %v1424 = vunpack.c.l.b16 %v1126
      %v1425 = vunpack.c.l.b16 %v1140
      %v1426 = vunpack.c.l.b16 %v1150
      %v1427 = vunpack.c.l.b16 %v1164
      %v1428 = vunpack.c.l.b16 %v1174
      %v1429 = vunpack.c.l.b16 %v1188
      %v1430 = vunpack.c.l.b16 %v1198
      %v1431 = vunpack.c.l.b16 %v1212
      %v1432 = vunpack.c.l.b16 %v1222
      %v1433 = vunpack.c.l.b16 %v1236
      %v1434 = vunpack.c.l.b16 %v1246
      %v1435 = vunpack.c.l.b16 %v1260
      %v1436 = vunpack.c.l.b16 %v1270
      %v1437 = vunpack.c.l.b16 %v1284
      %v1438 = vunpack.c.l.b16 %v1294
      %v1439 = vunpack.c.l.b16 %v1308
      %v1440 = vunpack.c.l.b16 %v1318
      %v1441 = vunpack.c.l.b16 %v1332
      %v1442 = vunpack.c.l.b16 %v1342
      %v1443 = vunpack.c.l.b16 %v1356
      %v1444 = vunpack.c.l.b16 %v1366
      %v1445 = vunpack.c.l.b16 %v1380
      %v1446 = vunpack.c.l.b16 %v1390
      %v1447 = vunpack.c.l.b16 %v1404
      %v1448 = vunpack.c.l.b16 %v1414
      %v1449 = vpack.c.b16 %v1418, %v1417
      %v1450 = vpack.c.b16 %v1420, %v1419
      %v1451 = vpack.c.b16 %v1422, %v1421
      %v1452 = vpack.c.b16 %v1424, %v1423
      %v1453 = vpack.c.b16 %v1426, %v1425
      %v1454 = vpack.c.b16 %v1428, %v1427
      %v1455 = vpack.c.b16 %v1430, %v1429
      %v1456 = vpack.c.b16 %v1432, %v1431
      %v1457 = vpack.c.b16 %v1434, %v1433
      %v1458 = vpack.c.b16 %v1436, %v1435
      %v1459 = vpack.c.b16 %v1438, %v1437
      %v1460 = vpack.c.b16 %v1440, %v1439
      %v1461 = vpack.c.b16 %v1442, %v1441
      %v1462 = vpack.c.b16 %v1444, %v1443
      %v1463 = vpack.c.b16 %v1446, %v1445
      %v1464 = vpack.c.b16 %v1448, %v1447
      %vm1465 = vcmask 31744
      %v1467 = vsel %vm1465, %v1449, 0
      %v1470 = vsel %vm1465, %v1450, 0
      %v1473 = vsel %vm1465, %v1451, 0
      %v1476 = vsel %vm1465, %v1452, 0
      %v1479 = vsel %vm1465, %v1453, 0
      %v1482 = vsel %vm1465, %v1454, 0
      %v1485 = vsel %vm1465, %v1455, 0
      %v1488 = vsel %vm1465, %v1456, 0
      %v1491 = vsel %vm1465, %v1457, 0
      %v1494 = vsel %vm1465, %v1458, 0
      %v1497 = vsel %vm1465, %v1459, 0
      %v1500 = vsel %vm1465, %v1460, 0
      %v1503 = vsel %vm1465, %v1461, 0
      %v1506 = vsel %vm1465, %v1462, 0
      %v1509 = vsel %vm1465, %v1463, 0
      %v1512 = vsel %vm1465, %v1464, 0
      %vm1514 = vcmask 1041408
      %v1516 = vsel %vm1514, %v1416, 0
      %1518 = vmatprep.subr.bf16.mxu0 0
      %1519 = vmatpush1.bf16.msra.mxu0 %v1516
      %1520 = vmatprep.subr.bf16.mxu0 0
      %1521 = vmatpush1.bf16.msra.mxu0 0
      %1522 = vmatprep.subr.bf16.mxu0 0
      %1523 = vmatpush1.bf16.msra.mxu0 0
      %1524 = vmatprep.subr.bf16.mxu0 0
      %1525 = vmatpush1.bf16.msra.mxu0 0
      %1526 = vmatprep.subr.bf16.mxu0 0
      %1527 = vmatpush1.bf16.msra.mxu0 0
      %1528 = vmatprep.subr.bf16.mxu0 0
      %1529 = vmatpush1.bf16.msra.mxu0 0
      %1530 = vmatprep.subr.bf16.mxu0 0
      %1531 = vmatpush1.bf16.msra.mxu0 0
      %1532 = vmatprep.subr.bf16.mxu0 0
      %1533 = vmatpush1.bf16.msra.mxu0 0
      %1534 = vmatprep.subr.bf16.mxu0 0
      %1535 = vmatpush1.bf16.msra.mxu0 0
      %1536 = vmatprep.subr.bf16.mxu0 0
      %1537 = vmatpush1.bf16.msra.mxu0 0
      %1538 = vmatprep.subr.bf16.mxu0 0
      %1539 = vmatpush1.bf16.msra.mxu0 0
      %1540 = vmatprep.subr.bf16.mxu0 0
      %1541 = vmatpush1.bf16.msra.mxu0 0
      %1542 = vmatprep.subr.bf16.mxu0 0
      %1543 = vmatpush1.bf16.msra.mxu0 0
      %1544 = vmatprep.subr.bf16.mxu0 0
      %1545 = vmatpush1.bf16.msra.mxu0 0
      %1546 = vmatprep.subr.bf16.mxu0 0
      %1547 = vmatpush1.bf16.msra.mxu0 0
      %1548 = vmatprep.subr.bf16.mxu0 0
      %1549 = vmatpush1.bf16.msra.mxu0 0
      %1550 = vmatprep.mubr.bf16.mxu0 0
      %1551 = vmatmul.mubr.bf16.gmra.mrb[0].mxu0 %v1467
      %v1552 = vpop.f32.mrb[0].mxu0
      %v1553 = vadd.f32 0.0, %v1552
      %v1554 = vpop.f32.mrb[0].mxu0
      %v1555 = vpop.f32.mrb[0].mxu0
      %v1556 = vadd.f32 0.0, %v1555
      %v1557 = vpop.f32.mrb[0].mxu0
      %1558 = vmatprep.mubr.bf16.mxu0 0
      %1559 = vmatmul.mubr.bf16.gmra.mrb[0].mxu0 %v1470
      %v1560 = vpop.f32.mrb[0].mxu0
      %v1561 = vadd.f32 0.0, %v1560
      %v1562 = vpop.f32.mrb[0].mxu0
      %v1563 = vpop.f32.mrb[0].mxu0
      %v1564 = vadd.f32 0.0, %v1563
      %v1565 = vpop.f32.mrb[0].mxu0
      %1566 = vmatprep.mubr.bf16.mxu0 0
      %1567 = vmatmul.mubr.bf16.gmra.mrb[0].mxu0 %v1473
      %v1568 = vpop.f32.mrb[0].mxu0
      %v1569 = vadd.f32 0.0, %v1568
      %v1570 = vpop.f32.mrb[0].mxu0
      %v1571 = vpop.f32.mrb[0].mxu0
      %v1572 = vadd.f32 0.0, %v1571
      %v1573 = vpop.f32.mrb[0].mxu0
      %1574 = vmatprep.mubr.bf16.mxu0 0
      %1575 = vmatmul.mubr.bf16.gmra.mrb[0].mxu0 %v1476
      %v1576 = vpop.f32.mrb[0].mxu0
      %v1577 = vadd.f32 0.0, %v1576
      %v1578 = vpop.f32.mrb[0].mxu0
      %v1579 = vpop.f32.mrb[0].mxu0
      %v1580 = vadd.f32 0.0, %v1579
      %v1581 = vpop.f32.mrb[0].mxu0
      %1582 = vmatprep.mubr.bf16.mxu0 0
      %1583 = vmatmul.mubr.bf16.gmra.mrb[0].mxu0 %v1479
      %v1584 = vpop.f32.mrb[0].mxu0
      %v1585 = vadd.f32 0.0, %v1584
      %v1586 = vpop.f32.mrb[0].mxu0
      %v1587 = vpop.f32.mrb[0].mxu0
      %v1588 = vadd.f32 0.0, %v1587
      %v1589 = vpop.f32.mrb[0].mxu0
      %1590 = vmatprep.mubr.bf16.mxu0 0
      %1591 = vmatmul.mubr.bf16.gmra.mrb[0].mxu0 %v1482
      %v1592 = vpop.f32.mrb[0].mxu0
      %v1593 = vadd.f32 0.0, %v1592
      %v1594 = vpop.f32.mrb[0].mxu0
      %v1595 = vpop.f32.mrb[0].mxu0
      %v1596 = vadd.f32 0.0, %v1595
      %v1597 = vpop.f32.mrb[0].mxu0
      %1598 = vmatprep.mubr.bf16.mxu0 0
      %1599 = vmatmul.mubr.bf16.gmra.mrb[0].mxu0 %v1485
      %v1600 = vpop.f32.mrb[0].mxu0
      %v1601 = vadd.f32 0.0, %v1600
      %v1602 = vpop.f32.mrb[0].mxu0
      %v1603 = vpop.f32.mrb[0].mxu0
      %v1604 = vadd.f32 0.0, %v1603
      %v1605 = vpop.f32.mrb[0].mxu0
      %1606 = vmatprep.mubr.bf16.mxu0 0
      %1607 = vmatmul.mubr.bf16.gmra.mrb[0].mxu0 %v1488
      %v1608 = vpop.f32.mrb[0].mxu0
      %v1609 = vadd.f32 0.0, %v1608
      %v1610 = vpop.f32.mrb[0].mxu0
      %v1611 = vpop.f32.mrb[0].mxu0
      %v1612 = vadd.f32 0.0, %v1611
      %v1613 = vpop.f32.mrb[0].mxu0
      %1614 = vmatprep.mubr.bf16.mxu0 0
      %1615 = vmatmul.mubr.bf16.gmra.mrb[0].mxu0 %v1491
      %v1616 = vpop.f32.mrb[0].mxu0
      %v1617 = vadd.f32 0.0, %v1616
      %v1618 = vpop.f32.mrb[0].mxu0
      %v1619 = vpop.f32.mrb[0].mxu0
      %v1620 = vadd.f32 0.0, %v1619
      %v1621 = vpop.f32.mrb[0].mxu0
      %1622 = vmatprep.mubr.bf16.mxu0 0
      %1623 = vmatmul.mubr.bf16.gmra.mrb[0].mxu0 %v1494
      %v1624 = vpop.f32.mrb[0].mxu0
      %v1625 = vadd.f32 0.0, %v1624
      %v1626 = vpop.f32.mrb[0].mxu0
      %v1627 = vpop.f32.mrb[0].mxu0
      %v1628 = vadd.f32 0.0, %v1627
      %v1629 = vpop.f32.mrb[0].mxu0
      %1630 = vmatprep.mubr.bf16.mxu0 0
      %1631 = vmatmul.mubr.bf16.gmra.mrb[0].mxu0 %v1497
      %v1632 = vpop.f32.mrb[0].mxu0
      %v1633 = vadd.f32 0.0, %v1632
      %v1634 = vpop.f32.mrb[0].mxu0
      %v1635 = vpop.f32.mrb[0].mxu0
      %v1636 = vadd.f32 0.0, %v1635
      %v1637 = vpop.f32.mrb[0].mxu0
      %1638 = vmatprep.mubr.bf16.mxu0 0
      %1639 = vmatmul.mubr.bf16.gmra.mrb[0].mxu0 %v1500
      %v1640 = vpop.f32.mrb[0].mxu0
      %v1641 = vadd.f32 0.0, %v1640
      %v1642 = vpop.f32.mrb[0].mxu0
      %v1643 = vpop.f32.mrb[0].mxu0
      %v1644 = vadd.f32 0.0, %v1643
      %v1645 = vpop.f32.mrb[0].mxu0
      %1646 = vmatprep.mubr.bf16.mxu0 0
      %1647 = vmatmul.mubr.bf16.gmra.mrb[0].mxu0 %v1503
      %v1648 = vpop.f32.mrb[0].mxu0
      %v1649 = vadd.f32 0.0, %v1648
      %v1650 = vpop.f32.mrb[0].mxu0
      %v1651 = vpop.f32.mrb[0].mxu0
      %v1652 = vadd.f32 0.0, %v1651
      %v1653 = vpop.f32.mrb[0].mxu0
      %1654 = vmatprep.mubr.bf16.mxu0 0
      %1655 = vmatmul.mubr.bf16.gmra.mrb[0].mxu0 %v1506
      %v1656 = vpop.f32.mrb[0].mxu0
      %v1657 = vadd.f32 0.0, %v1656
      %v1658 = vpop.f32.mrb[0].mxu0
      %v1659 = vpop.f32.mrb[0].mxu0
      %v1660 = vadd.f32 0.0, %v1659
      %v1661 = vpop.f32.mrb[0].mxu0
      %1662 = vmatprep.mubr.bf16.mxu0 0
      %1663 = vmatmul.mubr.bf16.gmra.mrb[0].mxu0 %v1509
      %v1664 = vpop.f32.mrb[0].mxu0
      %v1665 = vadd.f32 0.0, %v1664
      %v1666 = vpop.f32.mrb[0].mxu0
      %v1667 = vpop.f32.mrb[0].mxu0
      %v1668 = vadd.f32 0.0, %v1667
      %v1669 = vpop.f32.mrb[0].mxu0
      %1670 = vmatprep.mubr.bf16.mxu0 0
      %1671 = vmatmul.mubr.bf16.gmra.mrb[0].mxu0 %v1512
      %v1672 = vpop.f32.mrb[0].mxu0
      %v1673 = vadd.f32 0.0, %v1672
      %v1674 = vpop.f32.mrb[0].mxu0
      %v1675 = vpop.f32.mrb[0].mxu0
      %v1676 = vadd.f32 0.0, %v1675
      %v1677 = vpop.f32.mrb[0].mxu0
      %1678 = vdwg.mxu0
      %v1711 = vunpack.c.l.b16 %v955
      %v1712 = vunpack.c.l.b16 %v956
      %v1713 = vunpack.c.l.b16 %v957
      %v1714 = vunpack.c.l.b16 %v958
      %v1715 = vunpack.c.l.b16 %v959
      %v1716 = vunpack.c.l.b16 %v960
      %v1717 = vunpack.c.l.b16 %v961
      %v1718 = vunpack.c.l.b16 %v962
      %v1719 = vunpack.c.l.b16 %v963
      %v1720 = vunpack.c.l.b16 %v964
      %v1721 = vunpack.c.l.b16 %v965
      %v1722 = vunpack.c.l.b16 %v966
      %v1723 = vunpack.c.l.b16 %v967
      %v1724 = vunpack.c.l.b16 %v968
      %v1725 = vunpack.c.l.b16 %v969
      %v1726 = vunpack.c.l.b16 %v970
      %v1727 = vunpack.c.l.b16 %v971
      %v1728 = vunpack.c.l.b16 %v972
      %v1729 = vunpack.c.l.b16 %v973
      %v1730 = vunpack.c.l.b16 %v974
      %v1731 = vunpack.c.l.b16 %v975
      %v1732 = vunpack.c.l.b16 %v976
      %v1733 = vunpack.c.l.b16 %v977
      %v1734 = vunpack.c.l.b16 %v978
      %v1735 = vunpack.c.l.b16 %v979
      %v1736 = vunpack.c.l.b16 %v980
      %v1737 = vunpack.c.l.b16 %v981
      %v1738 = vunpack.c.l.b16 %v982
      %v1739 = vunpack.c.l.b16 %v983
      %v1740 = vunpack.c.l.b16 %v984
      %v1741 = vunpack.c.l.b16 %v985
      %v1742 = vunpack.c.l.b16 %v986
      %v1743 = vpack.c.b16 %v1712, %v1711
      %v1744 = vpack.c.b16 %v1714, %v1713
      %v1745 = vpack.c.b16 %v1716, %v1715
      %v1746 = vpack.c.b16 %v1718, %v1717
      %v1747 = vpack.c.b16 %v1720, %v1719
      %v1748 = vpack.c.b16 %v1722, %v1721
      %v1749 = vpack.c.b16 %v1724, %v1723
      %v1750 = vpack.c.b16 %v1726, %v1725
      %v1751 = vpack.c.b16 %v1728, %v1727
      %v1752 = vpack.c.b16 %v1730, %v1729
      %v1753 = vpack.c.b16 %v1732, %v1731
      %v1754 = vpack.c.b16 %v1734, %v1733
      %v1755 = vpack.c.b16 %v1736, %v1735
      %v1756 = vpack.c.b16 %v1738, %v1737
      %v1757 = vpack.c.b16 %v1740, %v1739
      %v1758 = vpack.c.b16 %v1742, %v1741
      %v1760 = vsel %vm1465, %v1743, 0
      %v1763 = vsel %vm1465, %v1744, 0
      %v1766 = vsel %vm1465, %v1745, 0
      %v1769 = vsel %vm1465, %v1746, 0
      %v1772 = vsel %vm1465, %v1747, 0
      %v1775 = vsel %vm1465, %v1748, 0
      %v1778 = vsel %vm1465, %v1749, 0
      %v1781 = vsel %vm1465, %v1750, 0
      %v1784 = vsel %vm1465, %v1751, 0
      %v1787 = vsel %vm1465, %v1752, 0
      %v1790 = vsel %vm1465, %v1753, 0
      %v1793 = vsel %vm1465, %v1754, 0
      %v1796 = vsel %vm1465, %v1755, 0
      %v1799 = vsel %vm1465, %v1756, 0
      %v1802 = vsel %vm1465, %v1757, 0
      %v1805 = vsel %vm1465, %v1758, 0
      %v1808 = vsel %vm1514, %v1027, 0
      %1810 = vmatprep.subr.bf16.mxu0 0
      %1811 = vmatpush1.bf16.msra.mxu0 %v1808
      %1812 = vmatprep.subr.bf16.mxu0 0
      %1813 = vmatpush1.bf16.msra.mxu0 0
      %1814 = vmatprep.subr.bf16.mxu0 0
      %1815 = vmatpush1.bf16.msra.mxu0 0
      %1816 = vmatprep.subr.bf16.mxu0 0
      %1817 = vmatpush1.bf16.msra.mxu0 0
      %1818 = vmatprep.subr.bf16.mxu0 0
      %1819 = vmatpush1.bf16.msra.mxu0 0
      %1820 = vmatprep.subr.bf16.mxu0 0
      %1821 = vmatpush1.bf16.msra.mxu0 0
      %1822 = vmatprep.subr.bf16.mxu0 0
      %1823 = vmatpush1.bf16.msra.mxu0 0
      %1824 = vmatprep.subr.bf16.mxu0 0
      %1825 = vmatpush1.bf16.msra.mxu0 0
      %1826 = vmatprep.subr.bf16.mxu0 0
      %1827 = vmatpush1.bf16.msra.mxu0 0
      %1828 = vmatprep.subr.bf16.mxu0 0
      %1829 = vmatpush1.bf16.msra.mxu0 0
      %1830 = vmatprep.subr.bf16.mxu0 0
      %1831 = vmatpush1.bf16.msra.mxu0 0
      %1832 = vmatprep.subr.bf16.mxu0 0
      %1833 = vmatpush1.bf16.msra.mxu0 0
      %1834 = vmatprep.subr.bf16.mxu0 0
      %1835 = vmatpush1.bf16.msra.mxu0 0
      %1836 = vmatprep.subr.bf16.mxu0 0
      %1837 = vmatpush1.bf16.msra.mxu0 0
      %1838 = vmatprep.subr.bf16.mxu0 0
      %1839 = vmatpush1.bf16.msra.mxu0 0
      %1840 = vmatprep.subr.bf16.mxu0 0
      %1841 = vmatpush1.bf16.msra.mxu0 0
      %1842 = vmatprep.mubr.bf16.mxu0 0
      %1843 = vmatmul.mubr.bf16.gmra.mrb[0].mxu0 %v1760
      %v1844 = vpop.f32.mrb[0].mxu0
      %v1845 = vadd.f32 %v1553, %v1844
      %v1846 = vpop.f32.mrb[0].mxu0
      %v1847 = vpop.f32.mrb[0].mxu0
      %v1848 = vadd.f32 %v1556, %v1847
      %v1849 = vpop.f32.mrb[0].mxu0
      %1850 = vmatprep.mubr.bf16.mxu0 0
      %1851 = vmatmul.mubr.bf16.gmra.mrb[0].mxu0 %v1763
      %v1852 = vpop.f32.mrb[0].mxu0
      %v1853 = vadd.f32 %v1561, %v1852
      %v1854 = vpop.f32.mrb[0].mxu0
      %v1855 = vpop.f32.mrb[0].mxu0
      %v1856 = vadd.f32 %v1564, %v1855
      %v1857 = vpop.f32.mrb[0].mxu0
      %1858 = vmatprep.mubr.bf16.mxu0 0
      %1859 = vmatmul.mubr.bf16.gmra.mrb[0].mxu0 %v1766
      %v1860 = vpop.f32.mrb[0].mxu0
      %v1861 = vadd.f32 %v1569, %v1860
      %v1862 = vpop.f32.mrb[0].mxu0
      %v1863 = vpop.f32.mrb[0].mxu0
      %v1864 = vadd.f32 %v1572, %v1863
      %v1865 = vpop.f32.mrb[0].mxu0
      %1866 = vmatprep.mubr.bf16.mxu0 0
      %1867 = vmatmul.mubr.bf16.gmra.mrb[0].mxu0 %v1769
      %v1868 = vpop.f32.mrb[0].mxu0
      %v1869 = vadd.f32 %v1577, %v1868
      %v1870 = vpop.f32.mrb[0].mxu0
      %v1871 = vpop.f32.mrb[0].mxu0
      %v1872 = vadd.f32 %v1580, %v1871
      %v1873 = vpop.f32.mrb[0].mxu0
      %1874 = vmatprep.mubr.bf16.mxu0 0
      %1875 = vmatmul.mubr.bf16.gmra.mrb[0].mxu0 %v1772
      %v1876 = vpop.f32.mrb[0].mxu0
      %v1877 = vadd.f32 %v1585, %v1876
      %v1878 = vpop.f32.mrb[0].mxu0
      %v1879 = vpop.f32.mrb[0].mxu0
      %v1880 = vadd.f32 %v1588, %v1879
      %v1881 = vpop.f32.mrb[0].mxu0
      %1882 = vmatprep.mubr.bf16.mxu0 0
      %1883 = vmatmul.mubr.bf16.gmra.mrb[0].mxu0 %v1775
      %v1884 = vpop.f32.mrb[0].mxu0
      %v1885 = vadd.f32 %v1593, %v1884
      %v1886 = vpop.f32.mrb[0].mxu0
      %v1887 = vpop.f32.mrb[0].mxu0
      %v1888 = vadd.f32 %v1596, %v1887
      %v1889 = vpop.f32.mrb[0].mxu0
      %1890 = vmatprep.mubr.bf16.mxu0 0
      %1891 = vmatmul.mubr.bf16.gmra.mrb[0].mxu0 %v1778
      %v1892 = vpop.f32.mrb[0].mxu0
      %v1893 = vadd.f32 %v1601, %v1892
      %v1894 = vpop.f32.mrb[0].mxu0
      %v1895 = vpop.f32.mrb[0].mxu0
      %v1896 = vadd.f32 %v1604, %v1895
      %v1897 = vpop.f32.mrb[0].mxu0
      %1898 = vmatprep.mubr.bf16.mxu0 0
      %1899 = vmatmul.mubr.bf16.gmra.mrb[0].mxu0 %v1781
      %v1900 = vpop.f32.mrb[0].mxu0
      %v1901 = vadd.f32 %v1609, %v1900
      %v1902 = vpop.f32.mrb[0].mxu0
      %v1903 = vpop.f32.mrb[0].mxu0
      %v1904 = vadd.f32 %v1612, %v1903
      %v1905 = vpop.f32.mrb[0].mxu0
      %1906 = vmatprep.mubr.bf16.mxu0 0
      %1907 = vmatmul.mubr.bf16.gmra.mrb[0].mxu0 %v1784
      %v1908 = vpop.f32.mrb[0].mxu0
      %v1909 = vadd.f32 %v1617, %v1908
      %v1910 = vpop.f32.mrb[0].mxu0
      %v1911 = vpop.f32.mrb[0].mxu0
      %v1912 = vadd.f32 %v1620, %v1911
      %v1913 = vpop.f32.mrb[0].mxu0
      %1914 = vmatprep.mubr.bf16.mxu0 0
      %1915 = vmatmul.mubr.bf16.gmra.mrb[0].mxu0 %v1787
      %v1916 = vpop.f32.mrb[0].mxu0
      %v1917 = vadd.f32 %v1625, %v1916
      %v1918 = vpop.f32.mrb[0].mxu0
      %v1919 = vpop.f32.mrb[0].mxu0
      %v1920 = vadd.f32 %v1628, %v1919
      %v1921 = vpop.f32.mrb[0].mxu0
      %1922 = vmatprep.mubr.bf16.mxu0 0
      %1923 = vmatmul.mubr.bf16.gmra.mrb[0].mxu0 %v1790
      %v1924 = vpop.f32.mrb[0].mxu0
      %v1925 = vadd.f32 %v1633, %v1924
      %v1926 = vpop.f32.mrb[0].mxu0
      %v1927 = vpop.f32.mrb[0].mxu0
      %v1928 = vadd.f32 %v1636, %v1927
      %v1929 = vpop.f32.mrb[0].mxu0
      %1930 = vmatprep.mubr.bf16.mxu0 0
      %1931 = vmatmul.mubr.bf16.gmra.mrb[0].mxu0 %v1793
      %v1932 = vpop.f32.mrb[0].mxu0
      %v1933 = vadd.f32 %v1641, %v1932
      %v1934 = vpop.f32.mrb[0].mxu0
      %v1935 = vpop.f32.mrb[0].mxu0
      %v1936 = vadd.f32 %v1644, %v1935
      %v1937 = vpop.f32.mrb[0].mxu0
      %1938 = vmatprep.mubr.bf16.mxu0 0
      %1939 = vmatmul.mubr.bf16.gmra.mrb[0].mxu0 %v1796
      %v1940 = vpop.f32.mrb[0].mxu0
      %v1941 = vadd.f32 %v1649, %v1940
      %v1942 = vpop.f32.mrb[0].mxu0
      %v1943 = vpop.f32.mrb[0].mxu0
      %v1944 = vadd.f32 %v1652, %v1943
      %v1945 = vpop.f32.mrb[0].mxu0
      %1946 = vmatprep.mubr.bf16.mxu0 0
      %1947 = vmatmul.mubr.bf16.gmra.mrb[0].mxu0 %v1799
      %v1948 = vpop.f32.mrb[0].mxu0
      %v1949 = vadd.f32 %v1657, %v1948
      %v1950 = vpop.f32.mrb[0].mxu0
      %v1951 = vpop.f32.mrb[0].mxu0
      %v1952 = vadd.f32 %v1660, %v1951
      %v1953 = vpop.f32.mrb[0].mxu0
      %1954 = vmatprep.mubr.bf16.mxu0 0
      %1955 = vmatmul.mubr.bf16.gmra.mrb[0].mxu0 %v1802
      %v1956 = vpop.f32.mrb[0].mxu0
      %v1957 = vadd.f32 %v1665, %v1956
      %v1958 = vpop.f32.mrb[0].mxu0
      %v1959 = vpop.f32.mrb[0].mxu0
      %v1960 = vadd.f32 %v1668, %v1959
      %v1961 = vpop.f32.mrb[0].mxu0
      %1962 = vmatprep.mubr.bf16.mxu0 0
      %1963 = vmatmul.mubr.bf16.gmra.mrb[0].mxu0 %v1805
      %v1964 = vpop.f32.mrb[0].mxu0
      %v1965 = vadd.f32 %v1673, %v1964
      %v1966 = vpop.f32.mrb[0].mxu0
      %v1967 = vpop.f32.mrb[0].mxu0
      %v1968 = vadd.f32 %v1676, %v1967
      %v1969 = vpop.f32.mrb[0].mxu0
      %1970 = vdwg.mxu0
      %vm2003 = vcmask 1042432
      %vm2004 = vcmask 1046532
      %vm2005 = vmor %vm2003, %vm2004
      %v2006 = vrot.slane %v1009, 5
      %v2007 = vrot.slane %v2006, 4
      %v2008 = vrot.slane %v956, 5
      %v2009 = vsel %vm2005, %v2007, %v2008
      %v2010 = vrot.slane %v2008, 4
      %v2011 = vrot.slane %v991, 5
      %v2012 = vsel %vm2005, %v2010, %v2011
      %v2013 = vrot.slane %v1010, 5
      %v2014 = vrot.slane %v2013, 4
      %v2015 = vrot.slane %v958, 5
      %v2016 = vsel %vm2005, %v2014, %v2015
      %v2017 = vrot.slane %v2015, 4
      %v2018 = vrot.slane %v992, 5
      %v2019 = vsel %vm2005, %v2017, %v2018
      %v2020 = vrot.slane %v1011, 5
      %v2021 = vrot.slane %v2020, 4
      %v2022 = vrot.slane %v960, 5
      %v2023 = vsel %vm2005, %v2021, %v2022
      %v2024 = vrot.slane %v2022, 4
      %v2025 = vrot.slane %v993, 5
      %v2026 = vsel %vm2005, %v2024, %v2025
      %v2027 = vrot.slane %v1012, 5
      %v2028 = vrot.slane %v2027, 4
      %v2029 = vrot.slane %v962, 5
      %v2030 = vsel %vm2005, %v2028, %v2029
      %v2031 = vrot.slane %v2029, 4
      %v2032 = vrot.slane %v994, 5
      %v2033 = vsel %vm2005, %v2031, %v2032
      %v2034 = vrot.slane %v1013, 5
      %v2035 = vrot.slane %v2034, 4
      %v2036 = vrot.slane %v964, 5
      %v2037 = vsel %vm2005, %v2035, %v2036
      %v2038 = vrot.slane %v2036, 4
      %v2039 = vrot.slane %v995, 5
      %v2040 = vsel %vm2005, %v2038, %v2039
      %v2041 = vrot.slane %v1014, 5
      %v2042 = vrot.slane %v2041, 4
      %v2043 = vrot.slane %v966, 5
      %v2044 = vsel %vm2005, %v2042, %v2043
      %v2045 = vrot.slane %v2043, 4
      %v2046 = vrot.slane %v996, 5
      %v2047 = vsel %vm2005, %v2045, %v2046
      %v2048 = vrot.slane %v1015, 5
      %v2049 = vrot.slane %v2048, 4
      %v2050 = vrot.slane %v968, 5
      %v2051 = vsel %vm2005, %v2049, %v2050
      %v2052 = vrot.slane %v2050, 4
      %v2053 = vrot.slane %v997, 5
      %v2054 = vsel %vm2005, %v2052, %v2053
      %v2055 = vrot.slane %v1016, 5
      %v2056 = vrot.slane %v2055, 4
      %v2057 = vrot.slane %v970, 5
      %v2058 = vsel %vm2005, %v2056, %v2057
      %v2059 = vrot.slane %v2057, 4
      %v2060 = vrot.slane %v998, 5
      %v2061 = vsel %vm2005, %v2059, %v2060
      %v2062 = vrot.slane %v1017, 5
      %v2063 = vrot.slane %v2062, 4
      %v2064 = vrot.slane %v972, 5
      %v2065 = vsel %vm2005, %v2063, %v2064
      %v2066 = vrot.slane %v2064, 4
      %v2067 = vrot.slane %v999, 5
      %v2068 = vsel %vm2005, %v2066, %v2067
      %v2069 = vrot.slane %v1018, 5
      %v2070 = vrot.slane %v2069, 4
      %v2071 = vrot.slane %v974, 5
      %v2072 = vsel %vm2005, %v2070, %v2071
      %v2073 = vrot.slane %v2071, 4
      %v2074 = vrot.slane %v1000, 5
      %v2075 = vsel %vm2005, %v2073, %v2074
      %v2076 = vrot.slane %v1019, 5
      %v2077 = vrot.slane %v2076, 4
      %v2078 = vrot.slane %v976, 5
      %v2079 = vsel %vm2005, %v2077, %v2078
      %v2080 = vrot.slane %v2078, 4
      %v2081 = vrot.slane %v1001, 5
      %v2082 = vsel %vm2005, %v2080, %v2081
      %v2083 = vrot.slane %v1020, 5
      %v2084 = vrot.slane %v2083, 4
      %v2085 = vrot.slane %v978, 5
      %v2086 = vsel %vm2005, %v2084, %v2085
      %v2087 = vrot.slane %v2085, 4
      %v2088 = vrot.slane %v1002, 5
      %v2089 = vsel %vm2005, %v2087, %v2088
      %v2090 = vrot.slane %v1021, 5
      %v2091 = vrot.slane %v2090, 4
      %v2092 = vrot.slane %v980, 5
      %v2093 = vsel %vm2005, %v2091, %v2092
      %v2094 = vrot.slane %v2092, 4
      %v2095 = vrot.slane %v1003, 5
      %v2096 = vsel %vm2005, %v2094, %v2095
      %v2097 = vrot.slane %v1022, 5
      %v2098 = vrot.slane %v2097, 4
      %v2099 = vrot.slane %v982, 5
      %v2100 = vsel %vm2005, %v2098, %v2099
      %v2101 = vrot.slane %v2099, 4
      %v2102 = vrot.slane %v1004, 5
      %v2103 = vsel %vm2005, %v2101, %v2102
      %v2104 = vrot.slane %v1023, 5
      %v2105 = vrot.slane %v2104, 4
      %v2106 = vrot.slane %v984, 5
      %v2107 = vsel %vm2005, %v2105, %v2106
      %v2108 = vrot.slane %v2106, 4
      %v2109 = vrot.slane %v1005, 5
      %v2110 = vsel %vm2005, %v2108, %v2109
      %v2111 = vrot.slane %v1024, 5
      %v2112 = vrot.slane %v2111, 4
      %v2113 = vrot.slane %v986, 5
      %v2114 = vsel %vm2005, %v2112, %v2113
      %v2115 = vrot.slane %v2113, 4
      %v2116 = vrot.slane %v1006, 5
      %v2117 = vsel %vm2005, %v2115, %v2116
      %s2118 = scalar_lea.vmem %s1, 4
      %v2119 = vld [vmem:[%s2118] sm:$0x3]
      %v2120 = vunpack.c.l.b16 %v2009
      %v2121 = vunpack.c.l.b16 %v2012
      %v2122 = vunpack.c.l.b16 %v2016
      %v2123 = vunpack.c.l.b16 %v2019
      %v2124 = vunpack.c.l.b16 %v2023
      %v2125 = vunpack.c.l.b16 %v2026
      %v2126 = vunpack.c.l.b16 %v2030
      %v2127 = vunpack.c.l.b16 %v2033
      %v2128 = vunpack.c.l.b16 %v2037
      %v2129 = vunpack.c.l.b16 %v2040
      %v2130 = vunpack.c.l.b16 %v2044
      %v2131 = vunpack.c.l.b16 %v2047
      %v2132 = vunpack.c.l.b16 %v2051
      %v2133 = vunpack.c.l.b16 %v2054
      %v2134 = vunpack.c.l.b16 %v2058
      %v2135 = vunpack.c.l.b16 %v2061
      %v2136 = vunpack.c.l.b16 %v2065
      %v2137 = vunpack.c.l.b16 %v2068
      %v2138 = vunpack.c.l.b16 %v2072
      %v2139 = vunpack.c.l.b16 %v2075
      %v2140 = vunpack.c.l.b16 %v2079
      %v2141 = vunpack.c.l.b16 %v2082
      %v2142 = vunpack.c.l.b16 %v2086
      %v2143 = vunpack.c.l.b16 %v2089
      %v2144 = vunpack.c.l.b16 %v2093
      %v2145 = vunpack.c.l.b16 %v2096
      %v2146 = vunpack.c.l.b16 %v2100
      %v2147 = vunpack.c.l.b16 %v2103
      %v2148 = vunpack.c.l.b16 %v2107
      %v2149 = vunpack.c.l.b16 %v2110
      %v2150 = vunpack.c.l.b16 %v2114
      %v2151 = vunpack.c.l.b16 %v2117
      %v2152 = vpack.c.b16 %v2121, %v2120
      %v2153 = vpack.c.b16 %v2123, %v2122
      %v2154 = vpack.c.b16 %v2125, %v2124
      %v2155 = vpack.c.b16 %v2127, %v2126
      %v2156 = vpack.c.b16 %v2129, %v2128
      %v2157 = vpack.c.b16 %v2131, %v2130
      %v2158 = vpack.c.b16 %v2133, %v2132
      %v2159 = vpack.c.b16 %v2135, %v2134
      %v2160 = vpack.c.b16 %v2137, %v2136
      %v2161 = vpack.c.b16 %v2139, %v2138
      %v2162 = vpack.c.b16 %v2141, %v2140
      %v2163 = vpack.c.b16 %v2143, %v2142
      %v2164 = vpack.c.b16 %v2145, %v2144
      %v2165 = vpack.c.b16 %v2147, %v2146
      %v2166 = vpack.c.b16 %v2149, %v2148
      %v2167 = vpack.c.b16 %v2151, %v2150
      %v2169 = vsel %vm1465, %v2152, 0
      %v2172 = vsel %vm1465, %v2153, 0
      %v2175 = vsel %vm1465, %v2154, 0
      %v2178 = vsel %vm1465, %v2155, 0
      %v2181 = vsel %vm1465, %v2156, 0
      %v2184 = vsel %vm1465, %v2157, 0
      %v2187 = vsel %vm1465, %v2158, 0
      %v2190 = vsel %vm1465, %v2159, 0
      %v2193 = vsel %vm1465, %v2160, 0
      %v2196 = vsel %vm1465, %v2161, 0
      %v2199 = vsel %vm1465, %v2162, 0
      %v2202 = vsel %vm1465, %v2163, 0
      %v2205 = vsel %vm1465, %v2164, 0
      %v2208 = vsel %vm1465, %v2165, 0
      %v2211 = vsel %vm1465, %v2166, 0
      %v2214 = vsel %vm1465, %v2167, 0
      %v2217 = vsel %vm1514, %v2119, 0
      %2219 = vmatprep.subr.bf16.mxu0 0
      %2220 = vmatpush1.bf16.msra.mxu0 %v2217
      %2221 = vmatprep.subr.bf16.mxu0 0
      %2222 = vmatpush1.bf16.msra.mxu0 0
      %2223 = vmatprep.subr.bf16.mxu0 0
      %2224 = vmatpush1.bf16.msra.mxu0 0
      %2225 = vmatprep.subr.bf16.mxu0 0
      %2226 = vmatpush1.bf16.msra.mxu0 0
      %2227 = vmatprep.subr.bf16.mxu0 0
      %2228 = vmatpush1.bf16.msra.mxu0 0
      %2229 = vmatprep.subr.bf16.mxu0 0
      %2230 = vmatpush1.bf16.msra.mxu0 0
      %2231 = vmatprep.subr.bf16.mxu0 0
      %2232 = vmatpush1.bf16.msra.mxu0 0
      %2233 = vmatprep.subr.bf16.mxu0 0
      %2234 = vmatpush1.bf16.msra.mxu0 0
      %2235 = vmatprep.subr.bf16.mxu0 0
      %2236 = vmatpush1.bf16.msra.mxu0 0
      %2237 = vmatprep.subr.bf16.mxu0 0
      %2238 = vmatpush1.bf16.msra.mxu0 0
      %2239 = vmatprep.subr.bf16.mxu0 0
      %2240 = vmatpush1.bf16.msra.mxu0 0
      %2241 = vmatprep.subr.bf16.mxu0 0
      %2242 = vmatpush1.bf16.msra.mxu0 0
      %2243 = vmatprep.subr.bf16.mxu0 0
      %2244 = vmatpush1.bf16.msra.mxu0 0
      %2245 = vmatprep.subr.bf16.mxu0 0
      %2246 = vmatpush1.bf16.msra.mxu0 0
      %2247 = vmatprep.subr.bf16.mxu0 0
      %2248 = vmatpush1.bf16.msra.mxu0 0
      %2249 = vmatprep.subr.bf16.mxu0 0
      %2250 = vmatpush1.bf16.msra.mxu0 0
      %2251 = vmatprep.mubr.bf16.mxu0 0
      %2252 = vmatmul.mubr.bf16.gmra.mrb[0].mxu0 %v2169
      %v2253 = vpop.f32.mrb[0].mxu0
      %v2254 = vadd.f32 0.0, %v2253
      %v2255 = vpop.f32.mrb[0].mxu0
      %v2256 = vpop.f32.mrb[0].mxu0
      %v2257 = vadd.f32 0.0, %v2256
      %v2258 = vpop.f32.mrb[0].mxu0
      %2259 = vmatprep.mubr.bf16.mxu0 0
      %2260 = vmatmul.mubr.bf16.gmra.mrb[0].mxu0 %v2172
      %v2261 = vpop.f32.mrb[0].mxu0
      %v2262 = vadd.f32 0.0, %v2261
      %v2263 = vpop.f32.mrb[0].mxu0
      %v2264 = vpop.f32.mrb[0].mxu0
      %v2265 = vadd.f32 0.0, %v2264
      %v2266 = vpop.f32.mrb[0].mxu0
      %2267 = vmatprep.mubr.bf16.mxu0 0
      %2268 = vmatmul.mubr.bf16.gmra.mrb[0].mxu0 %v2175
      %v2269 = vpop.f32.mrb[0].mxu0
      %v2270 = vadd.f32 0.0, %v2269
      %v2271 = vpop.f32.mrb[0].mxu0
      %v2272 = vpop.f32.mrb[0].mxu0
      %v2273 = vadd.f32 0.0, %v2272
      %v2274 = vpop.f32.mrb[0].mxu0
      %2275 = vmatprep.mubr.bf16.mxu0 0
      %2276 = vmatmul.mubr.bf16.gmra.mrb[0].mxu0 %v2178
      %v2277 = vpop.f32.mrb[0].mxu0
      %v2278 = vadd.f32 0.0, %v2277
      %v2279 = vpop.f32.mrb[0].mxu0
      %v2280 = vpop.f32.mrb[0].mxu0
      %v2281 = vadd.f32 0.0, %v2280
      %v2282 = vpop.f32.mrb[0].mxu0
      %2283 = vmatprep.mubr.bf16.mxu0 0
      %2284 = vmatmul.mubr.bf16.gmra.mrb[0].mxu0 %v2181
      %v2285 = vpop.f32.mrb[0].mxu0
      %v2286 = vadd.f32 0.0, %v2285
      %v2287 = vpop.f32.mrb[0].mxu0
      %v2288 = vpop.f32.mrb[0].mxu0
      %v2289 = vadd.f32 0.0, %v2288
      %v2290 = vpop.f32.mrb[0].mxu0
      %2291 = vmatprep.mubr.bf16.mxu0 0
      %2292 = vmatmul.mubr.bf16.gmra.mrb[0].mxu0 %v2184
      %v2293 = vpop.f32.mrb[0].mxu0
      %v2294 = vadd.f32 0.0, %v2293
      %v2295 = vpop.f32.mrb[0].mxu0
      %v2296 = vpop.f32.mrb[0].mxu0
      %v2297 = vadd.f32 0.0, %v2296
      %v2298 = vpop.f32.mrb[0].mxu0
      %2299 = vmatprep.mubr.bf16.mxu0 0
      %2300 = vmatmul.mubr.bf16.gmra.mrb[0].mxu0 %v2187
      %v2301 = vpop.f32.mrb[0].mxu0
      %v2302 = vadd.f32 0.0, %v2301
      %v2303 = vpop.f32.mrb[0].mxu0
      %v2304 = vpop.f32.mrb[0].mxu0
      %v2305 = vadd.f32 0.0, %v2304
      %v2306 = vpop.f32.mrb[0].mxu0
      %2307 = vmatprep.mubr.bf16.mxu0 0
      %2308 = vmatmul.mubr.bf16.gmra.mrb[0].mxu0 %v2190
      %v2309 = vpop.f32.mrb[0].mxu0
      %v2310 = vadd.f32 0.0, %v2309
      %v2311 = vpop.f32.mrb[0].mxu0
      %v2312 = vpop.f32.mrb[0].mxu0
      %v2313 = vadd.f32 0.0, %v2312
      %v2314 = vpop.f32.mrb[0].mxu0
      %2315 = vmatprep.mubr.bf16.mxu0 0
      %2316 = vmatmul.mubr.bf16.gmra.mrb[0].mxu0 %v2193
      %v2317 = vpop.f32.mrb[0].mxu0
      %v2318 = vadd.f32 0.0, %v2317
      %v2319 = vpop.f32.mrb[0].mxu0
      %v2320 = vpop.f32.mrb[0].mxu0
      %v2321 = vadd.f32 0.0, %v2320
      %v2322 = vpop.f32.mrb[0].mxu0
      %2323 = vmatprep.mubr.bf16.mxu0 0
      %2324 = vmatmul.mubr.bf16.gmra.mrb[0].mxu0 %v2196
      %v2325 = vpop.f32.mrb[0].mxu0
      %v2326 = vadd.f32 0.0, %v2325
      %v2327 = vpop.f32.mrb[0].mxu0
      %v2328 = vpop.f32.mrb[0].mxu0
      %v2329 = vadd.f32 0.0, %v2328
      %v2330 = vpop.f32.mrb[0].mxu0
      %2331 = vmatprep.mubr.bf16.mxu0 0
      %2332 = vmatmul.mubr.bf16.gmra.mrb[0].mxu0 %v2199
      %v2333 = vpop.f32.mrb[0].mxu0
      %v2334 = vadd.f32 0.0, %v2333
      %v2335 = vpop.f32.mrb[0].mxu0
      %v2336 = vpop.f32.mrb[0].mxu0
      %v2337 = vadd.f32 0.0, %v2336
      %v2338 = vpop.f32.mrb[0].mxu0
      %2339 = vmatprep.mubr.bf16.mxu0 0
      %2340 = vmatmul.mubr.bf16.gmra.mrb[0].mxu0 %v2202
      %v2341 = vpop.f32.mrb[0].mxu0
      %v2342 = vadd.f32 0.0, %v2341
      %v2343 = vpop.f32.mrb[0].mxu0
      %v2344 = vpop.f32.mrb[0].mxu0
      %v2345 = vadd.f32 0.0, %v2344
      %v2346 = vpop.f32.mrb[0].mxu0
      %2347 = vmatprep.mubr.bf16.mxu0 0
      %2348 = vmatmul.mubr.bf16.gmra.mrb[0].mxu0 %v2205
      %v2349 = vpop.f32.mrb[0].mxu0
      %v2350 = vadd.f32 0.0, %v2349
      %v2351 = vpop.f32.mrb[0].mxu0
      %v2352 = vpop.f32.mrb[0].mxu0
      %v2353 = vadd.f32 0.0, %v2352
      %v2354 = vpop.f32.mrb[0].mxu0
      %2355 = vmatprep.mubr.bf16.mxu0 0
      %2356 = vmatmul.mubr.bf16.gmra.mrb[0].mxu0 %v2208
      %v2357 = vpop.f32.mrb[0].mxu0
      %v2358 = vadd.f32 0.0, %v2357
      %v2359 = vpop.f32.mrb[0].mxu0
      %v2360 = vpop.f32.mrb[0].mxu0
      %v2361 = vadd.f32 0.0, %v2360
      %v2362 = vpop.f32.mrb[0].mxu0
      %2363 = vmatprep.mubr.bf16.mxu0 0
      %2364 = vmatmul.mubr.bf16.gmra.mrb[0].mxu0 %v2211
      %v2365 = vpop.f32.mrb[0].mxu0
      %v2366 = vadd.f32 0.0, %v2365
      %v2367 = vpop.f32.mrb[0].mxu0
      %v2368 = vpop.f32.mrb[0].mxu0
      %v2369 = vadd.f32 0.0, %v2368
      %v2370 = vpop.f32.mrb[0].mxu0
      %2371 = vmatprep.mubr.bf16.mxu0 0
      %2372 = vmatmul.mubr.bf16.gmra.mrb[0].mxu0 %v2214
      %v2373 = vpop.f32.mrb[0].mxu0
      %v2374 = vadd.f32 0.0, %v2373
      %v2375 = vpop.f32.mrb[0].mxu0
      %v2376 = vpop.f32.mrb[0].mxu0
      %v2377 = vadd.f32 0.0, %v2376
      %v2378 = vpop.f32.mrb[0].mxu0
      %2379 = vdwg.mxu0
      %v2380 = vadd.f32 %v1845, %v2254
      %v2381 = vadd.f32 %v1848, %v2257
      %v2382 = vadd.f32 %v1853, %v2262
      %v2383 = vadd.f32 %v1856, %v2265
      %v2384 = vadd.f32 %v1861, %v2270
      %v2385 = vadd.f32 %v1864, %v2273
      %v2386 = vadd.f32 %v1869, %v2278
      %v2387 = vadd.f32 %v1872, %v2281
      %v2388 = vadd.f32 %v1877, %v2286
      %v2389 = vadd.f32 %v1880, %v2289
      %v2390 = vadd.f32 %v1885, %v2294
      %v2391 = vadd.f32 %v1888, %v2297
      %v2392 = vadd.f32 %v1893, %v2302
      %v2393 = vadd.f32 %v1896, %v2305
      %v2394 = vadd.f32 %v1901, %v2310
      %v2395 = vadd.f32 %v1904, %v2313
      %v2396 = vadd.f32 %v1909, %v2318
      %v2397 = vadd.f32 %v1912, %v2321
      %v2398 = vadd.f32 %v1917, %v2326
      %v2399 = vadd.f32 %v1920, %v2329
      %v2400 = vadd.f32 %v1925, %v2334
      %v2401 = vadd.f32 %v1928, %v2337
      %v2402 = vadd.f32 %v1933, %v2342
      %v2403 = vadd.f32 %v1936, %v2345
      %v2404 = vadd.f32 %v1941, %v2350
      %v2405 = vadd.f32 %v1944, %v2353
      %v2406 = vadd.f32 %v1949, %v2358
      %v2407 = vadd.f32 %v1952, %v2361
      %v2408 = vadd.f32 %v1957, %v2366
      %v2409 = vadd.f32 %v1960, %v2369
      %v2410 = vadd.f32 %v1965, %v2374
      %v2411 = vadd.f32 %v1968, %v2377
      %s2412 = scalar_lea.vmem %s1, 6
      %v2413 = vld [vmem:[%s2412] sm:$0x3]
      %v2416 = vunpack.c.l.b16 %v987
      %v2417 = vunpack.c.l.b16 %v988
      %v2418 = vpack.c.b16 %v2417, %v2416
      %v2420 = vsel %vm1465, %v2418, 0
      %v2423 = vsel %vm1514, %v2413, 0
      %2425 = vmatprep.subr.bf16.mxu0 0
      %2426 = vmatpush1.bf16.msra.mxu0 %v2423
      %2427 = vmatprep.subr.bf16.mxu0 0
      %2428 = vmatpush1.bf16.msra.mxu0 0
      %2429 = vmatprep.subr.bf16.mxu0 0
      %2430 = vmatpush1.bf16.msra.mxu0 0
      %2431 = vmatprep.subr.bf16.mxu0 0
      %2432 = vmatpush1.bf16.msra.mxu0 0
      %2433 = vmatprep.subr.bf16.mxu0 0
      %2434 = vmatpush1.bf16.msra.mxu0 0
      %2435 = vmatprep.subr.bf16.mxu0 0
      %2436 = vmatpush1.bf16.msra.mxu0 0
      %2437 = vmatprep.subr.bf16.mxu0 0
      %2438 = vmatpush1.bf16.msra.mxu0 0
      %2439 = vmatprep.subr.bf16.mxu0 0
      %2440 = vmatpush1.bf16.msra.mxu0 0
      %2441 = vmatprep.subr.bf16.mxu0 0
      %2442 = vmatpush1.bf16.msra.mxu0 0
      %2443 = vmatprep.subr.bf16.mxu0 0
      %2444 = vmatpush1.bf16.msra.mxu0 0
      %2445 = vmatprep.subr.bf16.mxu0 0
      %2446 = vmatpush1.bf16.msra.mxu0 0
      %2447 = vmatprep.subr.bf16.mxu0 0
      %2448 = vmatpush1.bf16.msra.mxu0 0
      %2449 = vmatprep.subr.bf16.mxu0 0
      %2450 = vmatpush1.bf16.msra.mxu0 0
      %2451 = vmatprep.subr.bf16.mxu0 0
      %2452 = vmatpush1.bf16.msra.mxu0 0
      %2453 = vmatprep.subr.bf16.mxu0 0
      %2454 = vmatpush1.bf16.msra.mxu0 0
      %2455 = vmatprep.subr.bf16.mxu0 0
      %2456 = vmatpush1.bf16.msra.mxu0 0
      %2457 = vmatprep.mubr.bf16.mxu0 0
      %2458 = vmatmul.mubr.bf16.gmra.mrb[0].mxu0 %v1763
      %v2459 = vpop.f32.mrb[0].mxu0
      %v2460 = vadd.f32 0.0, %v2459
      %v2461 = vpop.f32.mrb[0].mxu0
      %v2462 = vpop.f32.mrb[0].mxu0
      %v2463 = vadd.f32 0.0, %v2462
      %v2464 = vpop.f32.mrb[0].mxu0
      %2465 = vmatprep.mubr.bf16.mxu0 0
      %2466 = vmatmul.mubr.bf16.gmra.mrb[0].mxu0 %v1766
      %v2467 = vpop.f32.mrb[0].mxu0
      %v2468 = vadd.f32 0.0, %v2467
      %v2469 = vpop.f32.mrb[0].mxu0
      %v2470 = vpop.f32.mrb[0].mxu0
      %v2471 = vadd.f32 0.0, %v2470
      %v2472 = vpop.f32.mrb[0].mxu0
      %2473 = vmatprep.mubr.bf16.mxu0 0
      %2474 = vmatmul.mubr.bf16.gmra.mrb[0].mxu0 %v1769
      %v2475 = vpop.f32.mrb[0].mxu0
      %v2476 = vadd.f32 0.0, %v2475
      %v2477 = vpop.f32.mrb[0].mxu0
      %v2478 = vpop.f32.mrb[0].mxu0
      %v2479 = vadd.f32 0.0, %v2478
      %v2480 = vpop.f32.mrb[0].mxu0
      %2481 = vmatprep.mubr.bf16.mxu0 0
      %2482 = vmatmul.mubr.bf16.gmra.mrb[0].mxu0 %v1772
      %v2483 = vpop.f32.mrb[0].mxu0
      %v2484 = vadd.f32 0.0, %v2483
      %v2485 = vpop.f32.mrb[0].mxu0
      %v2486 = vpop.f32.mrb[0].mxu0
      %v2487 = vadd.f32 0.0, %v2486
      %v2488 = vpop.f32.mrb[0].mxu0
      %2489 = vmatprep.mubr.bf16.mxu0 0
      %2490 = vmatmul.mubr.bf16.gmra.mrb[0].mxu0 %v1775
      %v2491 = vpop.f32.mrb[0].mxu0
      %v2492 = vadd.f32 0.0, %v2491
      %v2493 = vpop.f32.mrb[0].mxu0
      %v2494 = vpop.f32.mrb[0].mxu0
      %v2495 = vadd.f32 0.0, %v2494
      %v2496 = vpop.f32.mrb[0].mxu0
      %2497 = vmatprep.mubr.bf16.mxu0 0
      %2498 = vmatmul.mubr.bf16.gmra.mrb[0].mxu0 %v1778
      %v2499 = vpop.f32.mrb[0].mxu0
      %v2500 = vadd.f32 0.0, %v2499
      %v2501 = vpop.f32.mrb[0].mxu0
      %v2502 = vpop.f32.mrb[0].mxu0
      %v2503 = vadd.f32 0.0, %v2502
      %v2504 = vpop.f32.mrb[0].mxu0
      %2505 = vmatprep.mubr.bf16.mxu0 0
      %2506 = vmatmul.mubr.bf16.gmra.mrb[0].mxu0 %v1781
      %v2507 = vpop.f32.mrb[0].mxu0
      %v2508 = vadd.f32 0.0, %v2507
      %v2509 = vpop.f32.mrb[0].mxu0
      %v2510 = vpop.f32.mrb[0].mxu0
      %v2511 = vadd.f32 0.0, %v2510
      %v2512 = vpop.f32.mrb[0].mxu0
      %2513 = vmatprep.mubr.bf16.mxu0 0
      %2514 = vmatmul.mubr.bf16.gmra.mrb[0].mxu0 %v1784
      %v2515 = vpop.f32.mrb[0].mxu0
      %v2516 = vadd.f32 0.0, %v2515
      %v2517 = vpop.f32.mrb[0].mxu0
      %v2518 = vpop.f32.mrb[0].mxu0
      %v2519 = vadd.f32 0.0, %v2518
      %v2520 = vpop.f32.mrb[0].mxu0
      %2521 = vmatprep.mubr.bf16.mxu0 0
      %2522 = vmatmul.mubr.bf16.gmra.mrb[0].mxu0 %v1787
      %v2523 = vpop.f32.mrb[0].mxu0
      %v2524 = vadd.f32 0.0, %v2523
      %v2525 = vpop.f32.mrb[0].mxu0
      %v2526 = vpop.f32.mrb[0].mxu0
      %v2527 = vadd.f32 0.0, %v2526
      %v2528 = vpop.f32.mrb[0].mxu0
      %2529 = vmatprep.mubr.bf16.mxu0 0
      %2530 = vmatmul.mubr.bf16.gmra.mrb[0].mxu0 %v1790
      %v2531 = vpop.f32.mrb[0].mxu0
      %v2532 = vadd.f32 0.0, %v2531
      %v2533 = vpop.f32.mrb[0].mxu0
      %v2534 = vpop.f32.mrb[0].mxu0
      %v2535 = vadd.f32 0.0, %v2534
      %v2536 = vpop.f32.mrb[0].mxu0
      %2537 = vmatprep.mubr.bf16.mxu0 0
      %2538 = vmatmul.mubr.bf16.gmra.mrb[0].mxu0 %v1793
      %v2539 = vpop.f32.mrb[0].mxu0
      %v2540 = vadd.f32 0.0, %v2539
      %v2541 = vpop.f32.mrb[0].mxu0
      %v2542 = vpop.f32.mrb[0].mxu0
      %v2543 = vadd.f32 0.0, %v2542
      %v2544 = vpop.f32.mrb[0].mxu0
      %2545 = vmatprep.mubr.bf16.mxu0 0
      %2546 = vmatmul.mubr.bf16.gmra.mrb[0].mxu0 %v1796
      %v2547 = vpop.f32.mrb[0].mxu0
      %v2548 = vadd.f32 0.0, %v2547
      %v2549 = vpop.f32.mrb[0].mxu0
      %v2550 = vpop.f32.mrb[0].mxu0
      %v2551 = vadd.f32 0.0, %v2550
      %v2552 = vpop.f32.mrb[0].mxu0
      %2553 = vmatprep.mubr.bf16.mxu0 0
      %2554 = vmatmul.mubr.bf16.gmra.mrb[0].mxu0 %v1799
      %v2555 = vpop.f32.mrb[0].mxu0
      %v2556 = vadd.f32 0.0, %v2555
      %v2557 = vpop.f32.mrb[0].mxu0
      %v2558 = vpop.f32.mrb[0].mxu0
      %v2559 = vadd.f32 0.0, %v2558
      %v2560 = vpop.f32.mrb[0].mxu0
      %2561 = vmatprep.mubr.bf16.mxu0 0
      %2562 = vmatmul.mubr.bf16.gmra.mrb[0].mxu0 %v1802
      %v2563 = vpop.f32.mrb[0].mxu0
      %v2564 = vadd.f32 0.0, %v2563
      %v2565 = vpop.f32.mrb[0].mxu0
      %v2566 = vpop.f32.mrb[0].mxu0
      %v2567 = vadd.f32 0.0, %v2566
      %v2568 = vpop.f32.mrb[0].mxu0
      %2569 = vmatprep.mubr.bf16.mxu0 0
      %2570 = vmatmul.mubr.bf16.gmra.mrb[0].mxu0 %v1805
      %v2571 = vpop.f32.mrb[0].mxu0
      %v2572 = vadd.f32 0.0, %v2571
      %v2573 = vpop.f32.mrb[0].mxu0
      %v2574 = vpop.f32.mrb[0].mxu0
      %v2575 = vadd.f32 0.0, %v2574
      %v2576 = vpop.f32.mrb[0].mxu0
      %2577 = vmatprep.mubr.bf16.mxu0 0
      %2578 = vmatmul.mubr.bf16.gmra.mrb[0].mxu0 %v2420
      %v2579 = vpop.f32.mrb[0].mxu0
      %v2580 = vadd.f32 0.0, %v2579
      %v2581 = vpop.f32.mrb[0].mxu0
      %v2582 = vpop.f32.mrb[0].mxu0
      %v2583 = vadd.f32 0.0, %v2582
      %v2584 = vpop.f32.mrb[0].mxu0
      %2585 = vdwg.mxu0
      %v2586 = vadd.f32 %v2380, %v2460
      %v2587 = vadd.f32 %v2381, %v2463
      %v2588 = vadd.f32 %v2382, %v2468
      %v2589 = vadd.f32 %v2383, %v2471
      %v2590 = vadd.f32 %v2384, %v2476
      %v2591 = vadd.f32 %v2385, %v2479
      %v2592 = vadd.f32 %v2386, %v2484
      %v2593 = vadd.f32 %v2387, %v2487
      %v2594 = vadd.f32 %v2388, %v2492
      %v2595 = vadd.f32 %v2389, %v2495
      %v2596 = vadd.f32 %v2390, %v2500
      %v2597 = vadd.f32 %v2391, %v2503
      %v2598 = vadd.f32 %v2392, %v2508
      %v2599 = vadd.f32 %v2393, %v2511
      %v2600 = vadd.f32 %v2394, %v2516
      %v2601 = vadd.f32 %v2395, %v2519
      %v2602 = vadd.f32 %v2396, %v2524
      %v2603 = vadd.f32 %v2397, %v2527
      %v2604 = vadd.f32 %v2398, %v2532
      %v2605 = vadd.f32 %v2399, %v2535
      %v2606 = vadd.f32 %v2400, %v2540
      %v2607 = vadd.f32 %v2401, %v2543
      %v2608 = vadd.f32 %v2402, %v2548
      %v2609 = vadd.f32 %v2403, %v2551
      %v2610 = vadd.f32 %v2404, %v2556
      %v2611 = vadd.f32 %v2405, %v2559
      %v2612 = vadd.f32 %v2406, %v2564
      %v2613 = vadd.f32 %v2407, %v2567
      %v2614 = vadd.f32 %v2408, %v2572
      %v2615 = vadd.f32 %v2409, %v2575
      %v2616 = vadd.f32 %v2410, %v2580
      %v2617 = vadd.f32 %v2411, %v2583
      %v2619 = vshrl.u32 %v987, 16
      %v2621 = vrot.slane %v2619, 4
      %v2622 = vshll.u32 %v987, 16
      %v2624 = vrot.slane %v2622, 5
      %v2625 = vor.u32 %v2621, %v2624
      %v2626 = vrot.slane %v2625, 4
      %v2628 = vshll.u32 %v988, 16
      %v2630 = vrot.slane %v2628, 5
      %v2631 = vsel %vm1030, %v2626, %v2630
      %v2632 = vshrl.u32 %v988, 16
      %v2634 = vrot.slane %v2632, 4
      %v2635 = vor.u32 %v2634, %v2630
      %v2636 = vrot.slane %v2635, 4
      %v2638 = vshll.u32 %v1007, 16
      %v2640 = vrot.slane %v2638, 5
      %v2641 = vsel %vm1030, %v2636, %v2640
      %s2642 = scalar_lea.vmem %s1, 8
      %v2643 = vld [vmem:[%s2642] sm:$0x3]
      %v2644 = vunpack.c.l.b16 %v2631
      %v2645 = vunpack.c.l.b16 %v2641
      %v2646 = vpack.c.b16 %v2645, %v2644
      %v2648 = vsel %vm1465, %v2646, 0
      %v2651 = vsel %vm1514, %v2643, 0
      %2653 = vmatprep.subr.bf16.mxu0 0
      %2654 = vmatpush1.bf16.msra.mxu0 %v2651
      %2655 = vmatprep.subr.bf16.mxu0 0
      %2656 = vmatpush1.bf16.msra.mxu0 0
      %2657 = vmatprep.subr.bf16.mxu0 0
      %2658 = vmatpush1.bf16.msra.mxu0 0
      %2659 = vmatprep.subr.bf16.mxu0 0
      %2660 = vmatpush1.bf16.msra.mxu0 0
      %2661 = vmatprep.subr.bf16.mxu0 0
      %2662 = vmatpush1.bf16.msra.mxu0 0
      %2663 = vmatprep.subr.bf16.mxu0 0
      %2664 = vmatpush1.bf16.msra.mxu0 0
      %2665 = vmatprep.subr.bf16.mxu0 0
      %2666 = vmatpush1.bf16.msra.mxu0 0
      %2667 = vmatprep.subr.bf16.mxu0 0
      %2668 = vmatpush1.bf16.msra.mxu0 0
      %2669 = vmatprep.subr.bf16.mxu0 0
      %2670 = vmatpush1.bf16.msra.mxu0 0
      %2671 = vmatprep.subr.bf16.mxu0 0
      %2672 = vmatpush1.bf16.msra.mxu0 0
      %2673 = vmatprep.subr.bf16.mxu0 0
      %2674 = vmatpush1.bf16.msra.mxu0 0
      %2675 = vmatprep.subr.bf16.mxu0 0
      %2676 = vmatpush1.bf16.msra.mxu0 0
      %2677 = vmatprep.subr.bf16.mxu0 0
      %2678 = vmatpush1.bf16.msra.mxu0 0
      %2679 = vmatprep.subr.bf16.mxu0 0
      %2680 = vmatpush1.bf16.msra.mxu0 0
      %2681 = vmatprep.subr.bf16.mxu0 0
      %2682 = vmatpush1.bf16.msra.mxu0 0
      %2683 = vmatprep.subr.bf16.mxu0 0
      %2684 = vmatpush1.bf16.msra.mxu0 0
      %2685 = vmatprep.mubr.bf16.mxu0 0
      %2686 = vmatmul.mubr.bf16.gmra.mrb[0].mxu0 %v1470
      %v2687 = vpop.f32.mrb[0].mxu0
      %v2688 = vadd.f32 0.0, %v2687
      %v2689 = vpop.f32.mrb[0].mxu0
      %v2690 = vpop.f32.mrb[0].mxu0
      %v2691 = vadd.f32 0.0, %v2690
      %v2692 = vpop.f32.mrb[0].mxu0
      %2693 = vmatprep.mubr.bf16.mxu0 0
      %2694 = vmatmul.mubr.bf16.gmra.mrb[0].mxu0 %v1473
      %v2695 = vpop.f32.mrb[0].mxu0
      %v2696 = vadd.f32 0.0, %v2695
      %v2697 = vpop.f32.mrb[0].mxu0
      %v2698 = vpop.f32.mrb[0].mxu0
      %v2699 = vadd.f32 0.0, %v2698
      %v2700 = vpop.f32.mrb[0].mxu0
      %2701 = vmatprep.mubr.bf16.mxu0 0
      %2702 = vmatmul.mubr.bf16.gmra.mrb[0].mxu0 %v1476
      %v2703 = vpop.f32.mrb[0].mxu0
      %v2704 = vadd.f32 0.0, %v2703
      %v2705 = vpop.f32.mrb[0].mxu0
      %v2706 = vpop.f32.mrb[0].mxu0
      %v2707 = vadd.f32 0.0, %v2706
      %v2708 = vpop.f32.mrb[0].mxu0
      %2709 = vmatprep.mubr.bf16.mxu0 0
      %2710 = vmatmul.mubr.bf16.gmra.mrb[0].mxu0 %v1479
      %v2711 = vpop.f32.mrb[0].mxu0
      %v2712 = vadd.f32 0.0, %v2711
      %v2713 = vpop.f32.mrb[0].mxu0
      %v2714 = vpop.f32.mrb[0].mxu0
      %v2715 = vadd.f32 0.0, %v2714
      %v2716 = vpop.f32.mrb[0].mxu0
      %2717 = vmatprep.mubr.bf16.mxu0 0
      %2718 = vmatmul.mubr.bf16.gmra.mrb[0].mxu0 %v1482
      %v2719 = vpop.f32.mrb[0].mxu0
      %v2720 = vadd.f32 0.0, %v2719
      %v2721 = vpop.f32.mrb[0].mxu0
      %v2722 = vpop.f32.mrb[0].mxu0
      %v2723 = vadd.f32 0.0, %v2722
      %v2724 = vpop.f32.mrb[0].mxu0
      %2725 = vmatprep.mubr.bf16.mxu0 0
      %2726 = vmatmul.mubr.bf16.gmra.mrb[0].mxu0 %v1485
      %v2727 = vpop.f32.mrb[0].mxu0
      %v2728 = vadd.f32 0.0, %v2727
      %v2729 = vpop.f32.mrb[0].mxu0
      %v2730 = vpop.f32.mrb[0].mxu0
      %v2731 = vadd.f32 0.0, %v2730
      %v2732 = vpop.f32.mrb[0].mxu0
      %2733 = vmatprep.mubr.bf16.mxu0 0
      %2734 = vmatmul.mubr.bf16.gmra.mrb[0].mxu0 %v1488
      %v2735 = vpop.f32.mrb[0].mxu0
      %v2736 = vadd.f32 0.0, %v2735
      %v2737 = vpop.f32.mrb[0].mxu0
      %v2738 = vpop.f32.mrb[0].mxu0
      %v2739 = vadd.f32 0.0, %v2738
      %v2740 = vpop.f32.mrb[0].mxu0
      %2741 = vmatprep.mubr.bf16.mxu0 0
      %2742 = vmatmul.mubr.bf16.gmra.mrb[0].mxu0 %v1491
      %v2743 = vpop.f32.mrb[0].mxu0
      %v2744 = vadd.f32 0.0, %v2743
      %v2745 = vpop.f32.mrb[0].mxu0
      %v2746 = vpop.f32.mrb[0].mxu0
      %v2747 = vadd.f32 0.0, %v2746
      %v2748 = vpop.f32.mrb[0].mxu0
      %2749 = vmatprep.mubr.bf16.mxu0 0
      %2750 = vmatmul.mubr.bf16.gmra.mrb[0].mxu0 %v1494
      %v2751 = vpop.f32.mrb[0].mxu0
      %v2752 = vadd.f32 0.0, %v2751
      %v2753 = vpop.f32.mrb[0].mxu0
      %v2754 = vpop.f32.mrb[0].mxu0
      %v2755 = vadd.f32 0.0, %v2754
      %v2756 = vpop.f32.mrb[0].mxu0
      %2757 = vmatprep.mubr.bf16.mxu0 0
      %2758 = vmatmul.mubr.bf16.gmra.mrb[0].mxu0 %v1497
      %v2759 = vpop.f32.mrb[0].mxu0
      %v2760 = vadd.f32 0.0, %v2759
      %v2761 = vpop.f32.mrb[0].mxu0
      %v2762 = vpop.f32.mrb[0].mxu0
      %v2763 = vadd.f32 0.0, %v2762
      %v2764 = vpop.f32.mrb[0].mxu0
      %2765 = vmatprep.mubr.bf16.mxu0 0
      %2766 = vmatmul.mubr.bf16.gmra.mrb[0].mxu0 %v1500
      %v2767 = vpop.f32.mrb[0].mxu0
      %v2768 = vadd.f32 0.0, %v2767
      %v2769 = vpop.f32.mrb[0].mxu0
      %v2770 = vpop.f32.mrb[0].mxu0
      %v2771 = vadd.f32 0.0, %v2770
      %v2772 = vpop.f32.mrb[0].mxu0
      %2773 = vmatprep.mubr.bf16.mxu0 0
      %2774 = vmatmul.mubr.bf16.gmra.mrb[0].mxu0 %v1503
      %v2775 = vpop.f32.mrb[0].mxu0
      %v2776 = vadd.f32 0.0, %v2775
      %v2777 = vpop.f32.mrb[0].mxu0
      %v2778 = vpop.f32.mrb[0].mxu0
      %v2779 = vadd.f32 0.0, %v2778
      %v2780 = vpop.f32.mrb[0].mxu0
      %2781 = vmatprep.mubr.bf16.mxu0 0
      %2782 = vmatmul.mubr.bf16.gmra.mrb[0].mxu0 %v1506
      %v2783 = vpop.f32.mrb[0].mxu0
      %v2784 = vadd.f32 0.0, %v2783
      %v2785 = vpop.f32.mrb[0].mxu0
      %v2786 = vpop.f32.mrb[0].mxu0
      %v2787 = vadd.f32 0.0, %v2786
      %v2788 = vpop.f32.mrb[0].mxu0
      %2789 = vmatprep.mubr.bf16.mxu0 0
      %2790 = vmatmul.mubr.bf16.gmra.mrb[0].mxu0 %v1509
      %v2791 = vpop.f32.mrb[0].mxu0
      %v2792 = vadd.f32 0.0, %v2791
      %v2793 = vpop.f32.mrb[0].mxu0
      %v2794 = vpop.f32.mrb[0].mxu0
      %v2795 = vadd.f32 0.0, %v2794
      %v2796 = vpop.f32.mrb[0].mxu0
      %2797 = vmatprep.mubr.bf16.mxu0 0
      %2798 = vmatmul.mubr.bf16.gmra.mrb[0].mxu0 %v1512
      %v2799 = vpop.f32.mrb[0].mxu0
      %v2800 = vadd.f32 0.0, %v2799
      %v2801 = vpop.f32.mrb[0].mxu0
      %v2802 = vpop.f32.mrb[0].mxu0
      %v2803 = vadd.f32 0.0, %v2802
      %v2804 = vpop.f32.mrb[0].mxu0
      %2805 = vmatprep.mubr.bf16.mxu0 0
      %2806 = vmatmul.mubr.bf16.gmra.mrb[0].mxu0 %v2648
      %v2807 = vpop.f32.mrb[0].mxu0
      %v2808 = vadd.f32 0.0, %v2807
      %v2809 = vpop.f32.mrb[0].mxu0
      %v2810 = vpop.f32.mrb[0].mxu0
      %v2811 = vadd.f32 0.0, %v2810
      %v2812 = vpop.f32.mrb[0].mxu0
      %2813 = vdwg.mxu0
      %v2814 = vadd.f32 %v2586, %v2688
      %v2815 = vadd.f32 %v2587, %v2691
      %v2816 = vadd.f32 %v2588, %v2696
      %v2817 = vadd.f32 %v2589, %v2699
      %v2818 = vadd.f32 %v2590, %v2704
      %v2819 = vadd.f32 %v2591, %v2707
      %v2820 = vadd.f32 %v2592, %v2712
      %v2821 = vadd.f32 %v2593, %v2715
      %v2822 = vadd.f32 %v2594, %v2720
      %v2823 = vadd.f32 %v2595, %v2723
      %v2824 = vadd.f32 %v2596, %v2728
      %v2825 = vadd.f32 %v2597, %v2731
      %v2826 = vadd.f32 %v2598, %v2736
      %v2827 = vadd.f32 %v2599, %v2739
      %v2828 = vadd.f32 %v2600, %v2744
      %v2829 = vadd.f32 %v2601, %v2747
      %v2830 = vadd.f32 %v2602, %v2752
      %v2831 = vadd.f32 %v2603, %v2755
      %v2832 = vadd.f32 %v2604, %v2760
      %v2833 = vadd.f32 %v2605, %v2763
      %v2834 = vadd.f32 %v2606, %v2768
      %v2835 = vadd.f32 %v2607, %v2771
      %v2836 = vadd.f32 %v2608, %v2776
      %v2837 = vadd.f32 %v2609, %v2779
      %v2838 = vadd.f32 %v2610, %v2784
      %v2839 = vadd.f32 %v2611, %v2787
      %v2840 = vadd.f32 %v2612, %v2792
      %v2841 = vadd.f32 %v2613, %v2795
      %v2842 = vadd.f32 %v2614, %v2800
      %v2843 = vadd.f32 %v2615, %v2803
      %v2844 = vadd.f32 %v2616, %v2808
      %v2845 = vadd.f32 %v2617, %v2811
      %v2848 = vrot.slane %v1025, 5
      %v2849 = vrot.slane %v2848, 4
      %v2850 = vrot.slane %v988, 5
      %v2851 = vsel %vm2005, %v2849, %v2850
      %v2852 = vrot.slane %v2850, 4
      %v2853 = vrot.slane %v1007, 5
      %v2854 = vsel %vm2005, %v2852, %v2853
      %s2855 = scalar_lea.vmem %s1, 10
      %v2856 = vld [vmem:[%s2855] sm:$0x3]
      %v2857 = vunpack.c.l.b16 %v2851
      %v2858 = vunpack.c.l.b16 %v2854
      %v2859 = vpack.c.b16 %v2858, %v2857
      %v2861 = vsel %vm1465, %v2859, 0
      %v2864 = vsel %vm1514, %v2856, 0
      %2866 = vmatprep.subr.bf16.mxu0 0
      %2867 = vmatpush1.bf16.msra.mxu0 %v2864
      %2868 = vmatprep.subr.bf16.mxu0 0
      %2869 = vmatpush1.bf16.msra.mxu0 0
      %2870 = vmatprep.subr.bf16.mxu0 0
      %2871 = vmatpush1.bf16.msra.mxu0 0
      %2872 = vmatprep.subr.bf16.mxu0 0
      %2873 = vmatpush1.bf16.msra.mxu0 0
      %2874 = vmatprep.subr.bf16.mxu0 0
      %2875 = vmatpush1.bf16.msra.mxu0 0
      %2876 = vmatprep.subr.bf16.mxu0 0
      %2877 = vmatpush1.bf16.msra.mxu0 0
      %2878 = vmatprep.subr.bf16.mxu0 0
      %2879 = vmatpush1.bf16.msra.mxu0 0
      %2880 = vmatprep.subr.bf16.mxu0 0
      %2881 = vmatpush1.bf16.msra.mxu0 0
      %2882 = vmatprep.subr.bf16.mxu0 0
      %2883 = vmatpush1.bf16.msra.mxu0 0
      %2884 = vmatprep.subr.bf16.mxu0 0
      %2885 = vmatpush1.bf16.msra.mxu0 0
      %2886 = vmatprep.subr.bf16.mxu0 0
      %2887 = vmatpush1.bf16.msra.mxu0 0
      %2888 = vmatprep.subr.bf16.mxu0 0
      %2889 = vmatpush1.bf16.msra.mxu0 0
      %2890 = vmatprep.subr.bf16.mxu0 0
      %2891 = vmatpush1.bf16.msra.mxu0 0
      %2892 = vmatprep.subr.bf16.mxu0 0
      %2893 = vmatpush1.bf16.msra.mxu0 0
      %2894 = vmatprep.subr.bf16.mxu0 0
      %2895 = vmatpush1.bf16.msra.mxu0 0
      %2896 = vmatprep.subr.bf16.mxu0 0
      %2897 = vmatpush1.bf16.msra.mxu0 0
      %2898 = vmatprep.mubr.bf16.mxu0 0
      %2899 = vmatmul.mubr.bf16.gmra.mrb[0].mxu0 %v2172
      %v2900 = vpop.f32.mrb[0].mxu0
      %v2901 = vadd.f32 0.0, %v2900
      %v2902 = vpop.f32.mrb[0].mxu0
      %v2903 = vpop.f32.mrb[0].mxu0
      %v2904 = vadd.f32 0.0, %v2903
      %v2905 = vpop.f32.mrb[0].mxu0
      %2906 = vmatprep.mubr.bf16.mxu0 0
      %2907 = vmatmul.mubr.bf16.gmra.mrb[0].mxu0 %v2175
      %v2908 = vpop.f32.mrb[0].mxu0
      %v2909 = vadd.f32 0.0, %v2908
      %v2910 = vpop.f32.mrb[0].mxu0
      %v2911 = vpop.f32.mrb[0].mxu0
      %v2912 = vadd.f32 0.0, %v2911
      %v2913 = vpop.f32.mrb[0].mxu0
      %2914 = vmatprep.mubr.bf16.mxu0 0
      %2915 = vmatmul.mubr.bf16.gmra.mrb[0].mxu0 %v2178
      %v2916 = vpop.f32.mrb[0].mxu0
      %v2917 = vadd.f32 0.0, %v2916
      %v2918 = vpop.f32.mrb[0].mxu0
      %v2919 = vpop.f32.mrb[0].mxu0
      %v2920 = vadd.f32 0.0, %v2919
      %v2921 = vpop.f32.mrb[0].mxu0
      %2922 = vmatprep.mubr.bf16.mxu0 0
      %2923 = vmatmul.mubr.bf16.gmra.mrb[0].mxu0 %v2181
      %v2924 = vpop.f32.mrb[0].mxu0
      %v2925 = vadd.f32 0.0, %v2924
      %v2926 = vpop.f32.mrb[0].mxu0
      %v2927 = vpop.f32.mrb[0].mxu0
      %v2928 = vadd.f32 0.0, %v2927
      %v2929 = vpop.f32.mrb[0].mxu0
      %2930 = vmatprep.mubr.bf16.mxu0 0
      %2931 = vmatmul.mubr.bf16.gmra.mrb[0].mxu0 %v2184
      %v2932 = vpop.f32.mrb[0].mxu0
      %v2933 = vadd.f32 0.0, %v2932
      %v2934 = vpop.f32.mrb[0].mxu0
      %v2935 = vpop.f32.mrb[0].mxu0
      %v2936 = vadd.f32 0.0, %v2935
      %v2937 = vpop.f32.mrb[0].mxu0
      %2938 = vmatprep.mubr.bf16.mxu0 0
      %2939 = vmatmul.mubr.bf16.gmra.mrb[0].mxu0 %v2187
      %v2940 = vpop.f32.mrb[0].mxu0
      %v2941 = vadd.f32 0.0, %v2940
      %v2942 = vpop.f32.mrb[0].mxu0
      %v2943 = vpop.f32.mrb[0].mxu0
      %v2944 = vadd.f32 0.0, %v2943
      %v2945 = vpop.f32.mrb[0].mxu0
      %2946 = vmatprep.mubr.bf16.mxu0 0
      %2947 = vmatmul.mubr.bf16.gmra.mrb[0].mxu0 %v2190
      %v2948 = vpop.f32.mrb[0].mxu0
      %v2949 = vadd.f32 0.0, %v2948
      %v2950 = vpop.f32.mrb[0].mxu0
      %v2951 = vpop.f32.mrb[0].mxu0
      %v2952 = vadd.f32 0.0, %v2951
      %v2953 = vpop.f32.mrb[0].mxu0
      %2954 = vmatprep.mubr.bf16.mxu0 0
      %2955 = vmatmul.mubr.bf16.gmra.mrb[0].mxu0 %v2193
      %v2956 = vpop.f32.mrb[0].mxu0
      %v2957 = vadd.f32 0.0, %v2956
      %v2958 = vpop.f32.mrb[0].mxu0
      %v2959 = vpop.f32.mrb[0].mxu0
      %v2960 = vadd.f32 0.0, %v2959
      %v2961 = vpop.f32.mrb[0].mxu0
      %2962 = vmatprep.mubr.bf16.mxu0 0
      %2963 = vmatmul.mubr.bf16.gmra.mrb[0].mxu0 %v2196
      %v2964 = vpop.f32.mrb[0].mxu0
      %v2965 = vadd.f32 0.0, %v2964
      %v2966 = vpop.f32.mrb[0].mxu0
      %v2967 = vpop.f32.mrb[0].mxu0
      %v2968 = vadd.f32 0.0, %v2967
      %v2969 = vpop.f32.mrb[0].mxu0
      %2970 = vmatprep.mubr.bf16.mxu0 0
      %2971 = vmatmul.mubr.bf16.gmra.mrb[0].mxu0 %v2199
      %v2972 = vpop.f32.mrb[0].mxu0
      %v2973 = vadd.f32 0.0, %v2972
      %v2974 = vpop.f32.mrb[0].mxu0
      %v2975 = vpop.f32.mrb[0].mxu0
      %v2976 = vadd.f32 0.0, %v2975
      %v2977 = vpop.f32.mrb[0].mxu0
      %2978 = vmatprep.mubr.bf16.mxu0 0
      %2979 = vmatmul.mubr.bf16.gmra.mrb[0].mxu0 %v2202
      %v2980 = vpop.f32.mrb[0].mxu0
      %v2981 = vadd.f32 0.0, %v2980
      %v2982 = vpop.f32.mrb[0].mxu0
      %v2983 = vpop.f32.mrb[0].mxu0
      %v2984 = vadd.f32 0.0, %v2983
      %v2985 = vpop.f32.mrb[0].mxu0
      %2986 = vmatprep.mubr.bf16.mxu0 0
      %2987 = vmatmul.mubr.bf16.gmra.mrb[0].mxu0 %v2205
      %v2988 = vpop.f32.mrb[0].mxu0
      %v2989 = vadd.f32 0.0, %v2988
      %v2990 = vpop.f32.mrb[0].mxu0
      %v2991 = vpop.f32.mrb[0].mxu0
      %v2992 = vadd.f32 0.0, %v2991
      %v2993 = vpop.f32.mrb[0].mxu0
      %2994 = vmatprep.mubr.bf16.mxu0 0
      %2995 = vmatmul.mubr.bf16.gmra.mrb[0].mxu0 %v2208
      %v2996 = vpop.f32.mrb[0].mxu0
      %v2997 = vadd.f32 0.0, %v2996
      %v2998 = vpop.f32.mrb[0].mxu0
      %v2999 = vpop.f32.mrb[0].mxu0
      %v3000 = vadd.f32 0.0, %v2999
      %v3001 = vpop.f32.mrb[0].mxu0
      %3002 = vmatprep.mubr.bf16.mxu0 0
      %3003 = vmatmul.mubr.bf16.gmra.mrb[0].mxu0 %v2211
      %v3004 = vpop.f32.mrb[0].mxu0
      %v3005 = vadd.f32 0.0, %v3004
      %v3006 = vpop.f32.mrb[0].mxu0
      %v3007 = vpop.f32.mrb[0].mxu0
      %v3008 = vadd.f32 0.0, %v3007
      %v3009 = vpop.f32.mrb[0].mxu0
      %3010 = vmatprep.mubr.bf16.mxu0 0
      %3011 = vmatmul.mubr.bf16.gmra.mrb[0].mxu0 %v2214
      %v3012 = vpop.f32.mrb[0].mxu0
      %v3013 = vadd.f32 0.0, %v3012
      %v3014 = vpop.f32.mrb[0].mxu0
      %v3015 = vpop.f32.mrb[0].mxu0
      %v3016 = vadd.f32 0.0, %v3015
      %v3017 = vpop.f32.mrb[0].mxu0
      %3018 = vmatprep.mubr.bf16.mxu0 0
      %3019 = vmatmul.mubr.bf16.gmra.mrb[0].mxu0 %v2861
      %v3020 = vpop.f32.mrb[0].mxu0
      %v3021 = vadd.f32 0.0, %v3020
      %v3022 = vpop.f32.mrb[0].mxu0
      %v3023 = vpop.f32.mrb[0].mxu0
      %v3024 = vadd.f32 0.0, %v3023
      %v3025 = vpop.f32.mrb[0].mxu0
      %3026 = vdwg.mxu0
      %v3027 = vadd.f32 %v2814, %v2901
      %v3028 = vadd.f32 %v2815, %v2904
      %v3029 = vadd.f32 %v2816, %v2909
      %v3030 = vadd.f32 %v2817, %v2912
      %v3031 = vadd.f32 %v2818, %v2917
      %v3032 = vadd.f32 %v2819, %v2920
      %v3033 = vadd.f32 %v2820, %v2925
      %v3034 = vadd.f32 %v2821, %v2928
      %v3035 = vadd.f32 %v2822, %v2933
      %v3036 = vadd.f32 %v2823, %v2936
      %v3037 = vadd.f32 %v2824, %v2941
      %v3038 = vadd.f32 %v2825, %v2944
      %v3039 = vadd.f32 %v2826, %v2949
      %v3040 = vadd.f32 %v2827, %v2952
      %v3041 = vadd.f32 %v2828, %v2957
      %v3042 = vadd.f32 %v2829, %v2960
      %v3043 = vadd.f32 %v2830, %v2965
      %v3044 = vadd.f32 %v2831, %v2968
      %v3045 = vadd.f32 %v2832, %v2973
      %v3046 = vadd.f32 %v2833, %v2976
      %v3047 = vadd.f32 %v2834, %v2981
      %v3048 = vadd.f32 %v2835, %v2984
      %v3049 = vadd.f32 %v2836, %v2989
      %v3050 = vadd.f32 %v2837, %v2992
      %v3051 = vadd.f32 %v2838, %v2997
      %v3052 = vadd.f32 %v2839, %v3000
      %v3053 = vadd.f32 %v2840, %v3005
      %v3054 = vadd.f32 %v2841, %v3008
      %v3055 = vadd.f32 %v2842, %v3013
      %v3056 = vadd.f32 %v2843, %v3016
      %v3057 = vadd.f32 %v2844, %v3021
      %v3058 = vadd.f32 %v2845, %v3024
      %s3059 = scalar_lea.vmem %s1, 12
      %v3060 = vld [vmem:[%s3059] sm:$0x3]
      %v3063 = vunpack.c.l.b16 %v989
      %v3064 = vunpack.c.l.b16 %v990
      %v3065 = vpack.c.b16 %v3064, %v3063
      %v3067 = vsel %vm1465, %v3065, 0
      %v3070 = vsel %vm1514, %v3060, 0
      %3072 = vmatprep.subr.bf16.mxu0 0
      %3073 = vmatpush1.bf16.msra.mxu0 %v3070
      %3074 = vmatprep.subr.bf16.mxu0 0
      %3075 = vmatpush1.bf16.msra.mxu0 0
      %3076 = vmatprep.subr.bf16.mxu0 0
      %3077 = vmatpush1.bf16.msra.mxu0 0
      %3078 = vmatprep.subr.bf16.mxu0 0
      %3079 = vmatpush1.bf16.msra.mxu0 0
      %3080 = vmatprep.subr.bf16.mxu0 0
      %3081 = vmatpush1.bf16.msra.mxu0 0
      %3082 = vmatprep.subr.bf16.mxu0 0
      %3083 = vmatpush1.bf16.msra.mxu0 0
      %3084 = vmatprep.subr.bf16.mxu0 0
      %3085 = vmatpush1.bf16.msra.mxu0 0
      %3086 = vmatprep.subr.bf16.mxu0 0
      %3087 = vmatpush1.bf16.msra.mxu0 0
      %3088 = vmatprep.subr.bf16.mxu0 0
      %3089 = vmatpush1.bf16.msra.mxu0 0
      %3090 = vmatprep.subr.bf16.mxu0 0
      %3091 = vmatpush1.bf16.msra.mxu0 0
      %3092 = vmatprep.subr.bf16.mxu0 0
      %3093 = vmatpush1.bf16.msra.mxu0 0
      %3094 = vmatprep.subr.bf16.mxu0 0
      %3095 = vmatpush1.bf16.msra.mxu0 0
      %3096 = vmatprep.subr.bf16.mxu0 0
      %3097 = vmatpush1.bf16.msra.mxu0 0
      %3098 = vmatprep.subr.bf16.mxu0 0
      %3099 = vmatpush1.bf16.msra.mxu0 0
      %3100 = vmatprep.subr.bf16.mxu0 0
      %3101 = vmatpush1.bf16.msra.mxu0 0
      %3102 = vmatprep.subr.bf16.mxu0 0
      %3103 = vmatpush1.bf16.msra.mxu0 0
      %3104 = vmatprep.mubr.bf16.mxu0 0
      %3105 = vmatmul.mubr.bf16.gmra.mrb[0].mxu0 %v1766
      %v3106 = vpop.f32.mrb[0].mxu0
      %v3107 = vadd.f32 0.0, %v3106
      %v3108 = vpop.f32.mrb[0].mxu0
      %v3109 = vpop.f32.mrb[0].mxu0
      %v3110 = vadd.f32 0.0, %v3109
      %v3111 = vpop.f32.mrb[0].mxu0
      %3112 = vmatprep.mubr.bf16.mxu0 0
      %3113 = vmatmul.mubr.bf16.gmra.mrb[0].mxu0 %v1769
      %v3114 = vpop.f32.mrb[0].mxu0
      %v3115 = vadd.f32 0.0, %v3114
      %v3116 = vpop.f32.mrb[0].mxu0
      %v3117 = vpop.f32.mrb[0].mxu0
      %v3118 = vadd.f32 0.0, %v3117
      %v3119 = vpop.f32.mrb[0].mxu0
      %3120 = vmatprep.mubr.bf16.mxu0 0
      %3121 = vmatmul.mubr.bf16.gmra.mrb[0].mxu0 %v1772
      %v3122 = vpop.f32.mrb[0].mxu0
      %v3123 = vadd.f32 0.0, %v3122
      %v3124 = vpop.f32.mrb[0].mxu0
      %v3125 = vpop.f32.mrb[0].mxu0
      %v3126 = vadd.f32 0.0, %v3125
      %v3127 = vpop.f32.mrb[0].mxu0
      %3128 = vmatprep.mubr.bf16.mxu0 0
      %3129 = vmatmul.mubr.bf16.gmra.mrb[0].mxu0 %v1775
      %v3130 = vpop.f32.mrb[0].mxu0
      %v3131 = vadd.f32 0.0, %v3130
      %v3132 = vpop.f32.mrb[0].mxu0
      %v3133 = vpop.f32.mrb[0].mxu0
      %v3134 = vadd.f32 0.0, %v3133
      %v3135 = vpop.f32.mrb[0].mxu0
      %3136 = vmatprep.mubr.bf16.mxu0 0
      %3137 = vmatmul.mubr.bf16.gmra.mrb[0].mxu0 %v1778
      %v3138 = vpop.f32.mrb[0].mxu0
      %v3139 = vadd.f32 0.0, %v3138
      %v3140 = vpop.f32.mrb[0].mxu0
      %v3141 = vpop.f32.mrb[0].mxu0
      %v3142 = vadd.f32 0.0, %v3141
      %v3143 = vpop.f32.mrb[0].mxu0
      %3144 = vmatprep.mubr.bf16.mxu0 0
      %3145 = vmatmul.mubr.bf16.gmra.mrb[0].mxu0 %v1781
      %v3146 = vpop.f32.mrb[0].mxu0
      %v3147 = vadd.f32 0.0, %v3146
      %v3148 = vpop.f32.mrb[0].mxu0
      %v3149 = vpop.f32.mrb[0].mxu0
      %v3150 = vadd.f32 0.0, %v3149
      %v3151 = vpop.f32.mrb[0].mxu0
      %3152 = vmatprep.mubr.bf16.mxu0 0
      %3153 = vmatmul.mubr.bf16.gmra.mrb[0].mxu0 %v1784
      %v3154 = vpop.f32.mrb[0].mxu0
      %v3155 = vadd.f32 0.0, %v3154
      %v3156 = vpop.f32.mrb[0].mxu0
      %v3157 = vpop.f32.mrb[0].mxu0
      %v3158 = vadd.f32 0.0, %v3157
      %v3159 = vpop.f32.mrb[0].mxu0
      %3160 = vmatprep.mubr.bf16.mxu0 0
      %3161 = vmatmul.mubr.bf16.gmra.mrb[0].mxu0 %v1787
      %v3162 = vpop.f32.mrb[0].mxu0
      %v3163 = vadd.f32 0.0, %v3162
      %v3164 = vpop.f32.mrb[0].mxu0
      %v3165 = vpop.f32.mrb[0].mxu0
      %v3166 = vadd.f32 0.0, %v3165
      %v3167 = vpop.f32.mrb[0].mxu0
      %3168 = vmatprep.mubr.bf16.mxu0 0
      %3169 = vmatmul.mubr.bf16.gmra.mrb[0].mxu0 %v1790
      %v3170 = vpop.f32.mrb[0].mxu0
      %v3171 = vadd.f32 0.0, %v3170
      %v3172 = vpop.f32.mrb[0].mxu0
      %v3173 = vpop.f32.mrb[0].mxu0
      %v3174 = vadd.f32 0.0, %v3173
      %v3175 = vpop.f32.mrb[0].mxu0
      %3176 = vmatprep.mubr.bf16.mxu0 0
      %3177 = vmatmul.mubr.bf16.gmra.mrb[0].mxu0 %v1793
      %v3178 = vpop.f32.mrb[0].mxu0
      %v3179 = vadd.f32 0.0, %v3178
      %v3180 = vpop.f32.mrb[0].mxu0
      %v3181 = vpop.f32.mrb[0].mxu0
      %v3182 = vadd.f32 0.0, %v3181
      %v3183 = vpop.f32.mrb[0].mxu0
      %3184 = vmatprep.mubr.bf16.mxu0 0
      %3185 = vmatmul.mubr.bf16.gmra.mrb[0].mxu0 %v1796
      %v3186 = vpop.f32.mrb[0].mxu0
      %v3187 = vadd.f32 0.0, %v3186
      %v3188 = vpop.f32.mrb[0].mxu0
      %v3189 = vpop.f32.mrb[0].mxu0
      %v3190 = vadd.f32 0.0, %v3189
      %v3191 = vpop.f32.mrb[0].mxu0
      %3192 = vmatprep.mubr.bf16.mxu0 0
      %3193 = vmatmul.mubr.bf16.gmra.mrb[0].mxu0 %v1799
      %v3194 = vpop.f32.mrb[0].mxu0
      %v3195 = vadd.f32 0.0, %v3194
      %v3196 = vpop.f32.mrb[0].mxu0
      %v3197 = vpop.f32.mrb[0].mxu0
      %v3198 = vadd.f32 0.0, %v3197
      %v3199 = vpop.f32.mrb[0].mxu0
      %3200 = vmatprep.mubr.bf16.mxu0 0
      %3201 = vmatmul.mubr.bf16.gmra.mrb[0].mxu0 %v1802
      %v3202 = vpop.f32.mrb[0].mxu0
      %v3203 = vadd.f32 0.0, %v3202
      %v3204 = vpop.f32.mrb[0].mxu0
      %v3205 = vpop.f32.mrb[0].mxu0
      %v3206 = vadd.f32 0.0, %v3205
      %v3207 = vpop.f32.mrb[0].mxu0
      %3208 = vmatprep.mubr.bf16.mxu0 0
      %3209 = vmatmul.mubr.bf16.gmra.mrb[0].mxu0 %v1805
      %v3210 = vpop.f32.mrb[0].mxu0
      %v3211 = vadd.f32 0.0, %v3210
      %v3212 = vpop.f32.mrb[0].mxu0
      %v3213 = vpop.f32.mrb[0].mxu0
      %v3214 = vadd.f32 0.0, %v3213
      %v3215 = vpop.f32.mrb[0].mxu0
      %3216 = vmatprep.mubr.bf16.mxu0 0
      %3217 = vmatmul.mubr.bf16.gmra.mrb[0].mxu0 %v2420
      %v3218 = vpop.f32.mrb[0].mxu0
      %v3219 = vadd.f32 0.0, %v3218
      %v3220 = vpop.f32.mrb[0].mxu0
      %v3221 = vpop.f32.mrb[0].mxu0
      %v3222 = vadd.f32 0.0, %v3221
      %v3223 = vpop.f32.mrb[0].mxu0
      %3224 = vmatprep.mubr.bf16.mxu0 0
      %3225 = vmatmul.mubr.bf16.gmra.mrb[0].mxu0 %v3067
      %v3226 = vpop.f32.mrb[0].mxu0
      %v3227 = vadd.f32 0.0, %v3226
      %v3228 = vpop.f32.mrb[0].mxu0
      %v3229 = vpop.f32.mrb[0].mxu0
      %v3230 = vadd.f32 0.0, %v3229
      %v3231 = vpop.f32.mrb[0].mxu0
      %3232 = vdwg.mxu0
      %v3233 = vadd.f32 %v3027, %v3107
      %v3234 = vadd.f32 %v3028, %v3110
      %v3235 = vadd.f32 %v3029, %v3115
      %v3236 = vadd.f32 %v3030, %v3118
      %v3237 = vadd.f32 %v3031, %v3123
      %v3238 = vadd.f32 %v3032, %v3126
      %v3239 = vadd.f32 %v3033, %v3131
      %v3240 = vadd.f32 %v3034, %v3134
      %v3241 = vadd.f32 %v3035, %v3139
      %v3242 = vadd.f32 %v3036, %v3142
      %v3243 = vadd.f32 %v3037, %v3147
      %v3244 = vadd.f32 %v3038, %v3150
      %v3245 = vadd.f32 %v3039, %v3155
      %v3246 = vadd.f32 %v3040, %v3158
      %v3247 = vadd.f32 %v3041, %v3163
      %v3248 = vadd.f32 %v3042, %v3166
      %v3249 = vadd.f32 %v3043, %v3171
      %v3250 = vadd.f32 %v3044, %v3174
      %v3251 = vadd.f32 %v3045, %v3179
      %v3252 = vadd.f32 %v3046, %v3182
      %v3253 = vadd.f32 %v3047, %v3187
      %v3254 = vadd.f32 %v3048, %v3190
      %v3255 = vadd.f32 %v3049, %v3195
      %v3256 = vadd.f32 %v3050, %v3198
      %v3257 = vadd.f32 %v3051, %v3203
      %v3258 = vadd.f32 %v3052, %v3206
      %v3259 = vadd.f32 %v3053, %v3211
      %v3260 = vadd.f32 %v3054, %v3214
      %v3261 = vadd.f32 %v3055, %v3219
      %v3262 = vadd.f32 %v3056, %v3222
      %v3263 = vadd.f32 %v3057, %v3227
      %v3264 = vadd.f32 %v3058, %v3230
      %v3266 = vshrl.u32 %v989, 16
      %v3268 = vrot.slane %v3266, 4
      %v3269 = vshll.u32 %v989, 16
      %v3271 = vrot.slane %v3269, 5
      %v3272 = vor.u32 %v3268, %v3271
      %v3273 = vrot.slane %v3272, 4
      %v3275 = vshll.u32 %v990, 16
      %v3277 = vrot.slane %v3275, 5
      %v3278 = vsel %vm1030, %v3273, %v3277
      %v3279 = vshrl.u32 %v990, 16
      %v3281 = vrot.slane %v3279, 4
      %v3282 = vor.u32 %v3281, %v3277
      %v3283 = vrot.slane %v3282, 4
      %v3285 = vshll.u32 %v1008, 16
      %v3287 = vrot.slane %v3285, 5
      %v3288 = vsel %vm1030, %v3283, %v3287
      %s3289 = scalar_lea.vmem %s1, 14
      %v3290 = vld [vmem:[%s3289] sm:$0x3]
      %v3291 = vunpack.c.l.b16 %v3278
      %v3292 = vunpack.c.l.b16 %v3288
      %v3293 = vpack.c.b16 %v3292, %v3291
      %v3295 = vsel %vm1465, %v3293, 0
      %v3298 = vsel %vm1514, %v3290, 0
      %3300 = vmatprep.subr.bf16.mxu0 0
      %3301 = vmatpush1.bf16.msra.mxu0 %v3298
      %3302 = vmatprep.subr.bf16.mxu0 0
      %3303 = vmatpush1.bf16.msra.mxu0 0
      %3304 = vmatprep.subr.bf16.mxu0 0
      %3305 = vmatpush1.bf16.msra.mxu0 0
      %3306 = vmatprep.subr.bf16.mxu0 0
      %3307 = vmatpush1.bf16.msra.mxu0 0
      %3308 = vmatprep.subr.bf16.mxu0 0
      %3309 = vmatpush1.bf16.msra.mxu0 0
      %3310 = vmatprep.subr.bf16.mxu0 0
      %3311 = vmatpush1.bf16.msra.mxu0 0
      %3312 = vmatprep.subr.bf16.mxu0 0
      %3313 = vmatpush1.bf16.msra.mxu0 0
      %3314 = vmatprep.subr.bf16.mxu0 0
      %3315 = vmatpush1.bf16.msra.mxu0 0
      %3316 = vmatprep.subr.bf16.mxu0 0
      %3317 = vmatpush1.bf16.msra.mxu0 0
      %3318 = vmatprep.subr.bf16.mxu0 0
      %3319 = vmatpush1.bf16.msra.mxu0 0
      %3320 = vmatprep.subr.bf16.mxu0 0
      %3321 = vmatpush1.bf16.msra.mxu0 0
      %3322 = vmatprep.subr.bf16.mxu0 0
      %3323 = vmatpush1.bf16.msra.mxu0 0
      %3324 = vmatprep.subr.bf16.mxu0 0
      %3325 = vmatpush1.bf16.msra.mxu0 0
      %3326 = vmatprep.subr.bf16.mxu0 0
      %3327 = vmatpush1.bf16.msra.mxu0 0
      %3328 = vmatprep.subr.bf16.mxu0 0
      %3329 = vmatpush1.bf16.msra.mxu0 0
      %3330 = vmatprep.subr.bf16.mxu0 0
      %3331 = vmatpush1.bf16.msra.mxu0 0
      %3332 = vmatprep.mubr.bf16.mxu0 0
      %3333 = vmatmul.mubr.bf16.gmra.mrb[0].mxu0 %v1473
      %v3334 = vpop.f32.mrb[0].mxu0
      %v3335 = vadd.f32 0.0, %v3334
      %v3336 = vpop.f32.mrb[0].mxu0
      %v3337 = vpop.f32.mrb[0].mxu0
      %v3338 = vadd.f32 0.0, %v3337
      %v3339 = vpop.f32.mrb[0].mxu0
      %3340 = vmatprep.mubr.bf16.mxu0 0
      %3341 = vmatmul.mubr.bf16.gmra.mrb[0].mxu0 %v1476
      %v3342 = vpop.f32.mrb[0].mxu0
      %v3343 = vadd.f32 0.0, %v3342
      %v3344 = vpop.f32.mrb[0].mxu0
      %v3345 = vpop.f32.mrb[0].mxu0
      %v3346 = vadd.f32 0.0, %v3345
      %v3347 = vpop.f32.mrb[0].mxu0
      %3348 = vmatprep.mubr.bf16.mxu0 0
      %3349 = vmatmul.mubr.bf16.gmra.mrb[0].mxu0 %v1479
      %v3350 = vpop.f32.mrb[0].mxu0
      %v3351 = vadd.f32 0.0, %v3350
      %v3352 = vpop.f32.mrb[0].mxu0
      %v3353 = vpop.f32.mrb[0].mxu0
      %v3354 = vadd.f32 0.0, %v3353
      %v3355 = vpop.f32.mrb[0].mxu0
      %3356 = vmatprep.mubr.bf16.mxu0 0
      %3357 = vmatmul.mubr.bf16.gmra.mrb[0].mxu0 %v1482
      %v3358 = vpop.f32.mrb[0].mxu0
      %v3359 = vadd.f32 0.0, %v3358
      %v3360 = vpop.f32.mrb[0].mxu0
      %v3361 = vpop.f32.mrb[0].mxu0
      %v3362 = vadd.f32 0.0, %v3361
      %v3363 = vpop.f32.mrb[0].mxu0
      %3364 = vmatprep.mubr.bf16.mxu0 0
      %3365 = vmatmul.mubr.bf16.gmra.mrb[0].mxu0 %v1485
      %v3366 = vpop.f32.mrb[0].mxu0
      %v3367 = vadd.f32 0.0, %v3366
      %v3368 = vpop.f32.mrb[0].mxu0
      %v3369 = vpop.f32.mrb[0].mxu0
      %v3370 = vadd.f32 0.0, %v3369
      %v3371 = vpop.f32.mrb[0].mxu0
      %3372 = vmatprep.mubr.bf16.mxu0 0
      %3373 = vmatmul.mubr.bf16.gmra.mrb[0].mxu0 %v1488
      %v3374 = vpop.f32.mrb[0].mxu0
      %v3375 = vadd.f32 0.0, %v3374
      %v3376 = vpop.f32.mrb[0].mxu0
      %v3377 = vpop.f32.mrb[0].mxu0
      %v3378 = vadd.f32 0.0, %v3377
      %v3379 = vpop.f32.mrb[0].mxu0
      %3380 = vmatprep.mubr.bf16.mxu0 0
      %3381 = vmatmul.mubr.bf16.gmra.mrb[0].mxu0 %v1491
      %v3382 = vpop.f32.mrb[0].mxu0
      %v3383 = vadd.f32 0.0, %v3382
      %v3384 = vpop.f32.mrb[0].mxu0
      %v3385 = vpop.f32.mrb[0].mxu0
      %v3386 = vadd.f32 0.0, %v3385
      %v3387 = vpop.f32.mrb[0].mxu0
      %3388 = vmatprep.mubr.bf16.mxu0 0
      %3389 = vmatmul.mubr.bf16.gmra.mrb[0].mxu0 %v1494
      %v3390 = vpop.f32.mrb[0].mxu0
      %v3391 = vadd.f32 0.0, %v3390
      %v3392 = vpop.f32.mrb[0].mxu0
      %v3393 = vpop.f32.mrb[0].mxu0
      %v3394 = vadd.f32 0.0, %v3393
      %v3395 = vpop.f32.mrb[0].mxu0
      %3396 = vmatprep.mubr.bf16.mxu0 0
      %3397 = vmatmul.mubr.bf16.gmra.mrb[0].mxu0 %v1497
      %v3398 = vpop.f32.mrb[0].mxu0
      %v3399 = vadd.f32 0.0, %v3398
      %v3400 = vpop.f32.mrb[0].mxu0
      %v3401 = vpop.f32.mrb[0].mxu0
      %v3402 = vadd.f32 0.0, %v3401
      %v3403 = vpop.f32.mrb[0].mxu0
      %3404 = vmatprep.mubr.bf16.mxu0 0
      %3405 = vmatmul.mubr.bf16.gmra.mrb[0].mxu0 %v1500
      %v3406 = vpop.f32.mrb[0].mxu0
      %v3407 = vadd.f32 0.0, %v3406
      %v3408 = vpop.f32.mrb[0].mxu0
      %v3409 = vpop.f32.mrb[0].mxu0
      %v3410 = vadd.f32 0.0, %v3409
      %v3411 = vpop.f32.mrb[0].mxu0
      %3412 = vmatprep.mubr.bf16.mxu0 0
      %3413 = vmatmul.mubr.bf16.gmra.mrb[0].mxu0 %v1503
      %v3414 = vpop.f32.mrb[0].mxu0
      %v3415 = vadd.f32 0.0, %v3414
      %v3416 = vpop.f32.mrb[0].mxu0
      %v3417 = vpop.f32.mrb[0].mxu0
      %v3418 = vadd.f32 0.0, %v3417
      %v3419 = vpop.f32.mrb[0].mxu0
      %3420 = vmatprep.mubr.bf16.mxu0 0
      %3421 = vmatmul.mubr.bf16.gmra.mrb[0].mxu0 %v1506
      %v3422 = vpop.f32.mrb[0].mxu0
      %v3423 = vadd.f32 0.0, %v3422
      %v3424 = vpop.f32.mrb[0].mxu0
      %v3425 = vpop.f32.mrb[0].mxu0
      %v3426 = vadd.f32 0.0, %v3425
      %v3427 = vpop.f32.mrb[0].mxu0
      %3428 = vmatprep.mubr.bf16.mxu0 0
      %3429 = vmatmul.mubr.bf16.gmra.mrb[0].mxu0 %v1509
      %v3430 = vpop.f32.mrb[0].mxu0
      %v3431 = vadd.f32 0.0, %v3430
      %v3432 = vpop.f32.mrb[0].mxu0
      %v3433 = vpop.f32.mrb[0].mxu0
      %v3434 = vadd.f32 0.0, %v3433
      %v3435 = vpop.f32.mrb[0].mxu0
      %3436 = vmatprep.mubr.bf16.mxu0 0
      %3437 = vmatmul.mubr.bf16.gmra.mrb[0].mxu0 %v1512
      %v3438 = vpop.f32.mrb[0].mxu0
      %v3439 = vadd.f32 0.0, %v3438
      %v3440 = vpop.f32.mrb[0].mxu0
      %v3441 = vpop.f32.mrb[0].mxu0
      %v3442 = vadd.f32 0.0, %v3441
      %v3443 = vpop.f32.mrb[0].mxu0
      %3444 = vmatprep.mubr.bf16.mxu0 0
      %3445 = vmatmul.mubr.bf16.gmra.mrb[0].mxu0 %v2648
      %v3446 = vpop.f32.mrb[0].mxu0
      %v3447 = vadd.f32 0.0, %v3446
      %v3448 = vpop.f32.mrb[0].mxu0
      %v3449 = vpop.f32.mrb[0].mxu0
      %v3450 = vadd.f32 0.0, %v3449
      %v3451 = vpop.f32.mrb[0].mxu0
      %3452 = vmatprep.mubr.bf16.mxu0 0
      %3453 = vmatmul.mubr.bf16.gmra.mrb[0].mxu0 %v3295
      %v3454 = vpop.f32.mrb[0].mxu0
      %v3455 = vadd.f32 0.0, %v3454
      %v3456 = vpop.f32.mrb[0].mxu0
      %v3457 = vpop.f32.mrb[0].mxu0
      %v3458 = vadd.f32 0.0, %v3457
      %v3459 = vpop.f32.mrb[0].mxu0
      %3460 = vdwg.mxu0
      %v3461 = vadd.f32 %v3233, %v3335
      %v3462 = vadd.f32 %v3234, %v3338
      %v3463 = vadd.f32 %v3235, %v3343
      %v3464 = vadd.f32 %v3236, %v3346
      %v3465 = vadd.f32 %v3237, %v3351
      %v3466 = vadd.f32 %v3238, %v3354
      %v3467 = vadd.f32 %v3239, %v3359
      %v3468 = vadd.f32 %v3240, %v3362
      %v3469 = vadd.f32 %v3241, %v3367
      %v3470 = vadd.f32 %v3242, %v3370
      %v3471 = vadd.f32 %v3243, %v3375
      %v3472 = vadd.f32 %v3244, %v3378
      %v3473 = vadd.f32 %v3245, %v3383
      %v3474 = vadd.f32 %v3246, %v3386
      %v3475 = vadd.f32 %v3247, %v3391
      %v3476 = vadd.f32 %v3248, %v3394
      %v3477 = vadd.f32 %v3249, %v3399
      %v3478 = vadd.f32 %v3250, %v3402
      %v3479 = vadd.f32 %v3251, %v3407
      %v3480 = vadd.f32 %v3252, %v3410
      %v3481 = vadd.f32 %v3253, %v3415
      %v3482 = vadd.f32 %v3254, %v3418
      %v3483 = vadd.f32 %v3255, %v3423
      %v3484 = vadd.f32 %v3256, %v3426
      %v3485 = vadd.f32 %v3257, %v3431
      %v3486 = vadd.f32 %v3258, %v3434
      %v3487 = vadd.f32 %v3259, %v3439
      %v3488 = vadd.f32 %v3260, %v3442
      %v3489 = vadd.f32 %v3261, %v3447
      %v3490 = vadd.f32 %v3262, %v3450
      %v3491 = vadd.f32 %v3263, %v3455
      %v3492 = vadd.f32 %v3264, %v3458
      %v3495 = vrot.slane %v1026, 5
      %v3496 = vrot.slane %v3495, 4
      %v3497 = vrot.slane %v990, 5
      %v3498 = vsel %vm2005, %v3496, %v3497
      %v3499 = vrot.slane %v3497, 4
      %v3500 = vrot.slane %v1008, 5
      %v3501 = vsel %vm2005, %v3499, %v3500
      %s3502 = scalar_lea.vmem %s1, 16
      %v3503 = vld [vmem:[%s3502] sm:$0x3]
      %v3504 = vunpack.c.l.b16 %v3498
      %v3505 = vunpack.c.l.b16 %v3501
      %v3506 = vpack.c.b16 %v3505, %v3504
      %v3508 = vsel %vm1465, %v3506, 0
      %v3511 = vsel %vm1514, %v3503, 0
      %3513 = vmatprep.subr.bf16.mxu0 0
      %3514 = vmatpush1.bf16.msra.mxu0 %v3511
      %3515 = vmatprep.subr.bf16.mxu0 0
      %3516 = vmatpush1.bf16.msra.mxu0 0
      %3517 = vmatprep.subr.bf16.mxu0 0
      %3518 = vmatpush1.bf16.msra.mxu0 0
      %3519 = vmatprep.subr.bf16.mxu0 0
      %3520 = vmatpush1.bf16.msra.mxu0 0
      %3521 = vmatprep.subr.bf16.mxu0 0
      %3522 = vmatpush1.bf16.msra.mxu0 0
      %3523 = vmatprep.subr.bf16.mxu0 0
      %3524 = vmatpush1.bf16.msra.mxu0 0
      %3525 = vmatprep.subr.bf16.mxu0 0
      %3526 = vmatpush1.bf16.msra.mxu0 0
      %3527 = vmatprep.subr.bf16.mxu0 0
      %3528 = vmatpush1.bf16.msra.mxu0 0
      %3529 = vmatprep.subr.bf16.mxu0 0
      %3530 = vmatpush1.bf16.msra.mxu0 0
      %3531 = vmatprep.subr.bf16.mxu0 0
      %3532 = vmatpush1.bf16.msra.mxu0 0
      %3533 = vmatprep.subr.bf16.mxu0 0
      %3534 = vmatpush1.bf16.msra.mxu0 0
      %3535 = vmatprep.subr.bf16.mxu0 0
      %3536 = vmatpush1.bf16.msra.mxu0 0
      %3537 = vmatprep.subr.bf16.mxu0 0
      %3538 = vmatpush1.bf16.msra.mxu0 0
      %3539 = vmatprep.subr.bf16.mxu0 0
      %3540 = vmatpush1.bf16.msra.mxu0 0
      %3541 = vmatprep.subr.bf16.mxu0 0
      %3542 = vmatpush1.bf16.msra.mxu0 0
      %3543 = vmatprep.subr.bf16.mxu0 0
      %3544 = vmatpush1.bf16.msra.mxu0 0
      %3545 = vmatprep.mubr.bf16.mxu0 0
      %3546 = vmatmul.mubr.bf16.gmra.mrb[0].mxu0 %v2175
      %v3547 = vpop.f32.mrb[0].mxu0
      %v3548 = vadd.f32 0.0, %v3547
      %v3549 = vpop.f32.mrb[0].mxu0
      %v3550 = vpop.f32.mrb[0].mxu0
      %v3551 = vadd.f32 0.0, %v3550
      %v3552 = vpop.f32.mrb[0].mxu0
      %3553 = vmatprep.mubr.bf16.mxu0 0
      %3554 = vmatmul.mubr.bf16.gmra.mrb[0].mxu0 %v2178
      %v3555 = vpop.f32.mrb[0].mxu0
      %v3556 = vadd.f32 0.0, %v3555
      %v3557 = vpop.f32.mrb[0].mxu0
      %v3558 = vpop.f32.mrb[0].mxu0
      %v3559 = vadd.f32 0.0, %v3558
      %v3560 = vpop.f32.mrb[0].mxu0
      %3561 = vmatprep.mubr.bf16.mxu0 0
      %3562 = vmatmul.mubr.bf16.gmra.mrb[0].mxu0 %v2181
      %v3563 = vpop.f32.mrb[0].mxu0
      %v3564 = vadd.f32 0.0, %v3563
      %v3565 = vpop.f32.mrb[0].mxu0
      %v3566 = vpop.f32.mrb[0].mxu0
      %v3567 = vadd.f32 0.0, %v3566
      %v3568 = vpop.f32.mrb[0].mxu0
      %3569 = vmatprep.mubr.bf16.mxu0 0
      %3570 = vmatmul.mubr.bf16.gmra.mrb[0].mxu0 %v2184
      %v3571 = vpop.f32.mrb[0].mxu0
      %v3572 = vadd.f32 0.0, %v3571
      %v3573 = vpop.f32.mrb[0].mxu0
      %v3574 = vpop.f32.mrb[0].mxu0
      %v3575 = vadd.f32 0.0, %v3574
      %v3576 = vpop.f32.mrb[0].mxu0
      %3577 = vmatprep.mubr.bf16.mxu0 0
      %3578 = vmatmul.mubr.bf16.gmra.mrb[0].mxu0 %v2187
      %v3579 = vpop.f32.mrb[0].mxu0
      %v3580 = vadd.f32 0.0, %v3579
      %v3581 = vpop.f32.mrb[0].mxu0
      %v3582 = vpop.f32.mrb[0].mxu0
      %v3583 = vadd.f32 0.0, %v3582
      %v3584 = vpop.f32.mrb[0].mxu0
      %3585 = vmatprep.mubr.bf16.mxu0 0
      %3586 = vmatmul.mubr.bf16.gmra.mrb[0].mxu0 %v2190
      %v3587 = vpop.f32.mrb[0].mxu0
      %v3588 = vadd.f32 0.0, %v3587
      %v3589 = vpop.f32.mrb[0].mxu0
      %v3590 = vpop.f32.mrb[0].mxu0
      %v3591 = vadd.f32 0.0, %v3590
      %v3592 = vpop.f32.mrb[0].mxu0
      %3593 = vmatprep.mubr.bf16.mxu0 0
      %3594 = vmatmul.mubr.bf16.gmra.mrb[0].mxu0 %v2193
      %v3595 = vpop.f32.mrb[0].mxu0
      %v3596 = vadd.f32 0.0, %v3595
      %v3597 = vpop.f32.mrb[0].mxu0
      %v3598 = vpop.f32.mrb[0].mxu0
      %v3599 = vadd.f32 0.0, %v3598
      %v3600 = vpop.f32.mrb[0].mxu0
      %3601 = vmatprep.mubr.bf16.mxu0 0
      %3602 = vmatmul.mubr.bf16.gmra.mrb[0].mxu0 %v2196
      %v3603 = vpop.f32.mrb[0].mxu0
      %v3604 = vadd.f32 0.0, %v3603
      %v3605 = vpop.f32.mrb[0].mxu0
      %v3606 = vpop.f32.mrb[0].mxu0
      %v3607 = vadd.f32 0.0, %v3606
      %v3608 = vpop.f32.mrb[0].mxu0
      %3609 = vmatprep.mubr.bf16.mxu0 0
      %3610 = vmatmul.mubr.bf16.gmra.mrb[0].mxu0 %v2199
      %v3611 = vpop.f32.mrb[0].mxu0
      %v3612 = vadd.f32 0.0, %v3611
      %v3613 = vpop.f32.mrb[0].mxu0
      %v3614 = vpop.f32.mrb[0].mxu0
      %v3615 = vadd.f32 0.0, %v3614
      %v3616 = vpop.f32.mrb[0].mxu0
      %3617 = vmatprep.mubr.bf16.mxu0 0
      %3618 = vmatmul.mubr.bf16.gmra.mrb[0].mxu0 %v2202
      %v3619 = vpop.f32.mrb[0].mxu0
      %v3620 = vadd.f32 0.0, %v3619
      %v3621 = vpop.f32.mrb[0].mxu0
      %v3622 = vpop.f32.mrb[0].mxu0
      %v3623 = vadd.f32 0.0, %v3622
      %v3624 = vpop.f32.mrb[0].mxu0
      %3625 = vmatprep.mubr.bf16.mxu0 0
      %3626 = vmatmul.mubr.bf16.gmra.mrb[0].mxu0 %v2205
      %v3627 = vpop.f32.mrb[0].mxu0
      %v3628 = vadd.f32 0.0, %v3627
      %v3629 = vpop.f32.mrb[0].mxu0
      %v3630 = vpop.f32.mrb[0].mxu0
      %v3631 = vadd.f32 0.0, %v3630
      %v3632 = vpop.f32.mrb[0].mxu0
      %3633 = vmatprep.mubr.bf16.mxu0 0
      %3634 = vmatmul.mubr.bf16.gmra.mrb[0].mxu0 %v2208
      %v3635 = vpop.f32.mrb[0].mxu0
      %v3636 = vadd.f32 0.0, %v3635
      %v3637 = vpop.f32.mrb[0].mxu0
      %v3638 = vpop.f32.mrb[0].mxu0
      %v3639 = vadd.f32 0.0, %v3638
      %v3640 = vpop.f32.mrb[0].mxu0
      %3641 = vmatprep.mubr.bf16.mxu0 0
      %3642 = vmatmul.mubr.bf16.gmra.mrb[0].mxu0 %v2211
      %v3643 = vpop.f32.mrb[0].mxu0
      %v3644 = vadd.f32 0.0, %v3643
      %v3645 = vpop.f32.mrb[0].mxu0
      %v3646 = vpop.f32.mrb[0].mxu0
      %v3647 = vadd.f32 0.0, %v3646
      %v3648 = vpop.f32.mrb[0].mxu0
      %3649 = vmatprep.mubr.bf16.mxu0 0
      %3650 = vmatmul.mubr.bf16.gmra.mrb[0].mxu0 %v2214
      %v3651 = vpop.f32.mrb[0].mxu0
      %v3652 = vadd.f32 0.0, %v3651
      %v3653 = vpop.f32.mrb[0].mxu0
      %v3654 = vpop.f32.mrb[0].mxu0
      %v3655 = vadd.f32 0.0, %v3654
      %v3656 = vpop.f32.mrb[0].mxu0
      %3657 = vmatprep.mubr.bf16.mxu0 0
      %3658 = vmatmul.mubr.bf16.gmra.mrb[0].mxu0 %v2861
      %v3659 = vpop.f32.mrb[0].mxu0
      %v3660 = vadd.f32 0.0, %v3659
      %v3661 = vpop.f32.mrb[0].mxu0
      %v3662 = vpop.f32.mrb[0].mxu0
      %v3663 = vadd.f32 0.0, %v3662
      %v3664 = vpop.f32.mrb[0].mxu0
      %3665 = vmatprep.mubr.bf16.mxu0 0
      %3666 = vmatmul.mubr.bf16.gmra.mrb[0].mxu0 %v3508
      %v3667 = vpop.f32.mrb[0].mxu0
      %v3668 = vadd.f32 0.0, %v3667
      %v3669 = vpop.f32.mrb[0].mxu0
      %v3670 = vpop.f32.mrb[0].mxu0
      %v3671 = vadd.f32 0.0, %v3670
      %v3672 = vpop.f32.mrb[0].mxu0
      %3673 = vdwg.mxu0
      %v3674 = vadd.f32 %v3461, %v3548
      %v3675 = vadd.f32 %v3462, %v3551
      %v3676 = vadd.f32 %v3463, %v3556
      %v3677 = vadd.f32 %v3464, %v3559
      %v3678 = vadd.f32 %v3465, %v3564
      %v3679 = vadd.f32 %v3466, %v3567
      %v3680 = vadd.f32 %v3467, %v3572
      %v3681 = vadd.f32 %v3468, %v3575
      %v3682 = vadd.f32 %v3469, %v3580
      %v3683 = vadd.f32 %v3470, %v3583
      %v3684 = vadd.f32 %v3471, %v3588
      %v3685 = vadd.f32 %v3472, %v3591
      %v3686 = vadd.f32 %v3473, %v3596
      %v3687 = vadd.f32 %v3474, %v3599
      %v3688 = vadd.f32 %v3475, %v3604
      %v3689 = vadd.f32 %v3476, %v3607
      %v3690 = vadd.f32 %v3477, %v3612
      %v3691 = vadd.f32 %v3478, %v3615
      %v3692 = vadd.f32 %v3479, %v3620
      %v3693 = vadd.f32 %v3480, %v3623
      %v3694 = vadd.f32 %v3481, %v3628
      %v3695 = vadd.f32 %v3482, %v3631
      %v3696 = vadd.f32 %v3483, %v3636
      %v3697 = vadd.f32 %v3484, %v3639
      %v3698 = vadd.f32 %v3485, %v3644
      %v3699 = vadd.f32 %v3486, %v3647
      %v3700 = vadd.f32 %v3487, %v3652
      %v3701 = vadd.f32 %v3488, %v3655
      %v3702 = vadd.f32 %v3489, %v3660
      %v3703 = vadd.f32 %v3490, %v3663
      %v3704 = vadd.f32 %v3491, %v3668
      %v3705 = vadd.f32 %v3492, %v3671
      %v3706 = vld [vmem:[%s2] sm:$0x1]
      %v3708 = vlaneseq
      %v3709 = vshrl.u32 %v3708, 7
      %v3710 = vsub.s32 0, %v3709
      %v3711 = vrot.slane %v3706, %v3710
      %v3713 = vmul.f32 %v3674, %v3711
      %v3714 = vmul.f32 %v3675, %v3711
      %v3715 = vmul.f32 %v3676, %v3711
      %v3716 = vmul.f32 %v3677, %v3711
      %v3717 = vmul.f32 %v3678, %v3711
      %v3718 = vmul.f32 %v3679, %v3711
      %v3719 = vmul.f32 %v3680, %v3711
      %v3720 = vmul.f32 %v3681, %v3711
      %v3721 = vmul.f32 %v3682, %v3711
      %v3722 = vmul.f32 %v3683, %v3711
      %v3723 = vmul.f32 %v3684, %v3711
      %v3724 = vmul.f32 %v3685, %v3711
      %v3725 = vmul.f32 %v3686, %v3711
      %v3726 = vmul.f32 %v3687, %v3711
      %v3727 = vmul.f32 %v3688, %v3711
      %v3728 = vmul.f32 %v3689, %v3711
      %v3729 = vmul.f32 %v3690, %v3711
      %v3730 = vmul.f32 %v3691, %v3711
      %v3731 = vmul.f32 %v3692, %v3711
      %v3732 = vmul.f32 %v3693, %v3711
      %v3733 = vmul.f32 %v3694, %v3711
      %v3734 = vmul.f32 %v3695, %v3711
      %v3735 = vmul.f32 %v3696, %v3711
      %v3736 = vmul.f32 %v3697, %v3711
      %v3737 = vmul.f32 %v3698, %v3711
      %v3738 = vmul.f32 %v3699, %v3711
      %v3739 = vmul.f32 %v3700, %v3711
      %v3740 = vmul.f32 %v3701, %v3711
      %v3741 = vmul.f32 %v3702, %v3711
      %v3742 = vmul.f32 %v3703, %v3711
      %v3743 = vmul.f32 %v3704, %v3711
      %v3744 = vmul.f32 %v3705, %v3711
      %v3745 = vld [vmem:[%s3] sm:$0x1]
      %v3747 = vlaneseq
      %v3748 = vshrl.u32 %v3747, 7
      %v3749 = vsub.s32 0, %v3748
      %v3750 = vrot.slane %v3745, %v3749
      %v3752 = vadd.f32 %v3713, %v3750
      %v3753 = vadd.f32 %v3714, %v3750
      %v3754 = vadd.f32 %v3715, %v3750
      %v3755 = vadd.f32 %v3716, %v3750
      %v3756 = vadd.f32 %v3717, %v3750
      %v3757 = vadd.f32 %v3718, %v3750
      %v3758 = vadd.f32 %v3719, %v3750
      %v3759 = vadd.f32 %v3720, %v3750
      %v3760 = vadd.f32 %v3721, %v3750
      %v3761 = vadd.f32 %v3722, %v3750
      %v3762 = vadd.f32 %v3723, %v3750
      %v3763 = vadd.f32 %v3724, %v3750
      %v3764 = vadd.f32 %v3725, %v3750
      %v3765 = vadd.f32 %v3726, %v3750
      %v3766 = vadd.f32 %v3727, %v3750
      %v3767 = vadd.f32 %v3728, %v3750
      %v3768 = vadd.f32 %v3729, %v3750
      %v3769 = vadd.f32 %v3730, %v3750
      %v3770 = vadd.f32 %v3731, %v3750
      %v3771 = vadd.f32 %v3732, %v3750
      %v3772 = vadd.f32 %v3733, %v3750
      %v3773 = vadd.f32 %v3734, %v3750
      %v3774 = vadd.f32 %v3735, %v3750
      %v3775 = vadd.f32 %v3736, %v3750
      %v3776 = vadd.f32 %v3737, %v3750
      %v3777 = vadd.f32 %v3738, %v3750
      %v3778 = vadd.f32 %v3739, %v3750
      %v3779 = vadd.f32 %v3740, %v3750
      %v3780 = vadd.f32 %v3741, %v3750
      %v3781 = vadd.f32 %v3742, %v3750
      %v3782 = vadd.f32 %v3743, %v3750
      %v3783 = vadd.f32 %v3744, %v3750
      %vm3784 = vcmp.gt.f32.partialorder %v3752, 0.0
      %vm3785 = vcmp.gt.f32.partialorder %v3753, 0.0
      %vm3786 = vcmp.gt.f32.partialorder %v3754, 0.0
      %vm3787 = vcmp.gt.f32.partialorder %v3755, 0.0
      %vm3788 = vcmp.gt.f32.partialorder %v3756, 0.0
      %vm3789 = vcmp.gt.f32.partialorder %v3757, 0.0
      %vm3790 = vcmp.gt.f32.partialorder %v3758, 0.0
      %vm3791 = vcmp.gt.f32.partialorder %v3759, 0.0
      %vm3792 = vcmp.gt.f32.partialorder %v3760, 0.0
      %vm3793 = vcmp.gt.f32.partialorder %v3761, 0.0
      %vm3794 = vcmp.gt.f32.partialorder %v3762, 0.0
      %vm3795 = vcmp.gt.f32.partialorder %v3763, 0.0
      %vm3796 = vcmp.gt.f32.partialorder %v3764, 0.0
      %vm3797 = vcmp.gt.f32.partialorder %v3765, 0.0
      %vm3798 = vcmp.gt.f32.partialorder %v3766, 0.0
      %vm3799 = vcmp.gt.f32.partialorder %v3767, 0.0
      %vm3800 = vcmp.gt.f32.partialorder %v3768, 0.0
      %vm3801 = vcmp.gt.f32.partialorder %v3769, 0.0
      %vm3802 = vcmp.gt.f32.partialorder %v3770, 0.0
      %vm3803 = vcmp.gt.f32.partialorder %v3771, 0.0
      %vm3804 = vcmp.gt.f32.partialorder %v3772, 0.0
      %vm3805 = vcmp.gt.f32.partialorder %v3773, 0.0
      %vm3806 = vcmp.gt.f32.partialorder %v3774, 0.0
      %vm3807 = vcmp.gt.f32.partialorder %v3775, 0.0
      %vm3808 = vcmp.gt.f32.partialorder %v3776, 0.0
      %vm3809 = vcmp.gt.f32.partialorder %v3777, 0.0
      %vm3810 = vcmp.gt.f32.partialorder %v3778, 0.0
      %vm3811 = vcmp.gt.f32.partialorder %v3779, 0.0
      %vm3812 = vcmp.gt.f32.partialorder %v3780, 0.0
      %vm3813 = vcmp.gt.f32.partialorder %v3781, 0.0
      %vm3814 = vcmp.gt.f32.partialorder %v3782, 0.0
      %vm3815 = vcmp.gt.f32.partialorder %v3783, 0.0
      %v3816 = vmul.f32 %v3752, 0.01
      %v3817 = vmul.f32 %v3753, 0.01
      %v3818 = vmul.f32 %v3754, 0.01
      %v3819 = vmul.f32 %v3755, 0.01
      %v3820 = vmul.f32 %v3756, 0.01
      %v3821 = vmul.f32 %v3757, 0.01
      %v3822 = vmul.f32 %v3758, 0.01
      %v3823 = vmul.f32 %v3759, 0.01
      %v3824 = vmul.f32 %v3760, 0.01
      %v3825 = vmul.f32 %v3761, 0.01
      %v3826 = vmul.f32 %v3762, 0.01
      %v3827 = vmul.f32 %v3763, 0.01
      %v3828 = vmul.f32 %v3764, 0.01
      %v3829 = vmul.f32 %v3765, 0.01
      %v3830 = vmul.f32 %v3766, 0.01
      %v3831 = vmul.f32 %v3767, 0.01
      %v3832 = vmul.f32 %v3768, 0.01
      %v3833 = vmul.f32 %v3769, 0.01
      %v3834 = vmul.f32 %v3770, 0.01
      %v3835 = vmul.f32 %v3771, 0.01
      %v3836 = vmul.f32 %v3772, 0.01
      %v3837 = vmul.f32 %v3773, 0.01
      %v3838 = vmul.f32 %v3774, 0.01
      %v3839 = vmul.f32 %v3775, 0.01
      %v3840 = vmul.f32 %v3776, 0.01
      %v3841 = vmul.f32 %v3777, 0.01
      %v3842 = vmul.f32 %v3778, 0.01
      %v3843 = vmul.f32 %v3779, 0.01
      %v3844 = vmul.f32 %v3780, 0.01
      %v3845 = vmul.f32 %v3781, 0.01
      %v3846 = vmul.f32 %v3782, 0.01
      %v3847 = vmul.f32 %v3783, 0.01
      %v3848 = vsel %vm3784, %v3752, %v3816
      %v3849 = vsel %vm3785, %v3753, %v3817
      %v3850 = vsel %vm3786, %v3754, %v3818
      %v3851 = vsel %vm3787, %v3755, %v3819
      %v3852 = vsel %vm3788, %v3756, %v3820
      %v3853 = vsel %vm3789, %v3757, %v3821
      %v3854 = vsel %vm3790, %v3758, %v3822
      %v3855 = vsel %vm3791, %v3759, %v3823
      %v3856 = vsel %vm3792, %v3760, %v3824
      %v3857 = vsel %vm3793, %v3761, %v3825
      %v3858 = vsel %vm3794, %v3762, %v3826
      %v3859 = vsel %vm3795, %v3763, %v3827
      %v3860 = vsel %vm3796, %v3764, %v3828
      %v3861 = vsel %vm3797, %v3765, %v3829
      %v3862 = vsel %vm3798, %v3766, %v3830
      %v3863 = vsel %vm3799, %v3767, %v3831
      %v3864 = vsel %vm3800, %v3768, %v3832
      %v3865 = vsel %vm3801, %v3769, %v3833
      %v3866 = vsel %vm3802, %v3770, %v3834
      %v3867 = vsel %vm3803, %v3771, %v3835
      %v3868 = vsel %vm3804, %v3772, %v3836
      %v3869 = vsel %vm3805, %v3773, %v3837
      %v3870 = vsel %vm3806, %v3774, %v3838
      %v3871 = vsel %vm3807, %v3775, %v3839
      %v3872 = vsel %vm3808, %v3776, %v3840
      %v3873 = vsel %vm3809, %v3777, %v3841
      %v3874 = vsel %vm3810, %v3778, %v3842
      %v3875 = vsel %vm3811, %v3779, %v3843
      %v3876 = vsel %vm3812, %v3780, %v3844
      %v3877 = vsel %vm3813, %v3781, %v3845
      %v3878 = vsel %vm3814, %v3782, %v3846
      %v3879 = vsel %vm3815, %v3783, %v3847
      %3880 = vst [vmem:[#allocation3] sm:$0xf] 0
      %3881 = vst [vmem:[#allocation3 + $0x4] sm:$0xf] 0
      %3882 = vst [vmem:[#allocation3 + $0x8] sm:$0x1] 0
      %s3883 = scalar_lea.vmem [#allocation3], 204
      %3884 = vst [vmem:[%s3883] sm:$0xf] 0
      %3885 = vst [vmem:[%s3883 + $0x4] sm:$0xf] 0
      %3886 = vst [vmem:[%s3883 + $0x8] sm:$0x1] 0
      %s3887 = scalar_lea.vmem [#allocation3], 12
      %vm3888 = vcmask 1040384
      %vm3889 = vmand %vm3888, %vm323
      %v3890 = vld [vmem:[%s3887] sm:$0x1]
      %v3891 = vsel %vm3889, 0, %v3890
      %3892 = vst [vmem:[%s3887] sm:$0x1] %v3891
      %v3893 = vld [vmem:[%s3887 + $0xc] sm:$0x1]
      %v3894 = vsel %vm3889, 0, %v3893
      %3895 = vst [vmem:[%s3887 + $0xc] sm:$0x1] %v3894
      %v3896 = vld [vmem:[%s3887 + $0x18] sm:$0x1]
      %v3897 = vsel %vm3889, 0, %v3896
      %3898 = vst [vmem:[%s3887 + $0x18] sm:$0x1] %v3897
      %v3899 = vld [vmem:[%s3887 + $0x24] sm:$0x1]
      %v3900 = vsel %vm3889, 0, %v3899
      %3901 = vst [vmem:[%s3887 + $0x24] sm:$0x1] %v3900
      %v3902 = vld [vmem:[%s3887 + $0x30] sm:$0x1]
      %v3903 = vsel %vm3889, 0, %v3902
      %3904 = vst [vmem:[%s3887 + $0x30] sm:$0x1] %v3903
      %v3905 = vld [vmem:[%s3887 + $0x3c] sm:$0x1]
      %v3906 = vsel %vm3889, 0, %v3905
      %3907 = vst [vmem:[%s3887 + $0x3c] sm:$0x1] %v3906
      %v3908 = vld [vmem:[%s3887 + $0x48] sm:$0x1]
      %v3909 = vsel %vm3889, 0, %v3908
      %3910 = vst [vmem:[%s3887 + $0x48] sm:$0x1] %v3909
      %v3911 = vld [vmem:[%s3887 + $0x54] sm:$0x1]
      %v3912 = vsel %vm3889, 0, %v3911
      %3913 = vst [vmem:[%s3887 + $0x54] sm:$0x1] %v3912
      %v3914 = vld [vmem:[%s3887 + $0x60] sm:$0x1]
      %v3915 = vsel %vm3889, 0, %v3914
      %3916 = vst [vmem:[%s3887 + $0x60] sm:$0x1] %v3915
      %v3917 = vld [vmem:[%s3887 + $0x6c] sm:$0x1]
      %v3918 = vsel %vm3889, 0, %v3917
      %3919 = vst [vmem:[%s3887 + $0x6c] sm:$0x1] %v3918
      %v3920 = vld [vmem:[%s3887 + $0x78] sm:$0x1]
      %v3921 = vsel %vm3889, 0, %v3920
      %3922 = vst [vmem:[%s3887 + $0x78] sm:$0x1] %v3921
      %v3923 = vld [vmem:[%s3887 + $0x84] sm:$0x1]
      %v3924 = vsel %vm3889, 0, %v3923
      %3925 = vst [vmem:[%s3887 + $0x84] sm:$0x1] %v3924
      %v3926 = vld [vmem:[%s3887 + $0x90] sm:$0x1]
      %v3927 = vsel %vm3889, 0, %v3926
      %3928 = vst [vmem:[%s3887 + $0x90] sm:$0x1] %v3927
      %v3929 = vld [vmem:[%s3887 + $0x9c] sm:$0x1]
      %v3930 = vsel %vm3889, 0, %v3929
      %3931 = vst [vmem:[%s3887 + $0x9c] sm:$0x1] %v3930
      %v3932 = vld [vmem:[%s3887 + $0xa8] sm:$0x1]
      %v3933 = vsel %vm3889, 0, %v3932
      %3934 = vst [vmem:[%s3887 + $0xa8] sm:$0x1] %v3933
      %v3935 = vld [vmem:[%s3887 + $0xb4] sm:$0x1]
      %v3936 = vsel %vm3889, 0, %v3935
      %3937 = vst [vmem:[%s3887 + $0xb4] sm:$0x1] %v3936
      %vm3938 = vmand %vm3888, %vm373
      %v3939 = vld [vmem:[%s3887 + $0x8] sm:$0x1]
      %v3940 = vsel %vm3938, 0, %v3939
      %3941 = vst [vmem:[%s3887 + $0x8] sm:$0x1] %v3940
      %v3942 = vld [vmem:[%s3887 + $0x14] sm:$0x1]
      %v3943 = vsel %vm3938, 0, %v3942
      %3944 = vst [vmem:[%s3887 + $0x14] sm:$0x1] %v3943
      %v3945 = vld [vmem:[%s3887 + $0x20] sm:$0x1]
      %v3946 = vsel %vm3938, 0, %v3945
      %3947 = vst [vmem:[%s3887 + $0x20] sm:$0x1] %v3946
      %v3948 = vld [vmem:[%s3887 + $0x2c] sm:$0x1]
      %v3949 = vsel %vm3938, 0, %v3948
      %3950 = vst [vmem:[%s3887 + $0x2c] sm:$0x1] %v3949
      %v3951 = vld [vmem:[%s3887 + $0x38] sm:$0x1]
      %v3952 = vsel %vm3938, 0, %v3951
      %3953 = vst [vmem:[%s3887 + $0x38] sm:$0x1] %v3952
      %v3954 = vld [vmem:[%s3887 + $0x44] sm:$0x1]
      %v3955 = vsel %vm3938, 0, %v3954
      %3956 = vst [vmem:[%s3887 + $0x44] sm:$0x1] %v3955
      %v3957 = vld [vmem:[%s3887 + $0x50] sm:$0x1]
      %v3958 = vsel %vm3938, 0, %v3957
      %3959 = vst [vmem:[%s3887 + $0x50] sm:$0x1] %v3958
      %v3960 = vld [vmem:[%s3887 + $0x5c] sm:$0x1]
      %v3961 = vsel %vm3938, 0, %v3960
      %3962 = vst [vmem:[%s3887 + $0x5c] sm:$0x1] %v3961
      %v3963 = vld [vmem:[%s3887 + $0x68] sm:$0x1]
      %v3964 = vsel %vm3938, 0, %v3963
      %3965 = vst [vmem:[%s3887 + $0x68] sm:$0x1] %v3964
      %v3966 = vld [vmem:[%s3887 + $0x74] sm:$0x1]
      %v3967 = vsel %vm3938, 0, %v3966
      %3968 = vst [vmem:[%s3887 + $0x74] sm:$0x1] %v3967
      %v3969 = vld [vmem:[%s3887 + $0x80] sm:$0x1]
      %v3970 = vsel %vm3938, 0, %v3969
      %3971 = vst [vmem:[%s3887 + $0x80] sm:$0x1] %v3970
      %v3972 = vld [vmem:[%s3887 + $0x8c] sm:$0x1]
      %v3973 = vsel %vm3938, 0, %v3972
      %3974 = vst [vmem:[%s3887 + $0x8c] sm:$0x1] %v3973
      %v3975 = vld [vmem:[%s3887 + $0x98] sm:$0x1]
      %v3976 = vsel %vm3938, 0, %v3975
      %3977 = vst [vmem:[%s3887 + $0x98] sm:$0x1] %v3976
      %v3978 = vld [vmem:[%s3887 + $0xa4] sm:$0x1]
      %v3979 = vsel %vm3938, 0, %v3978
      %3980 = vst [vmem:[%s3887 + $0xa4] sm:$0x1] %v3979
      %v3981 = vld [vmem:[%s3887 + $0xb0] sm:$0x1]
      %v3982 = vsel %vm3938, 0, %v3981
      %3983 = vst [vmem:[%s3887 + $0xb0] sm:$0x1] %v3982
      %v3984 = vld [vmem:[%s3887 + $0xbc] sm:$0x1]
      %v3985 = vsel %vm3938, 0, %v3984
      %3986 = vst [vmem:[%s3887 + $0xbc] sm:$0x1] %v3985
      %v3987 = vpack.c.bf16 %v3849, %v3848
      %v3988 = vpack.c.bf16 %v3851, %v3850
      %v3989 = vpack.c.bf16 %v3853, %v3852
      %v3990 = vpack.c.bf16 %v3855, %v3854
      %v3991 = vpack.c.bf16 %v3857, %v3856
      %v3992 = vpack.c.bf16 %v3859, %v3858
      %v3993 = vpack.c.bf16 %v3861, %v3860
      %v3994 = vpack.c.bf16 %v3863, %v3862
      %v3995 = vpack.c.bf16 %v3865, %v3864
      %v3996 = vpack.c.bf16 %v3867, %v3866
      %v3997 = vpack.c.bf16 %v3869, %v3868
      %v3998 = vpack.c.bf16 %v3871, %v3870
      %v3999 = vpack.c.bf16 %v3873, %v3872
      %v4000 = vpack.c.bf16 %v3875, %v3874
      %v4001 = vpack.c.bf16 %v3877, %v3876
      %v4002 = vpack.c.bf16 %v3879, %v3878
      %v4019 = vunpack.c.l.b16 %v3987
      %v4020 = vunpack.c.h.b16 %v3987
      %v4021 = vunpack.c.l.b16 %v3988
      %v4022 = vunpack.c.h.b16 %v3988
      %v4023 = vunpack.c.l.b16 %v3989
      %v4024 = vunpack.c.h.b16 %v3989
      %v4025 = vunpack.c.l.b16 %v3990
      %v4026 = vunpack.c.h.b16 %v3990
      %v4027 = vunpack.c.l.b16 %v3991
      %v4028 = vunpack.c.h.b16 %v3991
      %v4029 = vunpack.c.l.b16 %v3992
      %v4030 = vunpack.c.h.b16 %v3992
      %v4031 = vunpack.c.l.b16 %v3993
      %v4032 = vunpack.c.h.b16 %v3993
      %v4033 = vunpack.c.l.b16 %v3994
      %v4034 = vunpack.c.h.b16 %v3994
      %v4035 = vunpack.c.l.b16 %v3995
      %v4036 = vunpack.c.h.b16 %v3995
      %v4037 = vunpack.c.l.b16 %v3996
      %v4038 = vunpack.c.h.b16 %v3996
      %v4039 = vunpack.c.l.b16 %v3997
      %v4040 = vunpack.c.h.b16 %v3997
      %v4041 = vunpack.c.l.b16 %v3998
      %v4042 = vunpack.c.h.b16 %v3998
      %v4043 = vunpack.c.l.b16 %v3999
      %v4044 = vunpack.c.h.b16 %v3999
      %v4045 = vunpack.c.l.b16 %v4000
      %v4046 = vunpack.c.h.b16 %v4000
      %v4047 = vunpack.c.l.b16 %v4001
      %v4048 = vunpack.c.h.b16 %v4001
      %v4049 = vunpack.c.l.b16 %v4002
      %v4050 = vunpack.c.h.b16 %v4002
      %v4051 = vpack.c.b16 %v4019, %v4019
      %v4052 = vpack.c.b16 %v4020, %v4020
      %v4053 = vpack.c.b16 %v4021, %v4021
      %v4054 = vpack.c.b16 %v4022, %v4022
      %v4055 = vpack.c.b16 %v4023, %v4023
      %v4056 = vpack.c.b16 %v4024, %v4024
      %v4057 = vpack.c.b16 %v4025, %v4025
      %v4058 = vpack.c.b16 %v4026, %v4026
      %v4059 = vpack.c.b16 %v4027, %v4027
      %v4060 = vpack.c.b16 %v4028, %v4028
      %v4061 = vpack.c.b16 %v4029, %v4029
      %v4062 = vpack.c.b16 %v4030, %v4030
      %v4063 = vpack.c.b16 %v4031, %v4031
      %v4064 = vpack.c.b16 %v4032, %v4032
      %v4065 = vpack.c.b16 %v4033, %v4033
      %v4066 = vpack.c.b16 %v4034, %v4034
      %v4067 = vpack.c.b16 %v4035, %v4035
      %v4068 = vpack.c.b16 %v4036, %v4036
      %v4069 = vpack.c.b16 %v4037, %v4037
      %v4070 = vpack.c.b16 %v4038, %v4038
      %v4071 = vpack.c.b16 %v4039, %v4039
      %v4072 = vpack.c.b16 %v4040, %v4040
      %v4073 = vpack.c.b16 %v4041, %v4041
      %v4074 = vpack.c.b16 %v4042, %v4042
      %v4075 = vpack.c.b16 %v4043, %v4043
      %v4076 = vpack.c.b16 %v4044, %v4044
      %v4077 = vpack.c.b16 %v4045, %v4045
      %v4078 = vpack.c.b16 %v4046, %v4046
      %v4079 = vpack.c.b16 %v4047, %v4047
      %v4080 = vpack.c.b16 %v4048, %v4048
      %v4081 = vpack.c.b16 %v4049, %v4049
      %v4082 = vpack.c.b16 %v4050, %v4050
      %v4084 = vshrl.u32 %v4051, 16
      %v4086 = vrot.slane %v4084, 7
      %v4087 = vshll.u32 %v4051, 16
      %v4089 = vor.u32 %v4086, %v4087
      %v4090 = vrot.slane %v4086, 4
      %v4092 = vshrl.u32 %v4052, 16
      %v4094 = vrot.slane %v4092, 7
      %v4095 = vshll.u32 %v4052, 16
      %v4097 = vor.u32 %v4094, %v4095
      %v4098 = vsel %vm520, %v4090, %v4097
      %v4099 = vrot.slane %v4094, 4
      %v4101 = vshrl.u32 %v4053, 16
      %v4103 = vrot.slane %v4101, 7
      %v4104 = vshll.u32 %v4053, 16
      %v4106 = vor.u32 %v4103, %v4104
      %v4107 = vrot.slane %v4103, 4
      %v4109 = vshrl.u32 %v4054, 16
      %v4111 = vrot.slane %v4109, 7
      %v4112 = vshll.u32 %v4054, 16
      %v4114 = vor.u32 %v4111, %v4112
      %v4115 = vsel %vm520, %v4107, %v4114
      %v4116 = vrot.slane %v4111, 4
      %v4118 = vshrl.u32 %v4055, 16
      %v4120 = vrot.slane %v4118, 7
      %v4121 = vshll.u32 %v4055, 16
      %v4123 = vor.u32 %v4120, %v4121
      %v4124 = vrot.slane %v4120, 4
      %v4126 = vshrl.u32 %v4056, 16
      %v4128 = vrot.slane %v4126, 7
      %v4129 = vshll.u32 %v4056, 16
      %v4131 = vor.u32 %v4128, %v4129
      %v4132 = vsel %vm520, %v4124, %v4131
      %v4133 = vrot.slane %v4128, 4
      %v4135 = vshrl.u32 %v4057, 16
      %v4137 = vrot.slane %v4135, 7
      %v4138 = vshll.u32 %v4057, 16
      %v4140 = vor.u32 %v4137, %v4138
      %v4141 = vrot.slane %v4137, 4
      %v4143 = vshrl.u32 %v4058, 16
      %v4145 = vrot.slane %v4143, 7
      %v4146 = vshll.u32 %v4058, 16
      %v4148 = vor.u32 %v4145, %v4146
      %v4149 = vsel %vm520, %v4141, %v4148
      %v4150 = vrot.slane %v4145, 4
      %v4152 = vshrl.u32 %v4059, 16
      %v4154 = vrot.slane %v4152, 7
      %v4155 = vshll.u32 %v4059, 16
      %v4157 = vor.u32 %v4154, %v4155
      %v4158 = vrot.slane %v4154, 4
      %v4160 = vshrl.u32 %v4060, 16
      %v4162 = vrot.slane %v4160, 7
      %v4163 = vshll.u32 %v4060, 16
      %v4165 = vor.u32 %v4162, %v4163
      %v4166 = vsel %vm520, %v4158, %v4165
      %v4167 = vrot.slane %v4162, 4
      %v4169 = vshrl.u32 %v4061, 16
      %v4171 = vrot.slane %v4169, 7
      %v4172 = vshll.u32 %v4061, 16
      %v4174 = vor.u32 %v4171, %v4172
      %v4175 = vrot.slane %v4171, 4
      %v4177 = vshrl.u32 %v4062, 16
      %v4179 = vrot.slane %v4177, 7
      %v4180 = vshll.u32 %v4062, 16
      %v4182 = vor.u32 %v4179, %v4180
      %v4183 = vsel %vm520, %v4175, %v4182
      %v4184 = vrot.slane %v4179, 4
      %v4186 = vshrl.u32 %v4063, 16
      %v4188 = vrot.slane %v4186, 7
      %v4189 = vshll.u32 %v4063, 16
      %v4191 = vor.u32 %v4188, %v4189
      %v4192 = vrot.slane %v4188, 4
      %v4194 = vshrl.u32 %v4064, 16
      %v4196 = vrot.slane %v4194, 7
      %v4197 = vshll.u32 %v4064, 16
      %v4199 = vor.u32 %v4196, %v4197
      %v4200 = vsel %vm520, %v4192, %v4199
      %v4201 = vrot.slane %v4196, 4
      %v4203 = vshrl.u32 %v4065, 16
      %v4205 = vrot.slane %v4203, 7
      %v4206 = vshll.u32 %v4065, 16
      %v4208 = vor.u32 %v4205, %v4206
      %v4209 = vrot.slane %v4205, 4
      %v4211 = vshrl.u32 %v4066, 16
      %v4213 = vrot.slane %v4211, 7
      %v4214 = vshll.u32 %v4066, 16
      %v4216 = vor.u32 %v4213, %v4214
      %v4217 = vsel %vm520, %v4209, %v4216
      %v4218 = vrot.slane %v4213, 4
      %v4220 = vshrl.u32 %v4067, 16
      %v4222 = vrot.slane %v4220, 7
      %v4223 = vshll.u32 %v4067, 16
      %v4225 = vor.u32 %v4222, %v4223
      %v4226 = vrot.slane %v4222, 4
      %v4228 = vshrl.u32 %v4068, 16
      %v4230 = vrot.slane %v4228, 7
      %v4231 = vshll.u32 %v4068, 16
      %v4233 = vor.u32 %v4230, %v4231
      %v4234 = vsel %vm520, %v4226, %v4233
      %v4235 = vrot.slane %v4230, 4
      %v4237 = vshrl.u32 %v4069, 16
      %v4239 = vrot.slane %v4237, 7
      %v4240 = vshll.u32 %v4069, 16
      %v4242 = vor.u32 %v4239, %v4240
      %v4243 = vrot.slane %v4239, 4
      %v4245 = vshrl.u32 %v4070, 16
      %v4247 = vrot.slane %v4245, 7
      %v4248 = vshll.u32 %v4070, 16
      %v4250 = vor.u32 %v4247, %v4248
      %v4251 = vsel %vm520, %v4243, %v4250
      %v4252 = vrot.slane %v4247, 4
      %v4254 = vshrl.u32 %v4071, 16
      %v4256 = vrot.slane %v4254, 7
      %v4257 = vshll.u32 %v4071, 16
      %v4259 = vor.u32 %v4256, %v4257
      %v4260 = vrot.slane %v4256, 4
      %v4262 = vshrl.u32 %v4072, 16
      %v4264 = vrot.slane %v4262, 7
      %v4265 = vshll.u32 %v4072, 16
      %v4267 = vor.u32 %v4264, %v4265
      %v4268 = vsel %vm520, %v4260, %v4267
      %v4269 = vrot.slane %v4264, 4
      %v4271 = vshrl.u32 %v4073, 16
      %v4273 = vrot.slane %v4271, 7
      %v4274 = vshll.u32 %v4073, 16
      %v4276 = vor.u32 %v4273, %v4274
      %v4277 = vrot.slane %v4273, 4
      %v4279 = vshrl.u32 %v4074, 16
      %v4281 = vrot.slane %v4279, 7
      %v4282 = vshll.u32 %v4074, 16
      %v4284 = vor.u32 %v4281, %v4282
      %v4285 = vsel %vm520, %v4277, %v4284
      %v4286 = vrot.slane %v4281, 4
      %v4288 = vshrl.u32 %v4075, 16
      %v4290 = vrot.slane %v4288, 7
      %v4291 = vshll.u32 %v4075, 16
      %v4293 = vor.u32 %v4290, %v4291
      %v4294 = vrot.slane %v4290, 4
      %v4296 = vshrl.u32 %v4076, 16
      %v4298 = vrot.slane %v4296, 7
      %v4299 = vshll.u32 %v4076, 16
      %v4301 = vor.u32 %v4298, %v4299
      %v4302 = vsel %vm520, %v4294, %v4301
      %v4303 = vrot.slane %v4298, 4
      %v4305 = vshrl.u32 %v4077, 16
      %v4307 = vrot.slane %v4305, 7
      %v4308 = vshll.u32 %v4077, 16
      %v4310 = vor.u32 %v4307, %v4308
      %v4311 = vrot.slane %v4307, 4
      %v4313 = vshrl.u32 %v4078, 16
      %v4315 = vrot.slane %v4313, 7
      %v4316 = vshll.u32 %v4078, 16
      %v4318 = vor.u32 %v4315, %v4316
      %v4319 = vsel %vm520, %v4311, %v4318
      %v4320 = vrot.slane %v4315, 4
      %v4322 = vshrl.u32 %v4079, 16
      %v4324 = vrot.slane %v4322, 7
      %v4325 = vshll.u32 %v4079, 16
      %v4327 = vor.u32 %v4324, %v4325
      %v4328 = vrot.slane %v4324, 4
      %v4330 = vshrl.u32 %v4080, 16
      %v4332 = vrot.slane %v4330, 7
      %v4333 = vshll.u32 %v4080, 16
      %v4335 = vor.u32 %v4332, %v4333
      %v4336 = vsel %vm520, %v4328, %v4335
      %v4337 = vrot.slane %v4332, 4
      %v4339 = vshrl.u32 %v4081, 16
      %v4341 = vrot.slane %v4339, 7
      %v4342 = vshll.u32 %v4081, 16
      %v4344 = vor.u32 %v4341, %v4342
      %v4345 = vrot.slane %v4341, 4
      %v4347 = vshrl.u32 %v4082, 16
      %v4349 = vrot.slane %v4347, 7
      %v4350 = vshll.u32 %v4082, 16
      %v4352 = vor.u32 %v4349, %v4350
      %v4353 = vsel %vm520, %v4345, %v4352
      %v4354 = vrot.slane %v4349, 4
      %vm4403 = vcmask 1043456
      %vm4404 = vmand %vm4403, %vm373
      %v4405 = vld [vmem:[%s3887] sm:$0xf]
      %v4406 = vsel %vm4404, %v4089, %v4405
      %4407 = vst [vmem:[%s3887] sm:$0xf] %v4406
      %4408 = vst [vmem:[%s3887 + $0x4] sm:$0xf] %v4098
      %v4409 = vld [vmem:[%s3887 + $0x8] sm:$0x1]
      %v4410 = vsel %vm3889, %v4099, %v4409
      %4411 = vst [vmem:[%s3887 + $0x8] sm:$0x1] %v4410
      %v4412 = vld [vmem:[%s3887 + $0xc] sm:$0xf]
      %v4413 = vsel %vm4404, %v4106, %v4412
      %4414 = vst [vmem:[%s3887 + $0xc] sm:$0xf] %v4413
      %4415 = vst [vmem:[%s3887 + $0x10] sm:$0xf] %v4115
      %v4416 = vld [vmem:[%s3887 + $0x14] sm:$0x1]
      %v4417 = vsel %vm3889, %v4116, %v4416
      %4418 = vst [vmem:[%s3887 + $0x14] sm:$0x1] %v4417
      %v4419 = vld [vmem:[%s3887 + $0x18] sm:$0xf]
      %v4420 = vsel %vm4404, %v4123, %v4419
      %4421 = vst [vmem:[%s3887 + $0x18] sm:$0xf] %v4420
      %4422 = vst [vmem:[%s3887 + $0x1c] sm:$0xf] %v4132
      %v4423 = vld [vmem:[%s3887 + $0x20] sm:$0x1]
      %v4424 = vsel %vm3889, %v4133, %v4423
      %4425 = vst [vmem:[%s3887 + $0x20] sm:$0x1] %v4424
      %v4426 = vld [vmem:[%s3887 + $0x24] sm:$0xf]
      %v4427 = vsel %vm4404, %v4140, %v4426
      %4428 = vst [vmem:[%s3887 + $0x24] sm:$0xf] %v4427
      %4429 = vst [vmem:[%s3887 + $0x28] sm:$0xf] %v4149
      %v4430 = vld [vmem:[%s3887 + $0x2c] sm:$0x1]
      %v4431 = vsel %vm3889, %v4150, %v4430
      %4432 = vst [vmem:[%s3887 + $0x2c] sm:$0x1] %v4431
      %v4433 = vld [vmem:[%s3887 + $0x30] sm:$0xf]
      %v4434 = vsel %vm4404, %v4157, %v4433
      %4435 = vst [vmem:[%s3887 + $0x30] sm:$0xf] %v4434
      %4436 = vst [vmem:[%s3887 + $0x34] sm:$0xf] %v4166
      %v4437 = vld [vmem:[%s3887 + $0x38] sm:$0x1]
      %v4438 = vsel %vm3889, %v4167, %v4437
      %4439 = vst [vmem:[%s3887 + $0x38] sm:$0x1] %v4438
      %v4440 = vld [vmem:[%s3887 + $0x3c] sm:$0xf]
      %v4441 = vsel %vm4404, %v4174, %v4440
      %4442 = vst [vmem:[%s3887 + $0x3c] sm:$0xf] %v4441
      %4443 = vst [vmem:[%s3887 + $0x40] sm:$0xf] %v4183
      %v4444 = vld [vmem:[%s3887 + $0x44] sm:$0x1]
      %v4445 = vsel %vm3889, %v4184, %v4444
      %4446 = vst [vmem:[%s3887 + $0x44] sm:$0x1] %v4445
      %v4447 = vld [vmem:[%s3887 + $0x48] sm:$0xf]
      %v4448 = vsel %vm4404, %v4191, %v4447
      %4449 = vst [vmem:[%s3887 + $0x48] sm:$0xf] %v4448
      %4450 = vst [vmem:[%s3887 + $0x4c] sm:$0xf] %v4200
      %v4451 = vld [vmem:[%s3887 + $0x50] sm:$0x1]
      %v4452 = vsel %vm3889, %v4201, %v4451
      %4453 = vst [vmem:[%s3887 + $0x50] sm:$0x1] %v4452
      %v4454 = vld [vmem:[%s3887 + $0x54] sm:$0xf]
      %v4455 = vsel %vm4404, %v4208, %v4454
      %4456 = vst [vmem:[%s3887 + $0x54] sm:$0xf] %v4455
      %4457 = vst [vmem:[%s3887 + $0x58] sm:$0xf] %v4217
      %v4458 = vld [vmem:[%s3887 + $0x5c] sm:$0x1]
      %v4459 = vsel %vm3889, %v4218, %v4458
      %4460 = vst [vmem:[%s3887 + $0x5c] sm:$0x1] %v4459
      %v4461 = vld [vmem:[%s3887 + $0x60] sm:$0xf]
      %v4462 = vsel %vm4404, %v4225, %v4461
      %4463 = vst [vmem:[%s3887 + $0x60] sm:$0xf] %v4462
      %4464 = vst [vmem:[%s3887 + $0x64] sm:$0xf] %v4234
      %v4465 = vld [vmem:[%s3887 + $0x68] sm:$0x1]
      %v4466 = vsel %vm3889, %v4235, %v4465
      %4467 = vst [vmem:[%s3887 + $0x68] sm:$0x1] %v4466
      %v4468 = vld [vmem:[%s3887 + $0x6c] sm:$0xf]
      %v4469 = vsel %vm4404, %v4242, %v4468
      %4470 = vst [vmem:[%s3887 + $0x6c] sm:$0xf] %v4469
      %4471 = vst [vmem:[%s3887 + $0x70] sm:$0xf] %v4251
      %v4472 = vld [vmem:[%s3887 + $0x74] sm:$0x1]
      %v4473 = vsel %vm3889, %v4252, %v4472
      %4474 = vst [vmem:[%s3887 + $0x74] sm:$0x1] %v4473
      %v4475 = vld [vmem:[%s3887 + $0x78] sm:$0xf]
      %v4476 = vsel %vm4404, %v4259, %v4475
      %4477 = vst [vmem:[%s3887 + $0x78] sm:$0xf] %v4476
      %4478 = vst [vmem:[%s3887 + $0x7c] sm:$0xf] %v4268
      %v4479 = vld [vmem:[%s3887 + $0x80] sm:$0x1]
      %v4480 = vsel %vm3889, %v4269, %v4479
      %4481 = vst [vmem:[%s3887 + $0x80] sm:$0x1] %v4480
      %v4482 = vld [vmem:[%s3887 + $0x84] sm:$0xf]
      %v4483 = vsel %vm4404, %v4276, %v4482
      %4484 = vst [vmem:[%s3887 + $0x84] sm:$0xf] %v4483
      %4485 = vst [vmem:[%s3887 + $0x88] sm:$0xf] %v4285
      %v4486 = vld [vmem:[%s3887 + $0x8c] sm:$0x1]
      %v4487 = vsel %vm3889, %v4286, %v4486
      %4488 = vst [vmem:[%s3887 + $0x8c] sm:$0x1] %v4487
      %v4489 = vld [vmem:[%s3887 + $0x90] sm:$0xf]
      %v4490 = vsel %vm4404, %v4293, %v4489
      %4491 = vst [vmem:[%s3887 + $0x90] sm:$0xf] %v4490
      %4492 = vst [vmem:[%s3887 + $0x94] sm:$0xf] %v4302
      %v4493 = vld [vmem:[%s3887 + $0x98] sm:$0x1]
      %v4494 = vsel %vm3889, %v4303, %v4493
      %4495 = vst [vmem:[%s3887 + $0x98] sm:$0x1] %v4494
      %v4496 = vld [vmem:[%s3887 + $0x9c] sm:$0xf]
      %v4497 = vsel %vm4404, %v4310, %v4496
      %4498 = vst [vmem:[%s3887 + $0x9c] sm:$0xf] %v4497
      %4499 = vst [vmem:[%s3887 + $0xa0] sm:$0xf] %v4319
      %v4500 = vld [vmem:[%s3887 + $0xa4] sm:$0x1]
      %v4501 = vsel %vm3889, %v4320, %v4500
      %4502 = vst [vmem:[%s3887 + $0xa4] sm:$0x1] %v4501
      %v4503 = vld [vmem:[%s3887 + $0xa8] sm:$0xf]
      %v4504 = vsel %vm4404, %v4327, %v4503
      %4505 = vst [vmem:[%s3887 + $0xa8] sm:$0xf] %v4504
      %4506 = vst [vmem:[%s3887 + $0xac] sm:$0xf] %v4336
      %v4507 = vld [vmem:[%s3887 + $0xb0] sm:$0x1]
      %v4508 = vsel %vm3889, %v4337, %v4507
      %4509 = vst [vmem:[%s3887 + $0xb0] sm:$0x1] %v4508
      %v4510 = vld [vmem:[%s3887 + $0xb4] sm:$0xf]
      %v4511 = vsel %vm4404, %v4344, %v4510
      %4512 = vst [vmem:[%s3887 + $0xb4] sm:$0xf] %v4511
      %4513 = vst [vmem:[%s3887 + $0xb8] sm:$0xf] %v4353
      %v4514 = vld [vmem:[%s3887 + $0xbc] sm:$0x1]
      %v4515 = vsel %vm3889, %v4354, %v4514
      %4516 = vst [vmem:[%s3887 + $0xbc] sm:$0x1] %v4515
      %v4517 = vld [vmem:[#allocation3] sm:$0xf]
      %v4518 = vld [vmem:[#allocation3 + $0x4] sm:$0xf]
      %v4519 = vld [vmem:[#allocation3 + $0xc] sm:$0xf]
      %v4520 = vld [vmem:[#allocation3 + $0x10] sm:$0xf]
      %v4521 = vld [vmem:[#allocation3 + $0x18] sm:$0xf]
      %v4522 = vld [vmem:[#allocation3 + $0x1c] sm:$0xf]
      %v4523 = vld [vmem:[#allocation3 + $0x24] sm:$0xf]
      %v4524 = vld [vmem:[#allocation3 + $0x28] sm:$0xf]
      %v4525 = vld [vmem:[#allocation3 + $0x30] sm:$0xf]
      %v4526 = vld [vmem:[#allocation3 + $0x34] sm:$0xf]
      %v4527 = vld [vmem:[#allocation3 + $0x3c] sm:$0xf]
      %v4528 = vld [vmem:[#allocation3 + $0x40] sm:$0xf]
      %v4529 = vld [vmem:[#allocation3 + $0x48] sm:$0xf]
      %v4530 = vld [vmem:[#allocation3 + $0x4c] sm:$0xf]
      %v4531 = vld [vmem:[#allocation3 + $0x54] sm:$0xf]
      %v4532 = vld [vmem:[#allocation3 + $0x58] sm:$0xf]
      %v4533 = vld [vmem:[#allocation3 + $0x60] sm:$0xf]
      %v4534 = vld [vmem:[#allocation3 + $0x64] sm:$0xf]
      %v4535 = vld [vmem:[#allocation3 + $0x6c] sm:$0xf]
      %v4536 = vld [vmem:[#allocation3 + $0x70] sm:$0xf]
      %v4537 = vld [vmem:[#allocation3 + $0x78] sm:$0xf]
      %v4538 = vld [vmem:[#allocation3 + $0x7c] sm:$0xf]
      %v4539 = vld [vmem:[#allocation3 + $0x84] sm:$0xf]
      %v4540 = vld [vmem:[#allocation3 + $0x88] sm:$0xf]
      %v4541 = vld [vmem:[#allocation3 + $0x90] sm:$0xf]
      %v4542 = vld [vmem:[#allocation3 + $0x94] sm:$0xf]
      %v4543 = vld [vmem:[#allocation3 + $0x9c] sm:$0xf]
      %v4544 = vld [vmem:[#allocation3 + $0xa0] sm:$0xf]
      %v4545 = vld [vmem:[#allocation3 + $0xa8] sm:$0xf]
      %v4546 = vld [vmem:[#allocation3 + $0xac] sm:$0xf]
      %v4547 = vld [vmem:[#allocation3 + $0xb4] sm:$0xf]
      %v4548 = vld [vmem:[#allocation3 + $0xb8] sm:$0xf]
      %v4549 = vld [vmem:[#allocation3 + $0xc0] sm:$0xf]
      %v4550 = vld [vmem:[#allocation3 + $0xc4] sm:$0xf]
      %v4551 = vld [vmem:[#allocation3 + $0xcc] sm:$0xf]
      %v4552 = vld [vmem:[#allocation3 + $0xd0] sm:$0xf]
      %v4553 = vld [vmem:[#allocation3 + $0x8] sm:$0x1]
      %v4554 = vld [vmem:[#allocation3 + $0x14] sm:$0x1]
      %v4555 = vld [vmem:[#allocation3 + $0x20] sm:$0x1]
      %v4556 = vld [vmem:[#allocation3 + $0x2c] sm:$0x1]
      %v4557 = vld [vmem:[#allocation3 + $0x38] sm:$0x1]
      %v4558 = vld [vmem:[#allocation3 + $0x44] sm:$0x1]
      %v4559 = vld [vmem:[#allocation3 + $0x50] sm:$0x1]
      %v4560 = vld [vmem:[#allocation3 + $0x5c] sm:$0x1]
      %v4561 = vld [vmem:[#allocation3 + $0x68] sm:$0x1]
      %v4562 = vld [vmem:[#allocation3 + $0x74] sm:$0x1]
      %v4563 = vld [vmem:[#allocation3 + $0x80] sm:$0x1]
      %v4564 = vld [vmem:[#allocation3 + $0x8c] sm:$0x1]
      %v4565 = vld [vmem:[#allocation3 + $0x98] sm:$0x1]
      %v4566 = vld [vmem:[#allocation3 + $0xa4] sm:$0x1]
      %v4567 = vld [vmem:[#allocation3 + $0xb0] sm:$0x1]
      %v4568 = vld [vmem:[#allocation3 + $0xbc] sm:$0x1]
      %v4569 = vld [vmem:[#allocation3 + $0xc8] sm:$0x1]
      %v4570 = vld [vmem:[#allocation3 + $0xd4] sm:$0x1]
      %v4571 = vld [vmem:[#allocation3] sm:$0xe]
      %v4572 = vld [vmem:[#allocation3 + $0xc] sm:$0xe]
      %v4573 = vld [vmem:[#allocation3 + $0x18] sm:$0xe]
      %v4574 = vld [vmem:[#allocation3 + $0x24] sm:$0xe]
      %v4575 = vld [vmem:[#allocation3 + $0x30] sm:$0xe]
      %v4576 = vld [vmem:[#allocation3 + $0x3c] sm:$0xe]
      %v4577 = vld [vmem:[#allocation3 + $0x48] sm:$0xe]
      %v4578 = vld [vmem:[#allocation3 + $0x54] sm:$0xe]
      %v4579 = vld [vmem:[#allocation3 + $0x60] sm:$0xe]
      %v4580 = vld [vmem:[#allocation3 + $0x6c] sm:$0xe]
      %v4581 = vld [vmem:[#allocation3 + $0x78] sm:$0xe]
      %v4582 = vld [vmem:[#allocation3 + $0x84] sm:$0xe]
      %v4583 = vld [vmem:[#allocation3 + $0x90] sm:$0xe]
      %v4584 = vld [vmem:[#allocation3 + $0x9c] sm:$0xe]
      %v4585 = vld [vmem:[#allocation3 + $0xa8] sm:$0xe]
      %v4586 = vld [vmem:[#allocation3 + $0xb4] sm:$0xe]
      %v4587 = vld [vmem:[#allocation3 + $0xc0] sm:$0xe]
      %v4588 = vld [vmem:[#allocation3 + $0xcc] sm:$0xe]
      %v4589 = vld [vmem:[%s4] sm:$0xf]
      %v4590 = vld [vmem:[%s4 + $0x4] sm:$0xf]
      %v4591 = vld [vmem:[%s4 + $0x8] sm:$0xf]
      %v4592 = vld [vmem:[%s4 + $0xc] sm:$0xf]
      %v4593 = vld [vmem:[%s4 + $0x10] sm:$0xf]
      %v4594 = vld [vmem:[%s4 + $0x14] sm:$0xf]
      %v4595 = vld [vmem:[%s4 + $0x18] sm:$0xf]
      %v4596 = vld [vmem:[%s4 + $0x1c] sm:$0xf]
      %v4597 = vld [vmem:[%s4 + $0x20] sm:$0xf]
      %v4598 = vld [vmem:[%s4 + $0x24] sm:$0xf]
      %v4599 = vld [vmem:[%s4 + $0x28] sm:$0xf]
      %v4600 = vld [vmem:[%s4 + $0x2c] sm:$0xf]
      %v4601 = vld [vmem:[%s4 + $0x30] sm:$0xf]
      %v4602 = vld [vmem:[%s4 + $0x34] sm:$0xf]
      %v4603 = vld [vmem:[%s4 + $0x38] sm:$0xf]
      %v4604 = vld [vmem:[%s4 + $0x3c] sm:$0xf]
      %v4606 = vshrl.u32 %v4517, 16
      %v4608 = vrot.slane %v4606, 4
      %v4609 = vshll.u32 %v4517, 16
      %v4611 = vrot.slane %v4609, 5
      %v4612 = vor.u32 %v4608, %v4611
      %v4613 = vrot.slane %v4612, 4
      %v4615 = vshll.u32 %v4518, 16
      %v4617 = vrot.slane %v4615, 5
      %v4618 = vsel %vm1030, %v4613, %v4617
      %v4619 = vshrl.u32 %v4518, 16
      %v4621 = vrot.slane %v4619, 4
      %v4622 = vor.u32 %v4621, %v4617
      %v4623 = vrot.slane %v4622, 4
      %v4625 = vshll.u32 %v4553, 16
      %v4627 = vrot.slane %v4625, 5
      %v4628 = vsel %vm1030, %v4623, %v4627
      %v4630 = vshrl.u32 %v4519, 16
      %v4632 = vrot.slane %v4630, 4
      %v4633 = vshll.u32 %v4519, 16
      %v4635 = vrot.slane %v4633, 5
      %v4636 = vor.u32 %v4632, %v4635
      %v4637 = vrot.slane %v4636, 4
      %v4639 = vshll.u32 %v4520, 16
      %v4641 = vrot.slane %v4639, 5
      %v4642 = vsel %vm1030, %v4637, %v4641
      %v4643 = vshrl.u32 %v4520, 16
      %v4645 = vrot.slane %v4643, 4
      %v4646 = vor.u32 %v4645, %v4641
      %v4647 = vrot.slane %v4646, 4
      %v4649 = vshll.u32 %v4554, 16
      %v4651 = vrot.slane %v4649, 5
      %v4652 = vsel %vm1030, %v4647, %v4651
      %v4654 = vshrl.u32 %v4521, 16
      %v4656 = vrot.slane %v4654, 4
      %v4657 = vshll.u32 %v4521, 16
      %v4659 = vrot.slane %v4657, 5
      %v4660 = vor.u32 %v4656, %v4659
      %v4661 = vrot.slane %v4660, 4
      %v4663 = vshll.u32 %v4522, 16
      %v4665 = vrot.slane %v4663, 5
      %v4666 = vsel %vm1030, %v4661, %v4665
      %v4667 = vshrl.u32 %v4522, 16
      %v4669 = vrot.slane %v4667, 4
      %v4670 = vor.u32 %v4669, %v4665
      %v4671 = vrot.slane %v4670, 4
      %v4673 = vshll.u32 %v4555, 16
      %v4675 = vrot.slane %v4673, 5
      %v4676 = vsel %vm1030, %v4671, %v4675
      %v4678 = vshrl.u32 %v4523, 16
      %v4680 = vrot.slane %v4678, 4
      %v4681 = vshll.u32 %v4523, 16
      %v4683 = vrot.slane %v4681, 5
      %v4684 = vor.u32 %v4680, %v4683
      %v4685 = vrot.slane %v4684, 4
      %v4687 = vshll.u32 %v4524, 16
      %v4689 = vrot.slane %v4687, 5
      %v4690 = vsel %vm1030, %v4685, %v4689
      %v4691 = vshrl.u32 %v4524, 16
      %v4693 = vrot.slane %v4691, 4
      %v4694 = vor.u32 %v4693, %v4689
      %v4695 = vrot.slane %v4694, 4
      %v4697 = vshll.u32 %v4556, 16
      %v4699 = vrot.slane %v4697, 5
      %v4700 = vsel %vm1030, %v4695, %v4699
      %v4702 = vshrl.u32 %v4525, 16
      %v4704 = vrot.slane %v4702, 4
      %v4705 = vshll.u32 %v4525, 16
      %v4707 = vrot.slane %v4705, 5
      %v4708 = vor.u32 %v4704, %v4707
      %v4709 = vrot.slane %v4708, 4
      %v4711 = vshll.u32 %v4526, 16
      %v4713 = vrot.slane %v4711, 5
      %v4714 = vsel %vm1030, %v4709, %v4713
      %v4715 = vshrl.u32 %v4526, 16
      %v4717 = vrot.slane %v4715, 4
      %v4718 = vor.u32 %v4717, %v4713
      %v4719 = vrot.slane %v4718, 4
      %v4721 = vshll.u32 %v4557, 16
      %v4723 = vrot.slane %v4721, 5
      %v4724 = vsel %vm1030, %v4719, %v4723
      %v4726 = vshrl.u32 %v4527, 16
      %v4728 = vrot.slane %v4726, 4
      %v4729 = vshll.u32 %v4527, 16
      %v4731 = vrot.slane %v4729, 5
      %v4732 = vor.u32 %v4728, %v4731
      %v4733 = vrot.slane %v4732, 4
      %v4735 = vshll.u32 %v4528, 16
      %v4737 = vrot.slane %v4735, 5
      %v4738 = vsel %vm1030, %v4733, %v4737
      %v4739 = vshrl.u32 %v4528, 16
      %v4741 = vrot.slane %v4739, 4
      %v4742 = vor.u32 %v4741, %v4737
      %v4743 = vrot.slane %v4742, 4
      %v4745 = vshll.u32 %v4558, 16
      %v4747 = vrot.slane %v4745, 5
      %v4748 = vsel %vm1030, %v4743, %v4747
      %v4750 = vshrl.u32 %v4529, 16
      %v4752 = vrot.slane %v4750, 4
      %v4753 = vshll.u32 %v4529, 16
      %v4755 = vrot.slane %v4753, 5
      %v4756 = vor.u32 %v4752, %v4755
      %v4757 = vrot.slane %v4756, 4
      %v4759 = vshll.u32 %v4530, 16
      %v4761 = vrot.slane %v4759, 5
      %v4762 = vsel %vm1030, %v4757, %v4761
      %v4763 = vshrl.u32 %v4530, 16
      %v4765 = vrot.slane %v4763, 4
      %v4766 = vor.u32 %v4765, %v4761
      %v4767 = vrot.slane %v4766, 4
      %v4769 = vshll.u32 %v4559, 16
      %v4771 = vrot.slane %v4769, 5
      %v4772 = vsel %vm1030, %v4767, %v4771
      %v4774 = vshrl.u32 %v4531, 16
      %v4776 = vrot.slane %v4774, 4
      %v4777 = vshll.u32 %v4531, 16
      %v4779 = vrot.slane %v4777, 5
      %v4780 = vor.u32 %v4776, %v4779
      %v4781 = vrot.slane %v4780, 4
      %v4783 = vshll.u32 %v4532, 16
      %v4785 = vrot.slane %v4783, 5
      %v4786 = vsel %vm1030, %v4781, %v4785
      %v4787 = vshrl.u32 %v4532, 16
      %v4789 = vrot.slane %v4787, 4
      %v4790 = vor.u32 %v4789, %v4785
      %v4791 = vrot.slane %v4790, 4
      %v4793 = vshll.u32 %v4560, 16
      %v4795 = vrot.slane %v4793, 5
      %v4796 = vsel %vm1030, %v4791, %v4795
      %v4798 = vshrl.u32 %v4533, 16
      %v4800 = vrot.slane %v4798, 4
      %v4801 = vshll.u32 %v4533, 16
      %v4803 = vrot.slane %v4801, 5
      %v4804 = vor.u32 %v4800, %v4803
      %v4805 = vrot.slane %v4804, 4
      %v4807 = vshll.u32 %v4534, 16
      %v4809 = vrot.slane %v4807, 5
      %v4810 = vsel %vm1030, %v4805, %v4809
      %v4811 = vshrl.u32 %v4534, 16
      %v4813 = vrot.slane %v4811, 4
      %v4814 = vor.u32 %v4813, %v4809
      %v4815 = vrot.slane %v4814, 4
      %v4817 = vshll.u32 %v4561, 16
      %v4819 = vrot.slane %v4817, 5
      %v4820 = vsel %vm1030, %v4815, %v4819
      %v4822 = vshrl.u32 %v4535, 16
      %v4824 = vrot.slane %v4822, 4
      %v4825 = vshll.u32 %v4535, 16
      %v4827 = vrot.slane %v4825, 5
      %v4828 = vor.u32 %v4824, %v4827
      %v4829 = vrot.slane %v4828, 4
      %v4831 = vshll.u32 %v4536, 16
      %v4833 = vrot.slane %v4831, 5
      %v4834 = vsel %vm1030, %v4829, %v4833
      %v4835 = vshrl.u32 %v4536, 16
      %v4837 = vrot.slane %v4835, 4
      %v4838 = vor.u32 %v4837, %v4833
      %v4839 = vrot.slane %v4838, 4
      %v4841 = vshll.u32 %v4562, 16
      %v4843 = vrot.slane %v4841, 5
      %v4844 = vsel %vm1030, %v4839, %v4843
      %v4846 = vshrl.u32 %v4537, 16
      %v4848 = vrot.slane %v4846, 4
      %v4849 = vshll.u32 %v4537, 16
      %v4851 = vrot.slane %v4849, 5
      %v4852 = vor.u32 %v4848, %v4851
      %v4853 = vrot.slane %v4852, 4
      %v4855 = vshll.u32 %v4538, 16
      %v4857 = vrot.slane %v4855, 5
      %v4858 = vsel %vm1030, %v4853, %v4857
      %v4859 = vshrl.u32 %v4538, 16
      %v4861 = vrot.slane %v4859, 4
      %v4862 = vor.u32 %v4861, %v4857
      %v4863 = vrot.slane %v4862, 4
      %v4865 = vshll.u32 %v4563, 16
      %v4867 = vrot.slane %v4865, 5
      %v4868 = vsel %vm1030, %v4863, %v4867
      %v4870 = vshrl.u32 %v4539, 16
      %v4872 = vrot.slane %v4870, 4
      %v4873 = vshll.u32 %v4539, 16
      %v4875 = vrot.slane %v4873, 5
      %v4876 = vor.u32 %v4872, %v4875
      %v4877 = vrot.slane %v4876, 4
      %v4879 = vshll.u32 %v4540, 16
      %v4881 = vrot.slane %v4879, 5
      %v4882 = vsel %vm1030, %v4877, %v4881
      %v4883 = vshrl.u32 %v4540, 16
      %v4885 = vrot.slane %v4883, 4
      %v4886 = vor.u32 %v4885, %v4881
      %v4887 = vrot.slane %v4886, 4
      %v4889 = vshll.u32 %v4564, 16
      %v4891 = vrot.slane %v4889, 5
      %v4892 = vsel %vm1030, %v4887, %v4891
      %v4894 = vshrl.u32 %v4541, 16
      %v4896 = vrot.slane %v4894, 4
      %v4897 = vshll.u32 %v4541, 16
      %v4899 = vrot.slane %v4897, 5
      %v4900 = vor.u32 %v4896, %v4899
      %v4901 = vrot.slane %v4900, 4
      %v4903 = vshll.u32 %v4542, 16
      %v4905 = vrot.slane %v4903, 5
      %v4906 = vsel %vm1030, %v4901, %v4905
      %v4907 = vshrl.u32 %v4542, 16
      %v4909 = vrot.slane %v4907, 4
      %v4910 = vor.u32 %v4909, %v4905
      %v4911 = vrot.slane %v4910, 4
      %v4913 = vshll.u32 %v4565, 16
      %v4915 = vrot.slane %v4913, 5
      %v4916 = vsel %vm1030, %v4911, %v4915
      %v4918 = vshrl.u32 %v4543, 16
      %v4920 = vrot.slane %v4918, 4
      %v4921 = vshll.u32 %v4543, 16
      %v4923 = vrot.slane %v4921, 5
      %v4924 = vor.u32 %v4920, %v4923
      %v4925 = vrot.slane %v4924, 4
      %v4927 = vshll.u32 %v4544, 16
      %v4929 = vrot.slane %v4927, 5
      %v4930 = vsel %vm1030, %v4925, %v4929
      %v4931 = vshrl.u32 %v4544, 16
      %v4933 = vrot.slane %v4931, 4
      %v4934 = vor.u32 %v4933, %v4929
      %v4935 = vrot.slane %v4934, 4
      %v4937 = vshll.u32 %v4566, 16
      %v4939 = vrot.slane %v4937, 5
      %v4940 = vsel %vm1030, %v4935, %v4939
      %v4942 = vshrl.u32 %v4545, 16
      %v4944 = vrot.slane %v4942, 4
      %v4945 = vshll.u32 %v4545, 16
      %v4947 = vrot.slane %v4945, 5
      %v4948 = vor.u32 %v4944, %v4947
      %v4949 = vrot.slane %v4948, 4
      %v4951 = vshll.u32 %v4546, 16
      %v4953 = vrot.slane %v4951, 5
      %v4954 = vsel %vm1030, %v4949, %v4953
      %v4955 = vshrl.u32 %v4546, 16
      %v4957 = vrot.slane %v4955, 4
      %v4958 = vor.u32 %v4957, %v4953
      %v4959 = vrot.slane %v4958, 4
      %v4961 = vshll.u32 %v4567, 16
      %v4963 = vrot.slane %v4961, 5
      %v4964 = vsel %vm1030, %v4959, %v4963
      %v4966 = vshrl.u32 %v4547, 16
      %v4968 = vrot.slane %v4966, 4
      %v4969 = vshll.u32 %v4547, 16
      %v4971 = vrot.slane %v4969, 5
      %v4972 = vor.u32 %v4968, %v4971
      %v4973 = vrot.slane %v4972, 4
      %v4975 = vshll.u32 %v4548, 16
      %v4977 = vrot.slane %v4975, 5
      %v4978 = vsel %vm1030, %v4973, %v4977
      %v4979 = vshrl.u32 %v4548, 16
      %v4981 = vrot.slane %v4979, 4
      %v4982 = vor.u32 %v4981, %v4977
      %v4983 = vrot.slane %v4982, 4
      %v4985 = vshll.u32 %v4568, 16
      %v4987 = vrot.slane %v4985, 5
      %v4988 = vsel %vm1030, %v4983, %v4987
      %s4989 = scalar_lea.vmem %s4, 64
      %v4990 = vld [vmem:[%s4989] sm:$0xf]
      %v4991 = vld [vmem:[%s4989 + $0x4] sm:$0xf]
      %v4992 = vld [vmem:[%s4989 + $0x8] sm:$0xf]
      %v4993 = vld [vmem:[%s4989 + $0xc] sm:$0xf]
      %v4994 = vld [vmem:[%s4989 + $0x10] sm:$0xf]
      %v4995 = vld [vmem:[%s4989 + $0x14] sm:$0xf]
      %v4996 = vld [vmem:[%s4989 + $0x18] sm:$0xf]
      %v4997 = vld [vmem:[%s4989 + $0x1c] sm:$0xf]
      %v4998 = vld [vmem:[%s4989 + $0x20] sm:$0xf]
      %v4999 = vld [vmem:[%s4989 + $0x24] sm:$0xf]
      %v5000 = vld [vmem:[%s4989 + $0x28] sm:$0xf]
      %v5001 = vld [vmem:[%s4989 + $0x2c] sm:$0xf]
      %v5002 = vld [vmem:[%s4989 + $0x30] sm:$0xf]
      %v5003 = vld [vmem:[%s4989 + $0x34] sm:$0xf]
      %v5004 = vld [vmem:[%s4989 + $0x38] sm:$0xf]
      %v5005 = vld [vmem:[%s4989 + $0x3c] sm:$0xf]
      %v5006 = vunpack.c.l.b16 %v4618
      %v5007 = vunpack.c.l.b16 %v4628
      %v5008 = vunpack.c.l.b16 %v4642
      %v5009 = vunpack.c.l.b16 %v4652
      %v5010 = vunpack.c.l.b16 %v4666
      %v5011 = vunpack.c.l.b16 %v4676
      %v5012 = vunpack.c.l.b16 %v4690
      %v5013 = vunpack.c.l.b16 %v4700
      %v5014 = vunpack.c.l.b16 %v4714
      %v5015 = vunpack.c.l.b16 %v4724
      %v5016 = vunpack.c.l.b16 %v4738
      %v5017 = vunpack.c.l.b16 %v4748
      %v5018 = vunpack.c.l.b16 %v4762
      %v5019 = vunpack.c.l.b16 %v4772
      %v5020 = vunpack.c.l.b16 %v4786
      %v5021 = vunpack.c.l.b16 %v4796
      %v5022 = vunpack.c.l.b16 %v4810
      %v5023 = vunpack.c.l.b16 %v4820
      %v5024 = vunpack.c.l.b16 %v4834
      %v5025 = vunpack.c.l.b16 %v4844
      %v5026 = vunpack.c.l.b16 %v4858
      %v5027 = vunpack.c.l.b16 %v4868
      %v5028 = vunpack.c.l.b16 %v4882
      %v5029 = vunpack.c.l.b16 %v4892
      %v5030 = vunpack.c.l.b16 %v4906
      %v5031 = vunpack.c.l.b16 %v4916
      %v5032 = vunpack.c.l.b16 %v4930
      %v5033 = vunpack.c.l.b16 %v4940
      %v5034 = vunpack.c.l.b16 %v4954
      %v5035 = vunpack.c.l.b16 %v4964
      %v5036 = vunpack.c.l.b16 %v4978
      %v5037 = vunpack.c.l.b16 %v4988
      %v5038 = vpack.c.b16 %v5007, %v5006
      %v5039 = vpack.c.b16 %v5009, %v5008
      %v5040 = vpack.c.b16 %v5011, %v5010
      %v5041 = vpack.c.b16 %v5013, %v5012
      %v5042 = vpack.c.b16 %v5015, %v5014
      %v5043 = vpack.c.b16 %v5017, %v5016
      %v5044 = vpack.c.b16 %v5019, %v5018
      %v5045 = vpack.c.b16 %v5021, %v5020
      %v5046 = vpack.c.b16 %v5023, %v5022
      %v5047 = vpack.c.b16 %v5025, %v5024
      %v5048 = vpack.c.b16 %v5027, %v5026
      %v5049 = vpack.c.b16 %v5029, %v5028
      %v5050 = vpack.c.b16 %v5031, %v5030
      %v5051 = vpack.c.b16 %v5033, %v5032
      %v5052 = vpack.c.b16 %v5035, %v5034
      %v5053 = vpack.c.b16 %v5037, %v5036
      %v5086 = vunpack.c.l.b16 %v4990
      %v5087 = vunpack.c.l.b16 %v4991
      %v5088 = vunpack.c.l.b16 %v4992
      %v5089 = vunpack.c.l.b16 %v4993
      %v5090 = vunpack.c.l.b16 %v4994
      %v5091 = vunpack.c.l.b16 %v4995
      %v5092 = vunpack.c.l.b16 %v4996
      %v5093 = vunpack.c.l.b16 %v4997
      %v5094 = vunpack.c.l.b16 %v4998
      %v5095 = vunpack.c.l.b16 %v4999
      %v5096 = vunpack.c.l.b16 %v5000
      %v5097 = vunpack.c.l.b16 %v5001
      %v5098 = vunpack.c.l.b16 %v5002
      %v5099 = vunpack.c.l.b16 %v5003
      %v5100 = vunpack.c.l.b16 %v5004
      %v5101 = vunpack.c.l.b16 %v5005
      %v5102 = vpack.c.b16 %v5087, %v5086
      %v5103 = vpack.c.b16 %v5089, %v5088
      %v5104 = vpack.c.b16 %v5091, %v5090
      %v5105 = vpack.c.b16 %v5093, %v5092
      %v5106 = vpack.c.b16 %v5095, %v5094
      %v5107 = vpack.c.b16 %v5097, %v5096
      %v5108 = vpack.c.b16 %v5099, %v5098
      %v5109 = vpack.c.b16 %v5101, %v5100
      %5118 = vmatprep.subr.bf16.mxu0 0
      %5119 = vmatpush1.bf16.msra.mxu0 %v5102
      %5120 = vmatprep.subr.bf16.mxu0 0
      %5121 = vmatpush1.bf16.msra.mxu0 %v5103
      %5122 = vmatprep.subr.bf16.mxu0 0
      %5123 = vmatpush1.bf16.msra.mxu0 %v5104
      %5124 = vmatprep.subr.bf16.mxu0 0
      %5125 = vmatpush1.bf16.msra.mxu0 %v5105
      %5126 = vmatprep.subr.bf16.mxu0 0
      %5127 = vmatpush1.bf16.msra.mxu0 %v5106
      %5128 = vmatprep.subr.bf16.mxu0 0
      %5129 = vmatpush1.bf16.msra.mxu0 %v5107
      %5130 = vmatprep.subr.bf16.mxu0 0
      %5131 = vmatpush1.bf16.msra.mxu0 %v5108
      %5132 = vmatprep.subr.bf16.mxu0 0
      %5133 = vmatpush1.bf16.msra.mxu0 %v5109
      %5134 = vmatprep.subr.bf16.mxu0 0
      %5135 = vmatpush1.bf16.msra.mxu0 0
      %5136 = vmatprep.subr.bf16.mxu0 0
      %5137 = vmatpush1.bf16.msra.mxu0 0
      %5138 = vmatprep.subr.bf16.mxu0 0
      %5139 = vmatpush1.bf16.msra.mxu0 0
      %5140 = vmatprep.subr.bf16.mxu0 0
      %5141 = vmatpush1.bf16.msra.mxu0 0
      %5142 = vmatprep.subr.bf16.mxu0 0
      %5143 = vmatpush1.bf16.msra.mxu0 0
      %5144 = vmatprep.subr.bf16.mxu0 0
      %5145 = vmatpush1.bf16.msra.mxu0 0
      %5146 = vmatprep.subr.bf16.mxu0 0
      %5147 = vmatpush1.bf16.msra.mxu0 0
      %5148 = vmatprep.subr.bf16.mxu0 0
      %5149 = vmatpush1.bf16.msra.mxu0 0
      %5150 = vmatprep.mubr.bf16.mxu0 0
      %5151 = vmatmul.mubr.bf16.gmra.mrb[0].mxu0 %v5038
      %v5152 = vpop.f32.mrb[0].mxu0
      %v5153 = vadd.f32 0.0, %v5152
      %v5154 = vpop.f32.mrb[0].mxu0
      %v5155 = vpop.f32.mrb[0].mxu0
      %v5156 = vadd.f32 0.0, %v5155
      %v5157 = vpop.f32.mrb[0].mxu0
      %5158 = vmatprep.mubr.bf16.mxu0 0
      %5159 = vmatmul.mubr.bf16.gmra.mrb[0].mxu0 %v5039
      %v5160 = vpop.f32.mrb[0].mxu0
      %v5161 = vadd.f32 0.0, %v5160
      %v5162 = vpop.f32.mrb[0].mxu0
      %v5163 = vpop.f32.mrb[0].mxu0
      %v5164 = vadd.f32 0.0, %v5163
      %v5165 = vpop.f32.mrb[0].mxu0
      %5166 = vmatprep.mubr.bf16.mxu0 0
      %5167 = vmatmul.mubr.bf16.gmra.mrb[0].mxu0 %v5040
      %v5168 = vpop.f32.mrb[0].mxu0
      %v5169 = vadd.f32 0.0, %v5168
      %v5170 = vpop.f32.mrb[0].mxu0
      %v5171 = vpop.f32.mrb[0].mxu0
      %v5172 = vadd.f32 0.0, %v5171
      %v5173 = vpop.f32.mrb[0].mxu0
      %5174 = vmatprep.mubr.bf16.mxu0 0
      %5175 = vmatmul.mubr.bf16.gmra.mrb[0].mxu0 %v5041
      %v5176 = vpop.f32.mrb[0].mxu0
      %v5177 = vadd.f32 0.0, %v5176
      %v5178 = vpop.f32.mrb[0].mxu0
      %v5179 = vpop.f32.mrb[0].mxu0
      %v5180 = vadd.f32 0.0, %v5179
      %v5181 = vpop.f32.mrb[0].mxu0
      %5182 = vmatprep.mubr.bf16.mxu0 0
      %5183 = vmatmul.mubr.bf16.gmra.mrb[0].mxu0 %v5042
      %v5184 = vpop.f32.mrb[0].mxu0
      %v5185 = vadd.f32 0.0, %v5184
      %v5186 = vpop.f32.mrb[0].mxu0
      %v5187 = vpop.f32.mrb[0].mxu0
      %v5188 = vadd.f32 0.0, %v5187
      %v5189 = vpop.f32.mrb[0].mxu0
      %5190 = vmatprep.mubr.bf16.mxu0 0
      %5191 = vmatmul.mubr.bf16.gmra.mrb[0].mxu0 %v5043
      %v5192 = vpop.f32.mrb[0].mxu0
      %v5193 = vadd.f32 0.0, %v5192
      %v5194 = vpop.f32.mrb[0].mxu0
      %v5195 = vpop.f32.mrb[0].mxu0
      %v5196 = vadd.f32 0.0, %v5195
      %v5197 = vpop.f32.mrb[0].mxu0
      %5198 = vmatprep.mubr.bf16.mxu0 0
      %5199 = vmatmul.mubr.bf16.gmra.mrb[0].mxu0 %v5044
      %v5200 = vpop.f32.mrb[0].mxu0
      %v5201 = vadd.f32 0.0, %v5200
      %v5202 = vpop.f32.mrb[0].mxu0
      %v5203 = vpop.f32.mrb[0].mxu0
      %v5204 = vadd.f32 0.0, %v5203
      %v5205 = vpop.f32.mrb[0].mxu0
      %5206 = vmatprep.mubr.bf16.mxu0 0
      %5207 = vmatmul.mubr.bf16.gmra.mrb[0].mxu0 %v5045
      %v5208 = vpop.f32.mrb[0].mxu0
      %v5209 = vadd.f32 0.0, %v5208
      %v5210 = vpop.f32.mrb[0].mxu0
      %v5211 = vpop.f32.mrb[0].mxu0
      %v5212 = vadd.f32 0.0, %v5211
      %v5213 = vpop.f32.mrb[0].mxu0
      %5214 = vmatprep.mubr.bf16.mxu0 0
      %5215 = vmatmul.mubr.bf16.gmra.mrb[0].mxu0 %v5046
      %v5216 = vpop.f32.mrb[0].mxu0
      %v5217 = vadd.f32 0.0, %v5216
      %v5218 = vpop.f32.mrb[0].mxu0
      %v5219 = vpop.f32.mrb[0].mxu0
      %v5220 = vadd.f32 0.0, %v5219
      %v5221 = vpop.f32.mrb[0].mxu0
      %5222 = vmatprep.mubr.bf16.mxu0 0
      %5223 = vmatmul.mubr.bf16.gmra.mrb[0].mxu0 %v5047
      %v5224 = vpop.f32.mrb[0].mxu0
      %v5225 = vadd.f32 0.0, %v5224
      %v5226 = vpop.f32.mrb[0].mxu0
      %v5227 = vpop.f32.mrb[0].mxu0
      %v5228 = vadd.f32 0.0, %v5227
      %v5229 = vpop.f32.mrb[0].mxu0
      %5230 = vmatprep.mubr.bf16.mxu0 0
      %5231 = vmatmul.mubr.bf16.gmra.mrb[0].mxu0 %v5048
      %v5232 = vpop.f32.mrb[0].mxu0
      %v5233 = vadd.f32 0.0, %v5232
      %v5234 = vpop.f32.mrb[0].mxu0
      %v5235 = vpop.f32.mrb[0].mxu0
      %v5236 = vadd.f32 0.0, %v5235
      %v5237 = vpop.f32.mrb[0].mxu0
      %5238 = vmatprep.mubr.bf16.mxu0 0
      %5239 = vmatmul.mubr.bf16.gmra.mrb[0].mxu0 %v5049
      %v5240 = vpop.f32.mrb[0].mxu0
      %v5241 = vadd.f32 0.0, %v5240
      %v5242 = vpop.f32.mrb[0].mxu0
      %v5243 = vpop.f32.mrb[0].mxu0
      %v5244 = vadd.f32 0.0, %v5243
      %v5245 = vpop.f32.mrb[0].mxu0
      %5246 = vmatprep.mubr.bf16.mxu0 0
      %5247 = vmatmul.mubr.bf16.gmra.mrb[0].mxu0 %v5050
      %v5248 = vpop.f32.mrb[0].mxu0
      %v5249 = vadd.f32 0.0, %v5248
      %v5250 = vpop.f32.mrb[0].mxu0
      %v5251 = vpop.f32.mrb[0].mxu0
      %v5252 = vadd.f32 0.0, %v5251
      %v5253 = vpop.f32.mrb[0].mxu0
      %5254 = vmatprep.mubr.bf16.mxu0 0
      %5255 = vmatmul.mubr.bf16.gmra.mrb[0].mxu0 %v5051
      %v5256 = vpop.f32.mrb[0].mxu0
      %v5257 = vadd.f32 0.0, %v5256
      %v5258 = vpop.f32.mrb[0].mxu0
      %v5259 = vpop.f32.mrb[0].mxu0
      %v5260 = vadd.f32 0.0, %v5259
      %v5261 = vpop.f32.mrb[0].mxu0
      %5262 = vmatprep.mubr.bf16.mxu0 0
      %5263 = vmatmul.mubr.bf16.gmra.mrb[0].mxu0 %v5052
      %v5264 = vpop.f32.mrb[0].mxu0
      %v5265 = vadd.f32 0.0, %v5264
      %v5266 = vpop.f32.mrb[0].mxu0
      %v5267 = vpop.f32.mrb[0].mxu0
      %v5268 = vadd.f32 0.0, %v5267
      %v5269 = vpop.f32.mrb[0].mxu0
      %5270 = vmatprep.mubr.bf16.mxu0 0
      %5271 = vmatmul.mubr.bf16.gmra.mrb[0].mxu0 %v5053
      %v5272 = vpop.f32.mrb[0].mxu0
      %v5273 = vadd.f32 0.0, %v5272
      %v5274 = vpop.f32.mrb[0].mxu0
      %v5275 = vpop.f32.mrb[0].mxu0
      %v5276 = vadd.f32 0.0, %v5275
      %v5277 = vpop.f32.mrb[0].mxu0
      %5278 = vdwg.mxu0
      %v5311 = vunpack.c.l.b16 %v4517
      %v5312 = vunpack.c.l.b16 %v4518
      %v5313 = vunpack.c.l.b16 %v4519
      %v5314 = vunpack.c.l.b16 %v4520
      %v5315 = vunpack.c.l.b16 %v4521
      %v5316 = vunpack.c.l.b16 %v4522
      %v5317 = vunpack.c.l.b16 %v4523
      %v5318 = vunpack.c.l.b16 %v4524
      %v5319 = vunpack.c.l.b16 %v4525
      %v5320 = vunpack.c.l.b16 %v4526
      %v5321 = vunpack.c.l.b16 %v4527
      %v5322 = vunpack.c.l.b16 %v4528
      %v5323 = vunpack.c.l.b16 %v4529
      %v5324 = vunpack.c.l.b16 %v4530
      %v5325 = vunpack.c.l.b16 %v4531
      %v5326 = vunpack.c.l.b16 %v4532
      %v5327 = vunpack.c.l.b16 %v4533
      %v5328 = vunpack.c.l.b16 %v4534
      %v5329 = vunpack.c.l.b16 %v4535
      %v5330 = vunpack.c.l.b16 %v4536
      %v5331 = vunpack.c.l.b16 %v4537
      %v5332 = vunpack.c.l.b16 %v4538
      %v5333 = vunpack.c.l.b16 %v4539
      %v5334 = vunpack.c.l.b16 %v4540
      %v5335 = vunpack.c.l.b16 %v4541
      %v5336 = vunpack.c.l.b16 %v4542
      %v5337 = vunpack.c.l.b16 %v4543
      %v5338 = vunpack.c.l.b16 %v4544
      %v5339 = vunpack.c.l.b16 %v4545
      %v5340 = vunpack.c.l.b16 %v4546
      %v5341 = vunpack.c.l.b16 %v4547
      %v5342 = vunpack.c.l.b16 %v4548
      %v5343 = vpack.c.b16 %v5312, %v5311
      %v5344 = vpack.c.b16 %v5314, %v5313
      %v5345 = vpack.c.b16 %v5316, %v5315
      %v5346 = vpack.c.b16 %v5318, %v5317
      %v5347 = vpack.c.b16 %v5320, %v5319
      %v5348 = vpack.c.b16 %v5322, %v5321
      %v5349 = vpack.c.b16 %v5324, %v5323
      %v5350 = vpack.c.b16 %v5326, %v5325
      %v5351 = vpack.c.b16 %v5328, %v5327
      %v5352 = vpack.c.b16 %v5330, %v5329
      %v5353 = vpack.c.b16 %v5332, %v5331
      %v5354 = vpack.c.b16 %v5334, %v5333
      %v5355 = vpack.c.b16 %v5336, %v5335
      %v5356 = vpack.c.b16 %v5338, %v5337
      %v5357 = vpack.c.b16 %v5340, %v5339
      %v5358 = vpack.c.b16 %v5342, %v5341
      %v5391 = vunpack.c.l.b16 %v4589
      %v5392 = vunpack.c.l.b16 %v4590
      %v5393 = vunpack.c.l.b16 %v4591
      %v5394 = vunpack.c.l.b16 %v4592
      %v5395 = vunpack.c.l.b16 %v4593
      %v5396 = vunpack.c.l.b16 %v4594
      %v5397 = vunpack.c.l.b16 %v4595
      %v5398 = vunpack.c.l.b16 %v4596
      %v5399 = vunpack.c.l.b16 %v4597
      %v5400 = vunpack.c.l.b16 %v4598
      %v5401 = vunpack.c.l.b16 %v4599
      %v5402 = vunpack.c.l.b16 %v4600
      %v5403 = vunpack.c.l.b16 %v4601
      %v5404 = vunpack.c.l.b16 %v4602
      %v5405 = vunpack.c.l.b16 %v4603
      %v5406 = vunpack.c.l.b16 %v4604
      %v5407 = vpack.c.b16 %v5392, %v5391
      %v5408 = vpack.c.b16 %v5394, %v5393
      %v5409 = vpack.c.b16 %v5396, %v5395
      %v5410 = vpack.c.b16 %v5398, %v5397
      %v5411 = vpack.c.b16 %v5400, %v5399
      %v5412 = vpack.c.b16 %v5402, %v5401
      %v5413 = vpack.c.b16 %v5404, %v5403
      %v5414 = vpack.c.b16 %v5406, %v5405
      %5423 = vmatprep.subr.bf16.mxu0 0
      %5424 = vmatpush1.bf16.msra.mxu0 %v5407
      %5425 = vmatprep.subr.bf16.mxu0 0
      %5426 = vmatpush1.bf16.msra.mxu0 %v5408
      %5427 = vmatprep.subr.bf16.mxu0 0
      %5428 = vmatpush1.bf16.msra.mxu0 %v5409
      %5429 = vmatprep.subr.bf16.mxu0 0
      %5430 = vmatpush1.bf16.msra.mxu0 %v5410
      %5431 = vmatprep.subr.bf16.mxu0 0
      %5432 = vmatpush1.bf16.msra.mxu0 %v5411
      %5433 = vmatprep.subr.bf16.mxu0 0
      %5434 = vmatpush1.bf16.msra.mxu0 %v5412
      %5435 = vmatprep.subr.bf16.mxu0 0
      %5436 = vmatpush1.bf16.msra.mxu0 %v5413
      %5437 = vmatprep.subr.bf16.mxu0 0
      %5438 = vmatpush1.bf16.msra.mxu0 %v5414
      %5439 = vmatprep.subr.bf16.mxu0 0
      %5440 = vmatpush1.bf16.msra.mxu0 0
      %5441 = vmatprep.subr.bf16.mxu0 0
      %5442 = vmatpush1.bf16.msra.mxu0 0
      %5443 = vmatprep.subr.bf16.mxu0 0
      %5444 = vmatpush1.bf16.msra.mxu0 0
      %5445 = vmatprep.subr.bf16.mxu0 0
      %5446 = vmatpush1.bf16.msra.mxu0 0
      %5447 = vmatprep.subr.bf16.mxu0 0
      %5448 = vmatpush1.bf16.msra.mxu0 0
      %5449 = vmatprep.subr.bf16.mxu0 0
      %5450 = vmatpush1.bf16.msra.mxu0 0
      %5451 = vmatprep.subr.bf16.mxu0 0
      %5452 = vmatpush1.bf16.msra.mxu0 0
      %5453 = vmatprep.subr.bf16.mxu0 0
      %5454 = vmatpush1.bf16.msra.mxu0 0
      %5455 = vmatprep.mubr.bf16.mxu0 0
      %5456 = vmatmul.mubr.bf16.gmra.mrb[0].mxu0 %v5343
      %v5457 = vpop.f32.mrb[0].mxu0
      %v5458 = vadd.f32 %v5153, %v5457
      %v5459 = vpop.f32.mrb[0].mxu0
      %v5460 = vpop.f32.mrb[0].mxu0
      %v5461 = vadd.f32 %v5156, %v5460
      %v5462 = vpop.f32.mrb[0].mxu0
      %5463 = vmatprep.mubr.bf16.mxu0 0
      %5464 = vmatmul.mubr.bf16.gmra.mrb[0].mxu0 %v5344
      %v5465 = vpop.f32.mrb[0].mxu0
      %v5466 = vadd.f32 %v5161, %v5465
      %v5467 = vpop.f32.mrb[0].mxu0
      %v5468 = vpop.f32.mrb[0].mxu0
      %v5469 = vadd.f32 %v5164, %v5468
      %v5470 = vpop.f32.mrb[0].mxu0
      %5471 = vmatprep.mubr.bf16.mxu0 0
      %5472 = vmatmul.mubr.bf16.gmra.mrb[0].mxu0 %v5345
      %v5473 = vpop.f32.mrb[0].mxu0
      %v5474 = vadd.f32 %v5169, %v5473
      %v5475 = vpop.f32.mrb[0].mxu0
      %v5476 = vpop.f32.mrb[0].mxu0
      %v5477 = vadd.f32 %v5172, %v5476
      %v5478 = vpop.f32.mrb[0].mxu0
      %5479 = vmatprep.mubr.bf16.mxu0 0
      %5480 = vmatmul.mubr.bf16.gmra.mrb[0].mxu0 %v5346
      %v5481 = vpop.f32.mrb[0].mxu0
      %v5482 = vadd.f32 %v5177, %v5481
      %v5483 = vpop.f32.mrb[0].mxu0
      %v5484 = vpop.f32.mrb[0].mxu0
      %v5485 = vadd.f32 %v5180, %v5484
      %v5486 = vpop.f32.mrb[0].mxu0
      %5487 = vmatprep.mubr.bf16.mxu0 0
      %5488 = vmatmul.mubr.bf16.gmra.mrb[0].mxu0 %v5347
      %v5489 = vpop.f32.mrb[0].mxu0
      %v5490 = vadd.f32 %v5185, %v5489
      %v5491 = vpop.f32.mrb[0].mxu0
      %v5492 = vpop.f32.mrb[0].mxu0
      %v5493 = vadd.f32 %v5188, %v5492
      %v5494 = vpop.f32.mrb[0].mxu0
      %5495 = vmatprep.mubr.bf16.mxu0 0
      %5496 = vmatmul.mubr.bf16.gmra.mrb[0].mxu0 %v5348
      %v5497 = vpop.f32.mrb[0].mxu0
      %v5498 = vadd.f32 %v5193, %v5497
      %v5499 = vpop.f32.mrb[0].mxu0
      %v5500 = vpop.f32.mrb[0].mxu0
      %v5501 = vadd.f32 %v5196, %v5500
      %v5502 = vpop.f32.mrb[0].mxu0
      %5503 = vmatprep.mubr.bf16.mxu0 0
      %5504 = vmatmul.mubr.bf16.gmra.mrb[0].mxu0 %v5349
      %v5505 = vpop.f32.mrb[0].mxu0
      %v5506 = vadd.f32 %v5201, %v5505
      %v5507 = vpop.f32.mrb[0].mxu0
      %v5508 = vpop.f32.mrb[0].mxu0
      %v5509 = vadd.f32 %v5204, %v5508
      %v5510 = vpop.f32.mrb[0].mxu0
      %5511 = vmatprep.mubr.bf16.mxu0 0
      %5512 = vmatmul.mubr.bf16.gmra.mrb[0].mxu0 %v5350
      %v5513 = vpop.f32.mrb[0].mxu0
      %v5514 = vadd.f32 %v5209, %v5513
      %v5515 = vpop.f32.mrb[0].mxu0
      %v5516 = vpop.f32.mrb[0].mxu0
      %v5517 = vadd.f32 %v5212, %v5516
      %v5518 = vpop.f32.mrb[0].mxu0
      %5519 = vmatprep.mubr.bf16.mxu0 0
      %5520 = vmatmul.mubr.bf16.gmra.mrb[0].mxu0 %v5351
      %v5521 = vpop.f32.mrb[0].mxu0
      %v5522 = vadd.f32 %v5217, %v5521
      %v5523 = vpop.f32.mrb[0].mxu0
      %v5524 = vpop.f32.mrb[0].mxu0
      %v5525 = vadd.f32 %v5220, %v5524
      %v5526 = vpop.f32.mrb[0].mxu0
      %5527 = vmatprep.mubr.bf16.mxu0 0
      %5528 = vmatmul.mubr.bf16.gmra.mrb[0].mxu0 %v5352
      %v5529 = vpop.f32.mrb[0].mxu0
      %v5530 = vadd.f32 %v5225, %v5529
      %v5531 = vpop.f32.mrb[0].mxu0
      %v5532 = vpop.f32.mrb[0].mxu0
      %v5533 = vadd.f32 %v5228, %v5532
      %v5534 = vpop.f32.mrb[0].mxu0
      %5535 = vmatprep.mubr.bf16.mxu0 0
      %5536 = vmatmul.mubr.bf16.gmra.mrb[0].mxu0 %v5353
      %v5537 = vpop.f32.mrb[0].mxu0
      %v5538 = vadd.f32 %v5233, %v5537
      %v5539 = vpop.f32.mrb[0].mxu0
      %v5540 = vpop.f32.mrb[0].mxu0
      %v5541 = vadd.f32 %v5236, %v5540
      %v5542 = vpop.f32.mrb[0].mxu0
      %5543 = vmatprep.mubr.bf16.mxu0 0
      %5544 = vmatmul.mubr.bf16.gmra.mrb[0].mxu0 %v5354
      %v5545 = vpop.f32.mrb[0].mxu0
      %v5546 = vadd.f32 %v5241, %v5545
      %v5547 = vpop.f32.mrb[0].mxu0
      %v5548 = vpop.f32.mrb[0].mxu0
      %v5549 = vadd.f32 %v5244, %v5548
      %v5550 = vpop.f32.mrb[0].mxu0
      %5551 = vmatprep.mubr.bf16.mxu0 0
      %5552 = vmatmul.mubr.bf16.gmra.mrb[0].mxu0 %v5355
      %v5553 = vpop.f32.mrb[0].mxu0
      %v5554 = vadd.f32 %v5249, %v5553
      %v5555 = vpop.f32.mrb[0].mxu0
      %v5556 = vpop.f32.mrb[0].mxu0
      %v5557 = vadd.f32 %v5252, %v5556
      %v5558 = vpop.f32.mrb[0].mxu0
      %5559 = vmatprep.mubr.bf16.mxu0 0
      %5560 = vmatmul.mubr.bf16.gmra.mrb[0].mxu0 %v5356
      %v5561 = vpop.f32.mrb[0].mxu0
      %v5562 = vadd.f32 %v5257, %v5561
      %v5563 = vpop.f32.mrb[0].mxu0
      %v5564 = vpop.f32.mrb[0].mxu0
      %v5565 = vadd.f32 %v5260, %v5564
      %v5566 = vpop.f32.mrb[0].mxu0
      %5567 = vmatprep.mubr.bf16.mxu0 0
      %5568 = vmatmul.mubr.bf16.gmra.mrb[0].mxu0 %v5357
      %v5569 = vpop.f32.mrb[0].mxu0
      %v5570 = vadd.f32 %v5265, %v5569
      %v5571 = vpop.f32.mrb[0].mxu0
      %v5572 = vpop.f32.mrb[0].mxu0
      %v5573 = vadd.f32 %v5268, %v5572
      %v5574 = vpop.f32.mrb[0].mxu0
      %5575 = vmatprep.mubr.bf16.mxu0 0
      %5576 = vmatmul.mubr.bf16.gmra.mrb[0].mxu0 %v5358
      %v5577 = vpop.f32.mrb[0].mxu0
      %v5578 = vadd.f32 %v5273, %v5577
      %v5579 = vpop.f32.mrb[0].mxu0
      %v5580 = vpop.f32.mrb[0].mxu0
      %v5581 = vadd.f32 %v5276, %v5580
      %v5582 = vpop.f32.mrb[0].mxu0
      %5583 = vdwg.mxu0
      %v5616 = vrot.slane %v4571, 5
      %v5617 = vrot.slane %v5616, 4
      %v5618 = vrot.slane %v4518, 5
      %v5619 = vsel %vm2005, %v5617, %v5618
      %v5620 = vrot.slane %v5618, 4
      %v5621 = vrot.slane %v4553, 5
      %v5622 = vsel %vm2005, %v5620, %v5621
      %v5623 = vrot.slane %v4572, 5
      %v5624 = vrot.slane %v5623, 4
      %v5625 = vrot.slane %v4520, 5
      %v5626 = vsel %vm2005, %v5624, %v5625
      %v5627 = vrot.slane %v5625, 4
      %v5628 = vrot.slane %v4554, 5
      %v5629 = vsel %vm2005, %v5627, %v5628
      %v5630 = vrot.slane %v4573, 5
      %v5631 = vrot.slane %v5630, 4
      %v5632 = vrot.slane %v4522, 5
      %v5633 = vsel %vm2005, %v5631, %v5632
      %v5634 = vrot.slane %v5632, 4
      %v5635 = vrot.slane %v4555, 5
      %v5636 = vsel %vm2005, %v5634, %v5635
      %v5637 = vrot.slane %v4574, 5
      %v5638 = vrot.slane %v5637, 4
      %v5639 = vrot.slane %v4524, 5
      %v5640 = vsel %vm2005, %v5638, %v5639
      %v5641 = vrot.slane %v5639, 4
      %v5642 = vrot.slane %v4556, 5
      %v5643 = vsel %vm2005, %v5641, %v5642
      %v5644 = vrot.slane %v4575, 5
      %v5645 = vrot.slane %v5644, 4
      %v5646 = vrot.slane %v4526, 5
      %v5647 = vsel %vm2005, %v5645, %v5646
      %v5648 = vrot.slane %v5646, 4
      %v5649 = vrot.slane %v4557, 5
      %v5650 = vsel %vm2005, %v5648, %v5649
      %v5651 = vrot.slane %v4576, 5
      %v5652 = vrot.slane %v5651, 4
      %v5653 = vrot.slane %v4528, 5
      %v5654 = vsel %vm2005, %v5652, %v5653
      %v5655 = vrot.slane %v5653, 4
      %v5656 = vrot.slane %v4558, 5
      %v5657 = vsel %vm2005, %v5655, %v5656
      %v5658 = vrot.slane %v4577, 5
      %v5659 = vrot.slane %v5658, 4
      %v5660 = vrot.slane %v4530, 5
      %v5661 = vsel %vm2005, %v5659, %v5660
      %v5662 = vrot.slane %v5660, 4
      %v5663 = vrot.slane %v4559, 5
      %v5664 = vsel %vm2005, %v5662, %v5663
      %v5665 = vrot.slane %v4578, 5
      %v5666 = vrot.slane %v5665, 4
      %v5667 = vrot.slane %v4532, 5
      %v5668 = vsel %vm2005, %v5666, %v5667
      %v5669 = vrot.slane %v5667, 4
      %v5670 = vrot.slane %v4560, 5
      %v5671 = vsel %vm2005, %v5669, %v5670
      %v5672 = vrot.slane %v4579, 5
      %v5673 = vrot.slane %v5672, 4
      %v5674 = vrot.slane %v4534, 5
      %v5675 = vsel %vm2005, %v5673, %v5674
      %v5676 = vrot.slane %v5674, 4
      %v5677 = vrot.slane %v4561, 5
      %v5678 = vsel %vm2005, %v5676, %v5677
      %v5679 = vrot.slane %v4580, 5
      %v5680 = vrot.slane %v5679, 4
      %v5681 = vrot.slane %v4536, 5
      %v5682 = vsel %vm2005, %v5680, %v5681
      %v5683 = vrot.slane %v5681, 4
      %v5684 = vrot.slane %v4562, 5
      %v5685 = vsel %vm2005, %v5683, %v5684
      %v5686 = vrot.slane %v4581, 5
      %v5687 = vrot.slane %v5686, 4
      %v5688 = vrot.slane %v4538, 5
      %v5689 = vsel %vm2005, %v5687, %v5688
      %v5690 = vrot.slane %v5688, 4
      %v5691 = vrot.slane %v4563, 5
      %v5692 = vsel %vm2005, %v5690, %v5691
      %v5693 = vrot.slane %v4582, 5
      %v5694 = vrot.slane %v5693, 4
      %v5695 = vrot.slane %v4540, 5
      %v5696 = vsel %vm2005, %v5694, %v5695
      %v5697 = vrot.slane %v5695, 4
      %v5698 = vrot.slane %v4564, 5
      %v5699 = vsel %vm2005, %v5697, %v5698
      %v5700 = vrot.slane %v4583, 5
      %v5701 = vrot.slane %v5700, 4
      %v5702 = vrot.slane %v4542, 5
      %v5703 = vsel %vm2005, %v5701, %v5702
      %v5704 = vrot.slane %v5702, 4
      %v5705 = vrot.slane %v4565, 5
      %v5706 = vsel %vm2005, %v5704, %v5705
      %v5707 = vrot.slane %v4584, 5
      %v5708 = vrot.slane %v5707, 4
      %v5709 = vrot.slane %v4544, 5
      %v5710 = vsel %vm2005, %v5708, %v5709
      %v5711 = vrot.slane %v5709, 4
      %v5712 = vrot.slane %v4566, 5
      %v5713 = vsel %vm2005, %v5711, %v5712
      %v5714 = vrot.slane %v4585, 5
      %v5715 = vrot.slane %v5714, 4
      %v5716 = vrot.slane %v4546, 5
      %v5717 = vsel %vm2005, %v5715, %v5716
      %v5718 = vrot.slane %v5716, 4
      %v5719 = vrot.slane %v4567, 5
      %v5720 = vsel %vm2005, %v5718, %v5719
      %v5721 = vrot.slane %v4586, 5
      %v5722 = vrot.slane %v5721, 4
      %v5723 = vrot.slane %v4548, 5
      %v5724 = vsel %vm2005, %v5722, %v5723
      %v5725 = vrot.slane %v5723, 4
      %v5726 = vrot.slane %v4568, 5
      %v5727 = vsel %vm2005, %v5725, %v5726
      %s5728 = scalar_lea.vmem %s4, 128
      %v5729 = vld [vmem:[%s5728] sm:$0xf]
      %v5730 = vld [vmem:[%s5728 + $0x4] sm:$0xf]
      %v5731 = vld [vmem:[%s5728 + $0x8] sm:$0xf]
      %v5732 = vld [vmem:[%s5728 + $0xc] sm:$0xf]
      %v5733 = vld [vmem:[%s5728 + $0x10] sm:$0xf]
      %v5734 = vld [vmem:[%s5728 + $0x14] sm:$0xf]
      %v5735 = vld [vmem:[%s5728 + $0x18] sm:$0xf]
      %v5736 = vld [vmem:[%s5728 + $0x1c] sm:$0xf]
      %v5737 = vld [vmem:[%s5728 + $0x20] sm:$0xf]
      %v5738 = vld [vmem:[%s5728 + $0x24] sm:$0xf]
      %v5739 = vld [vmem:[%s5728 + $0x28] sm:$0xf]
      %v5740 = vld [vmem:[%s5728 + $0x2c] sm:$0xf]
      %v5741 = vld [vmem:[%s5728 + $0x30] sm:$0xf]
      %v5742 = vld [vmem:[%s5728 + $0x34] sm:$0xf]
      %v5743 = vld [vmem:[%s5728 + $0x38] sm:$0xf]
      %v5744 = vld [vmem:[%s5728 + $0x3c] sm:$0xf]
      %v5745 = vunpack.c.l.b16 %v5619
      %v5746 = vunpack.c.l.b16 %v5622
      %v5747 = vunpack.c.l.b16 %v5626
      %v5748 = vunpack.c.l.b16 %v5629
      %v5749 = vunpack.c.l.b16 %v5633
      %v5750 = vunpack.c.l.b16 %v5636
      %v5751 = vunpack.c.l.b16 %v5640
      %v5752 = vunpack.c.l.b16 %v5643
      %v5753 = vunpack.c.l.b16 %v5647
      %v5754 = vunpack.c.l.b16 %v5650
      %v5755 = vunpack.c.l.b16 %v5654
      %v5756 = vunpack.c.l.b16 %v5657
      %v5757 = vunpack.c.l.b16 %v5661
      %v5758 = vunpack.c.l.b16 %v5664
      %v5759 = vunpack.c.l.b16 %v5668
      %v5760 = vunpack.c.l.b16 %v5671
      %v5761 = vunpack.c.l.b16 %v5675
      %v5762 = vunpack.c.l.b16 %v5678
      %v5763 = vunpack.c.l.b16 %v5682
      %v5764 = vunpack.c.l.b16 %v5685
      %v5765 = vunpack.c.l.b16 %v5689
      %v5766 = vunpack.c.l.b16 %v5692
      %v5767 = vunpack.c.l.b16 %v5696
      %v5768 = vunpack.c.l.b16 %v5699
      %v5769 = vunpack.c.l.b16 %v5703
      %v5770 = vunpack.c.l.b16 %v5706
      %v5771 = vunpack.c.l.b16 %v5710
      %v5772 = vunpack.c.l.b16 %v5713
      %v5773 = vunpack.c.l.b16 %v5717
      %v5774 = vunpack.c.l.b16 %v5720
      %v5775 = vunpack.c.l.b16 %v5724
      %v5776 = vunpack.c.l.b16 %v5727
      %v5777 = vpack.c.b16 %v5746, %v5745
      %v5778 = vpack.c.b16 %v5748, %v5747
      %v5779 = vpack.c.b16 %v5750, %v5749
      %v5780 = vpack.c.b16 %v5752, %v5751
      %v5781 = vpack.c.b16 %v5754, %v5753
      %v5782 = vpack.c.b16 %v5756, %v5755
      %v5783 = vpack.c.b16 %v5758, %v5757
      %v5784 = vpack.c.b16 %v5760, %v5759
      %v5785 = vpack.c.b16 %v5762, %v5761
      %v5786 = vpack.c.b16 %v5764, %v5763
      %v5787 = vpack.c.b16 %v5766, %v5765
      %v5788 = vpack.c.b16 %v5768, %v5767
      %v5789 = vpack.c.b16 %v5770, %v5769
      %v5790 = vpack.c.b16 %v5772, %v5771
      %v5791 = vpack.c.b16 %v5774, %v5773
      %v5792 = vpack.c.b16 %v5776, %v5775
      %v5825 = vunpack.c.l.b16 %v5729
      %v5826 = vunpack.c.l.b16 %v5730
      %v5827 = vunpack.c.l.b16 %v5731
      %v5828 = vunpack.c.l.b16 %v5732
      %v5829 = vunpack.c.l.b16 %v5733
      %v5830 = vunpack.c.l.b16 %v5734
      %v5831 = vunpack.c.l.b16 %v5735
      %v5832 = vunpack.c.l.b16 %v5736
      %v5833 = vunpack.c.l.b16 %v5737
      %v5834 = vunpack.c.l.b16 %v5738
      %v5835 = vunpack.c.l.b16 %v5739
      %v5836 = vunpack.c.l.b16 %v5740
      %v5837 = vunpack.c.l.b16 %v5741
      %v5838 = vunpack.c.l.b16 %v5742
      %v5839 = vunpack.c.l.b16 %v5743
      %v5840 = vunpack.c.l.b16 %v5744
      %v5841 = vpack.c.b16 %v5826, %v5825
      %v5842 = vpack.c.b16 %v5828, %v5827
      %v5843 = vpack.c.b16 %v5830, %v5829
      %v5844 = vpack.c.b16 %v5832, %v5831
      %v5845 = vpack.c.b16 %v5834, %v5833
      %v5846 = vpack.c.b16 %v5836, %v5835
      %v5847 = vpack.c.b16 %v5838, %v5837
      %v5848 = vpack.c.b16 %v5840, %v5839
      %5857 = vmatprep.subr.bf16.mxu0 0
      %5858 = vmatpush1.bf16.msra.mxu0 %v5841
      %5859 = vmatprep.subr.bf16.mxu0 0
      %5860 = vmatpush1.bf16.msra.mxu0 %v5842
      %5861 = vmatprep.subr.bf16.mxu0 0
      %5862 = vmatpush1.bf16.msra.mxu0 %v5843
      %5863 = vmatprep.subr.bf16.mxu0 0
      %5864 = vmatpush1.bf16.msra.mxu0 %v5844
      %5865 = vmatprep.subr.bf16.mxu0 0
      %5866 = vmatpush1.bf16.msra.mxu0 %v5845
      %5867 = vmatprep.subr.bf16.mxu0 0
      %5868 = vmatpush1.bf16.msra.mxu0 %v5846
      %5869 = vmatprep.subr.bf16.mxu0 0
      %5870 = vmatpush1.bf16.msra.mxu0 %v5847
      %5871 = vmatprep.subr.bf16.mxu0 0
      %5872 = vmatpush1.bf16.msra.mxu0 %v5848
      %5873 = vmatprep.subr.bf16.mxu0 0
      %5874 = vmatpush1.bf16.msra.mxu0 0
      %5875 = vmatprep.subr.bf16.mxu0 0
      %5876 = vmatpush1.bf16.msra.mxu0 0
      %5877 = vmatprep.subr.bf16.mxu0 0
      %5878 = vmatpush1.bf16.msra.mxu0 0
      %5879 = vmatprep.subr.bf16.mxu0 0
      %5880 = vmatpush1.bf16.msra.mxu0 0
      %5881 = vmatprep.subr.bf16.mxu0 0
      %5882 = vmatpush1.bf16.msra.mxu0 0
      %5883 = vmatprep.subr.bf16.mxu0 0
      %5884 = vmatpush1.bf16.msra.mxu0 0
      %5885 = vmatprep.subr.bf16.mxu0 0
      %5886 = vmatpush1.bf16.msra.mxu0 0
      %5887 = vmatprep.subr.bf16.mxu0 0
      %5888 = vmatpush1.bf16.msra.mxu0 0
      %5889 = vmatprep.mubr.bf16.mxu0 0
      %5890 = vmatmul.mubr.bf16.gmra.mrb[0].mxu0 %v5777
      %v5891 = vpop.f32.mrb[0].mxu0
      %v5892 = vadd.f32 0.0, %v5891
      %v5893 = vpop.f32.mrb[0].mxu0
      %v5894 = vpop.f32.mrb[0].mxu0
      %v5895 = vadd.f32 0.0, %v5894
      %v5896 = vpop.f32.mrb[0].mxu0
      %5897 = vmatprep.mubr.bf16.mxu0 0
      %5898 = vmatmul.mubr.bf16.gmra.mrb[0].mxu0 %v5778
      %v5899 = vpop.f32.mrb[0].mxu0
      %v5900 = vadd.f32 0.0, %v5899
      %v5901 = vpop.f32.mrb[0].mxu0
      %v5902 = vpop.f32.mrb[0].mxu0
      %v5903 = vadd.f32 0.0, %v5902
      %v5904 = vpop.f32.mrb[0].mxu0
      %5905 = vmatprep.mubr.bf16.mxu0 0
      %5906 = vmatmul.mubr.bf16.gmra.mrb[0].mxu0 %v5779
      %v5907 = vpop.f32.mrb[0].mxu0
      %v5908 = vadd.f32 0.0, %v5907
      %v5909 = vpop.f32.mrb[0].mxu0
      %v5910 = vpop.f32.mrb[0].mxu0
      %v5911 = vadd.f32 0.0, %v5910
      %v5912 = vpop.f32.mrb[0].mxu0
      %5913 = vmatprep.mubr.bf16.mxu0 0
      %5914 = vmatmul.mubr.bf16.gmra.mrb[0].mxu0 %v5780
      %v5915 = vpop.f32.mrb[0].mxu0
      %v5916 = vadd.f32 0.0, %v5915
      %v5917 = vpop.f32.mrb[0].mxu0
      %v5918 = vpop.f32.mrb[0].mxu0
      %v5919 = vadd.f32 0.0, %v5918
      %v5920 = vpop.f32.mrb[0].mxu0
      %5921 = vmatprep.mubr.bf16.mxu0 0
      %5922 = vmatmul.mubr.bf16.gmra.mrb[0].mxu0 %v5781
      %v5923 = vpop.f32.mrb[0].mxu0
      %v5924 = vadd.f32 0.0, %v5923
      %v5925 = vpop.f32.mrb[0].mxu0
      %v5926 = vpop.f32.mrb[0].mxu0
      %v5927 = vadd.f32 0.0, %v5926
      %v5928 = vpop.f32.mrb[0].mxu0
      %5929 = vmatprep.mubr.bf16.mxu0 0
      %5930 = vmatmul.mubr.bf16.gmra.mrb[0].mxu0 %v5782
      %v5931 = vpop.f32.mrb[0].mxu0
      %v5932 = vadd.f32 0.0, %v5931
      %v5933 = vpop.f32.mrb[0].mxu0
      %v5934 = vpop.f32.mrb[0].mxu0
      %v5935 = vadd.f32 0.0, %v5934
      %v5936 = vpop.f32.mrb[0].mxu0
      %5937 = vmatprep.mubr.bf16.mxu0 0
      %5938 = vmatmul.mubr.bf16.gmra.mrb[0].mxu0 %v5783
      %v5939 = vpop.f32.mrb[0].mxu0
      %v5940 = vadd.f32 0.0, %v5939
      %v5941 = vpop.f32.mrb[0].mxu0
      %v5942 = vpop.f32.mrb[0].mxu0
      %v5943 = vadd.f32 0.0, %v5942
      %v5944 = vpop.f32.mrb[0].mxu0
      %5945 = vmatprep.mubr.bf16.mxu0 0
      %5946 = vmatmul.mubr.bf16.gmra.mrb[0].mxu0 %v5784
      %v5947 = vpop.f32.mrb[0].mxu0
      %v5948 = vadd.f32 0.0, %v5947
      %v5949 = vpop.f32.mrb[0].mxu0
      %v5950 = vpop.f32.mrb[0].mxu0
      %v5951 = vadd.f32 0.0, %v5950
      %v5952 = vpop.f32.mrb[0].mxu0
      %5953 = vmatprep.mubr.bf16.mxu0 0
      %5954 = vmatmul.mubr.bf16.gmra.mrb[0].mxu0 %v5785
      %v5955 = vpop.f32.mrb[0].mxu0
      %v5956 = vadd.f32 0.0, %v5955
      %v5957 = vpop.f32.mrb[0].mxu0
      %v5958 = vpop.f32.mrb[0].mxu0
      %v5959 = vadd.f32 0.0, %v5958
      %v5960 = vpop.f32.mrb[0].mxu0
      %5961 = vmatprep.mubr.bf16.mxu0 0
      %5962 = vmatmul.mubr.bf16.gmra.mrb[0].mxu0 %v5786
      %v5963 = vpop.f32.mrb[0].mxu0
      %v5964 = vadd.f32 0.0, %v5963
      %v5965 = vpop.f32.mrb[0].mxu0
      %v5966 = vpop.f32.mrb[0].mxu0
      %v5967 = vadd.f32 0.0, %v5966
      %v5968 = vpop.f32.mrb[0].mxu0
      %5969 = vmatprep.mubr.bf16.mxu0 0
      %5970 = vmatmul.mubr.bf16.gmra.mrb[0].mxu0 %v5787
      %v5971 = vpop.f32.mrb[0].mxu0
      %v5972 = vadd.f32 0.0, %v5971
      %v5973 = vpop.f32.mrb[0].mxu0
      %v5974 = vpop.f32.mrb[0].mxu0
      %v5975 = vadd.f32 0.0, %v5974
      %v5976 = vpop.f32.mrb[0].mxu0
      %5977 = vmatprep.mubr.bf16.mxu0 0
      %5978 = vmatmul.mubr.bf16.gmra.mrb[0].mxu0 %v5788
      %v5979 = vpop.f32.mrb[0].mxu0
      %v5980 = vadd.f32 0.0, %v5979
      %v5981 = vpop.f32.mrb[0].mxu0
      %v5982 = vpop.f32.mrb[0].mxu0
      %v5983 = vadd.f32 0.0, %v5982
      %v5984 = vpop.f32.mrb[0].mxu0
      %5985 = vmatprep.mubr.bf16.mxu0 0
      %5986 = vmatmul.mubr.bf16.gmra.mrb[0].mxu0 %v5789
      %v5987 = vpop.f32.mrb[0].mxu0
      %v5988 = vadd.f32 0.0, %v5987
      %v5989 = vpop.f32.mrb[0].mxu0
      %v5990 = vpop.f32.mrb[0].mxu0
      %v5991 = vadd.f32 0.0, %v5990
      %v5992 = vpop.f32.mrb[0].mxu0
      %5993 = vmatprep.mubr.bf16.mxu0 0
      %5994 = vmatmul.mubr.bf16.gmra.mrb[0].mxu0 %v5790
      %v5995 = vpop.f32.mrb[0].mxu0
      %v5996 = vadd.f32 0.0, %v5995
      %v5997 = vpop.f32.mrb[0].mxu0
      %v5998 = vpop.f32.mrb[0].mxu0
      %v5999 = vadd.f32 0.0, %v5998
      %v6000 = vpop.f32.mrb[0].mxu0
      %6001 = vmatprep.mubr.bf16.mxu0 0
      %6002 = vmatmul.mubr.bf16.gmra.mrb[0].mxu0 %v5791
      %v6003 = vpop.f32.mrb[0].mxu0
      %v6004 = vadd.f32 0.0, %v6003
      %v6005 = vpop.f32.mrb[0].mxu0
      %v6006 = vpop.f32.mrb[0].mxu0
      %v6007 = vadd.f32 0.0, %v6006
      %v6008 = vpop.f32.mrb[0].mxu0
      %6009 = vmatprep.mubr.bf16.mxu0 0
      %6010 = vmatmul.mubr.bf16.gmra.mrb[0].mxu0 %v5792
      %v6011 = vpop.f32.mrb[0].mxu0
      %v6012 = vadd.f32 0.0, %v6011
      %v6013 = vpop.f32.mrb[0].mxu0
      %v6014 = vpop.f32.mrb[0].mxu0
      %v6015 = vadd.f32 0.0, %v6014
      %v6016 = vpop.f32.mrb[0].mxu0
      %6017 = vdwg.mxu0
      %v6018 = vadd.f32 %v5458, %v5892
      %v6019 = vadd.f32 %v5461, %v5895
      %v6020 = vadd.f32 %v5466, %v5900
      %v6021 = vadd.f32 %v5469, %v5903
      %v6022 = vadd.f32 %v5474, %v5908
      %v6023 = vadd.f32 %v5477, %v5911
      %v6024 = vadd.f32 %v5482, %v5916
      %v6025 = vadd.f32 %v5485, %v5919
      %v6026 = vadd.f32 %v5490, %v5924
      %v6027 = vadd.f32 %v5493, %v5927
      %v6028 = vadd.f32 %v5498, %v5932
      %v6029 = vadd.f32 %v5501, %v5935
      %v6030 = vadd.f32 %v5506, %v5940
      %v6031 = vadd.f32 %v5509, %v5943
      %v6032 = vadd.f32 %v5514, %v5948
      %v6033 = vadd.f32 %v5517, %v5951
      %v6034 = vadd.f32 %v5522, %v5956
      %v6035 = vadd.f32 %v5525, %v5959
      %v6036 = vadd.f32 %v5530, %v5964
      %v6037 = vadd.f32 %v5533, %v5967
      %v6038 = vadd.f32 %v5538, %v5972
      %v6039 = vadd.f32 %v5541, %v5975
      %v6040 = vadd.f32 %v5546, %v5980
      %v6041 = vadd.f32 %v5549, %v5983
      %v6042 = vadd.f32 %v5554, %v5988
      %v6043 = vadd.f32 %v5557, %v5991
      %v6044 = vadd.f32 %v5562, %v5996
      %v6045 = vadd.f32 %v5565, %v5999
      %v6046 = vadd.f32 %v5570, %v6004
      %v6047 = vadd.f32 %v5573, %v6007
      %v6048 = vadd.f32 %v5578, %v6012
      %v6049 = vadd.f32 %v5581, %v6015
      %s6050 = scalar_lea.vmem %s4, 192
      %v6051 = vld [vmem:[%s6050] sm:$0xf]
      %v6052 = vld [vmem:[%s6050 + $0x4] sm:$0xf]
      %v6053 = vld [vmem:[%s6050 + $0x8] sm:$0xf]
      %v6054 = vld [vmem:[%s6050 + $0xc] sm:$0xf]
      %v6055 = vld [vmem:[%s6050 + $0x10] sm:$0xf]
      %v6056 = vld [vmem:[%s6050 + $0x14] sm:$0xf]
      %v6057 = vld [vmem:[%s6050 + $0x18] sm:$0xf]
      %v6058 = vld [vmem:[%s6050 + $0x1c] sm:$0xf]
      %v6059 = vld [vmem:[%s6050 + $0x20] sm:$0xf]
      %v6060 = vld [vmem:[%s6050 + $0x24] sm:$0xf]
      %v6061 = vld [vmem:[%s6050 + $0x28] sm:$0xf]
      %v6062 = vld [vmem:[%s6050 + $0x2c] sm:$0xf]
      %v6063 = vld [vmem:[%s6050 + $0x30] sm:$0xf]
      %v6064 = vld [vmem:[%s6050 + $0x34] sm:$0xf]
      %v6065 = vld [vmem:[%s6050 + $0x38] sm:$0xf]
      %v6066 = vld [vmem:[%s6050 + $0x3c] sm:$0xf]
      %v6069 = vunpack.c.l.b16 %v4549
      %v6070 = vunpack.c.l.b16 %v4550
      %v6071 = vpack.c.b16 %v6070, %v6069
      %v6089 = vunpack.c.l.b16 %v6051
      %v6090 = vunpack.c.l.b16 %v6052
      %v6091 = vunpack.c.l.b16 %v6053
      %v6092 = vunpack.c.l.b16 %v6054
      %v6093 = vunpack.c.l.b16 %v6055
      %v6094 = vunpack.c.l.b16 %v6056
      %v6095 = vunpack.c.l.b16 %v6057
      %v6096 = vunpack.c.l.b16 %v6058
      %v6097 = vunpack.c.l.b16 %v6059
      %v6098 = vunpack.c.l.b16 %v6060
      %v6099 = vunpack.c.l.b16 %v6061
      %v6100 = vunpack.c.l.b16 %v6062
      %v6101 = vunpack.c.l.b16 %v6063
      %v6102 = vunpack.c.l.b16 %v6064
      %v6103 = vunpack.c.l.b16 %v6065
      %v6104 = vunpack.c.l.b16 %v6066
      %v6105 = vpack.c.b16 %v6090, %v6089
      %v6106 = vpack.c.b16 %v6092, %v6091
      %v6107 = vpack.c.b16 %v6094, %v6093
      %v6108 = vpack.c.b16 %v6096, %v6095
      %v6109 = vpack.c.b16 %v6098, %v6097
      %v6110 = vpack.c.b16 %v6100, %v6099
      %v6111 = vpack.c.b16 %v6102, %v6101
      %v6112 = vpack.c.b16 %v6104, %v6103
      %6121 = vmatprep.subr.bf16.mxu0 0
      %6122 = vmatpush1.bf16.msra.mxu0 %v6105
      %6123 = vmatprep.subr.bf16.mxu0 0
      %6124 = vmatpush1.bf16.msra.mxu0 %v6106
      %6125 = vmatprep.subr.bf16.mxu0 0
      %6126 = vmatpush1.bf16.msra.mxu0 %v6107
      %6127 = vmatprep.subr.bf16.mxu0 0
      %6128 = vmatpush1.bf16.msra.mxu0 %v6108
      %6129 = vmatprep.subr.bf16.mxu0 0
      %6130 = vmatpush1.bf16.msra.mxu0 %v6109
      %6131 = vmatprep.subr.bf16.mxu0 0
      %6132 = vmatpush1.bf16.msra.mxu0 %v6110
      %6133 = vmatprep.subr.bf16.mxu0 0
      %6134 = vmatpush1.bf16.msra.mxu0 %v6111
      %6135 = vmatprep.subr.bf16.mxu0 0
      %6136 = vmatpush1.bf16.msra.mxu0 %v6112
      %6137 = vmatprep.subr.bf16.mxu0 0
      %6138 = vmatpush1.bf16.msra.mxu0 0
      %6139 = vmatprep.subr.bf16.mxu0 0
      %6140 = vmatpush1.bf16.msra.mxu0 0
      %6141 = vmatprep.subr.bf16.mxu0 0
      %6142 = vmatpush1.bf16.msra.mxu0 0
      %6143 = vmatprep.subr.bf16.mxu0 0
      %6144 = vmatpush1.bf16.msra.mxu0 0
      %6145 = vmatprep.subr.bf16.mxu0 0
      %6146 = vmatpush1.bf16.msra.mxu0 0
      %6147 = vmatprep.subr.bf16.mxu0 0
      %6148 = vmatpush1.bf16.msra.mxu0 0
      %6149 = vmatprep.subr.bf16.mxu0 0
      %6150 = vmatpush1.bf16.msra.mxu0 0
      %6151 = vmatprep.subr.bf16.mxu0 0
      %6152 = vmatpush1.bf16.msra.mxu0 0
      %6153 = vmatprep.mubr.bf16.mxu0 0
      %6154 = vmatmul.mubr.bf16.gmra.mrb[0].mxu0 %v5344
      %v6155 = vpop.f32.mrb[0].mxu0
      %v6156 = vadd.f32 0.0, %v6155
      %v6157 = vpop.f32.mrb[0].mxu0
      %v6158 = vpop.f32.mrb[0].mxu0
      %v6159 = vadd.f32 0.0, %v6158
      %v6160 = vpop.f32.mrb[0].mxu0
      %6161 = vmatprep.mubr.bf16.mxu0 0
      %6162 = vmatmul.mubr.bf16.gmra.mrb[0].mxu0 %v5345
      %v6163 = vpop.f32.mrb[0].mxu0
      %v6164 = vadd.f32 0.0, %v6163
      %v6165 = vpop.f32.mrb[0].mxu0
      %v6166 = vpop.f32.mrb[0].mxu0
      %v6167 = vadd.f32 0.0, %v6166
      %v6168 = vpop.f32.mrb[0].mxu0
      %6169 = vmatprep.mubr.bf16.mxu0 0
      %6170 = vmatmul.mubr.bf16.gmra.mrb[0].mxu0 %v5346
      %v6171 = vpop.f32.mrb[0].mxu0
      %v6172 = vadd.f32 0.0, %v6171
      %v6173 = vpop.f32.mrb[0].mxu0
      %v6174 = vpop.f32.mrb[0].mxu0
      %v6175 = vadd.f32 0.0, %v6174
      %v6176 = vpop.f32.mrb[0].mxu0
      %6177 = vmatprep.mubr.bf16.mxu0 0
      %6178 = vmatmul.mubr.bf16.gmra.mrb[0].mxu0 %v5347
      %v6179 = vpop.f32.mrb[0].mxu0
      %v6180 = vadd.f32 0.0, %v6179
      %v6181 = vpop.f32.mrb[0].mxu0
      %v6182 = vpop.f32.mrb[0].mxu0
      %v6183 = vadd.f32 0.0, %v6182
      %v6184 = vpop.f32.mrb[0].mxu0
      %6185 = vmatprep.mubr.bf16.mxu0 0
      %6186 = vmatmul.mubr.bf16.gmra.mrb[0].mxu0 %v5348
      %v6187 = vpop.f32.mrb[0].mxu0
      %v6188 = vadd.f32 0.0, %v6187
      %v6189 = vpop.f32.mrb[0].mxu0
      %v6190 = vpop.f32.mrb[0].mxu0
      %v6191 = vadd.f32 0.0, %v6190
      %v6192 = vpop.f32.mrb[0].mxu0
      %6193 = vmatprep.mubr.bf16.mxu0 0
      %6194 = vmatmul.mubr.bf16.gmra.mrb[0].mxu0 %v5349
      %v6195 = vpop.f32.mrb[0].mxu0
      %v6196 = vadd.f32 0.0, %v6195
      %v6197 = vpop.f32.mrb[0].mxu0
      %v6198 = vpop.f32.mrb[0].mxu0
      %v6199 = vadd.f32 0.0, %v6198
      %v6200 = vpop.f32.mrb[0].mxu0
      %6201 = vmatprep.mubr.bf16.mxu0 0
      %6202 = vmatmul.mubr.bf16.gmra.mrb[0].mxu0 %v5350
      %v6203 = vpop.f32.mrb[0].mxu0
      %v6204 = vadd.f32 0.0, %v6203
      %v6205 = vpop.f32.mrb[0].mxu0
      %v6206 = vpop.f32.mrb[0].mxu0
      %v6207 = vadd.f32 0.0, %v6206
      %v6208 = vpop.f32.mrb[0].mxu0
      %6209 = vmatprep.mubr.bf16.mxu0 0
      %6210 = vmatmul.mubr.bf16.gmra.mrb[0].mxu0 %v5351
      %v6211 = vpop.f32.mrb[0].mxu0
      %v6212 = vadd.f32 0.0, %v6211
      %v6213 = vpop.f32.mrb[0].mxu0
      %v6214 = vpop.f32.mrb[0].mxu0
      %v6215 = vadd.f32 0.0, %v6214
      %v6216 = vpop.f32.mrb[0].mxu0
      %6217 = vmatprep.mubr.bf16.mxu0 0
      %6218 = vmatmul.mubr.bf16.gmra.mrb[0].mxu0 %v5352
      %v6219 = vpop.f32.mrb[0].mxu0
      %v6220 = vadd.f32 0.0, %v6219
      %v6221 = vpop.f32.mrb[0].mxu0
      %v6222 = vpop.f32.mrb[0].mxu0
      %v6223 = vadd.f32 0.0, %v6222
      %v6224 = vpop.f32.mrb[0].mxu0
      %6225 = vmatprep.mubr.bf16.mxu0 0
      %6226 = vmatmul.mubr.bf16.gmra.mrb[0].mxu0 %v5353
      %v6227 = vpop.f32.mrb[0].mxu0
      %v6228 = vadd.f32 0.0, %v6227
      %v6229 = vpop.f32.mrb[0].mxu0
      %v6230 = vpop.f32.mrb[0].mxu0
      %v6231 = vadd.f32 0.0, %v6230
      %v6232 = vpop.f32.mrb[0].mxu0
      %6233 = vmatprep.mubr.bf16.mxu0 0
      %6234 = vmatmul.mubr.bf16.gmra.mrb[0].mxu0 %v5354
      %v6235 = vpop.f32.mrb[0].mxu0
      %v6236 = vadd.f32 0.0, %v6235
      %v6237 = vpop.f32.mrb[0].mxu0
      %v6238 = vpop.f32.mrb[0].mxu0
      %v6239 = vadd.f32 0.0, %v6238
      %v6240 = vpop.f32.mrb[0].mxu0
      %6241 = vmatprep.mubr.bf16.mxu0 0
      %6242 = vmatmul.mubr.bf16.gmra.mrb[0].mxu0 %v5355
      %v6243 = vpop.f32.mrb[0].mxu0
      %v6244 = vadd.f32 0.0, %v6243
      %v6245 = vpop.f32.mrb[0].mxu0
      %v6246 = vpop.f32.mrb[0].mxu0
      %v6247 = vadd.f32 0.0, %v6246
      %v6248 = vpop.f32.mrb[0].mxu0
      %6249 = vmatprep.mubr.bf16.mxu0 0
      %6250 = vmatmul.mubr.bf16.gmra.mrb[0].mxu0 %v5356
      %v6251 = vpop.f32.mrb[0].mxu0
      %v6252 = vadd.f32 0.0, %v6251
      %v6253 = vpop.f32.mrb[0].mxu0
      %v6254 = vpop.f32.mrb[0].mxu0
      %v6255 = vadd.f32 0.0, %v6254
      %v6256 = vpop.f32.mrb[0].mxu0
      %6257 = vmatprep.mubr.bf16.mxu0 0
      %6258 = vmatmul.mubr.bf16.gmra.mrb[0].mxu0 %v5357
      %v6259 = vpop.f32.mrb[0].mxu0
      %v6260 = vadd.f32 0.0, %v6259
      %v6261 = vpop.f32.mrb[0].mxu0
      %v6262 = vpop.f32.mrb[0].mxu0
      %v6263 = vadd.f32 0.0, %v6262
      %v6264 = vpop.f32.mrb[0].mxu0
      %6265 = vmatprep.mubr.bf16.mxu0 0
      %6266 = vmatmul.mubr.bf16.gmra.mrb[0].mxu0 %v5358
      %v6267 = vpop.f32.mrb[0].mxu0
      %v6268 = vadd.f32 0.0, %v6267
      %v6269 = vpop.f32.mrb[0].mxu0
      %v6270 = vpop.f32.mrb[0].mxu0
      %v6271 = vadd.f32 0.0, %v6270
      %v6272 = vpop.f32.mrb[0].mxu0
      %6273 = vmatprep.mubr.bf16.mxu0 0
      %6274 = vmatmul.mubr.bf16.gmra.mrb[0].mxu0 %v6071
      %v6275 = vpop.f32.mrb[0].mxu0
      %v6276 = vadd.f32 0.0, %v6275
      %v6277 = vpop.f32.mrb[0].mxu0
      %v6278 = vpop.f32.mrb[0].mxu0
      %v6279 = vadd.f32 0.0, %v6278
      %v6280 = vpop.f32.mrb[0].mxu0
      %6281 = vdwg.mxu0
      %v6282 = vadd.f32 %v6018, %v6156
      %v6283 = vadd.f32 %v6019, %v6159
      %v6284 = vadd.f32 %v6020, %v6164
      %v6285 = vadd.f32 %v6021, %v6167
      %v6286 = vadd.f32 %v6022, %v6172
      %v6287 = vadd.f32 %v6023, %v6175
      %v6288 = vadd.f32 %v6024, %v6180
      %v6289 = vadd.f32 %v6025, %v6183
      %v6290 = vadd.f32 %v6026, %v6188
      %v6291 = vadd.f32 %v6027, %v6191
      %v6292 = vadd.f32 %v6028, %v6196
      %v6293 = vadd.f32 %v6029, %v6199
      %v6294 = vadd.f32 %v6030, %v6204
      %v6295 = vadd.f32 %v6031, %v6207
      %v6296 = vadd.f32 %v6032, %v6212
      %v6297 = vadd.f32 %v6033, %v6215
      %v6298 = vadd.f32 %v6034, %v6220
      %v6299 = vadd.f32 %v6035, %v6223
      %v6300 = vadd.f32 %v6036, %v6228
      %v6301 = vadd.f32 %v6037, %v6231
      %v6302 = vadd.f32 %v6038, %v6236
      %v6303 = vadd.f32 %v6039, %v6239
      %v6304 = vadd.f32 %v6040, %v6244
      %v6305 = vadd.f32 %v6041, %v6247
      %v6306 = vadd.f32 %v6042, %v6252
      %v6307 = vadd.f32 %v6043, %v6255
      %v6308 = vadd.f32 %v6044, %v6260
      %v6309 = vadd.f32 %v6045, %v6263
      %v6310 = vadd.f32 %v6046, %v6268
      %v6311 = vadd.f32 %v6047, %v6271
      %v6312 = vadd.f32 %v6048, %v6276
      %v6313 = vadd.f32 %v6049, %v6279
      %v6315 = vshrl.u32 %v4549, 16
      %v6317 = vrot.slane %v6315, 4
      %v6318 = vshll.u32 %v4549, 16
      %v6320 = vrot.slane %v6318, 5
      %v6321 = vor.u32 %v6317, %v6320
      %v6322 = vrot.slane %v6321, 4
      %v6324 = vshll.u32 %v4550, 16
      %v6326 = vrot.slane %v6324, 5
      %v6327 = vsel %vm1030, %v6322, %v6326
      %v6328 = vshrl.u32 %v4550, 16
      %v6330 = vrot.slane %v6328, 4
      %v6331 = vor.u32 %v6330, %v6326
      %v6332 = vrot.slane %v6331, 4
      %v6334 = vshll.u32 %v4569, 16
      %v6336 = vrot.slane %v6334, 5
      %v6337 = vsel %vm1030, %v6332, %v6336
      %s6338 = scalar_lea.vmem %s4, 256
      %v6339 = vld [vmem:[%s6338] sm:$0xf]
      %v6340 = vld [vmem:[%s6338 + $0x4] sm:$0xf]
      %v6341 = vld [vmem:[%s6338 + $0x8] sm:$0xf]
      %v6342 = vld [vmem:[%s6338 + $0xc] sm:$0xf]
      %v6343 = vld [vmem:[%s6338 + $0x10] sm:$0xf]
      %v6344 = vld [vmem:[%s6338 + $0x14] sm:$0xf]
      %v6345 = vld [vmem:[%s6338 + $0x18] sm:$0xf]
      %v6346 = vld [vmem:[%s6338 + $0x1c] sm:$0xf]
      %v6347 = vld [vmem:[%s6338 + $0x20] sm:$0xf]
      %v6348 = vld [vmem:[%s6338 + $0x24] sm:$0xf]
      %v6349 = vld [vmem:[%s6338 + $0x28] sm:$0xf]
      %v6350 = vld [vmem:[%s6338 + $0x2c] sm:$0xf]
      %v6351 = vld [vmem:[%s6338 + $0x30] sm:$0xf]
      %v6352 = vld [vmem:[%s6338 + $0x34] sm:$0xf]
      %v6353 = vld [vmem:[%s6338 + $0x38] sm:$0xf]
      %v6354 = vld [vmem:[%s6338 + $0x3c] sm:$0xf]
      %v6355 = vunpack.c.l.b16 %v6327
      %v6356 = vunpack.c.l.b16 %v6337
      %v6357 = vpack.c.b16 %v6356, %v6355
      %v6375 = vunpack.c.l.b16 %v6339
      %v6376 = vunpack.c.l.b16 %v6340
      %v6377 = vunpack.c.l.b16 %v6341
      %v6378 = vunpack.c.l.b16 %v6342
      %v6379 = vunpack.c.l.b16 %v6343
      %v6380 = vunpack.c.l.b16 %v6344
      %v6381 = vunpack.c.l.b16 %v6345
      %v6382 = vunpack.c.l.b16 %v6346
      %v6383 = vunpack.c.l.b16 %v6347
      %v6384 = vunpack.c.l.b16 %v6348
      %v6385 = vunpack.c.l.b16 %v6349
      %v6386 = vunpack.c.l.b16 %v6350
      %v6387 = vunpack.c.l.b16 %v6351
      %v6388 = vunpack.c.l.b16 %v6352
      %v6389 = vunpack.c.l.b16 %v6353
      %v6390 = vunpack.c.l.b16 %v6354
      %v6391 = vpack.c.b16 %v6376, %v6375
      %v6392 = vpack.c.b16 %v6378, %v6377
      %v6393 = vpack.c.b16 %v6380, %v6379
      %v6394 = vpack.c.b16 %v6382, %v6381
      %v6395 = vpack.c.b16 %v6384, %v6383
      %v6396 = vpack.c.b16 %v6386, %v6385
      %v6397 = vpack.c.b16 %v6388, %v6387
      %v6398 = vpack.c.b16 %v6390, %v6389
      %6407 = vmatprep.subr.bf16.mxu0 0
      %6408 = vmatpush1.bf16.msra.mxu0 %v6391
      %6409 = vmatprep.subr.bf16.mxu0 0
      %6410 = vmatpush1.bf16.msra.mxu0 %v6392
      %6411 = vmatprep.subr.bf16.mxu0 0
      %6412 = vmatpush1.bf16.msra.mxu0 %v6393
      %6413 = vmatprep.subr.bf16.mxu0 0
      %6414 = vmatpush1.bf16.msra.mxu0 %v6394
      %6415 = vmatprep.subr.bf16.mxu0 0
      %6416 = vmatpush1.bf16.msra.mxu0 %v6395
      %6417 = vmatprep.subr.bf16.mxu0 0
      %6418 = vmatpush1.bf16.msra.mxu0 %v6396
      %6419 = vmatprep.subr.bf16.mxu0 0
      %6420 = vmatpush1.bf16.msra.mxu0 %v6397
      %6421 = vmatprep.subr.bf16.mxu0 0
      %6422 = vmatpush1.bf16.msra.mxu0 %v6398
      %6423 = vmatprep.subr.bf16.mxu0 0
      %6424 = vmatpush1.bf16.msra.mxu0 0
      %6425 = vmatprep.subr.bf16.mxu0 0
      %6426 = vmatpush1.bf16.msra.mxu0 0
      %6427 = vmatprep.subr.bf16.mxu0 0
      %6428 = vmatpush1.bf16.msra.mxu0 0
      %6429 = vmatprep.subr.bf16.mxu0 0
      %6430 = vmatpush1.bf16.msra.mxu0 0
      %6431 = vmatprep.subr.bf16.mxu0 0
      %6432 = vmatpush1.bf16.msra.mxu0 0
      %6433 = vmatprep.subr.bf16.mxu0 0
      %6434 = vmatpush1.bf16.msra.mxu0 0
      %6435 = vmatprep.subr.bf16.mxu0 0
      %6436 = vmatpush1.bf16.msra.mxu0 0
      %6437 = vmatprep.subr.bf16.mxu0 0
      %6438 = vmatpush1.bf16.msra.mxu0 0
      %6439 = vmatprep.mubr.bf16.mxu0 0
      %6440 = vmatmul.mubr.bf16.gmra.mrb[0].mxu0 %v5039
      %v6441 = vpop.f32.mrb[0].mxu0
      %v6442 = vadd.f32 0.0, %v6441
      %v6443 = vpop.f32.mrb[0].mxu0
      %v6444 = vpop.f32.mrb[0].mxu0
      %v6445 = vadd.f32 0.0, %v6444
      %v6446 = vpop.f32.mrb[0].mxu0
      %6447 = vmatprep.mubr.bf16.mxu0 0
      %6448 = vmatmul.mubr.bf16.gmra.mrb[0].mxu0 %v5040
      %v6449 = vpop.f32.mrb[0].mxu0
      %v6450 = vadd.f32 0.0, %v6449
      %v6451 = vpop.f32.mrb[0].mxu0
      %v6452 = vpop.f32.mrb[0].mxu0
      %v6453 = vadd.f32 0.0, %v6452
      %v6454 = vpop.f32.mrb[0].mxu0
      %6455 = vmatprep.mubr.bf16.mxu0 0
      %6456 = vmatmul.mubr.bf16.gmra.mrb[0].mxu0 %v5041
      %v6457 = vpop.f32.mrb[0].mxu0
      %v6458 = vadd.f32 0.0, %v6457
      %v6459 = vpop.f32.mrb[0].mxu0
      %v6460 = vpop.f32.mrb[0].mxu0
      %v6461 = vadd.f32 0.0, %v6460
      %v6462 = vpop.f32.mrb[0].mxu0
      %6463 = vmatprep.mubr.bf16.mxu0 0
      %6464 = vmatmul.mubr.bf16.gmra.mrb[0].mxu0 %v5042
      %v6465 = vpop.f32.mrb[0].mxu0
      %v6466 = vadd.f32 0.0, %v6465
      %v6467 = vpop.f32.mrb[0].mxu0
      %v6468 = vpop.f32.mrb[0].mxu0
      %v6469 = vadd.f32 0.0, %v6468
      %v6470 = vpop.f32.mrb[0].mxu0
      %6471 = vmatprep.mubr.bf16.mxu0 0
      %6472 = vmatmul.mubr.bf16.gmra.mrb[0].mxu0 %v5043
      %v6473 = vpop.f32.mrb[0].mxu0
      %v6474 = vadd.f32 0.0, %v6473
      %v6475 = vpop.f32.mrb[0].mxu0
      %v6476 = vpop.f32.mrb[0].mxu0
      %v6477 = vadd.f32 0.0, %v6476
      %v6478 = vpop.f32.mrb[0].mxu0
      %6479 = vmatprep.mubr.bf16.mxu0 0
      %6480 = vmatmul.mubr.bf16.gmra.mrb[0].mxu0 %v5044
      %v6481 = vpop.f32.mrb[0].mxu0
      %v6482 = vadd.f32 0.0, %v6481
      %v6483 = vpop.f32.mrb[0].mxu0
      %v6484 = vpop.f32.mrb[0].mxu0
      %v6485 = vadd.f32 0.0, %v6484
      %v6486 = vpop.f32.mrb[0].mxu0
      %6487 = vmatprep.mubr.bf16.mxu0 0
      %6488 = vmatmul.mubr.bf16.gmra.mrb[0].mxu0 %v5045
      %v6489 = vpop.f32.mrb[0].mxu0
      %v6490 = vadd.f32 0.0, %v6489
      %v6491 = vpop.f32.mrb[0].mxu0
      %v6492 = vpop.f32.mrb[0].mxu0
      %v6493 = vadd.f32 0.0, %v6492
      %v6494 = vpop.f32.mrb[0].mxu0
      %6495 = vmatprep.mubr.bf16.mxu0 0
      %6496 = vmatmul.mubr.bf16.gmra.mrb[0].mxu0 %v5046
      %v6497 = vpop.f32.mrb[0].mxu0
      %v6498 = vadd.f32 0.0, %v6497
      %v6499 = vpop.f32.mrb[0].mxu0
      %v6500 = vpop.f32.mrb[0].mxu0
      %v6501 = vadd.f32 0.0, %v6500
      %v6502 = vpop.f32.mrb[0].mxu0
      %6503 = vmatprep.mubr.bf16.mxu0 0
      %6504 = vmatmul.mubr.bf16.gmra.mrb[0].mxu0 %v5047
      %v6505 = vpop.f32.mrb[0].mxu0
      %v6506 = vadd.f32 0.0, %v6505
      %v6507 = vpop.f32.mrb[0].mxu0
      %v6508 = vpop.f32.mrb[0].mxu0
      %v6509 = vadd.f32 0.0, %v6508
      %v6510 = vpop.f32.mrb[0].mxu0
      %6511 = vmatprep.mubr.bf16.mxu0 0
      %6512 = vmatmul.mubr.bf16.gmra.mrb[0].mxu0 %v5048
      %v6513 = vpop.f32.mrb[0].mxu0
      %v6514 = vadd.f32 0.0, %v6513
      %v6515 = vpop.f32.mrb[0].mxu0
      %v6516 = vpop.f32.mrb[0].mxu0
      %v6517 = vadd.f32 0.0, %v6516
      %v6518 = vpop.f32.mrb[0].mxu0
      %6519 = vmatprep.mubr.bf16.mxu0 0
      %6520 = vmatmul.mubr.bf16.gmra.mrb[0].mxu0 %v5049
      %v6521 = vpop.f32.mrb[0].mxu0
      %v6522 = vadd.f32 0.0, %v6521
      %v6523 = vpop.f32.mrb[0].mxu0
      %v6524 = vpop.f32.mrb[0].mxu0
      %v6525 = vadd.f32 0.0, %v6524
      %v6526 = vpop.f32.mrb[0].mxu0
      %6527 = vmatprep.mubr.bf16.mxu0 0
      %6528 = vmatmul.mubr.bf16.gmra.mrb[0].mxu0 %v5050
      %v6529 = vpop.f32.mrb[0].mxu0
      %v6530 = vadd.f32 0.0, %v6529
      %v6531 = vpop.f32.mrb[0].mxu0
      %v6532 = vpop.f32.mrb[0].mxu0
      %v6533 = vadd.f32 0.0, %v6532
      %v6534 = vpop.f32.mrb[0].mxu0
      %6535 = vmatprep.mubr.bf16.mxu0 0
      %6536 = vmatmul.mubr.bf16.gmra.mrb[0].mxu0 %v5051
      %v6537 = vpop.f32.mrb[0].mxu0
      %v6538 = vadd.f32 0.0, %v6537
      %v6539 = vpop.f32.mrb[0].mxu0
      %v6540 = vpop.f32.mrb[0].mxu0
      %v6541 = vadd.f32 0.0, %v6540
      %v6542 = vpop.f32.mrb[0].mxu0
      %6543 = vmatprep.mubr.bf16.mxu0 0
      %6544 = vmatmul.mubr.bf16.gmra.mrb[0].mxu0 %v5052
      %v6545 = vpop.f32.mrb[0].mxu0
      %v6546 = vadd.f32 0.0, %v6545
      %v6547 = vpop.f32.mrb[0].mxu0
      %v6548 = vpop.f32.mrb[0].mxu0
      %v6549 = vadd.f32 0.0, %v6548
      %v6550 = vpop.f32.mrb[0].mxu0
      %6551 = vmatprep.mubr.bf16.mxu0 0
      %6552 = vmatmul.mubr.bf16.gmra.mrb[0].mxu0 %v5053
      %v6553 = vpop.f32.mrb[0].mxu0
      %v6554 = vadd.f32 0.0, %v6553
      %v6555 = vpop.f32.mrb[0].mxu0
      %v6556 = vpop.f32.mrb[0].mxu0
      %v6557 = vadd.f32 0.0, %v6556
      %v6558 = vpop.f32.mrb[0].mxu0
      %6559 = vmatprep.mubr.bf16.mxu0 0
      %6560 = vmatmul.mubr.bf16.gmra.mrb[0].mxu0 %v6357
      %v6561 = vpop.f32.mrb[0].mxu0
      %v6562 = vadd.f32 0.0, %v6561
      %v6563 = vpop.f32.mrb[0].mxu0
      %v6564 = vpop.f32.mrb[0].mxu0
      %v6565 = vadd.f32 0.0, %v6564
      %v6566 = vpop.f32.mrb[0].mxu0
      %6567 = vdwg.mxu0
      %v6568 = vadd.f32 %v6282, %v6442
      %v6569 = vadd.f32 %v6283, %v6445
      %v6570 = vadd.f32 %v6284, %v6450
      %v6571 = vadd.f32 %v6285, %v6453
      %v6572 = vadd.f32 %v6286, %v6458
      %v6573 = vadd.f32 %v6287, %v6461
      %v6574 = vadd.f32 %v6288, %v6466
      %v6575 = vadd.f32 %v6289, %v6469
      %v6576 = vadd.f32 %v6290, %v6474
      %v6577 = vadd.f32 %v6291, %v6477
      %v6578 = vadd.f32 %v6292, %v6482
      %v6579 = vadd.f32 %v6293, %v6485
      %v6580 = vadd.f32 %v6294, %v6490
      %v6581 = vadd.f32 %v6295, %v6493
      %v6582 = vadd.f32 %v6296, %v6498
      %v6583 = vadd.f32 %v6297, %v6501
      %v6584 = vadd.f32 %v6298, %v6506
      %v6585 = vadd.f32 %v6299, %v6509
      %v6586 = vadd.f32 %v6300, %v6514
      %v6587 = vadd.f32 %v6301, %v6517
      %v6588 = vadd.f32 %v6302, %v6522
      %v6589 = vadd.f32 %v6303, %v6525
      %v6590 = vadd.f32 %v6304, %v6530
      %v6591 = vadd.f32 %v6305, %v6533
      %v6592 = vadd.f32 %v6306, %v6538
      %v6593 = vadd.f32 %v6307, %v6541
      %v6594 = vadd.f32 %v6308, %v6546
      %v6595 = vadd.f32 %v6309, %v6549
      %v6596 = vadd.f32 %v6310, %v6554
      %v6597 = vadd.f32 %v6311, %v6557
      %v6598 = vadd.f32 %v6312, %v6562
      %v6599 = vadd.f32 %v6313, %v6565
      %v6602 = vrot.slane %v4587, 5
      %v6603 = vrot.slane %v6602, 4
      %v6604 = vrot.slane %v4550, 5
      %v6605 = vsel %vm2005, %v6603, %v6604
      %v6606 = vrot.slane %v6604, 4
      %v6607 = vrot.slane %v4569, 5
      %v6608 = vsel %vm2005, %v6606, %v6607
      %s6609 = scalar_lea.vmem %s4, 320
      %v6610 = vld [vmem:[%s6609] sm:$0xf]
      %v6611 = vld [vmem:[%s6609 + $0x4] sm:$0xf]
      %v6612 = vld [vmem:[%s6609 + $0x8] sm:$0xf]
      %v6613 = vld [vmem:[%s6609 + $0xc] sm:$0xf]
      %v6614 = vld [vmem:[%s6609 + $0x10] sm:$0xf]
      %v6615 = vld [vmem:[%s6609 + $0x14] sm:$0xf]
      %v6616 = vld [vmem:[%s6609 + $0x18] sm:$0xf]
      %v6617 = vld [vmem:[%s6609 + $0x1c] sm:$0xf]
      %v6618 = vld [vmem:[%s6609 + $0x20] sm:$0xf]
      %v6619 = vld [vmem:[%s6609 + $0x24] sm:$0xf]
      %v6620 = vld [vmem:[%s6609 + $0x28] sm:$0xf]
      %v6621 = vld [vmem:[%s6609 + $0x2c] sm:$0xf]
      %v6622 = vld [vmem:[%s6609 + $0x30] sm:$0xf]
      %v6623 = vld [vmem:[%s6609 + $0x34] sm:$0xf]
      %v6624 = vld [vmem:[%s6609 + $0x38] sm:$0xf]
      %v6625 = vld [vmem:[%s6609 + $0x3c] sm:$0xf]
      %v6626 = vunpack.c.l.b16 %v6605
      %v6627 = vunpack.c.l.b16 %v6608
      %v6628 = vpack.c.b16 %v6627, %v6626
      %v6646 = vunpack.c.l.b16 %v6610
      %v6647 = vunpack.c.l.b16 %v6611
      %v6648 = vunpack.c.l.b16 %v6612
      %v6649 = vunpack.c.l.b16 %v6613
      %v6650 = vunpack.c.l.b16 %v6614
      %v6651 = vunpack.c.l.b16 %v6615
      %v6652 = vunpack.c.l.b16 %v6616
      %v6653 = vunpack.c.l.b16 %v6617
      %v6654 = vunpack.c.l.b16 %v6618
      %v6655 = vunpack.c.l.b16 %v6619
      %v6656 = vunpack.c.l.b16 %v6620
      %v6657 = vunpack.c.l.b16 %v6621
      %v6658 = vunpack.c.l.b16 %v6622
      %v6659 = vunpack.c.l.b16 %v6623
      %v6660 = vunpack.c.l.b16 %v6624
      %v6661 = vunpack.c.l.b16 %v6625
      %v6662 = vpack.c.b16 %v6647, %v6646
      %v6663 = vpack.c.b16 %v6649, %v6648
      %v6664 = vpack.c.b16 %v6651, %v6650
      %v6665 = vpack.c.b16 %v6653, %v6652
      %v6666 = vpack.c.b16 %v6655, %v6654
      %v6667 = vpack.c.b16 %v6657, %v6656
      %v6668 = vpack.c.b16 %v6659, %v6658
      %v6669 = vpack.c.b16 %v6661, %v6660
      %6678 = vmatprep.subr.bf16.mxu0 0
      %6679 = vmatpush1.bf16.msra.mxu0 %v6662
      %6680 = vmatprep.subr.bf16.mxu0 0
      %6681 = vmatpush1.bf16.msra.mxu0 %v6663
      %6682 = vmatprep.subr.bf16.mxu0 0
      %6683 = vmatpush1.bf16.msra.mxu0 %v6664
      %6684 = vmatprep.subr.bf16.mxu0 0
      %6685 = vmatpush1.bf16.msra.mxu0 %v6665
      %6686 = vmatprep.subr.bf16.mxu0 0
      %6687 = vmatpush1.bf16.msra.mxu0 %v6666
      %6688 = vmatprep.subr.bf16.mxu0 0
      %6689 = vmatpush1.bf16.msra.mxu0 %v6667
      %6690 = vmatprep.subr.bf16.mxu0 0
      %6691 = vmatpush1.bf16.msra.mxu0 %v6668
      %6692 = vmatprep.subr.bf16.mxu0 0
      %6693 = vmatpush1.bf16.msra.mxu0 %v6669
      %6694 = vmatprep.subr.bf16.mxu0 0
      %6695 = vmatpush1.bf16.msra.mxu0 0
      %6696 = vmatprep.subr.bf16.mxu0 0
      %6697 = vmatpush1.bf16.msra.mxu0 0
      %6698 = vmatprep.subr.bf16.mxu0 0
      %6699 = vmatpush1.bf16.msra.mxu0 0
      %6700 = vmatprep.subr.bf16.mxu0 0
      %6701 = vmatpush1.bf16.msra.mxu0 0
      %6702 = vmatprep.subr.bf16.mxu0 0
      %6703 = vmatpush1.bf16.msra.mxu0 0
      %6704 = vmatprep.subr.bf16.mxu0 0
      %6705 = vmatpush1.bf16.msra.mxu0 0
      %6706 = vmatprep.subr.bf16.mxu0 0
      %6707 = vmatpush1.bf16.msra.mxu0 0
      %6708 = vmatprep.subr.bf16.mxu0 0
      %6709 = vmatpush1.bf16.msra.mxu0 0
      %6710 = vmatprep.mubr.bf16.mxu0 0
      %6711 = vmatmul.mubr.bf16.gmra.mrb[0].mxu0 %v5778
      %v6712 = vpop.f32.mrb[0].mxu0
      %v6713 = vadd.f32 0.0, %v6712
      %v6714 = vpop.f32.mrb[0].mxu0
      %v6715 = vpop.f32.mrb[0].mxu0
      %v6716 = vadd.f32 0.0, %v6715
      %v6717 = vpop.f32.mrb[0].mxu0
      %6718 = vmatprep.mubr.bf16.mxu0 0
      %6719 = vmatmul.mubr.bf16.gmra.mrb[0].mxu0 %v5779
      %v6720 = vpop.f32.mrb[0].mxu0
      %v6721 = vadd.f32 0.0, %v6720
      %v6722 = vpop.f32.mrb[0].mxu0
      %v6723 = vpop.f32.mrb[0].mxu0
      %v6724 = vadd.f32 0.0, %v6723
      %v6725 = vpop.f32.mrb[0].mxu0
      %6726 = vmatprep.mubr.bf16.mxu0 0
      %6727 = vmatmul.mubr.bf16.gmra.mrb[0].mxu0 %v5780
      %v6728 = vpop.f32.mrb[0].mxu0
      %v6729 = vadd.f32 0.0, %v6728
      %v6730 = vpop.f32.mrb[0].mxu0
      %v6731 = vpop.f32.mrb[0].mxu0
      %v6732 = vadd.f32 0.0, %v6731
      %v6733 = vpop.f32.mrb[0].mxu0
      %6734 = vmatprep.mubr.bf16.mxu0 0
      %6735 = vmatmul.mubr.bf16.gmra.mrb[0].mxu0 %v5781
      %v6736 = vpop.f32.mrb[0].mxu0
      %v6737 = vadd.f32 0.0, %v6736
      %v6738 = vpop.f32.mrb[0].mxu0
      %v6739 = vpop.f32.mrb[0].mxu0
      %v6740 = vadd.f32 0.0, %v6739
      %v6741 = vpop.f32.mrb[0].mxu0
      %6742 = vmatprep.mubr.bf16.mxu0 0
      %6743 = vmatmul.mubr.bf16.gmra.mrb[0].mxu0 %v5782
      %v6744 = vpop.f32.mrb[0].mxu0
      %v6745 = vadd.f32 0.0, %v6744
      %v6746 = vpop.f32.mrb[0].mxu0
      %v6747 = vpop.f32.mrb[0].mxu0
      %v6748 = vadd.f32 0.0, %v6747
      %v6749 = vpop.f32.mrb[0].mxu0
      %6750 = vmatprep.mubr.bf16.mxu0 0
      %6751 = vmatmul.mubr.bf16.gmra.mrb[0].mxu0 %v5783
      %v6752 = vpop.f32.mrb[0].mxu0
      %v6753 = vadd.f32 0.0, %v6752
      %v6754 = vpop.f32.mrb[0].mxu0
      %v6755 = vpop.f32.mrb[0].mxu0
      %v6756 = vadd.f32 0.0, %v6755
      %v6757 = vpop.f32.mrb[0].mxu0
      %6758 = vmatprep.mubr.bf16.mxu0 0
      %6759 = vmatmul.mubr.bf16.gmra.mrb[0].mxu0 %v5784
      %v6760 = vpop.f32.mrb[0].mxu0
      %v6761 = vadd.f32 0.0, %v6760
      %v6762 = vpop.f32.mrb[0].mxu0
      %v6763 = vpop.f32.mrb[0].mxu0
      %v6764 = vadd.f32 0.0, %v6763
      %v6765 = vpop.f32.mrb[0].mxu0
      %6766 = vmatprep.mubr.bf16.mxu0 0
      %6767 = vmatmul.mubr.bf16.gmra.mrb[0].mxu0 %v5785
      %v6768 = vpop.f32.mrb[0].mxu0
      %v6769 = vadd.f32 0.0, %v6768
      %v6770 = vpop.f32.mrb[0].mxu0
      %v6771 = vpop.f32.mrb[0].mxu0
      %v6772 = vadd.f32 0.0, %v6771
      %v6773 = vpop.f32.mrb[0].mxu0
      %6774 = vmatprep.mubr.bf16.mxu0 0
      %6775 = vmatmul.mubr.bf16.gmra.mrb[0].mxu0 %v5786
      %v6776 = vpop.f32.mrb[0].mxu0
      %v6777 = vadd.f32 0.0, %v6776
      %v6778 = vpop.f32.mrb[0].mxu0
      %v6779 = vpop.f32.mrb[0].mxu0
      %v6780 = vadd.f32 0.0, %v6779
      %v6781 = vpop.f32.mrb[0].mxu0
      %6782 = vmatprep.mubr.bf16.mxu0 0
      %6783 = vmatmul.mubr.bf16.gmra.mrb[0].mxu0 %v5787
      %v6784 = vpop.f32.mrb[0].mxu0
      %v6785 = vadd.f32 0.0, %v6784
      %v6786 = vpop.f32.mrb[0].mxu0
      %v6787 = vpop.f32.mrb[0].mxu0
      %v6788 = vadd.f32 0.0, %v6787
      %v6789 = vpop.f32.mrb[0].mxu0
      %6790 = vmatprep.mubr.bf16.mxu0 0
      %6791 = vmatmul.mubr.bf16.gmra.mrb[0].mxu0 %v5788
      %v6792 = vpop.f32.mrb[0].mxu0
      %v6793 = vadd.f32 0.0, %v6792
      %v6794 = vpop.f32.mrb[0].mxu0
      %v6795 = vpop.f32.mrb[0].mxu0
      %v6796 = vadd.f32 0.0, %v6795
      %v6797 = vpop.f32.mrb[0].mxu0
      %6798 = vmatprep.mubr.bf16.mxu0 0
      %6799 = vmatmul.mubr.bf16.gmra.mrb[0].mxu0 %v5789
      %v6800 = vpop.f32.mrb[0].mxu0
      %v6801 = vadd.f32 0.0, %v6800
      %v6802 = vpop.f32.mrb[0].mxu0
      %v6803 = vpop.f32.mrb[0].mxu0
      %v6804 = vadd.f32 0.0, %v6803
      %v6805 = vpop.f32.mrb[0].mxu0
      %6806 = vmatprep.mubr.bf16.mxu0 0
      %6807 = vmatmul.mubr.bf16.gmra.mrb[0].mxu0 %v5790
      %v6808 = vpop.f32.mrb[0].mxu0
      %v6809 = vadd.f32 0.0, %v6808
      %v6810 = vpop.f32.mrb[0].mxu0
      %v6811 = vpop.f32.mrb[0].mxu0
      %v6812 = vadd.f32 0.0, %v6811
      %v6813 = vpop.f32.mrb[0].mxu0
      %6814 = vmatprep.mubr.bf16.mxu0 0
      %6815 = vmatmul.mubr.bf16.gmra.mrb[0].mxu0 %v5791
      %v6816 = vpop.f32.mrb[0].mxu0
      %v6817 = vadd.f32 0.0, %v6816
      %v6818 = vpop.f32.mrb[0].mxu0
      %v6819 = vpop.f32.mrb[0].mxu0
      %v6820 = vadd.f32 0.0, %v6819
      %v6821 = vpop.f32.mrb[0].mxu0
      %6822 = vmatprep.mubr.bf16.mxu0 0
      %6823 = vmatmul.mubr.bf16.gmra.mrb[0].mxu0 %v5792
      %v6824 = vpop.f32.mrb[0].mxu0
      %v6825 = vadd.f32 0.0, %v6824
      %v6826 = vpop.f32.mrb[0].mxu0
      %v6827 = vpop.f32.mrb[0].mxu0
      %v6828 = vadd.f32 0.0, %v6827
      %v6829 = vpop.f32.mrb[0].mxu0
      %6830 = vmatprep.mubr.bf16.mxu0 0
      %6831 = vmatmul.mubr.bf16.gmra.mrb[0].mxu0 %v6628
      %v6832 = vpop.f32.mrb[0].mxu0
      %v6833 = vadd.f32 0.0, %v6832
      %v6834 = vpop.f32.mrb[0].mxu0
      %v6835 = vpop.f32.mrb[0].mxu0
      %v6836 = vadd.f32 0.0, %v6835
      %v6837 = vpop.f32.mrb[0].mxu0
      %6838 = vdwg.mxu0
      %v6839 = vadd.f32 %v6568, %v6713
      %v6840 = vadd.f32 %v6569, %v6716
      %v6841 = vadd.f32 %v6570, %v6721
      %v6842 = vadd.f32 %v6571, %v6724
      %v6843 = vadd.f32 %v6572, %v6729
      %v6844 = vadd.f32 %v6573, %v6732
      %v6845 = vadd.f32 %v6574, %v6737
      %v6846 = vadd.f32 %v6575, %v6740
      %v6847 = vadd.f32 %v6576, %v6745
      %v6848 = vadd.f32 %v6577, %v6748
      %v6849 = vadd.f32 %v6578, %v6753
      %v6850 = vadd.f32 %v6579, %v6756
      %v6851 = vadd.f32 %v6580, %v6761
      %v6852 = vadd.f32 %v6581, %v6764
      %v6853 = vadd.f32 %v6582, %v6769
      %v6854 = vadd.f32 %v6583, %v6772
      %v6855 = vadd.f32 %v6584, %v6777
      %v6856 = vadd.f32 %v6585, %v6780
      %v6857 = vadd.f32 %v6586, %v6785
      %v6858 = vadd.f32 %v6587, %v6788
      %v6859 = vadd.f32 %v6588, %v6793
      %v6860 = vadd.f32 %v6589, %v6796
      %v6861 = vadd.f32 %v6590, %v6801
      %v6862 = vadd.f32 %v6591, %v6804
      %v6863 = vadd.f32 %v6592, %v6809
      %v6864 = vadd.f32 %v6593, %v6812
      %v6865 = vadd.f32 %v6594, %v6817
      %v6866 = vadd.f32 %v6595, %v6820
      %v6867 = vadd.f32 %v6596, %v6825
      %v6868 = vadd.f32 %v6597, %v6828
      %v6869 = vadd.f32 %v6598, %v6833
      %v6870 = vadd.f32 %v6599, %v6836
      %s6871 = scalar_lea.vmem %s4, 384
      %v6872 = vld [vmem:[%s6871] sm:$0xf]
      %v6873 = vld [vmem:[%s6871 + $0x4] sm:$0xf]
      %v6874 = vld [vmem:[%s6871 + $0x8] sm:$0xf]
      %v6875 = vld [vmem:[%s6871 + $0xc] sm:$0xf]
      %v6876 = vld [vmem:[%s6871 + $0x10] sm:$0xf]
      %v6877 = vld [vmem:[%s6871 + $0x14] sm:$0xf]
      %v6878 = vld [vmem:[%s6871 + $0x18] sm:$0xf]
      %v6879 = vld [vmem:[%s6871 + $0x1c] sm:$0xf]
      %v6880 = vld [vmem:[%s6871 + $0x20] sm:$0xf]
      %v6881 = vld [vmem:[%s6871 + $0x24] sm:$0xf]
      %v6882 = vld [vmem:[%s6871 + $0x28] sm:$0xf]
      %v6883 = vld [vmem:[%s6871 + $0x2c] sm:$0xf]
      %v6884 = vld [vmem:[%s6871 + $0x30] sm:$0xf]
      %v6885 = vld [vmem:[%s6871 + $0x34] sm:$0xf]
      %v6886 = vld [vmem:[%s6871 + $0x38] sm:$0xf]
      %v6887 = vld [vmem:[%s6871 + $0x3c] sm:$0xf]
      %v6890 = vunpack.c.l.b16 %v4551
      %v6891 = vunpack.c.l.b16 %v4552
      %v6892 = vpack.c.b16 %v6891, %v6890
      %v6910 = vunpack.c.l.b16 %v6872
      %v6911 = vunpack.c.l.b16 %v6873
      %v6912 = vunpack.c.l.b16 %v6874
      %v6913 = vunpack.c.l.b16 %v6875
      %v6914 = vunpack.c.l.b16 %v6876
      %v6915 = vunpack.c.l.b16 %v6877
      %v6916 = vunpack.c.l.b16 %v6878
      %v6917 = vunpack.c.l.b16 %v6879
      %v6918 = vunpack.c.l.b16 %v6880
      %v6919 = vunpack.c.l.b16 %v6881
      %v6920 = vunpack.c.l.b16 %v6882
      %v6921 = vunpack.c.l.b16 %v6883
      %v6922 = vunpack.c.l.b16 %v6884
      %v6923 = vunpack.c.l.b16 %v6885
      %v6924 = vunpack.c.l.b16 %v6886
      %v6925 = vunpack.c.l.b16 %v6887
      %v6926 = vpack.c.b16 %v6911, %v6910
      %v6927 = vpack.c.b16 %v6913, %v6912
      %v6928 = vpack.c.b16 %v6915, %v6914
      %v6929 = vpack.c.b16 %v6917, %v6916
      %v6930 = vpack.c.b16 %v6919, %v6918
      %v6931 = vpack.c.b16 %v6921, %v6920
      %v6932 = vpack.c.b16 %v6923, %v6922
      %v6933 = vpack.c.b16 %v6925, %v6924
      %6942 = vmatprep.subr.bf16.mxu0 0
      %6943 = vmatpush1.bf16.msra.mxu0 %v6926
      %6944 = vmatprep.subr.bf16.mxu0 0
      %6945 = vmatpush1.bf16.msra.mxu0 %v6927
      %6946 = vmatprep.subr.bf16.mxu0 0
      %6947 = vmatpush1.bf16.msra.mxu0 %v6928
      %6948 = vmatprep.subr.bf16.mxu0 0
      %6949 = vmatpush1.bf16.msra.mxu0 %v6929
      %6950 = vmatprep.subr.bf16.mxu0 0
      %6951 = vmatpush1.bf16.msra.mxu0 %v6930
      %6952 = vmatprep.subr.bf16.mxu0 0
      %6953 = vmatpush1.bf16.msra.mxu0 %v6931
      %6954 = vmatprep.subr.bf16.mxu0 0
      %6955 = vmatpush1.bf16.msra.mxu0 %v6932
      %6956 = vmatprep.subr.bf16.mxu0 0
      %6957 = vmatpush1.bf16.msra.mxu0 %v6933
      %6958 = vmatprep.subr.bf16.mxu0 0
      %6959 = vmatpush1.bf16.msra.mxu0 0
      %6960 = vmatprep.subr.bf16.mxu0 0
      %6961 = vmatpush1.bf16.msra.mxu0 0
      %6962 = vmatprep.subr.bf16.mxu0 0
      %6963 = vmatpush1.bf16.msra.mxu0 0
      %6964 = vmatprep.subr.bf16.mxu0 0
      %6965 = vmatpush1.bf16.msra.mxu0 0
      %6966 = vmatprep.subr.bf16.mxu0 0
      %6967 = vmatpush1.bf16.msra.mxu0 0
      %6968 = vmatprep.subr.bf16.mxu0 0
      %6969 = vmatpush1.bf16.msra.mxu0 0
      %6970 = vmatprep.subr.bf16.mxu0 0
      %6971 = vmatpush1.bf16.msra.mxu0 0
      %6972 = vmatprep.subr.bf16.mxu0 0
      %6973 = vmatpush1.bf16.msra.mxu0 0
      %6974 = vmatprep.mubr.bf16.mxu0 0
      %6975 = vmatmul.mubr.bf16.gmra.mrb[0].mxu0 %v5345
      %v6976 = vpop.f32.mrb[0].mxu0
      %v6977 = vadd.f32 0.0, %v6976
      %v6978 = vpop.f32.mrb[0].mxu0
      %v6979 = vpop.f32.mrb[0].mxu0
      %v6980 = vadd.f32 0.0, %v6979
      %v6981 = vpop.f32.mrb[0].mxu0
      %6982 = vmatprep.mubr.bf16.mxu0 0
      %6983 = vmatmul.mubr.bf16.gmra.mrb[0].mxu0 %v5346
      %v6984 = vpop.f32.mrb[0].mxu0
      %v6985 = vadd.f32 0.0, %v6984
      %v6986 = vpop.f32.mrb[0].mxu0
      %v6987 = vpop.f32.mrb[0].mxu0
      %v6988 = vadd.f32 0.0, %v6987
      %v6989 = vpop.f32.mrb[0].mxu0
      %6990 = vmatprep.mubr.bf16.mxu0 0
      %6991 = vmatmul.mubr.bf16.gmra.mrb[0].mxu0 %v5347
      %v6992 = vpop.f32.mrb[0].mxu0
      %v6993 = vadd.f32 0.0, %v6992
      %v6994 = vpop.f32.mrb[0].mxu0
      %v6995 = vpop.f32.mrb[0].mxu0
      %v6996 = vadd.f32 0.0, %v6995
      %v6997 = vpop.f32.mrb[0].mxu0
      %6998 = vmatprep.mubr.bf16.mxu0 0
      %6999 = vmatmul.mubr.bf16.gmra.mrb[0].mxu0 %v5348
      %v7000 = vpop.f32.mrb[0].mxu0
      %v7001 = vadd.f32 0.0, %v7000
      %v7002 = vpop.f32.mrb[0].mxu0
      %v7003 = vpop.f32.mrb[0].mxu0
      %v7004 = vadd.f32 0.0, %v7003
      %v7005 = vpop.f32.mrb[0].mxu0
      %7006 = vmatprep.mubr.bf16.mxu0 0
      %7007 = vmatmul.mubr.bf16.gmra.mrb[0].mxu0 %v5349
      %v7008 = vpop.f32.mrb[0].mxu0
      %v7009 = vadd.f32 0.0, %v7008
      %v7010 = vpop.f32.mrb[0].mxu0
      %v7011 = vpop.f32.mrb[0].mxu0
      %v7012 = vadd.f32 0.0, %v7011
      %v7013 = vpop.f32.mrb[0].mxu0
      %7014 = vmatprep.mubr.bf16.mxu0 0
      %7015 = vmatmul.mubr.bf16.gmra.mrb[0].mxu0 %v5350
      %v7016 = vpop.f32.mrb[0].mxu0
      %v7017 = vadd.f32 0.0, %v7016
      %v7018 = vpop.f32.mrb[0].mxu0
      %v7019 = vpop.f32.mrb[0].mxu0
      %v7020 = vadd.f32 0.0, %v7019
      %v7021 = vpop.f32.mrb[0].mxu0
      %7022 = vmatprep.mubr.bf16.mxu0 0
      %7023 = vmatmul.mubr.bf16.gmra.mrb[0].mxu0 %v5351
      %v7024 = vpop.f32.mrb[0].mxu0
      %v7025 = vadd.f32 0.0, %v7024
      %v7026 = vpop.f32.mrb[0].mxu0
      %v7027 = vpop.f32.mrb[0].mxu0
      %v7028 = vadd.f32 0.0, %v7027
      %v7029 = vpop.f32.mrb[0].mxu0
      %7030 = vmatprep.mubr.bf16.mxu0 0
      %7031 = vmatmul.mubr.bf16.gmra.mrb[0].mxu0 %v5352
      %v7032 = vpop.f32.mrb[0].mxu0
      %v7033 = vadd.f32 0.0, %v7032
      %v7034 = vpop.f32.mrb[0].mxu0
      %v7035 = vpop.f32.mrb[0].mxu0
      %v7036 = vadd.f32 0.0, %v7035
      %v7037 = vpop.f32.mrb[0].mxu0
      %7038 = vmatprep.mubr.bf16.mxu0 0
      %7039 = vmatmul.mubr.bf16.gmra.mrb[0].mxu0 %v5353
      %v7040 = vpop.f32.mrb[0].mxu0
      %v7041 = vadd.f32 0.0, %v7040
      %v7042 = vpop.f32.mrb[0].mxu0
      %v7043 = vpop.f32.mrb[0].mxu0
      %v7044 = vadd.f32 0.0, %v7043
      %v7045 = vpop.f32.mrb[0].mxu0
      %7046 = vmatprep.mubr.bf16.mxu0 0
      %7047 = vmatmul.mubr.bf16.gmra.mrb[0].mxu0 %v5354
      %v7048 = vpop.f32.mrb[0].mxu0
      %v7049 = vadd.f32 0.0, %v7048
      %v7050 = vpop.f32.mrb[0].mxu0
      %v7051 = vpop.f32.mrb[0].mxu0
      %v7052 = vadd.f32 0.0, %v7051
      %v7053 = vpop.f32.mrb[0].mxu0
      %7054 = vmatprep.mubr.bf16.mxu0 0
      %7055 = vmatmul.mubr.bf16.gmra.mrb[0].mxu0 %v5355
      %v7056 = vpop.f32.mrb[0].mxu0
      %v7057 = vadd.f32 0.0, %v7056
      %v7058 = vpop.f32.mrb[0].mxu0
      %v7059 = vpop.f32.mrb[0].mxu0
      %v7060 = vadd.f32 0.0, %v7059
      %v7061 = vpop.f32.mrb[0].mxu0
      %7062 = vmatprep.mubr.bf16.mxu0 0
      %7063 = vmatmul.mubr.bf16.gmra.mrb[0].mxu0 %v5356
      %v7064 = vpop.f32.mrb[0].mxu0
      %v7065 = vadd.f32 0.0, %v7064
      %v7066 = vpop.f32.mrb[0].mxu0
      %v7067 = vpop.f32.mrb[0].mxu0
      %v7068 = vadd.f32 0.0, %v7067
      %v7069 = vpop.f32.mrb[0].mxu0
      %7070 = vmatprep.mubr.bf16.mxu0 0
      %7071 = vmatmul.mubr.bf16.gmra.mrb[0].mxu0 %v5357
      %v7072 = vpop.f32.mrb[0].mxu0
      %v7073 = vadd.f32 0.0, %v7072
      %v7074 = vpop.f32.mrb[0].mxu0
      %v7075 = vpop.f32.mrb[0].mxu0
      %v7076 = vadd.f32 0.0, %v7075
      %v7077 = vpop.f32.mrb[0].mxu0
      %7078 = vmatprep.mubr.bf16.mxu0 0
      %7079 = vmatmul.mubr.bf16.gmra.mrb[0].mxu0 %v5358
      %v7080 = vpop.f32.mrb[0].mxu0
      %v7081 = vadd.f32 0.0, %v7080
      %v7082 = vpop.f32.mrb[0].mxu0
      %v7083 = vpop.f32.mrb[0].mxu0
      %v7084 = vadd.f32 0.0, %v7083
      %v7085 = vpop.f32.mrb[0].mxu0
      %7086 = vmatprep.mubr.bf16.mxu0 0
      %7087 = vmatmul.mubr.bf16.gmra.mrb[0].mxu0 %v6071
      %v7088 = vpop.f32.mrb[0].mxu0
      %v7089 = vadd.f32 0.0, %v7088
      %v7090 = vpop.f32.mrb[0].mxu0
      %v7091 = vpop.f32.mrb[0].mxu0
      %v7092 = vadd.f32 0.0, %v7091
      %v7093 = vpop.f32.mrb[0].mxu0
      %7094 = vmatprep.mubr.bf16.mxu0 0
      %7095 = vmatmul.mubr.bf16.gmra.mrb[0].mxu0 %v6892
      %v7096 = vpop.f32.mrb[0].mxu0
      %v7097 = vadd.f32 0.0, %v7096
      %v7098 = vpop.f32.mrb[0].mxu0
      %v7099 = vpop.f32.mrb[0].mxu0
      %v7100 = vadd.f32 0.0, %v7099
      %v7101 = vpop.f32.mrb[0].mxu0
      %7102 = vdwg.mxu0
      %v7103 = vadd.f32 %v6839, %v6977
      %v7104 = vadd.f32 %v6840, %v6980
      %v7105 = vadd.f32 %v6841, %v6985
      %v7106 = vadd.f32 %v6842, %v6988
      %v7107 = vadd.f32 %v6843, %v6993
      %v7108 = vadd.f32 %v6844, %v6996
      %v7109 = vadd.f32 %v6845, %v7001
      %v7110 = vadd.f32 %v6846, %v7004
      %v7111 = vadd.f32 %v6847, %v7009
      %v7112 = vadd.f32 %v6848, %v7012
      %v7113 = vadd.f32 %v6849, %v7017
      %v7114 = vadd.f32 %v6850, %v7020
      %v7115 = vadd.f32 %v6851, %v7025
      %v7116 = vadd.f32 %v6852, %v7028
      %v7117 = vadd.f32 %v6853, %v7033
      %v7118 = vadd.f32 %v6854, %v7036
      %v7119 = vadd.f32 %v6855, %v7041
      %v7120 = vadd.f32 %v6856, %v7044
      %v7121 = vadd.f32 %v6857, %v7049
      %v7122 = vadd.f32 %v6858, %v7052
      %v7123 = vadd.f32 %v6859, %v7057
      %v7124 = vadd.f32 %v6860, %v7060
      %v7125 = vadd.f32 %v6861, %v7065
      %v7126 = vadd.f32 %v6862, %v7068
      %v7127 = vadd.f32 %v6863, %v7073
      %v7128 = vadd.f32 %v6864, %v7076
      %v7129 = vadd.f32 %v6865, %v7081
      %v7130 = vadd.f32 %v6866, %v7084
      %v7131 = vadd.f32 %v6867, %v7089
      %v7132 = vadd.f32 %v6868, %v7092
      %v7133 = vadd.f32 %v6869, %v7097
      %v7134 = vadd.f32 %v6870, %v7100
      %v7136 = vshrl.u32 %v4551, 16
      %v7138 = vrot.slane %v7136, 4
      %v7139 = vshll.u32 %v4551, 16
      %v7141 = vrot.slane %v7139, 5
      %v7142 = vor.u32 %v7138, %v7141
      %v7143 = vrot.slane %v7142, 4
      %v7145 = vshll.u32 %v4552, 16
      %v7147 = vrot.slane %v7145, 5
      %v7148 = vsel %vm1030, %v7143, %v7147
      %v7149 = vshrl.u32 %v4552, 16
      %v7151 = vrot.slane %v7149, 4
      %v7152 = vor.u32 %v7151, %v7147
      %v7153 = vrot.slane %v7152, 4
      %v7155 = vshll.u32 %v4570, 16
      %v7157 = vrot.slane %v7155, 5
      %v7158 = vsel %vm1030, %v7153, %v7157
      %s7159 = scalar_lea.vmem %s4, 448
      %v7160 = vld [vmem:[%s7159] sm:$0xf]
      %v7161 = vld [vmem:[%s7159 + $0x4] sm:$0xf]
      %v7162 = vld [vmem:[%s7159 + $0x8] sm:$0xf]
      %v7163 = vld [vmem:[%s7159 + $0xc] sm:$0xf]
      %v7164 = vld [vmem:[%s7159 + $0x10] sm:$0xf]
      %v7165 = vld [vmem:[%s7159 + $0x14] sm:$0xf]
      %v7166 = vld [vmem:[%s7159 + $0x18] sm:$0xf]
      %v7167 = vld [vmem:[%s7159 + $0x1c] sm:$0xf]
      %v7168 = vld [vmem:[%s7159 + $0x20] sm:$0xf]
      %v7169 = vld [vmem:[%s7159 + $0x24] sm:$0xf]
      %v7170 = vld [vmem:[%s7159 + $0x28] sm:$0xf]
      %v7171 = vld [vmem:[%s7159 + $0x2c] sm:$0xf]
      %v7172 = vld [vmem:[%s7159 + $0x30] sm:$0xf]
      %v7173 = vld [vmem:[%s7159 + $0x34] sm:$0xf]
      %v7174 = vld [vmem:[%s7159 + $0x38] sm:$0xf]
      %v7175 = vld [vmem:[%s7159 + $0x3c] sm:$0xf]
      %v7176 = vunpack.c.l.b16 %v7148
      %v7177 = vunpack.c.l.b16 %v7158
      %v7178 = vpack.c.b16 %v7177, %v7176
      %v7196 = vunpack.c.l.b16 %v7160
      %v7197 = vunpack.c.l.b16 %v7161
      %v7198 = vunpack.c.l.b16 %v7162
      %v7199 = vunpack.c.l.b16 %v7163
      %v7200 = vunpack.c.l.b16 %v7164
      %v7201 = vunpack.c.l.b16 %v7165
      %v7202 = vunpack.c.l.b16 %v7166
      %v7203 = vunpack.c.l.b16 %v7167
      %v7204 = vunpack.c.l.b16 %v7168
      %v7205 = vunpack.c.l.b16 %v7169
      %v7206 = vunpack.c.l.b16 %v7170
      %v7207 = vunpack.c.l.b16 %v7171
      %v7208 = vunpack.c.l.b16 %v7172
      %v7209 = vunpack.c.l.b16 %v7173
      %v7210 = vunpack.c.l.b16 %v7174
      %v7211 = vunpack.c.l.b16 %v7175
      %v7212 = vpack.c.b16 %v7197, %v7196
      %v7213 = vpack.c.b16 %v7199, %v7198
      %v7214 = vpack.c.b16 %v7201, %v7200
      %v7215 = vpack.c.b16 %v7203, %v7202
      %v7216 = vpack.c.b16 %v7205, %v7204
      %v7217 = vpack.c.b16 %v7207, %v7206
      %v7218 = vpack.c.b16 %v7209, %v7208
      %v7219 = vpack.c.b16 %v7211, %v7210
      %7228 = vmatprep.subr.bf16.mxu0 0
      %7229 = vmatpush1.bf16.msra.mxu0 %v7212
      %7230 = vmatprep.subr.bf16.mxu0 0
      %7231 = vmatpush1.bf16.msra.mxu0 %v7213
      %7232 = vmatprep.subr.bf16.mxu0 0
      %7233 = vmatpush1.bf16.msra.mxu0 %v7214
      %7234 = vmatprep.subr.bf16.mxu0 0
      %7235 = vmatpush1.bf16.msra.mxu0 %v7215
      %7236 = vmatprep.subr.bf16.mxu0 0
      %7237 = vmatpush1.bf16.msra.mxu0 %v7216
      %7238 = vmatprep.subr.bf16.mxu0 0
      %7239 = vmatpush1.bf16.msra.mxu0 %v7217
      %7240 = vmatprep.subr.bf16.mxu0 0
      %7241 = vmatpush1.bf16.msra.mxu0 %v7218
      %7242 = vmatprep.subr.bf16.mxu0 0
      %7243 = vmatpush1.bf16.msra.mxu0 %v7219
      %7244 = vmatprep.subr.bf16.mxu0 0
      %7245 = vmatpush1.bf16.msra.mxu0 0
      %7246 = vmatprep.subr.bf16.mxu0 0
      %7247 = vmatpush1.bf16.msra.mxu0 0
      %7248 = vmatprep.subr.bf16.mxu0 0
      %7249 = vmatpush1.bf16.msra.mxu0 0
      %7250 = vmatprep.subr.bf16.mxu0 0
      %7251 = vmatpush1.bf16.msra.mxu0 0
      %7252 = vmatprep.subr.bf16.mxu0 0
      %7253 = vmatpush1.bf16.msra.mxu0 0
      %7254 = vmatprep.subr.bf16.mxu0 0
      %7255 = vmatpush1.bf16.msra.mxu0 0
      %7256 = vmatprep.subr.bf16.mxu0 0
      %7257 = vmatpush1.bf16.msra.mxu0 0
      %7258 = vmatprep.subr.bf16.mxu0 0
      %7259 = vmatpush1.bf16.msra.mxu0 0
      %7260 = vmatprep.mubr.bf16.mxu0 0
      %7261 = vmatmul.mubr.bf16.gmra.mrb[0].mxu0 %v5040
      %v7262 = vpop.f32.mrb[0].mxu0
      %v7263 = vadd.f32 0.0, %v7262
      %v7264 = vpop.f32.mrb[0].mxu0
      %v7265 = vpop.f32.mrb[0].mxu0
      %v7266 = vadd.f32 0.0, %v7265
      %v7267 = vpop.f32.mrb[0].mxu0
      %7268 = vmatprep.mubr.bf16.mxu0 0
      %7269 = vmatmul.mubr.bf16.gmra.mrb[0].mxu0 %v5041
      %v7270 = vpop.f32.mrb[0].mxu0
      %v7271 = vadd.f32 0.0, %v7270
      %v7272 = vpop.f32.mrb[0].mxu0
      %v7273 = vpop.f32.mrb[0].mxu0
      %v7274 = vadd.f32 0.0, %v7273
      %v7275 = vpop.f32.mrb[0].mxu0
      %7276 = vmatprep.mubr.bf16.mxu0 0
      %7277 = vmatmul.mubr.bf16.gmra.mrb[0].mxu0 %v5042
      %v7278 = vpop.f32.mrb[0].mxu0
      %v7279 = vadd.f32 0.0, %v7278
      %v7280 = vpop.f32.mrb[0].mxu0
      %v7281 = vpop.f32.mrb[0].mxu0
      %v7282 = vadd.f32 0.0, %v7281
      %v7283 = vpop.f32.mrb[0].mxu0
      %7284 = vmatprep.mubr.bf16.mxu0 0
      %7285 = vmatmul.mubr.bf16.gmra.mrb[0].mxu0 %v5043
      %v7286 = vpop.f32.mrb[0].mxu0
      %v7287 = vadd.f32 0.0, %v7286
      %v7288 = vpop.f32.mrb[0].mxu0
      %v7289 = vpop.f32.mrb[0].mxu0
      %v7290 = vadd.f32 0.0, %v7289
      %v7291 = vpop.f32.mrb[0].mxu0
      %7292 = vmatprep.mubr.bf16.mxu0 0
      %7293 = vmatmul.mubr.bf16.gmra.mrb[0].mxu0 %v5044
      %v7294 = vpop.f32.mrb[0].mxu0
      %v7295 = vadd.f32 0.0, %v7294
      %v7296 = vpop.f32.mrb[0].mxu0
      %v7297 = vpop.f32.mrb[0].mxu0
      %v7298 = vadd.f32 0.0, %v7297
      %v7299 = vpop.f32.mrb[0].mxu0
      %7300 = vmatprep.mubr.bf16.mxu0 0
      %7301 = vmatmul.mubr.bf16.gmra.mrb[0].mxu0 %v5045
      %v7302 = vpop.f32.mrb[0].mxu0
      %v7303 = vadd.f32 0.0, %v7302
      %v7304 = vpop.f32.mrb[0].mxu0
      %v7305 = vpop.f32.mrb[0].mxu0
      %v7306 = vadd.f32 0.0, %v7305
      %v7307 = vpop.f32.mrb[0].mxu0
      %7308 = vmatprep.mubr.bf16.mxu0 0
      %7309 = vmatmul.mubr.bf16.gmra.mrb[0].mxu0 %v5046
      %v7310 = vpop.f32.mrb[0].mxu0
      %v7311 = vadd.f32 0.0, %v7310
      %v7312 = vpop.f32.mrb[0].mxu0
      %v7313 = vpop.f32.mrb[0].mxu0
      %v7314 = vadd.f32 0.0, %v7313
      %v7315 = vpop.f32.mrb[0].mxu0
      %7316 = vmatprep.mubr.bf16.mxu0 0
      %7317 = vmatmul.mubr.bf16.gmra.mrb[0].mxu0 %v5047
      %v7318 = vpop.f32.mrb[0].mxu0
      %v7319 = vadd.f32 0.0, %v7318
      %v7320 = vpop.f32.mrb[0].mxu0
      %v7321 = vpop.f32.mrb[0].mxu0
      %v7322 = vadd.f32 0.0, %v7321
      %v7323 = vpop.f32.mrb[0].mxu0
      %7324 = vmatprep.mubr.bf16.mxu0 0
      %7325 = vmatmul.mubr.bf16.gmra.mrb[0].mxu0 %v5048
      %v7326 = vpop.f32.mrb[0].mxu0
      %v7327 = vadd.f32 0.0, %v7326
      %v7328 = vpop.f32.mrb[0].mxu0
      %v7329 = vpop.f32.mrb[0].mxu0
      %v7330 = vadd.f32 0.0, %v7329
      %v7331 = vpop.f32.mrb[0].mxu0
      %7332 = vmatprep.mubr.bf16.mxu0 0
      %7333 = vmatmul.mubr.bf16.gmra.mrb[0].mxu0 %v5049
      %v7334 = vpop.f32.mrb[0].mxu0
      %v7335 = vadd.f32 0.0, %v7334
      %v7336 = vpop.f32.mrb[0].mxu0
      %v7337 = vpop.f32.mrb[0].mxu0
      %v7338 = vadd.f32 0.0, %v7337
      %v7339 = vpop.f32.mrb[0].mxu0
      %7340 = vmatprep.mubr.bf16.mxu0 0
      %7341 = vmatmul.mubr.bf16.gmra.mrb[0].mxu0 %v5050
      %v7342 = vpop.f32.mrb[0].mxu0
      %v7343 = vadd.f32 0.0, %v7342
      %v7344 = vpop.f32.mrb[0].mxu0
      %v7345 = vpop.f32.mrb[0].mxu0
      %v7346 = vadd.f32 0.0, %v7345
      %v7347 = vpop.f32.mrb[0].mxu0
      %7348 = vmatprep.mubr.bf16.mxu0 0
      %7349 = vmatmul.mubr.bf16.gmra.mrb[0].mxu0 %v5051
      %v7350 = vpop.f32.mrb[0].mxu0
      %v7351 = vadd.f32 0.0, %v7350
      %v7352 = vpop.f32.mrb[0].mxu0
      %v7353 = vpop.f32.mrb[0].mxu0
      %v7354 = vadd.f32 0.0, %v7353
      %v7355 = vpop.f32.mrb[0].mxu0
      %7356 = vmatprep.mubr.bf16.mxu0 0
      %7357 = vmatmul.mubr.bf16.gmra.mrb[0].mxu0 %v5052
      %v7358 = vpop.f32.mrb[0].mxu0
      %v7359 = vadd.f32 0.0, %v7358
      %v7360 = vpop.f32.mrb[0].mxu0
      %v7361 = vpop.f32.mrb[0].mxu0
      %v7362 = vadd.f32 0.0, %v7361
      %v7363 = vpop.f32.mrb[0].mxu0
      %7364 = vmatprep.mubr.bf16.mxu0 0
      %7365 = vmatmul.mubr.bf16.gmra.mrb[0].mxu0 %v5053
      %v7366 = vpop.f32.mrb[0].mxu0
      %v7367 = vadd.f32 0.0, %v7366
      %v7368 = vpop.f32.mrb[0].mxu0
      %v7369 = vpop.f32.mrb[0].mxu0
      %v7370 = vadd.f32 0.0, %v7369
      %v7371 = vpop.f32.mrb[0].mxu0
      %7372 = vmatprep.mubr.bf16.mxu0 0
      %7373 = vmatmul.mubr.bf16.gmra.mrb[0].mxu0 %v6357
      %v7374 = vpop.f32.mrb[0].mxu0
      %v7375 = vadd.f32 0.0, %v7374
      %v7376 = vpop.f32.mrb[0].mxu0
      %v7377 = vpop.f32.mrb[0].mxu0
      %v7378 = vadd.f32 0.0, %v7377
      %v7379 = vpop.f32.mrb[0].mxu0
      %7380 = vmatprep.mubr.bf16.mxu0 0
      %7381 = vmatmul.mubr.bf16.gmra.mrb[0].mxu0 %v7178
      %v7382 = vpop.f32.mrb[0].mxu0
      %v7383 = vadd.f32 0.0, %v7382
      %v7384 = vpop.f32.mrb[0].mxu0
      %v7385 = vpop.f32.mrb[0].mxu0
      %v7386 = vadd.f32 0.0, %v7385
      %v7387 = vpop.f32.mrb[0].mxu0
      %7388 = vdwg.mxu0
      %v7389 = vadd.f32 %v7103, %v7263
      %v7390 = vadd.f32 %v7104, %v7266
      %v7391 = vadd.f32 %v7105, %v7271
      %v7392 = vadd.f32 %v7106, %v7274
      %v7393 = vadd.f32 %v7107, %v7279
      %v7394 = vadd.f32 %v7108, %v7282
      %v7395 = vadd.f32 %v7109, %v7287
      %v7396 = vadd.f32 %v7110, %v7290
      %v7397 = vadd.f32 %v7111, %v7295
      %v7398 = vadd.f32 %v7112, %v7298
      %v7399 = vadd.f32 %v7113, %v7303
      %v7400 = vadd.f32 %v7114, %v7306
      %v7401 = vadd.f32 %v7115, %v7311
      %v7402 = vadd.f32 %v7116, %v7314
      %v7403 = vadd.f32 %v7117, %v7319
      %v7404 = vadd.f32 %v7118, %v7322
      %v7405 = vadd.f32 %v7119, %v7327
      %v7406 = vadd.f32 %v7120, %v7330
      %v7407 = vadd.f32 %v7121, %v7335
      %v7408 = vadd.f32 %v7122, %v7338
      %v7409 = vadd.f32 %v7123, %v7343
      %v7410 = vadd.f32 %v7124, %v7346
      %v7411 = vadd.f32 %v7125, %v7351
      %v7412 = vadd.f32 %v7126, %v7354
      %v7413 = vadd.f32 %v7127, %v7359
      %v7414 = vadd.f32 %v7128, %v7362
      %v7415 = vadd.f32 %v7129, %v7367
      %v7416 = vadd.f32 %v7130, %v7370
      %v7417 = vadd.f32 %v7131, %v7375
      %v7418 = vadd.f32 %v7132, %v7378
      %v7419 = vadd.f32 %v7133, %v7383
      %v7420 = vadd.f32 %v7134, %v7386
      %v7423 = vrot.slane %v4588, 5
      %v7424 = vrot.slane %v7423, 4
      %v7425 = vrot.slane %v4552, 5
      %v7426 = vsel %vm2005, %v7424, %v7425
      %v7427 = vrot.slane %v7425, 4
      %v7428 = vrot.slane %v4570, 5
      %v7429 = vsel %vm2005, %v7427, %v7428
      %s7430 = scalar_lea.vmem %s4, 512
      %v7431 = vld [vmem:[%s7430] sm:$0xf]
      %v7432 = vld [vmem:[%s7430 + $0x4] sm:$0xf]
      %v7433 = vld [vmem:[%s7430 + $0x8] sm:$0xf]
      %v7434 = vld [vmem:[%s7430 + $0xc] sm:$0xf]
      %v7435 = vld [vmem:[%s7430 + $0x10] sm:$0xf]
      %v7436 = vld [vmem:[%s7430 + $0x14] sm:$0xf]
      %v7437 = vld [vmem:[%s7430 + $0x18] sm:$0xf]
      %v7438 = vld [vmem:[%s7430 + $0x1c] sm:$0xf]
      %v7439 = vld [vmem:[%s7430 + $0x20] sm:$0xf]
      %v7440 = vld [vmem:[%s7430 + $0x24] sm:$0xf]
      %v7441 = vld [vmem:[%s7430 + $0x28] sm:$0xf]
      %v7442 = vld [vmem:[%s7430 + $0x2c] sm:$0xf]
      %v7443 = vld [vmem:[%s7430 + $0x30] sm:$0xf]
      %v7444 = vld [vmem:[%s7430 + $0x34] sm:$0xf]
      %v7445 = vld [vmem:[%s7430 + $0x38] sm:$0xf]
      %v7446 = vld [vmem:[%s7430 + $0x3c] sm:$0xf]
      %v7447 = vunpack.c.l.b16 %v7426
      %v7448 = vunpack.c.l.b16 %v7429
      %v7449 = vpack.c.b16 %v7448, %v7447
      %v7467 = vunpack.c.l.b16 %v7431
      %v7468 = vunpack.c.l.b16 %v7432
      %v7469 = vunpack.c.l.b16 %v7433
      %v7470 = vunpack.c.l.b16 %v7434
      %v7471 = vunpack.c.l.b16 %v7435
      %v7472 = vunpack.c.l.b16 %v7436
      %v7473 = vunpack.c.l.b16 %v7437
      %v7474 = vunpack.c.l.b16 %v7438
      %v7475 = vunpack.c.l.b16 %v7439
      %v7476 = vunpack.c.l.b16 %v7440
      %v7477 = vunpack.c.l.b16 %v7441
      %v7478 = vunpack.c.l.b16 %v7442
      %v7479 = vunpack.c.l.b16 %v7443
      %v7480 = vunpack.c.l.b16 %v7444
      %v7481 = vunpack.c.l.b16 %v7445
      %v7482 = vunpack.c.l.b16 %v7446
      %v7483 = vpack.c.b16 %v7468, %v7467
      %v7484 = vpack.c.b16 %v7470, %v7469
      %v7485 = vpack.c.b16 %v7472, %v7471
      %v7486 = vpack.c.b16 %v7474, %v7473
      %v7487 = vpack.c.b16 %v7476, %v7475
      %v7488 = vpack.c.b16 %v7478, %v7477
      %v7489 = vpack.c.b16 %v7480, %v7479
      %v7490 = vpack.c.b16 %v7482, %v7481
      %7499 = vmatprep.subr.bf16.mxu0 0
      %7500 = vmatpush1.bf16.msra.mxu0 %v7483
      %7501 = vmatprep.subr.bf16.mxu0 0
      %7502 = vmatpush1.bf16.msra.mxu0 %v7484
      %7503 = vmatprep.subr.bf16.mxu0 0
      %7504 = vmatpush1.bf16.msra.mxu0 %v7485
      %7505 = vmatprep.subr.bf16.mxu0 0
      %7506 = vmatpush1.bf16.msra.mxu0 %v7486
      %7507 = vmatprep.subr.bf16.mxu0 0
      %7508 = vmatpush1.bf16.msra.mxu0 %v7487
      %7509 = vmatprep.subr.bf16.mxu0 0
      %7510 = vmatpush1.bf16.msra.mxu0 %v7488
      %7511 = vmatprep.subr.bf16.mxu0 0
      %7512 = vmatpush1.bf16.msra.mxu0 %v7489
      %7513 = vmatprep.subr.bf16.mxu0 0
      %7514 = vmatpush1.bf16.msra.mxu0 %v7490
      %7515 = vmatprep.subr.bf16.mxu0 0
      %7516 = vmatpush1.bf16.msra.mxu0 0
      %7517 = vmatprep.subr.bf16.mxu0 0
      %7518 = vmatpush1.bf16.msra.mxu0 0
      %7519 = vmatprep.subr.bf16.mxu0 0
      %7520 = vmatpush1.bf16.msra.mxu0 0
      %7521 = vmatprep.subr.bf16.mxu0 0
      %7522 = vmatpush1.bf16.msra.mxu0 0
      %7523 = vmatprep.subr.bf16.mxu0 0
      %7524 = vmatpush1.bf16.msra.mxu0 0
      %7525 = vmatprep.subr.bf16.mxu0 0
      %7526 = vmatpush1.bf16.msra.mxu0 0
      %7527 = vmatprep.subr.bf16.mxu0 0
      %7528 = vmatpush1.bf16.msra.mxu0 0
      %7529 = vmatprep.subr.bf16.mxu0 0
      %7530 = vmatpush1.bf16.msra.mxu0 0
      %7531 = vmatprep.mubr.bf16.mxu0 0
      %7532 = vmatmul.mubr.bf16.gmra.mrb[0].mxu0 %v5779
      %v7533 = vpop.f32.mrb[0].mxu0
      %v7534 = vadd.f32 0.0, %v7533
      %v7535 = vpop.f32.mrb[0].mxu0
      %v7536 = vpop.f32.mrb[0].mxu0
      %v7537 = vadd.f32 0.0, %v7536
      %v7538 = vpop.f32.mrb[0].mxu0
      %7539 = vmatprep.mubr.bf16.mxu0 0
      %7540 = vmatmul.mubr.bf16.gmra.mrb[0].mxu0 %v5780
      %v7541 = vpop.f32.mrb[0].mxu0
      %v7542 = vadd.f32 0.0, %v7541
      %v7543 = vpop.f32.mrb[0].mxu0
      %v7544 = vpop.f32.mrb[0].mxu0
      %v7545 = vadd.f32 0.0, %v7544
      %v7546 = vpop.f32.mrb[0].mxu0
      %7547 = vmatprep.mubr.bf16.mxu0 0
      %7548 = vmatmul.mubr.bf16.gmra.mrb[0].mxu0 %v5781
      %v7549 = vpop.f32.mrb[0].mxu0
      %v7550 = vadd.f32 0.0, %v7549
      %v7551 = vpop.f32.mrb[0].mxu0
      %v7552 = vpop.f32.mrb[0].mxu0
      %v7553 = vadd.f32 0.0, %v7552
      %v7554 = vpop.f32.mrb[0].mxu0
      %7555 = vmatprep.mubr.bf16.mxu0 0
      %7556 = vmatmul.mubr.bf16.gmra.mrb[0].mxu0 %v5782
      %v7557 = vpop.f32.mrb[0].mxu0
      %v7558 = vadd.f32 0.0, %v7557
      %v7559 = vpop.f32.mrb[0].mxu0
      %v7560 = vpop.f32.mrb[0].mxu0
      %v7561 = vadd.f32 0.0, %v7560
      %v7562 = vpop.f32.mrb[0].mxu0
      %7563 = vmatprep.mubr.bf16.mxu0 0
      %7564 = vmatmul.mubr.bf16.gmra.mrb[0].mxu0 %v5783
      %v7565 = vpop.f32.mrb[0].mxu0
      %v7566 = vadd.f32 0.0, %v7565
      %v7567 = vpop.f32.mrb[0].mxu0
      %v7568 = vpop.f32.mrb[0].mxu0
      %v7569 = vadd.f32 0.0, %v7568
      %v7570 = vpop.f32.mrb[0].mxu0
      %7571 = vmatprep.mubr.bf16.mxu0 0
      %7572 = vmatmul.mubr.bf16.gmra.mrb[0].mxu0 %v5784
      %v7573 = vpop.f32.mrb[0].mxu0
      %v7574 = vadd.f32 0.0, %v7573
      %v7575 = vpop.f32.mrb[0].mxu0
      %v7576 = vpop.f32.mrb[0].mxu0
      %v7577 = vadd.f32 0.0, %v7576
      %v7578 = vpop.f32.mrb[0].mxu0
      %7579 = vmatprep.mubr.bf16.mxu0 0
      %7580 = vmatmul.mubr.bf16.gmra.mrb[0].mxu0 %v5785
      %v7581 = vpop.f32.mrb[0].mxu0
      %v7582 = vadd.f32 0.0, %v7581
      %v7583 = vpop.f32.mrb[0].mxu0
      %v7584 = vpop.f32.mrb[0].mxu0
      %v7585 = vadd.f32 0.0, %v7584
      %v7586 = vpop.f32.mrb[0].mxu0
      %7587 = vmatprep.mubr.bf16.mxu0 0
      %7588 = vmatmul.mubr.bf16.gmra.mrb[0].mxu0 %v5786
      %v7589 = vpop.f32.mrb[0].mxu0
      %v7590 = vadd.f32 0.0, %v7589
      %v7591 = vpop.f32.mrb[0].mxu0
      %v7592 = vpop.f32.mrb[0].mxu0
      %v7593 = vadd.f32 0.0, %v7592
      %v7594 = vpop.f32.mrb[0].mxu0
      %7595 = vmatprep.mubr.bf16.mxu0 0
      %7596 = vmatmul.mubr.bf16.gmra.mrb[0].mxu0 %v5787
      %v7597 = vpop.f32.mrb[0].mxu0
      %v7598 = vadd.f32 0.0, %v7597
      %v7599 = vpop.f32.mrb[0].mxu0
      %v7600 = vpop.f32.mrb[0].mxu0
      %v7601 = vadd.f32 0.0, %v7600
      %v7602 = vpop.f32.mrb[0].mxu0
      %7603 = vmatprep.mubr.bf16.mxu0 0
      %7604 = vmatmul.mubr.bf16.gmra.mrb[0].mxu0 %v5788
      %v7605 = vpop.f32.mrb[0].mxu0
      %v7606 = vadd.f32 0.0, %v7605
      %v7607 = vpop.f32.mrb[0].mxu0
      %v7608 = vpop.f32.mrb[0].mxu0
      %v7609 = vadd.f32 0.0, %v7608
      %v7610 = vpop.f32.mrb[0].mxu0
      %7611 = vmatprep.mubr.bf16.mxu0 0
      %7612 = vmatmul.mubr.bf16.gmra.mrb[0].mxu0 %v5789
      %v7613 = vpop.f32.mrb[0].mxu0
      %v7614 = vadd.f32 0.0, %v7613
      %v7615 = vpop.f32.mrb[0].mxu0
      %v7616 = vpop.f32.mrb[0].mxu0
      %v7617 = vadd.f32 0.0, %v7616
      %v7618 = vpop.f32.mrb[0].mxu0
      %7619 = vmatprep.mubr.bf16.mxu0 0
      %7620 = vmatmul.mubr.bf16.gmra.mrb[0].mxu0 %v5790
      %v7621 = vpop.f32.mrb[0].mxu0
      %v7622 = vadd.f32 0.0, %v7621
      %v7623 = vpop.f32.mrb[0].mxu0
      %v7624 = vpop.f32.mrb[0].mxu0
      %v7625 = vadd.f32 0.0, %v7624
      %v7626 = vpop.f32.mrb[0].mxu0
      %7627 = vmatprep.mubr.bf16.mxu0 0
      %7628 = vmatmul.mubr.bf16.gmra.mrb[0].mxu0 %v5791
      %v7629 = vpop.f32.mrb[0].mxu0
      %v7630 = vadd.f32 0.0, %v7629
      %v7631 = vpop.f32.mrb[0].mxu0
      %v7632 = vpop.f32.mrb[0].mxu0
      %v7633 = vadd.f32 0.0, %v7632
      %v7634 = vpop.f32.mrb[0].mxu0
      %7635 = vmatprep.mubr.bf16.mxu0 0
      %7636 = vmatmul.mubr.bf16.gmra.mrb[0].mxu0 %v5792
      %v7637 = vpop.f32.mrb[0].mxu0
      %v7638 = vadd.f32 0.0, %v7637
      %v7639 = vpop.f32.mrb[0].mxu0
      %v7640 = vpop.f32.mrb[0].mxu0
      %v7641 = vadd.f32 0.0, %v7640
      %v7642 = vpop.f32.mrb[0].mxu0
      %7643 = vmatprep.mubr.bf16.mxu0 0
      %7644 = vmatmul.mubr.bf16.gmra.mrb[0].mxu0 %v6628
      %v7645 = vpop.f32.mrb[0].mxu0
      %v7646 = vadd.f32 0.0, %v7645
      %v7647 = vpop.f32.mrb[0].mxu0
      %v7648 = vpop.f32.mrb[0].mxu0
      %v7649 = vadd.f32 0.0, %v7648
      %v7650 = vpop.f32.mrb[0].mxu0
      %7651 = vmatprep.mubr.bf16.mxu0 0
      %7652 = vmatmul.mubr.bf16.gmra.mrb[0].mxu0 %v7449
      %v7653 = vpop.f32.mrb[0].mxu0
      %v7654 = vadd.f32 0.0, %v7653
      %v7655 = vpop.f32.mrb[0].mxu0
      %v7656 = vpop.f32.mrb[0].mxu0
      %v7657 = vadd.f32 0.0, %v7656
      %v7658 = vpop.f32.mrb[0].mxu0
      %7659 = vdwg.mxu0
      %v7660 = vadd.f32 %v7389, %v7534
      %v7661 = vadd.f32 %v7390, %v7537
      %v7662 = vadd.f32 %v7391, %v7542
      %v7663 = vadd.f32 %v7392, %v7545
      %v7664 = vadd.f32 %v7393, %v7550
      %v7665 = vadd.f32 %v7394, %v7553
      %v7666 = vadd.f32 %v7395, %v7558
      %v7667 = vadd.f32 %v7396, %v7561
      %v7668 = vadd.f32 %v7397, %v7566
      %v7669 = vadd.f32 %v7398, %v7569
      %v7670 = vadd.f32 %v7399, %v7574
      %v7671 = vadd.f32 %v7400, %v7577
      %v7672 = vadd.f32 %v7401, %v7582
      %v7673 = vadd.f32 %v7402, %v7585
      %v7674 = vadd.f32 %v7403, %v7590
      %v7675 = vadd.f32 %v7404, %v7593
      %v7676 = vadd.f32 %v7405, %v7598
      %v7677 = vadd.f32 %v7406, %v7601
      %v7678 = vadd.f32 %v7407, %v7606
      %v7679 = vadd.f32 %v7408, %v7609
      %v7680 = vadd.f32 %v7409, %v7614
      %v7681 = vadd.f32 %v7410, %v7617
      %v7682 = vadd.f32 %v7411, %v7622
      %v7683 = vadd.f32 %v7412, %v7625
      %v7684 = vadd.f32 %v7413, %v7630
      %v7685 = vadd.f32 %v7414, %v7633
      %v7686 = vadd.f32 %v7415, %v7638
      %v7687 = vadd.f32 %v7416, %v7641
      %v7688 = vadd.f32 %v7417, %v7646
      %v7689 = vadd.f32 %v7418, %v7649
      %v7690 = vadd.f32 %v7419, %v7654
      %v7691 = vadd.f32 %v7420, %v7657
      %v7692 = vld [vmem:[%s5] sm:$0x1]
      %v7694 = vlaneseq
      %v7695 = vshrl.u32 %v7694, 7
      %v7696 = vsub.s32 0, %v7695
      %v7697 = vrot.slane %v7692, %v7696
      %v7699 = vmul.f32 %v7660, %v7697
      %v7700 = vmul.f32 %v7661, %v7697
      %v7701 = vmul.f32 %v7662, %v7697
      %v7702 = vmul.f32 %v7663, %v7697
      %v7703 = vmul.f32 %v7664, %v7697
      %v7704 = vmul.f32 %v7665, %v7697
      %v7705 = vmul.f32 %v7666, %v7697
      %v7706 = vmul.f32 %v7667, %v7697
      %v7707 = vmul.f32 %v7668, %v7697
      %v7708 = vmul.f32 %v7669, %v7697
      %v7709 = vmul.f32 %v7670, %v7697
      %v7710 = vmul.f32 %v7671, %v7697
      %v7711 = vmul.f32 %v7672, %v7697
      %v7712 = vmul.f32 %v7673, %v7697
      %v7713 = vmul.f32 %v7674, %v7697
      %v7714 = vmul.f32 %v7675, %v7697
      %v7715 = vmul.f32 %v7676, %v7697
      %v7716 = vmul.f32 %v7677, %v7697
      %v7717 = vmul.f32 %v7678, %v7697
      %v7718 = vmul.f32 %v7679, %v7697
      %v7719 = vmul.f32 %v7680, %v7697
      %v7720 = vmul.f32 %v7681, %v7697
      %v7721 = vmul.f32 %v7682, %v7697
      %v7722 = vmul.f32 %v7683, %v7697
      %v7723 = vmul.f32 %v7684, %v7697
      %v7724 = vmul.f32 %v7685, %v7697
      %v7725 = vmul.f32 %v7686, %v7697
      %v7726 = vmul.f32 %v7687, %v7697
      %v7727 = vmul.f32 %v7688, %v7697
      %v7728 = vmul.f32 %v7689, %v7697
      %v7729 = vmul.f32 %v7690, %v7697
      %v7730 = vmul.f32 %v7691, %v7697
      %v7731 = vld [vmem:[%s6] sm:$0x1]
      %v7733 = vlaneseq
      %v7734 = vshrl.u32 %v7733, 7
      %v7735 = vsub.s32 0, %v7734
      %v7736 = vrot.slane %v7731, %v7735
      %v7738 = vadd.f32 %v7699, %v7736
      %v7739 = vadd.f32 %v7700, %v7736
      %v7740 = vadd.f32 %v7701, %v7736
      %v7741 = vadd.f32 %v7702, %v7736
      %v7742 = vadd.f32 %v7703, %v7736
      %v7743 = vadd.f32 %v7704, %v7736
      %v7744 = vadd.f32 %v7705, %v7736
      %v7745 = vadd.f32 %v7706, %v7736
      %v7746 = vadd.f32 %v7707, %v7736
      %v7747 = vadd.f32 %v7708, %v7736
      %v7748 = vadd.f32 %v7709, %v7736
      %v7749 = vadd.f32 %v7710, %v7736
      %v7750 = vadd.f32 %v7711, %v7736
      %v7751 = vadd.f32 %v7712, %v7736
      %v7752 = vadd.f32 %v7713, %v7736
      %v7753 = vadd.f32 %v7714, %v7736
      %v7754 = vadd.f32 %v7715, %v7736
      %v7755 = vadd.f32 %v7716, %v7736
      %v7756 = vadd.f32 %v7717, %v7736
      %v7757 = vadd.f32 %v7718, %v7736
      %v7758 = vadd.f32 %v7719, %v7736
      %v7759 = vadd.f32 %v7720, %v7736
      %v7760 = vadd.f32 %v7721, %v7736
      %v7761 = vadd.f32 %v7722, %v7736
      %v7762 = vadd.f32 %v7723, %v7736
      %v7763 = vadd.f32 %v7724, %v7736
      %v7764 = vadd.f32 %v7725, %v7736
      %v7765 = vadd.f32 %v7726, %v7736
      %v7766 = vadd.f32 %v7727, %v7736
      %v7767 = vadd.f32 %v7728, %v7736
      %v7768 = vadd.f32 %v7729, %v7736
      %v7769 = vadd.f32 %v7730, %v7736
      %vm7770 = vcmp.gt.f32.partialorder %v7738, 0.0
      %vm7771 = vcmp.gt.f32.partialorder %v7739, 0.0
      %vm7772 = vcmp.gt.f32.partialorder %v7740, 0.0
      %vm7773 = vcmp.gt.f32.partialorder %v7741, 0.0
      %vm7774 = vcmp.gt.f32.partialorder %v7742, 0.0
      %vm7775 = vcmp.gt.f32.partialorder %v7743, 0.0
      %vm7776 = vcmp.gt.f32.partialorder %v7744, 0.0
      %vm7777 = vcmp.gt.f32.partialorder %v7745, 0.0
      %vm7778 = vcmp.gt.f32.partialorder %v7746, 0.0
      %vm7779 = vcmp.gt.f32.partialorder %v7747, 0.0
      %vm7780 = vcmp.gt.f32.partialorder %v7748, 0.0
      %vm7781 = vcmp.gt.f32.partialorder %v7749, 0.0
      %vm7782 = vcmp.gt.f32.partialorder %v7750, 0.0
      %vm7783 = vcmp.gt.f32.partialorder %v7751, 0.0
      %vm7784 = vcmp.gt.f32.partialorder %v7752, 0.0
      %vm7785 = vcmp.gt.f32.partialorder %v7753, 0.0
      %vm7786 = vcmp.gt.f32.partialorder %v7754, 0.0
      %vm7787 = vcmp.gt.f32.partialorder %v7755, 0.0
      %vm7788 = vcmp.gt.f32.partialorder %v7756, 0.0
      %vm7789 = vcmp.gt.f32.partialorder %v7757, 0.0
      %vm7790 = vcmp.gt.f32.partialorder %v7758, 0.0
      %vm7791 = vcmp.gt.f32.partialorder %v7759, 0.0
      %vm7792 = vcmp.gt.f32.partialorder %v7760, 0.0
      %vm7793 = vcmp.gt.f32.partialorder %v7761, 0.0
      %vm7794 = vcmp.gt.f32.partialorder %v7762, 0.0
      %vm7795 = vcmp.gt.f32.partialorder %v7763, 0.0
      %vm7796 = vcmp.gt.f32.partialorder %v7764, 0.0
      %vm7797 = vcmp.gt.f32.partialorder %v7765, 0.0
      %vm7798 = vcmp.gt.f32.partialorder %v7766, 0.0
      %vm7799 = vcmp.gt.f32.partialorder %v7767, 0.0
      %vm7800 = vcmp.gt.f32.partialorder %v7768, 0.0
      %vm7801 = vcmp.gt.f32.partialorder %v7769, 0.0
      %v7802 = vmul.f32 %v7738, 0.01
      %v7803 = vmul.f32 %v7739, 0.01
      %v7804 = vmul.f32 %v7740, 0.01
      %v7805 = vmul.f32 %v7741, 0.01
      %v7806 = vmul.f32 %v7742, 0.01
      %v7807 = vmul.f32 %v7743, 0.01
      %v7808 = vmul.f32 %v7744, 0.01
      %v7809 = vmul.f32 %v7745, 0.01
      %v7810 = vmul.f32 %v7746, 0.01
      %v7811 = vmul.f32 %v7747, 0.01
      %v7812 = vmul.f32 %v7748, 0.01
      %v7813 = vmul.f32 %v7749, 0.01
      %v7814 = vmul.f32 %v7750, 0.01
      %v7815 = vmul.f32 %v7751, 0.01
      %v7816 = vmul.f32 %v7752, 0.01
      %v7817 = vmul.f32 %v7753, 0.01
      %v7818 = vmul.f32 %v7754, 0.01
      %v7819 = vmul.f32 %v7755, 0.01
      %v7820 = vmul.f32 %v7756, 0.01
      %v7821 = vmul.f32 %v7757, 0.01
      %v7822 = vmul.f32 %v7758, 0.01
      %v7823 = vmul.f32 %v7759, 0.01
      %v7824 = vmul.f32 %v7760, 0.01
      %v7825 = vmul.f32 %v7761, 0.01
      %v7826 = vmul.f32 %v7762, 0.01
      %v7827 = vmul.f32 %v7763, 0.01
      %v7828 = vmul.f32 %v7764, 0.01
      %v7829 = vmul.f32 %v7765, 0.01
      %v7830 = vmul.f32 %v7766, 0.01
      %v7831 = vmul.f32 %v7767, 0.01
      %v7832 = vmul.f32 %v7768, 0.01
      %v7833 = vmul.f32 %v7769, 0.01
      %v7834 = vsel %vm7770, %v7738, %v7802
      %v7835 = vsel %vm7771, %v7739, %v7803
      %v7836 = vsel %vm7772, %v7740, %v7804
      %v7837 = vsel %vm7773, %v7741, %v7805
      %v7838 = vsel %vm7774, %v7742, %v7806
      %v7839 = vsel %vm7775, %v7743, %v7807
      %v7840 = vsel %vm7776, %v7744, %v7808
      %v7841 = vsel %vm7777, %v7745, %v7809
      %v7842 = vsel %vm7778, %v7746, %v7810
      %v7843 = vsel %vm7779, %v7747, %v7811
      %v7844 = vsel %vm7780, %v7748, %v7812
      %v7845 = vsel %vm7781, %v7749, %v7813
      %v7846 = vsel %vm7782, %v7750, %v7814
      %v7847 = vsel %vm7783, %v7751, %v7815
      %v7848 = vsel %vm7784, %v7752, %v7816
      %v7849 = vsel %vm7785, %v7753, %v7817
      %v7850 = vsel %vm7786, %v7754, %v7818
      %v7851 = vsel %vm7787, %v7755, %v7819
      %v7852 = vsel %vm7788, %v7756, %v7820
      %v7853 = vsel %vm7789, %v7757, %v7821
      %v7854 = vsel %vm7790, %v7758, %v7822
      %v7855 = vsel %vm7791, %v7759, %v7823
      %v7856 = vsel %vm7792, %v7760, %v7824
      %v7857 = vsel %vm7793, %v7761, %v7825
      %v7858 = vsel %vm7794, %v7762, %v7826
      %v7859 = vsel %vm7795, %v7763, %v7827
      %v7860 = vsel %vm7796, %v7764, %v7828
      %v7861 = vsel %vm7797, %v7765, %v7829
      %v7862 = vsel %vm7798, %v7766, %v7830
      %v7863 = vsel %vm7799, %v7767, %v7831
      %v7864 = vsel %vm7800, %v7768, %v7832
      %v7865 = vsel %vm7801, %v7769, %v7833
      %v7866 = vpack.c.bf16 %v7835, %v7834
      %v7867 = vpack.c.bf16 %v7837, %v7836
      %v7868 = vpack.c.bf16 %v7839, %v7838
      %v7869 = vpack.c.bf16 %v7841, %v7840
      %v7870 = vpack.c.bf16 %v7843, %v7842
      %v7871 = vpack.c.bf16 %v7845, %v7844
      %v7872 = vpack.c.bf16 %v7847, %v7846
      %v7873 = vpack.c.bf16 %v7849, %v7848
      %v7874 = vpack.c.bf16 %v7851, %v7850
      %v7875 = vpack.c.bf16 %v7853, %v7852
      %v7876 = vpack.c.bf16 %v7855, %v7854
      %v7877 = vpack.c.bf16 %v7857, %v7856
      %v7878 = vpack.c.bf16 %v7859, %v7858
      %v7879 = vpack.c.bf16 %v7861, %v7860
      %v7880 = vpack.c.bf16 %v7863, %v7862
      %v7881 = vpack.c.bf16 %v7865, %v7864
      %v7898 = vunpack.c.l.b16 %v7866
      %v7899 = vunpack.c.h.b16 %v7866
      %v7900 = vunpack.c.l.b16 %v7867
      %v7901 = vunpack.c.h.b16 %v7867
      %v7902 = vunpack.c.l.b16 %v7868
      %v7903 = vunpack.c.h.b16 %v7868
      %v7904 = vunpack.c.l.b16 %v7869
      %v7905 = vunpack.c.h.b16 %v7869
      %v7906 = vunpack.c.l.b16 %v7870
      %v7907 = vunpack.c.h.b16 %v7870
      %v7908 = vunpack.c.l.b16 %v7871
      %v7909 = vunpack.c.h.b16 %v7871
      %v7910 = vunpack.c.l.b16 %v7872
      %v7911 = vunpack.c.h.b16 %v7872
      %v7912 = vunpack.c.l.b16 %v7873
      %v7913 = vunpack.c.h.b16 %v7873
      %v7914 = vunpack.c.l.b16 %v7874
      %v7915 = vunpack.c.h.b16 %v7874
      %v7916 = vunpack.c.l.b16 %v7875
      %v7917 = vunpack.c.h.b16 %v7875
      %v7918 = vunpack.c.l.b16 %v7876
      %v7919 = vunpack.c.h.b16 %v7876
      %v7920 = vunpack.c.l.b16 %v7877
      %v7921 = vunpack.c.h.b16 %v7877
      %v7922 = vunpack.c.l.b16 %v7878
      %v7923 = vunpack.c.h.b16 %v7878
      %v7924 = vunpack.c.l.b16 %v7879
      %v7925 = vunpack.c.h.b16 %v7879
      %v7926 = vunpack.c.l.b16 %v7880
      %v7927 = vunpack.c.h.b16 %v7880
      %v7928 = vunpack.c.l.b16 %v7881
      %v7929 = vunpack.c.h.b16 %v7881
      %v7930 = vpack.c.b16 %v7898, %v7898
      %v7931 = vpack.c.b16 %v7899, %v7899
      %v7932 = vpack.c.b16 %v7900, %v7900
      %v7933 = vpack.c.b16 %v7901, %v7901
      %v7934 = vpack.c.b16 %v7902, %v7902
      %v7935 = vpack.c.b16 %v7903, %v7903
      %v7936 = vpack.c.b16 %v7904, %v7904
      %v7937 = vpack.c.b16 %v7905, %v7905
      %v7938 = vpack.c.b16 %v7906, %v7906
      %v7939 = vpack.c.b16 %v7907, %v7907
      %v7940 = vpack.c.b16 %v7908, %v7908
      %v7941 = vpack.c.b16 %v7909, %v7909
      %v7942 = vpack.c.b16 %v7910, %v7910
      %v7943 = vpack.c.b16 %v7911, %v7911
      %v7944 = vpack.c.b16 %v7912, %v7912
      %v7945 = vpack.c.b16 %v7913, %v7913
      %v7946 = vpack.c.b16 %v7914, %v7914
      %v7947 = vpack.c.b16 %v7915, %v7915
      %v7948 = vpack.c.b16 %v7916, %v7916
      %v7949 = vpack.c.b16 %v7917, %v7917
      %v7950 = vpack.c.b16 %v7918, %v7918
      %v7951 = vpack.c.b16 %v7919, %v7919
      %v7952 = vpack.c.b16 %v7920, %v7920
      %v7953 = vpack.c.b16 %v7921, %v7921
      %v7954 = vpack.c.b16 %v7922, %v7922
      %v7955 = vpack.c.b16 %v7923, %v7923
      %v7956 = vpack.c.b16 %v7924, %v7924
      %v7957 = vpack.c.b16 %v7925, %v7925
      %v7958 = vpack.c.b16 %v7926, %v7926
      %v7959 = vpack.c.b16 %v7927, %v7927
      %v7960 = vpack.c.b16 %v7928, %v7928
      %v7961 = vpack.c.b16 %v7929, %v7929
      %vm7994 = vcmask 60416
      %7995 = vst.msk [vmem:[%s278] sm:$0xf] %vm7994, %v7930
      %7996 = vst.msk [vmem:[%s278 + $0x4] sm:$0xf] %vm7994, %v7931
      %7997 = vst.msk [vmem:[%s278 + $0x8] sm:$0xf] %vm7994, %v7932
      %7998 = vst.msk [vmem:[%s278 + $0xc] sm:$0xf] %vm7994, %v7933
      %7999 = vst.msk [vmem:[%s278 + $0x10] sm:$0xf] %vm7994, %v7934
      %8000 = vst.msk [vmem:[%s278 + $0x14] sm:$0xf] %vm7994, %v7935
      %8001 = vst.msk [vmem:[%s278 + $0x18] sm:$0xf] %vm7994, %v7936
      %8002 = vst.msk [vmem:[%s278 + $0x1c] sm:$0xf] %vm7994, %v7937
      %8003 = vst.msk [vmem:[%s278 + $0x20] sm:$0xf] %vm7994, %v7938
      %8004 = vst.msk [vmem:[%s278 + $0x24] sm:$0xf] %vm7994, %v7939
      %8005 = vst.msk [vmem:[%s278 + $0x28] sm:$0xf] %vm7994, %v7940
      %8006 = vst.msk [vmem:[%s278 + $0x2c] sm:$0xf] %vm7994, %v7941
      %8007 = vst.msk [vmem:[%s278 + $0x30] sm:$0xf] %vm7994, %v7942
      %8008 = vst.msk [vmem:[%s278 + $0x34] sm:$0xf] %vm7994, %v7943
      %8009 = vst.msk [vmem:[%s278 + $0x38] sm:$0xf] %vm7994, %v7944
      %8010 = vst.msk [vmem:[%s278 + $0x3c] sm:$0xf] %vm7994, %v7945
      %8011 = vst.msk [vmem:[%s278 + $0x40] sm:$0xf] %vm7994, %v7946
      %8012 = vst.msk [vmem:[%s278 + $0x44] sm:$0xf] %vm7994, %v7947
      %8013 = vst.msk [vmem:[%s278 + $0x48] sm:$0xf] %vm7994, %v7948
      %8014 = vst.msk [vmem:[%s278 + $0x4c] sm:$0xf] %vm7994, %v7949
      %8015 = vst.msk [vmem:[%s278 + $0x50] sm:$0xf] %vm7994, %v7950
      %8016 = vst.msk [vmem:[%s278 + $0x54] sm:$0xf] %vm7994, %v7951
      %8017 = vst.msk [vmem:[%s278 + $0x58] sm:$0xf] %vm7994, %v7952
      %8018 = vst.msk [vmem:[%s278 + $0x5c] sm:$0xf] %vm7994, %v7953
      %8019 = vst.msk [vmem:[%s278 + $0x60] sm:$0xf] %vm7994, %v7954
      %8020 = vst.msk [vmem:[%s278 + $0x64] sm:$0xf] %vm7994, %v7955
      %8021 = vst.msk [vmem:[%s278 + $0x68] sm:$0xf] %vm7994, %v7956
      %8022 = vst.msk [vmem:[%s278 + $0x6c] sm:$0xf] %vm7994, %v7957
      %8023 = vst.msk [vmem:[%s278 + $0x70] sm:$0xf] %vm7994, %v7958
      %8024 = vst.msk [vmem:[%s278 + $0x74] sm:$0xf] %vm7994, %v7959
      %8025 = vst.msk [vmem:[%s278 + $0x78] sm:$0xf] %vm7994, %v7960
      %8026 = vst.msk [vmem:[%s278 + $0x7c] sm:$0xf] %vm7994, %v7961
      %p8027 = scmp.lt.s32.totalorder %s18, 1
      %s8028 = scalar_select %p8027, %s18, 1
      %s8029 = smul.addr %s8028, 32
      %s8030 = smul.addr %s8029, 4
      %s8031 = scalar_lea.vmem %s7, %s8030
      // Predicated region
      $region49: #{double_conv_nhwc.1} parent=47 // pred_check
        %p8032 = pneg %p188
      $region50: #{double_conv_nhwc.1} parent=47 // pred_check_branch
        %8034 = sbr.rel (%p8032) target = $region52
      $region51: #{double_conv_nhwc.1} parent=47 // pred_region
        _
      $region52: #{double_conv_nhwc.1} parent=47 // pred_fallthru
        _
    $region48: #{double_conv_nhwc.1} parent=5 // pred_fallthru
      _
    %p8035 = scmp.le.s32.totalorder 2, %s13
    // Predicated region
    $region53: #{double_conv_nhwc.1} parent=5 // pred_check
      %p8036 = pneg %p8035
    $region54: #{double_conv_nhwc.1} parent=5 // pred_check_branch
      %8038 = sbr.rel (%p8036) target = $region56
    $region55: #{double_conv_nhwc.1} parent=5 // pred_region
      %s8039 = ssub.s32 %s13, 2
      // Predicated region
      $region57: #{double_conv_nhwc.1} parent=55 // pred_check
        %p8040 = pneg %p194
      $region58: #{double_conv_nhwc.1} parent=55 // pred_check_branch
        %8042 = sbr.rel (%p8040) target = $region60
      $region59: #{double_conv_nhwc.1} parent=55 // pred_region
        %p8043 = scmp.lt.s32.totalorder %s19, 1
        %s8044 = scalar_select %p8043, %s19, 1
        %s8045 = smul.addr %s8044, 32
        %s8046 = smul.addr %s8045, 4
        %s8047 = scalar_lea.vmem %s7, %s8046
      $region60: #{double_conv_nhwc.1} parent=55 // pred_fallthru
        _
    $region56: #{double_conv_nhwc.1} parent=5 // pred_fallthru
      _
  $region6: #{double_conv_nhwc.1} parent=0 // loop_footer
    %s17 = sadd.s32 1, %s13
  $region7: #{double_conv_nhwc.1} parent=0 // loop_footer_branch
    %12 = sbr.rel target = $region3
  $region8: #{double_conv_nhwc.1} parent=0 // loop_exit
    _

</llo_original>
